<compile_context>
chip_gen: v5e
topology: v5e:2x2
jax: 0.10.0
libtpu: 0.0.40
codegen_flags: <defaults>
</compile_context>

<pallas_src>
import functools

import jax
import jax.numpy as jnp
from jax.experimental import pallas as pl
from jax.experimental.pallas import tpu as pltpu

EPS = 1e-5


def _conv_stats_kernel(x_ref, w_ref, y_ref, stats_ref, *, valid_w):
    # x_ref:     (1, Hp, Wpad, Cin)  bf16, zero-padded (1 top/bottom/left, right up to Wpad)
    # w_ref:     (3, 3*Cin, Cout)    bf16, [kh, kw*Cin + ci, co]
    # y_ref:     (1, H, Wpad, Cout)  f32 conv output (columns >= valid_w hold garbage)
    # stats_ref: (1, 2, Cout)        f32: row 0 = per-channel sum, row 1 = sum of squares
    _, Hp, Wpad, Cin = x_ref.shape
    H = Hp - 2
    Cout = y_ref.shape[-1]
    rows_full = Hp * Wpad
    rows_out = H * Wpad

    # (Hp, Wpad, Cin) -> (Hp*Wpad, Cin): free relayout because Wpad % 8 == 0.
    x0 = x_ref[0].reshape(rows_full, Cin)
    # kw-shifted copies (shift of one flattened row == shift of one W column). Rows that
    # would wrap only ever feed padded output columns (>= valid_w), which are masked out
    # of the stats and sliced off in the wrapper, so zero-fill is fine.
    # TODO(synk): pltpu.roll(axis=0) would move this onto the idle XLU, but sublane
    # rotation of packed bf16 is not a reliably-supported lowering, so keep slice+concat.
    x1 = jnp.concatenate([x0[1:], jnp.zeros((1, Cin), x0.dtype)], axis=0)
    x2 = jnp.concatenate([x0[2:], jnp.zeros((2, Cin), x0.dtype)], axis=0)
    # The 3 kw taps sit side by side along the contraction dim -> K = 3*Cin.
    xbig = jnp.concatenate([x0, x1, x2], axis=1)            # (rows_full, 3*Cin)

    # 3 fat MXU matmuls (K = 384); initialise acc from the first product (no zero-fill).
    acc = jnp.dot(xbig[0:rows_out], w_ref[0], preferred_element_type=jnp.float32)
    acc = acc + jnp.dot(xbig[Wpad:Wpad + rows_out], w_ref[1],
                        preferred_element_type=jnp.float32)
    acc = acc + jnp.dot(xbig[2 * Wpad:2 * Wpad + rows_out], w_ref[2],
                        preferred_element_type=jnp.float32)

    # One-pass BN statistics over the valid (non-padded) columns only.
    col = jax.lax.broadcasted_iota(jnp.int32, (rows_out, 1), 0) % Wpad
    acc_valid = jnp.where(col < valid_w, acc, 0.0)
    stats_ref[0, 0:1, :] = jnp.sum(acc_valid, axis=0, keepdims=True)
    stats_ref[0, 1:2, :] = jnp.sum(acc_valid * acc_valid, axis=0, keepdims=True)

    y_ref[0] = acc.reshape(H, Wpad, Cout)


def conv2d_batchnorm(x_nchw, w_oihw, gamma, beta, *, eps=EPS):
    """Conv2d(3x3, stride 1, pad 1, no bias) + BatchNorm2d (training-mode stats).

    x_nchw : (N, Cin, H, W) f32, w_oihw : (Cout, Cin, 3, 3) f32, gamma/beta : (Cout,) f32
    returns (N, Cout, H, W) f32
    """
    N, Cin, H, W = x_nchw.shape
    Cout = w_oihw.shape[0]
    Hp = H + 2
    Wpad = ((W + 2 + 7) // 8) * 8                           # keep W-axis sublane aligned

    # NCHW -> NHWC (C=128 on the lane axis), zero-pad, cast to bf16 for the MXU.
    x = jnp.transpose(x_nchw, (0, 2, 3, 1))
    x = jnp.pad(x, ((0, 0), (1, 1), (1, Wpad - W - 1), (0, 0))).astype(jnp.bfloat16)

    # OIHW -> (kh, kw*Cin + ci, co), bf16.
    w = jnp.transpose(w_oihw, (2, 3, 1, 0)).reshape(3, 3 * Cin, Cout).astype(jnp.bfloat16)

    # Single Pallas pass: conv + per-image per-channel sum / sum-of-squares.
    y_wide, stats = pl.pallas_call(
        functools.partial(_conv_stats_kernel, valid_w=W),
        out_shape=(
            jax.ShapeDtypeStruct((N, H, Wpad, Cout), jnp.float32),
            jax.ShapeDtypeStruct((N, 2, Cout), jnp.float32),
        ),
        grid=(N,),
        in_specs=[
            pl.BlockSpec((1, Hp, Wpad, Cin), lambda n: (n, 0, 0, 0)),
            pl.BlockSpec((3, 3 * Cin, Cout), lambda n: (0, 0, 0)),
        ],
        out_specs=(
            pl.BlockSpec((1, H, Wpad, Cout), lambda n: (n, 0, 0, 0)),
            pl.BlockSpec((1, 2, Cout), lambda n: (n, 0, 0)),
        ),
        compiler_params=pltpu.CompilerParams(
            dimension_semantics=("parallel",),
            vmem_limit_bytes=32 * 1024 * 1024,
        ),
    )(x, w)

    # Finalize batch statistics (tiny (Cout,) vectors) and fold gamma/beta into a single
    # per-channel scale/shift.
    count = N * H * W
    s1 = jnp.sum(stats[:, 0, :], axis=0)
    s2 = jnp.sum(stats[:, 1, :], axis=0)
    mean = s1 / count
    var = jnp.maximum(s2 / count - mean * mean, 0.0)
    inv_std = jax.lax.rsqrt(var + eps)
    scale = gamma * inv_std                                  # (Cout,)
    shift = beta - mean * scale                              # (Cout,)

    # Apply BN in the same XLA fusion as the padded-column slice + NCHW transpose:
    # one FMA per element, no second Pallas pass, no extra HBM round trip.
    out = y_wide[:, :, :W, :] * scale + shift
    # TODO(synk): running_mean / running_var updates (track_running_stats) not emitted.
    return jnp.transpose(out, (0, 3, 1, 2))


def _reference(x_nchw, w_oihw, gamma, beta, *, eps=EPS):
    # Pure-JAX reference (conv + training-mode BN with biased variance).
    x = jnp.transpose(x_nchw, (0, 2, 3, 1))
    w = jnp.transpose(w_oihw, (2, 3, 1, 0))
    y = jax.lax.conv_general_dilated(
        x, w, window_strides=(1, 1), padding="SAME",
        dimension_numbers=("NHWC", "HWIO", "NHWC"))
    mean = jnp.mean(y, axis=(0, 1, 2), keepdims=True)
    var = jnp.mean((y - mean) ** 2, axis=(0, 1, 2), keepdims=True)
    y = (y - mean) * jax.lax.rsqrt(var + eps) * gamma + beta
    return jnp.transpose(y, (0, 3, 1, 2))


if __name__ == "__main__":
    key = jax.random.PRNGKey(0)
    k_x, k_w, k_g, k_b = jax.random.split(key, 4)

    # Channels are fixed at 128 by the module; module's spatial size is 28x28.
    N, C, H, W = 2, 128, 28, 28
    x = jax.random.normal(k_x, (N, C, H, W), dtype=jnp.float32)

    fan_in = C * 3 * 3
    w = jax.random.normal(k_w, (C, C, 3, 3), dtype=jnp.float32) * (2.0 / fan_in) ** 0.5
    gamma = 1.0 + 0.1 * jax.random.normal(k_g, (C,), dtype=jnp.float32)
    beta = 0.1 * jax.random.normal(k_b, (C,), dtype=jnp.float32)

    out = jax.block_until_ready(conv2d_batchnorm(x, w, gamma, beta))
    assert out.shape == (N, C, H, W)

    # Tight check against a reference fed the same bf16-rounded conv inputs
    # (validates the conv/BN structure independently of the bf16 cast).
    ref_matched = _reference(
        x.astype(jnp.bfloat16).astype(jnp.float32),
        w.astype(jnp.bfloat16).astype(jnp.float32), gamma, beta)
    assert jnp.allclose(out, ref_matched, atol=5e-3, rtol=5e-3), (
        "structural mismatch: max abs err = "
        f"{float(jnp.max(jnp.abs(out - ref_matched)))}")

    # Looser check against the full fp32 reference (bounds the bf16 MXU deviation).
    ref_f32 = _reference(x, w, gamma, beta)
    assert jnp.allclose(out, ref_f32, atol=5e-2, rtol=5e-2), (
        "fp32-reference mismatch: max abs err = "
        f"{float(jnp.max(jnp.abs(out - ref_f32)))}")

    print("KERNEL_OK")
</pallas_src>

<mosaic_0001>
module attributes {stable_mosaic.version = 11 : i64} {
  func.func @_conv_stats_kernel(%arg0: i32, %arg1: memref<1x30x32x128xbf16, #tpu.memory_space<vmem>>, %arg2: memref<3x384x128xbf16, #tpu.memory_space<vmem>>, %arg3: memref<1x28x32x128xf32, #tpu.memory_space<vmem>>, %arg4: memref<1x2x128xf32, #tpu.memory_space<vmem>>) attributes {dimension_semantics = [#tpu.dimension_semantics<parallel>], iteration_bounds = array<i64: 2>, scalar_prefetch = 0 : i64, scratch_operands = 0 : i64, tpu.core_type = #tpu.core_type<tc>, window_params = [{transform_indices = @transform_0, window_bounds = array<i64: 1, 30, 32, 128>}, {pipeline_mode = #tpu.pipeline_mode<synchronous>, transform_indices = @transform_1, window_bounds = array<i64: 3, 384, 128>}, {transform_indices = @transform_2, window_bounds = array<i64: 1, 28, 32, 128>}, {transform_indices = @transform_3, window_bounds = array<i64: 1, 2, 128>}]} {
    %c0 = arith.constant 0 : index
    %c0_0 = arith.constant 0 : index
    %c0_1 = arith.constant 0 : index
    %c0_2 = arith.constant 0 : index
    %0 = vector.load %arg1[%c0, %c0_0, %c0_1, %c0_2] : memref<1x30x32x128xbf16, #tpu.memory_space<vmem>>, vector<1x30x32x128xbf16>
    %1 = vector.shape_cast %0 : vector<1x30x32x128xbf16> to vector<30x32x128xbf16>
    %2 = vector.shape_cast %1 : vector<30x32x128xbf16> to vector<960x128xbf16>
    %3 = vector.extract_strided_slice %2 {offsets = [1, 0], sizes = [959, 128], strides = [1, 1]} : vector<960x128xbf16> to vector<959x128xbf16>
    %cst = arith.constant 0.000000e+00 : bf16
    %4 = vector.broadcast %cst : bf16 to vector<1x128xbf16>
    %5 = tpu.concatenate %3, %4 in 0 : vector<959x128xbf16>, vector<1x128xbf16> -> vector<960x128xbf16>
    %6 = vector.extract_strided_slice %2 {offsets = [2, 0], sizes = [958, 128], strides = [1, 1]} : vector<960x128xbf16> to vector<958x128xbf16>
    %cst_3 = arith.constant 0.000000e+00 : bf16
    %7 = vector.broadcast %cst_3 : bf16 to vector<2x128xbf16>
    %8 = tpu.concatenate %6, %7 in 0 : vector<958x128xbf16>, vector<2x128xbf16> -> vector<960x128xbf16>
    %9 = tpu.concatenate %2, %5, %8 in 1 : vector<960x128xbf16>, vector<960x128xbf16>, vector<960x128xbf16> -> vector<960x384xbf16>
    %10 = vector.extract_strided_slice %9 {offsets = [0, 0], sizes = [896, 384], strides = [1, 1]} : vector<960x384xbf16> to vector<896x384xbf16>
    %c0_4 = arith.constant 0 : index
    %c0_5 = arith.constant 0 : index
    %c0_6 = arith.constant 0 : index
    %11 = vector.load %arg2[%c0_4, %c0_5, %c0_6] : memref<3x384x128xbf16, #tpu.memory_space<vmem>>, vector<1x384x128xbf16>
    %12 = vector.shape_cast %11 : vector<1x384x128xbf16> to vector<384x128xbf16>
    %cst_7 = arith.constant dense<0.000000e+00> : vector<896x128xf32>
    %13 = tpu.matmul %10, %12, %cst_7 {dimension_numbers = #tpu.dot_dimension_numbers<[1], [0], [0], [1], [0, 0, 1, 1], [], []>} : vector<896x384xbf16>, vector<384x128xbf16>, vector<896x128xf32> -> vector<896x128xf32>
    %14 = vector.extract_strided_slice %9 {offsets = [32, 0], sizes = [896, 384], strides = [1, 1]} : vector<960x384xbf16> to vector<896x384xbf16>
    %c1 = arith.constant 1 : index
    %c0_8 = arith.constant 0 : index
    %c0_9 = arith.constant 0 : index
    %15 = vector.load %arg2[%c1, %c0_8, %c0_9] : memref<3x384x128xbf16, #tpu.memory_space<vmem>>, vector<1x384x128xbf16>
    %16 = vector.shape_cast %15 : vector<1x384x128xbf16> to vector<384x128xbf16>
    %cst_10 = arith.constant dense<0.000000e+00> : vector<896x128xf32>
    %17 = tpu.matmul %14, %16, %cst_10 {dimension_numbers = #tpu.dot_dimension_numbers<[1], [0], [0], [1], [0, 0, 1, 1], [], []>} : vector<896x384xbf16>, vector<384x128xbf16>, vector<896x128xf32> -> vector<896x128xf32>
    %18 = arith.addf %13, %17 : vector<896x128xf32>
    %19 = vector.extract_strided_slice %9 {offsets = [64, 0], sizes = [896, 384], strides = [1, 1]} : vector<960x384xbf16> to vector<896x384xbf16>
    %c2 = arith.constant 2 : index
    %c0_11 = arith.constant 0 : index
    %c0_12 = arith.constant 0 : index
    %20 = vector.load %arg2[%c2, %c0_11, %c0_12] : memref<3x384x128xbf16, #tpu.memory_space<vmem>>, vector<1x384x128xbf16>
    %21 = vector.shape_cast %20 : vector<1x384x128xbf16> to vector<384x128xbf16>
    %cst_13 = arith.constant dense<0.000000e+00> : vector<896x128xf32>
    %22 = tpu.matmul %19, %21, %cst_13 {dimension_numbers = #tpu.dot_dimension_numbers<[1], [0], [0], [1], [0, 0, 1, 1], [], []>} : vector<896x384xbf16>, vector<384x128xbf16>, vector<896x128xf32> -> vector<896x128xf32>
    %23 = arith.addf %18, %22 : vector<896x128xf32>
    %24 = tpu.iota {dimensions = array<i32: 0>} : vector<896x1xi32>
    %c32_i32 = arith.constant 32 : i32
    %c0_i32 = arith.constant 0 : i32
    %25 = arith.cmpi eq, %c32_i32, %c0_i32 : i32
    %c1_i32 = arith.constant 1 : i32
    %26 = arith.select %25, %c1_i32, %c32_i32 : i32
    %27 = vector.broadcast %26 : i32 to vector<896x1xi32>
    %28 = arith.remsi %24, %27 : vector<896x1xi32>
    %c0_i32_14 = arith.constant 0 : i32
    %29 = vector.broadcast %c0_i32_14 : i32 to vector<896x1xi32>
    %30 = arith.cmpi ne, %28, %29 : vector<896x1xi32>
    %c0_i32_15 = arith.constant 0 : i32
    %31 = vector.broadcast %c0_i32_15 : i32 to vector<896x1xi32>
    %32 = arith.cmpi slt, %28, %31 : vector<896x1xi32>
    %c0_i32_16 = arith.constant 0 : i32
    %33 = arith.cmpi slt, %26, %c0_i32_16 : i32
    %34 = vector.broadcast %33 : i1 to vector<896x1xi1>
    %35 = vector.broadcast %34 : vector<896x1xi1> to vector<896x1xi1>
    %36 = arith.xori %32, %35 : vector<896x1xi1>
    %37 = arith.andi %36, %30 : vector<896x1xi1>
    %38 = vector.broadcast %26 : i32 to vector<896x1xi32>
    %39 = arith.addi %28, %38 : vector<896x1xi32>
    %40 = arith.select %37, %39, %28 : vector<896x1xi1>, vector<896x1xi32>
    %c28_i32 = arith.constant 28 : i32
    %41 = vector.broadcast %c28_i32 : i32 to vector<896x1xi32>
    %42 = arith.cmpi slt, %40, %41 : vector<896x1xi32>
    %cst_17 = arith.constant 0.000000e+00 : f32
    %43 = vector.shape_cast %42 : vector<896x1xi1> to vector<896x1xi1>
    %44 = vector.broadcast %43 : vector<896x1xi1> to vector<896x128xi1>
    %45 = vector.broadcast %cst_17 : f32 to vector<896x128xf32>
    %46 = arith.select %44, %23, %45 : vector<896x128xi1>, vector<896x128xf32>
    %cst_18 = arith.constant dense<0.000000e+00> : vector<128xf32>
    %47 = vector.multi_reduction <add>, %46, %cst_18 [0] : vector<896x128xf32> to vector<128xf32>
    %48 = vector.shape_cast %47 : vector<128xf32> to vector<1x128xf32>
    %c0_19 = arith.constant 0 : index
    %c0_20 = arith.constant 0 : index
    %c0_21 = arith.constant 0 : index
    %49 = vector.load %arg4[%c0_19, %c0_20, %c0_21] : memref<1x2x128xf32, #tpu.memory_space<vmem>>, vector<1x1x128xf32>
    %50 = vector.shape_cast %49 : vector<1x1x128xf32> to vector<1x128xf32>
    %51 = vector.shape_cast %48 : vector<1x128xf32> to vector<1x1x128xf32>
    tpu.vector_store %arg4[%c0_19, %c0_20, %c0_21], %51 {strides = array<i32>} : memref<1x2x128xf32, #tpu.memory_space<vmem>>, vector<1x1x128xf32>,
    %52 = arith.mulf %46, %46 : vector<896x128xf32>
    %cst_22 = arith.constant dense<0.000000e+00> : vector<128xf32>
    %53 = vector.multi_reduction <add>, %52, %cst_22 [0] : vector<896x128xf32> to vector<128xf32>
    %54 = vector.shape_cast %53 : vector<128xf32> to vector<1x128xf32>
    %c0_23 = arith.constant 0 : index
    %c1_24 = arith.constant 1 : index
    %c0_25 = arith.constant 0 : index
    %55 = vector.load %arg4[%c0_23, %c1_24, %c0_25] : memref<1x2x128xf32, #tpu.memory_space<vmem>>, vector<1x1x128xf32>
    %56 = vector.shape_cast %55 : vector<1x1x128xf32> to vector<1x128xf32>
    %57 = vector.shape_cast %54 : vector<1x128xf32> to vector<1x1x128xf32>
    tpu.vector_store %arg4[%c0_23, %c1_24, %c0_25], %57 {strides = array<i32>} : memref<1x2x128xf32, #tpu.memory_space<vmem>>, vector<1x1x128xf32>,
    %58 = vector.shape_cast %23 : vector<896x128xf32> to vector<28x32x128xf32>
    %c0_26 = arith.constant 0 : index
    %c0_27 = arith.constant 0 : index
    %c0_28 = arith.constant 0 : index
    %c0_29 = arith.constant 0 : index
    %59 = vector.load %arg3[%c0_26, %c0_27, %c0_28, %c0_29] : memref<1x28x32x128xf32, #tpu.memory_space<vmem>>, vector<1x28x32x128xf32>
    %60 = vector.shape_cast %59 : vector<1x28x32x128xf32> to vector<28x32x128xf32>
    %61 = vector.shape_cast %58 : vector<28x32x128xf32> to vector<1x28x32x128xf32>
    tpu.vector_store %arg3[%c0_26, %c0_27, %c0_28, %c0_29], %61 {strides = array<i32>} : memref<1x28x32x128xf32, #tpu.memory_space<vmem>>, vector<1x28x32x128xf32>,
    return
  }
  func.func @transform_0(%arg0: i32) -> (i32, i32, i32, i32) {
    %c0_i32 = arith.constant 0 : i32
    %c0_i32_0 = arith.constant 0 : i32
    %c0_i32_1 = arith.constant 0 : i32
    %c0_i32_2 = arith.constant 0 : i32
    return %arg0, %c0_i32, %c0_i32_0, %c0_i32_1 : i32, i32, i32, i32
  }
  func.func @transform_1(%arg0: i32) -> (i32, i32, i32) {
    %c0_i32 = arith.constant 0 : i32
    %c0_i32_0 = arith.constant 0 : i32
    %c0_i32_1 = arith.constant 0 : i32
    %c0_i32_2 = arith.constant 0 : i32
    return %c0_i32, %c0_i32_0, %c0_i32_1 : i32, i32, i32
  }
  func.func @transform_2(%arg0: i32) -> (i32, i32, i32, i32) {
    %c0_i32 = arith.constant 0 : i32
    %c0_i32_0 = arith.constant 0 : i32
    %c0_i32_1 = arith.constant 0 : i32
    %c0_i32_2 = arith.constant 0 : i32
    return %arg0, %c0_i32, %c0_i32_0, %c0_i32_1 : i32, i32, i32, i32
  }
  func.func @transform_3(%arg0: i32) -> (i32, i32, i32) {
    %c0_i32 = arith.constant 0 : i32
    %c0_i32_0 = arith.constant 0 : i32
    %c0_i32_1 = arith.constant 0 : i32
    return %arg0, %c0_i32, %c0_i32_0 : i32, i32, i32
  }
}

</mosaic_0001>

<llo_original>
// kernel: tpu_custom_call.1
$region0: #{tpu_custom_call.1}
  #allocation0 [shape = 'u32[]', space=smem, size = 0x4, offset = 0x4, fixed_abs, tag = 'smem constant byte address 0x4 - core index']
  #allocation1 [shape = 'u32[72,128]{1,0:T(1,128)}', space=vmem, size = 0x9000, scoped, tag = 'internal scratch']
  %s0 = inlined_call_operand.hbm [shape: bf16[2,30,32,128], index: 0, kind: input, shape index: {}]
  %s1 = inlined_call_operand.hbm [shape: bf16[3,384,128], index: 1, kind: input, shape index: {}]
  %s2 = inlined_call_operand.hbm [shape: f32[2,28,32,128], index: 2, kind: output, shape index: {0}]
  %s3 = inlined_call_operand.hbm [shape: f32[2,2,128], index: 3, kind: output, shape index: {1}]
  %4 = xla_tuple %s2, %s3
  %s5 = sld [smem:[#allocation0]]
  $region57: #{tpu_custom_call.1} parent=0
    _
  %s7 = ssub.s32 1, %s5
  %s8 = scalar_select 0, %s7, %s5
  $region1: #{tpu_custom_call.1} parent=0
    #allocation2 [shape = 'u8[491520]{0}', space=vmem, size = 0x78000, scoped, tag = 'input window, operand 0']
    #allocation3 [shape = 's32[2]{0}', space=sflag, size = 0x8, scoped, tag = 'scoped memory for tpu_custom_call.1']
    #allocation4 [shape = 's32[2]{0}', space=sflag, size = 0x8, scoped, tag = 'scoped memory for tpu_custom_call.1']
    #allocation5 [shape = 'u8[294912]{0}', space=vmem, size = 0x48000, scoped, tag = 'input window, operand 1, single buffered']
    #allocation6 [shape = 's32[1]{0}', space=sflag, size = 0x4, scoped, tag = 'scoped memory for tpu_custom_call.1']
    #allocation7 [shape = 'u8[917504]{0}', space=vmem, size = 0xe0000, scoped, tag = 'output window, operand 0']
    #allocation8 [shape = 'u8[2048]{0}', space=vmem, size = 0x800, scoped, tag = 'output window, operand 1']
    #allocation9 [shape = 's32[2]{0}', space=sflag, size = 0x8, scoped, tag = 'scoped memory for tpu_custom_call.1']
    %9 = vsyncpa [#allocation3], 0
    %s10 = scalar_lea.sflag [#allocation3], 1
    %11 = vsyncpa %s10, 0
    %12 = vsyncpa [#allocation6], 0
    %13 = vsyncpa [#allocation4], 0
    %s14 = scalar_lea.sflag [#allocation4], 1
    %15 = vsyncpa %s14, 0
    %16 = vsyncpa [#allocation9], 0
    %s17 = scalar_lea.sflag [#allocation9], 1
    %18 = vsyncpa %s17, 0
    loop: start=0, step=1, limit=4
    $region2: #{tpu_custom_call.1} parent=1 // loop_pre_header
      _
    $region3: #{tpu_custom_call.1} parent=1 // loop_header
      %s20 = sphi 0, %s24
      %p21 = scmp.ge.s32.totalorder %s20, 4
      %s30 = sphi 0, %s32
      %s33 = sphi 0, %s30
      %s34 = sphi 0, %s33
      %s50 = sphi 0, %s34
      %s54 = sphi 0, %s54
      %s56 = sphi 0, %s54
      %s57 = sphi 0, %s56
      %s71 = sphi 0, %s57
      %s77 = sphi 0, %s79
      %s80 = sphi 0, %s77
      %s81 = sphi 0, %s80
      %s97 = sphi 0, %s81
      %s103 = sphi 0, %s105
      %s106 = sphi 0, %s103
      %s107 = sphi 0, %s106
      %s123 = sphi 0, %s107
    $region4: #{tpu_custom_call.1} parent=1 // loop_header_branch
      %23 = sbr.rel (%p21) target = $region8
    $region5: #{tpu_custom_call.1} parent=1 // loop_body
      %s25 = ssub.s32 %s20, 1
      %s26 = ssub.s32 %s20, 2
      %s27 = sadd.s32 %s20, 1
      %s28 = ssub.s32 %s20, %s27
      %p29 = scmp.eq.s32.totalorder %s28, 0
      %s31 = sadd.s32 %s30, 1
      %s32 = scalar_select %p29, %s30, %s31
      %p35 = pneg %p29
      %p36 = scmp.eq.s32.totalorder %s20, 1
      %p37 = por %p35, %p36
      %p38 = scmp.ne.s32.totalorder %s30, %s33
      %p39 = scmp.eq.s32.totalorder %s20, 0
      %p40 = por %p38, %p39
      %p41 = scmp.ne.s32.totalorder %s30, %s33
      %p42 = scmp.eq.s32.totalorder %s25, 1
      %p43 = por %p41, %p42
      %p44 = scmp.ne.s32.totalorder %s33, %s34
      %p45 = scmp.eq.s32.totalorder %s25, 0
      %p46 = por %p44, %p45
      %p47 = scmp.ne.s32.totalorder %s33, %s34
      %p48 = scmp.eq.s32.totalorder %s26, 1
      %p49 = por %p47, %p48
      %p51 = scmp.ne.s32.totalorder %s34, %s50
      %p52 = scmp.eq.s32.totalorder %s26, 0
      %p53 = por %p51, %p52
      %s55 = sadd.s32 %s54, 1
      %p58 = scmp.eq.s32.totalorder %s20, 1
      %p59 = scmp.ne.s32.totalorder %s54, %s56
      %p60 = scmp.eq.s32.totalorder %s20, 0
      %p61 = por %p59, %p60
      %p62 = scmp.ne.s32.totalorder %s54, %s56
      %p63 = scmp.eq.s32.totalorder %s25, 1
      %p64 = por %p62, %p63
      %p65 = scmp.ne.s32.totalorder %s56, %s57
      %p66 = scmp.eq.s32.totalorder %s25, 0
      %p67 = por %p65, %p66
      %p68 = scmp.ne.s32.totalorder %s56, %s57
      %p69 = scmp.eq.s32.totalorder %s26, 1
      %p70 = por %p68, %p69
      %p72 = scmp.ne.s32.totalorder %s57, %s71
      %p73 = scmp.eq.s32.totalorder %s26, 0
      %p74 = por %p72, %p73
      %s75 = ssub.s32 %s20, %s27
      %p76 = scmp.eq.s32.totalorder %s75, 0
      %s78 = sadd.s32 %s77, 1
      %s79 = scalar_select %p76, %s77, %s78
      %p82 = pneg %p76
      %p83 = scmp.eq.s32.totalorder %s20, 1
      %p84 = por %p82, %p83
      %p85 = scmp.ne.s32.totalorder %s77, %s80
      %p86 = scmp.eq.s32.totalorder %s20, 0
      %p87 = por %p85, %p86
      %p88 = scmp.ne.s32.totalorder %s77, %s80
      %p89 = scmp.eq.s32.totalorder %s25, 1
      %p90 = por %p88, %p89
      %p91 = scmp.ne.s32.totalorder %s80, %s81
      %p92 = scmp.eq.s32.totalorder %s25, 0
      %p93 = por %p91, %p92
      %p94 = scmp.ne.s32.totalorder %s80, %s81
      %p95 = scmp.eq.s32.totalorder %s26, 1
      %p96 = por %p94, %p95
      %p98 = scmp.ne.s32.totalorder %s81, %s97
      %p99 = scmp.eq.s32.totalorder %s26, 0
      %p100 = por %p98, %p99
      %s101 = ssub.s32 %s20, %s27
      %p102 = scmp.eq.s32.totalorder %s101, 0
      %s104 = sadd.s32 %s103, 1
      %s105 = scalar_select %p102, %s103, %s104
      %p108 = pneg %p102
      %p109 = scmp.eq.s32.totalorder %s20, 1
      %p110 = por %p108, %p109
      %p111 = scmp.ne.s32.totalorder %s103, %s106
      %p112 = scmp.eq.s32.totalorder %s20, 0
      %p113 = por %p111, %p112
      %p114 = scmp.ne.s32.totalorder %s103, %s106
      %p115 = scmp.eq.s32.totalorder %s25, 1
      %p116 = por %p114, %p115
      %p117 = scmp.ne.s32.totalorder %s106, %s107
      %p118 = scmp.eq.s32.totalorder %s25, 0
      %p119 = por %p117, %p118
      %p120 = scmp.ne.s32.totalorder %s106, %s107
      %p121 = scmp.eq.s32.totalorder %s26, 1
      %p122 = por %p120, %p121
      %p124 = scmp.ne.s32.totalorder %s107, %s123
      %p125 = scmp.eq.s32.totalorder %s26, 0
      %p126 = por %p124, %p125
      %p127 = scmp.le.s32.totalorder 1, %s20
      %p128 = scmp.lt.s32.totalorder %s20, 3
      %p129 = pnand %p127, %p128
      %p130 = pneg %p129
      // Predicated region
      $region9: #{tpu_custom_call.1} parent=5 // pred_check
        _
      $region10: #{tpu_custom_call.1} parent=5 // pred_check_branch
        %132 = sbr.rel (%p129) target = $region12
      $region11: #{tpu_custom_call.1} parent=5 // pred_region
        %s133 = ssub.s32 %s20, 1
        // Predicated region
        $region13: #{tpu_custom_call.1} parent=11 // pred_check
          %p134 = pneg %p67
        $region14: #{tpu_custom_call.1} parent=11 // pred_check_branch
          %136 = sbr.rel (%p134) target = $region16
        $region15: #{tpu_custom_call.1} parent=11 // pred_region
          %138 = vsyncadd [#allocation6], 0
          %s139 = sshll.u32 %s1, 4
          %s140 = int_to_ptr.hbm [resolvable:$true] %s139
          %s141 = sshll.u32 [#allocation5], 4
          %s142 = int_to_ptr.vmem [resolvable:$true] %s141
          %147 = dma.hbm_to_vmem [thread:$0]  %s140, 9216, %s142, [#allocation6], 64, 64, 4
        $region16: #{tpu_custom_call.1} parent=11 // pred_fallthru
          _
      $region12: #{tpu_custom_call.1} parent=5 // pred_fallthru
        _
      %p148 = scmp.lt.s32.totalorder %s20, 2
      // Predicated region
      $region17: #{tpu_custom_call.1} parent=5 // pred_check
        %p149 = pneg %p148
      $region18: #{tpu_custom_call.1} parent=5 // pred_check_branch
        %151 = sbr.rel (%p149) target = $region20
      $region19: #{tpu_custom_call.1} parent=5 // pred_region
        // Predicated region
        $region21: #{tpu_custom_call.1} parent=19 // pred_check
          %p152 = pneg %p40
        $region22: #{tpu_custom_call.1} parent=19 // pred_check_branch
          %154 = sbr.rel (%p152) target = $region24
        $region23: #{tpu_custom_call.1} parent=19 // pred_region
          %s155 = sand.u32 %s30, 1
          %s156 = scalar_lea.sflag [#allocation3], %s155
          %s157 = sand.u32 %s30, 1
          %s158 = smul.addr %s157, 480
          %s159 = scalar_lea.vmem [#allocation2], %s158
          %161 = vsyncadd %s156, 0
          %s162 = smul.addr %s20, 120
          %s163 = smul.addr %s162, 4
          %s164 = scalar_lea.hbm %s0, %s163
          %s165 = sshll.u32 %s164, 4
          %s166 = int_to_ptr.hbm [resolvable:$true] %s165
          %s167 = sshll.u32 %s159, 4
          %s168 = int_to_ptr.vmem [resolvable:$true] %s167
          %173 = dma.hbm_to_vmem [thread:$0]  %s166, 7680, %s168, %s156, 64, 64, 4
        $region24: #{tpu_custom_call.1} parent=19 // pred_fallthru
          _
      $region20: #{tpu_custom_call.1} parent=5 // pred_fallthru
        _
      %p174 = scmp.le.s32.totalorder 1, %s20
      %p175 = scmp.lt.s32.totalorder %s20, 3
      %p176 = pnand %p174, %p175
      %p177 = pneg %p176
      // Predicated region
      $region25: #{tpu_custom_call.1} parent=5 // pred_check
        _
      $region26: #{tpu_custom_call.1} parent=5 // pred_check_branch
        %179 = sbr.rel (%p176) target = $region28
      $region27: #{tpu_custom_call.1} parent=5 // pred_region
        %s180 = ssub.s32 %s20, 1
        %s181 = sand.u32 %s33, 1
        %s182 = scalar_lea.sflag [#allocation3], %s181
        %s183 = sand.u32 %s33, 1
        %s184 = smul.addr %s183, 480
        %s185 = scalar_lea.vmem [#allocation2], %s184
        // Predicated region
        $region29: #{tpu_custom_call.1} parent=27 // pred_check
          %p186 = pneg %p46
        $region30: #{tpu_custom_call.1} parent=27 // pred_check_branch
          %188 = sbr.rel (%p186) target = $region32
        $region31: #{tpu_custom_call.1} parent=27 // pred_region
          %190 = dma.done %s182, 7680
        $region32: #{tpu_custom_call.1} parent=27 // pred_fallthru
          _
        // Predicated region
        $region33: #{tpu_custom_call.1} parent=27 // pred_check
          %p191 = pneg %p67
        $region34: #{tpu_custom_call.1} parent=27 // pred_check_branch
          %193 = sbr.rel (%p191) target = $region36
        $region35: #{tpu_custom_call.1} parent=27 // pred_region
          %195 = dma.done [#allocation6], 9216
        $region36: #{tpu_custom_call.1} parent=27 // pred_fallthru
          _
        %s196 = sand.u32 %s33, 1
        %s197 = scalar_lea.sflag [#allocation3], %s196
        %s198 = sand.u32 %s33, 1
        %s199 = smul.addr %s198, 480
        %s200 = scalar_lea.vmem [#allocation2], %s199
        %p201 = pneg %p46
        %p202 = pneg %p43
        %p203 = pneg %p67
        %p204 = pneg %p64
        %p205 = pneg %p93
        %p206 = pneg %p90
        %s207 = sand.u32 %s80, 1
        %s208 = scalar_lea.sflag [#allocation4], %s207
        %s209 = sand.u32 %s80, 1
        %s210 = smul.addr %s209, 896
        %s211 = scalar_lea.vmem [#allocation7], %s210
        %p212 = pneg %p119
        %p213 = pneg %p116
        %s214 = sand.u32 %s106, 1
        %s215 = scalar_lea.sflag [#allocation9], %s214
        %s216 = sand.u32 %s106, 1
        %s217 = smul.addr %s216, 2
        %s218 = scalar_lea.vmem [#allocation8], %s217
        %v220 = vld [vmem:[%s185] sm:$0xf]
        %v221 = vld [vmem:[%s185 + $0x4] sm:$0xf]
        %v222 = vld [vmem:[%s185 + $0x8] sm:$0xf]
        %v223 = vld [vmem:[%s185 + $0xc] sm:$0xf]
        %v224 = vld [vmem:[%s185 + $0x10] sm:$0xf]
        %v225 = vld [vmem:[%s185 + $0x14] sm:$0xf]
        %v226 = vld [vmem:[%s185 + $0x18] sm:$0xf]
        %v227 = vld [vmem:[%s185 + $0x1c] sm:$0xf]
        %v228 = vld [vmem:[%s185 + $0x20] sm:$0xf]
        %v229 = vld [vmem:[%s185 + $0x24] sm:$0xf]
        %v230 = vld [vmem:[%s185 + $0x28] sm:$0xf]
        %v231 = vld [vmem:[%s185 + $0x2c] sm:$0xf]
        %v232 = vld [vmem:[%s185 + $0x30] sm:$0xf]
        %v233 = vld [vmem:[%s185 + $0x34] sm:$0xf]
        %v234 = vld [vmem:[%s185 + $0x38] sm:$0xf]
        %v235 = vld [vmem:[%s185 + $0x3c] sm:$0xf]
        %v236 = vld [vmem:[%s185 + $0x40] sm:$0xf]
        %v237 = vld [vmem:[%s185 + $0x44] sm:$0xf]
        %v238 = vld [vmem:[%s185 + $0x48] sm:$0xf]
        %v239 = vld [vmem:[%s185 + $0x4c] sm:$0xf]
        %v240 = vld [vmem:[%s185 + $0x50] sm:$0xf]
        %v241 = vld [vmem:[%s185 + $0x54] sm:$0xf]
        %v242 = vld [vmem:[%s185 + $0x58] sm:$0xf]
        %v243 = vld [vmem:[%s185 + $0x5c] sm:$0xf]
        %v244 = vld [vmem:[%s185 + $0x60] sm:$0xf]
        %v245 = vld [vmem:[%s185 + $0x64] sm:$0xf]
        %v246 = vld [vmem:[%s185 + $0x68] sm:$0xf]
        %v247 = vld [vmem:[%s185 + $0x6c] sm:$0xf]
        %v248 = vld [vmem:[%s185 + $0x70] sm:$0xf]
        %v249 = vld [vmem:[%s185 + $0x74] sm:$0xf]
        %v250 = vld [vmem:[%s185 + $0x78] sm:$0xf]
        %v251 = vld [vmem:[%s185 + $0x7c] sm:$0xf]
        %v252 = vld [vmem:[%s185 + $0x80] sm:$0xf]
        %v253 = vld [vmem:[%s185 + $0x84] sm:$0xf]
        %v254 = vld [vmem:[%s185 + $0x88] sm:$0xf]
        %v255 = vld [vmem:[%s185 + $0x8c] sm:$0xf]
        %v256 = vld [vmem:[%s185 + $0x90] sm:$0xf]
        %v257 = vld [vmem:[%s185 + $0x94] sm:$0xf]
        %v258 = vld [vmem:[%s185 + $0x98] sm:$0xf]
        %v259 = vld [vmem:[%s185 + $0x9c] sm:$0xf]
        %v260 = vld [vmem:[%s185 + $0xa0] sm:$0xf]
        %v261 = vld [vmem:[%s185 + $0xa4] sm:$0xf]
        %v262 = vld [vmem:[%s185 + $0xa8] sm:$0xf]
        %v263 = vld [vmem:[%s185 + $0xac] sm:$0xf]
        %v264 = vld [vmem:[%s185 + $0xb0] sm:$0xf]
        %v265 = vld [vmem:[%s185 + $0xb4] sm:$0xf]
        %v266 = vld [vmem:[%s185 + $0xb8] sm:$0xf]
        %v267 = vld [vmem:[%s185 + $0xbc] sm:$0xf]
        %v268 = vld [vmem:[%s185 + $0xc0] sm:$0xf]
        %v269 = vld [vmem:[%s185 + $0xc4] sm:$0xf]
        %v270 = vld [vmem:[%s185 + $0xc8] sm:$0xf]
        %v271 = vld [vmem:[%s185 + $0xcc] sm:$0xf]
        %v272 = vld [vmem:[%s185 + $0xd0] sm:$0xf]
        %v273 = vld [vmem:[%s185 + $0xd4] sm:$0xf]
        %v274 = vld [vmem:[%s185 + $0xd8] sm:$0xf]
        %v275 = vld [vmem:[%s185 + $0xdc] sm:$0xf]
        %v276 = vld [vmem:[%s185 + $0xe0] sm:$0xf]
        %v277 = vld [vmem:[%s185 + $0xe4] sm:$0xf]
        %v278 = vld [vmem:[%s185 + $0xe8] sm:$0xf]
        %v279 = vld [vmem:[%s185 + $0xec] sm:$0xf]
        %v280 = vld [vmem:[%s185 + $0xf0] sm:$0xf]
        %v281 = vld [vmem:[%s185 + $0xf4] sm:$0xf]
        %v282 = vld [vmem:[%s185 + $0xf8] sm:$0xf]
        %v283 = vld [vmem:[%s185 + $0xfc] sm:$0xf]
        %v284 = vld [vmem:[%s185 + $0x100] sm:$0xf]
        %v285 = vld [vmem:[%s185 + $0x104] sm:$0xf]
        %v286 = vld [vmem:[%s185 + $0x108] sm:$0xf]
        %v287 = vld [vmem:[%s185 + $0x10c] sm:$0xf]
        %v288 = vld [vmem:[%s185 + $0x110] sm:$0xf]
        %v289 = vld [vmem:[%s185 + $0x114] sm:$0xf]
        %v290 = vld [vmem:[%s185 + $0x118] sm:$0xf]
        %v291 = vld [vmem:[%s185 + $0x11c] sm:$0xf]
        %v292 = vld [vmem:[%s185 + $0x120] sm:$0xf]
        %v293 = vld [vmem:[%s185 + $0x124] sm:$0xf]
        %v294 = vld [vmem:[%s185 + $0x128] sm:$0xf]
        %v295 = vld [vmem:[%s185 + $0x12c] sm:$0xf]
        %v296 = vld [vmem:[%s185 + $0x130] sm:$0xf]
        %v297 = vld [vmem:[%s185 + $0x134] sm:$0xf]
        %v298 = vld [vmem:[%s185 + $0x138] sm:$0xf]
        %v299 = vld [vmem:[%s185 + $0x13c] sm:$0xf]
        %v300 = vld [vmem:[%s185 + $0x140] sm:$0xf]
        %v301 = vld [vmem:[%s185 + $0x144] sm:$0xf]
        %v302 = vld [vmem:[%s185 + $0x148] sm:$0xf]
        %v303 = vld [vmem:[%s185 + $0x14c] sm:$0xf]
        %v304 = vld [vmem:[%s185 + $0x150] sm:$0xf]
        %v305 = vld [vmem:[%s185 + $0x154] sm:$0xf]
        %v306 = vld [vmem:[%s185 + $0x158] sm:$0xf]
        %v307 = vld [vmem:[%s185 + $0x15c] sm:$0xf]
        %v308 = vld [vmem:[%s185 + $0x160] sm:$0xf]
        %v309 = vld [vmem:[%s185 + $0x164] sm:$0xf]
        %v310 = vld [vmem:[%s185 + $0x168] sm:$0xf]
        %v311 = vld [vmem:[%s185 + $0x16c] sm:$0xf]
        %v312 = vld [vmem:[%s185 + $0x170] sm:$0xf]
        %v313 = vld [vmem:[%s185 + $0x174] sm:$0xf]
        %v314 = vld [vmem:[%s185 + $0x178] sm:$0xf]
        %v315 = vld [vmem:[%s185 + $0x17c] sm:$0xf]
        %v316 = vld [vmem:[%s185 + $0x180] sm:$0xf]
        %v317 = vld [vmem:[%s185 + $0x184] sm:$0xf]
        %v318 = vld [vmem:[%s185 + $0x188] sm:$0xf]
        %v319 = vld [vmem:[%s185 + $0x18c] sm:$0xf]
        %v320 = vld [vmem:[%s185 + $0x190] sm:$0xf]
        %v321 = vld [vmem:[%s185 + $0x194] sm:$0xf]
        %v322 = vld [vmem:[%s185 + $0x198] sm:$0xf]
        %v323 = vld [vmem:[%s185 + $0x19c] sm:$0xf]
        %v324 = vld [vmem:[%s185 + $0x1a0] sm:$0xf]
        %v325 = vld [vmem:[%s185 + $0x1a4] sm:$0xf]
        %v326 = vld [vmem:[%s185 + $0x1a8] sm:$0xf]
        %v327 = vld [vmem:[%s185 + $0x1ac] sm:$0xf]
        %v328 = vld [vmem:[%s185 + $0x1b0] sm:$0xf]
        %v329 = vld [vmem:[%s185 + $0x1b4] sm:$0xf]
        %v330 = vld [vmem:[%s185 + $0x1b8] sm:$0xf]
        %v331 = vld [vmem:[%s185 + $0x1bc] sm:$0xf]
        %v332 = vld [vmem:[%s185 + $0x1c0] sm:$0xf]
        %v333 = vld [vmem:[%s185 + $0x1c4] sm:$0xf]
        %v334 = vld [vmem:[%s185 + $0x1c8] sm:$0xf]
        %v335 = vld [vmem:[%s185 + $0x1cc] sm:$0xf]
        %v336 = vld [vmem:[%s185 + $0x1d0] sm:$0xf]
        %v337 = vld [vmem:[%s185 + $0x1d4] sm:$0xf]
        %v338 = vld [vmem:[%s185 + $0x1d8] sm:$0xf]
        %v339 = vld [vmem:[%s185 + $0x1dc] sm:$0xf]
        %v460 = vunpack.c.l.b16 %v220
        %v461 = vunpack.c.l.b16 %v221
        %v462 = vunpack.c.l.b16 %v222
        %v463 = vunpack.c.l.b16 %v223
        %v464 = vunpack.c.l.b16 %v224
        %v465 = vunpack.c.l.b16 %v225
        %v466 = vunpack.c.l.b16 %v226
        %v467 = vunpack.c.l.b16 %v227
        %v468 = vunpack.c.l.b16 %v228
        %v469 = vunpack.c.l.b16 %v229
        %v470 = vunpack.c.l.b16 %v230
        %v471 = vunpack.c.l.b16 %v231
        %v472 = vunpack.c.l.b16 %v232
        %v473 = vunpack.c.l.b16 %v233
        %v474 = vunpack.c.l.b16 %v234
        %v475 = vunpack.c.l.b16 %v235
        %v476 = vunpack.c.l.b16 %v236
        %v477 = vunpack.c.l.b16 %v237
        %v478 = vunpack.c.l.b16 %v238
        %v479 = vunpack.c.l.b16 %v239
        %v480 = vunpack.c.l.b16 %v240
        %v481 = vunpack.c.l.b16 %v241
        %v482 = vunpack.c.l.b16 %v242
        %v483 = vunpack.c.l.b16 %v243
        %v484 = vunpack.c.l.b16 %v244
        %v485 = vunpack.c.l.b16 %v245
        %v486 = vunpack.c.l.b16 %v246
        %v487 = vunpack.c.l.b16 %v247
        %v488 = vunpack.c.l.b16 %v248
        %v489 = vunpack.c.l.b16 %v249
        %v490 = vunpack.c.l.b16 %v250
        %v491 = vunpack.c.l.b16 %v251
        %v492 = vunpack.c.l.b16 %v252
        %v493 = vunpack.c.l.b16 %v253
        %v494 = vunpack.c.l.b16 %v254
        %v495 = vunpack.c.l.b16 %v255
        %v496 = vunpack.c.l.b16 %v256
        %v497 = vunpack.c.l.b16 %v257
        %v498 = vunpack.c.l.b16 %v258
        %v499 = vunpack.c.l.b16 %v259
        %v500 = vunpack.c.l.b16 %v260
        %v501 = vunpack.c.l.b16 %v261
        %v502 = vunpack.c.l.b16 %v262
        %v503 = vunpack.c.l.b16 %v263
        %v504 = vunpack.c.l.b16 %v264
        %v505 = vunpack.c.l.b16 %v265
        %v506 = vunpack.c.l.b16 %v266
        %v507 = vunpack.c.l.b16 %v267
        %v508 = vunpack.c.l.b16 %v268
        %v509 = vunpack.c.l.b16 %v269
        %v510 = vunpack.c.l.b16 %v270
        %v511 = vunpack.c.l.b16 %v271
        %v512 = vunpack.c.l.b16 %v272
        %v513 = vunpack.c.l.b16 %v273
        %v514 = vunpack.c.l.b16 %v274
        %v515 = vunpack.c.l.b16 %v275
        %v516 = vunpack.c.l.b16 %v276
        %v517 = vunpack.c.l.b16 %v277
        %v518 = vunpack.c.l.b16 %v278
        %v519 = vunpack.c.l.b16 %v279
        %v520 = vunpack.c.l.b16 %v280
        %v521 = vunpack.c.l.b16 %v281
        %v522 = vunpack.c.l.b16 %v282
        %v523 = vunpack.c.l.b16 %v283
        %v524 = vunpack.c.l.b16 %v284
        %v525 = vunpack.c.l.b16 %v285
        %v526 = vunpack.c.l.b16 %v286
        %v527 = vunpack.c.l.b16 %v287
        %v528 = vunpack.c.l.b16 %v288
        %v529 = vunpack.c.l.b16 %v289
        %v530 = vunpack.c.l.b16 %v290
        %v531 = vunpack.c.l.b16 %v291
        %v532 = vunpack.c.l.b16 %v292
        %v533 = vunpack.c.l.b16 %v293
        %v534 = vunpack.c.l.b16 %v294
        %v535 = vunpack.c.l.b16 %v295
        %v536 = vunpack.c.l.b16 %v296
        %v537 = vunpack.c.l.b16 %v297
        %v538 = vunpack.c.l.b16 %v298
        %v539 = vunpack.c.l.b16 %v299
        %v540 = vunpack.c.l.b16 %v300
        %v541 = vunpack.c.l.b16 %v301
        %v542 = vunpack.c.l.b16 %v302
        %v543 = vunpack.c.l.b16 %v303
        %v544 = vunpack.c.l.b16 %v304
        %v545 = vunpack.c.l.b16 %v305
        %v546 = vunpack.c.l.b16 %v306
        %v547 = vunpack.c.l.b16 %v307
        %v548 = vunpack.c.l.b16 %v308
        %v549 = vunpack.c.l.b16 %v309
        %v550 = vunpack.c.l.b16 %v310
        %v551 = vunpack.c.l.b16 %v311
        %v552 = vunpack.c.l.b16 %v312
        %v553 = vunpack.c.l.b16 %v313
        %v554 = vunpack.c.l.b16 %v314
        %v555 = vunpack.c.l.b16 %v315
        %v556 = vunpack.c.l.b16 %v316
        %v557 = vunpack.c.l.b16 %v317
        %v558 = vunpack.c.l.b16 %v318
        %v559 = vunpack.c.l.b16 %v319
        %v560 = vunpack.c.l.b16 %v320
        %v561 = vunpack.c.l.b16 %v321
        %v562 = vunpack.c.l.b16 %v322
        %v563 = vunpack.c.l.b16 %v323
        %v564 = vunpack.c.l.b16 %v324
        %v565 = vunpack.c.l.b16 %v325
        %v566 = vunpack.c.l.b16 %v326
        %v567 = vunpack.c.l.b16 %v327
        %v568 = vunpack.c.l.b16 %v328
        %v569 = vunpack.c.l.b16 %v329
        %v570 = vunpack.c.l.b16 %v330
        %v571 = vunpack.c.l.b16 %v331
        %v572 = vunpack.c.l.b16 %v332
        %v573 = vunpack.c.l.b16 %v333
        %v574 = vunpack.c.l.b16 %v334
        %v575 = vunpack.c.l.b16 %v335
        %v576 = vunpack.c.l.b16 %v336
        %v577 = vunpack.c.l.b16 %v337
        %v578 = vunpack.c.l.b16 %v338
        %v579 = vunpack.c.l.b16 %v339
        %v580 = vpack.c.b16 %v461, %v460
        %v581 = vpack.c.b16 %v463, %v462
        %v582 = vpack.c.b16 %v465, %v464
        %v583 = vpack.c.b16 %v467, %v466
        %v584 = vpack.c.b16 %v469, %v468
        %v585 = vpack.c.b16 %v471, %v470
        %v586 = vpack.c.b16 %v473, %v472
        %v587 = vpack.c.b16 %v475, %v474
        %v588 = vpack.c.b16 %v477, %v476
        %v589 = vpack.c.b16 %v479, %v478
        %v590 = vpack.c.b16 %v481, %v480
        %v591 = vpack.c.b16 %v483, %v482
        %v592 = vpack.c.b16 %v485, %v484
        %v593 = vpack.c.b16 %v487, %v486
        %v594 = vpack.c.b16 %v489, %v488
        %v595 = vpack.c.b16 %v491, %v490
        %v596 = vpack.c.b16 %v493, %v492
        %v597 = vpack.c.b16 %v495, %v494
        %v598 = vpack.c.b16 %v497, %v496
        %v599 = vpack.c.b16 %v499, %v498
        %v600 = vpack.c.b16 %v501, %v500
        %v601 = vpack.c.b16 %v503, %v502
        %v602 = vpack.c.b16 %v505, %v504
        %v603 = vpack.c.b16 %v507, %v506
        %v604 = vpack.c.b16 %v509, %v508
        %v605 = vpack.c.b16 %v511, %v510
        %v606 = vpack.c.b16 %v513, %v512
        %v607 = vpack.c.b16 %v515, %v514
        %v608 = vpack.c.b16 %v517, %v516
        %v609 = vpack.c.b16 %v519, %v518
        %v610 = vpack.c.b16 %v521, %v520
        %v611 = vpack.c.b16 %v523, %v522
        %v612 = vpack.c.b16 %v525, %v524
        %v613 = vpack.c.b16 %v527, %v526
        %v614 = vpack.c.b16 %v529, %v528
        %v615 = vpack.c.b16 %v531, %v530
        %v616 = vpack.c.b16 %v533, %v532
        %v617 = vpack.c.b16 %v535, %v534
        %v618 = vpack.c.b16 %v537, %v536
        %v619 = vpack.c.b16 %v539, %v538
        %v620 = vpack.c.b16 %v541, %v540
        %v621 = vpack.c.b16 %v543, %v542
        %v622 = vpack.c.b16 %v545, %v544
        %v623 = vpack.c.b16 %v547, %v546
        %v624 = vpack.c.b16 %v549, %v548
        %v625 = vpack.c.b16 %v551, %v550
        %v626 = vpack.c.b16 %v553, %v552
        %v627 = vpack.c.b16 %v555, %v554
        %v628 = vpack.c.b16 %v557, %v556
        %v629 = vpack.c.b16 %v559, %v558
        %v630 = vpack.c.b16 %v561, %v560
        %v631 = vpack.c.b16 %v563, %v562
        %v632 = vpack.c.b16 %v565, %v564
        %v633 = vpack.c.b16 %v567, %v566
        %v634 = vpack.c.b16 %v569, %v568
        %v635 = vpack.c.b16 %v571, %v570
        %v636 = vpack.c.b16 %v573, %v572
        %v637 = vpack.c.b16 %v575, %v574
        %v638 = vpack.c.b16 %v577, %v576
        %v639 = vpack.c.b16 %v579, %v578
        %vm640 = vsmask.f32 7424
        %v642 = vshrl.u32 %v580, 16
        %v644 = vshll.u32 %v580, 16
        %v646 = vrot.slane %v644, 1
        %v647 = vor.u32 %v642, %v646
        %v649 = vshll.u32 %v581, 16
        %v651 = vrot.slane %v649, 1
        %v652 = vsel %vm640, %v647, %v651
        %v653 = vshrl.u32 %v581, 16
        %v655 = vor.u32 %v653, %v651
        %v657 = vshll.u32 %v582, 16
        %v659 = vrot.slane %v657, 1
        %v660 = vsel %vm640, %v655, %v659
        %v661 = vshrl.u32 %v582, 16
        %v663 = vor.u32 %v661, %v659
        %v665 = vshll.u32 %v583, 16
        %v667 = vrot.slane %v665, 1
        %v668 = vsel %vm640, %v663, %v667
        %v669 = vshrl.u32 %v583, 16
        %v671 = vor.u32 %v669, %v667
        %v673 = vshll.u32 %v584, 16
        %v675 = vrot.slane %v673, 1
        %v676 = vsel %vm640, %v671, %v675
        %v677 = vshrl.u32 %v584, 16
        %v679 = vor.u32 %v677, %v675
        %v681 = vshll.u32 %v585, 16
        %v683 = vrot.slane %v681, 1
        %v684 = vsel %vm640, %v679, %v683
        %v685 = vshrl.u32 %v585, 16
        %v687 = vor.u32 %v685, %v683
        %v689 = vshll.u32 %v586, 16
        %v691 = vrot.slane %v689, 1
        %v692 = vsel %vm640, %v687, %v691
        %v693 = vshrl.u32 %v586, 16
        %v695 = vor.u32 %v693, %v691
        %v697 = vshll.u32 %v587, 16
        %v699 = vrot.slane %v697, 1
        %v700 = vsel %vm640, %v695, %v699
        %v701 = vshrl.u32 %v587, 16
        %v703 = vor.u32 %v701, %v699
        %v705 = vshll.u32 %v588, 16
        %v707 = vrot.slane %v705, 1
        %v708 = vsel %vm640, %v703, %v707
        %v709 = vshrl.u32 %v588, 16
        %v711 = vor.u32 %v709, %v707
        %v713 = vshll.u32 %v589, 16
        %v715 = vrot.slane %v713, 1
        %v716 = vsel %vm640, %v711, %v715
        %v717 = vshrl.u32 %v589, 16
        %v719 = vor.u32 %v717, %v715
        %v721 = vshll.u32 %v590, 16
        %v723 = vrot.slane %v721, 1
        %v724 = vsel %vm640, %v719, %v723
        %v725 = vshrl.u32 %v590, 16
        %v727 = vor.u32 %v725, %v723
        %v729 = vshll.u32 %v591, 16
        %v731 = vrot.slane %v729, 1
        %v732 = vsel %vm640, %v727, %v731
        %v733 = vshrl.u32 %v591, 16
        %v735 = vor.u32 %v733, %v731
        %v737 = vshll.u32 %v592, 16
        %v739 = vrot.slane %v737, 1
        %v740 = vsel %vm640, %v735, %v739
        %v741 = vshrl.u32 %v592, 16
        %v743 = vor.u32 %v741, %v739
        %v745 = vshll.u32 %v593, 16
        %v747 = vrot.slane %v745, 1
        %v748 = vsel %vm640, %v743, %v747
        %v749 = vshrl.u32 %v593, 16
        %v751 = vor.u32 %v749, %v747
        %v753 = vshll.u32 %v594, 16
        %v755 = vrot.slane %v753, 1
        %v756 = vsel %vm640, %v751, %v755
        %v757 = vshrl.u32 %v594, 16
        %v759 = vor.u32 %v757, %v755
        %v761 = vshll.u32 %v595, 16
        %v763 = vrot.slane %v761, 1
        %v764 = vsel %vm640, %v759, %v763
        %v765 = vshrl.u32 %v595, 16
        %v767 = vor.u32 %v765, %v763
        %v769 = vshll.u32 %v596, 16
        %v771 = vrot.slane %v769, 1
        %v772 = vsel %vm640, %v767, %v771
        %v773 = vshrl.u32 %v596, 16
        %v775 = vor.u32 %v773, %v771
        %v777 = vshll.u32 %v597, 16
        %v779 = vrot.slane %v777, 1
        %v780 = vsel %vm640, %v775, %v779
        %v781 = vshrl.u32 %v597, 16
        %v783 = vor.u32 %v781, %v779
        %v785 = vshll.u32 %v598, 16
        %v787 = vrot.slane %v785, 1
        %v788 = vsel %vm640, %v783, %v787
        %v789 = vshrl.u32 %v598, 16
        %v791 = vor.u32 %v789, %v787
        %v793 = vshll.u32 %v599, 16
        %v795 = vrot.slane %v793, 1
        %v796 = vsel %vm640, %v791, %v795
        %v797 = vshrl.u32 %v599, 16
        %v799 = vor.u32 %v797, %v795
        %v801 = vshll.u32 %v600, 16
        %v803 = vrot.slane %v801, 1
        %v804 = vsel %vm640, %v799, %v803
        %v805 = vshrl.u32 %v600, 16
        %v807 = vor.u32 %v805, %v803
        %v809 = vshll.u32 %v601, 16
        %v811 = vrot.slane %v809, 1
        %v812 = vsel %vm640, %v807, %v811
        %v813 = vshrl.u32 %v601, 16
        %v815 = vor.u32 %v813, %v811
        %v817 = vshll.u32 %v602, 16
        %v819 = vrot.slane %v817, 1
        %v820 = vsel %vm640, %v815, %v819
        %v821 = vshrl.u32 %v602, 16
        %v823 = vor.u32 %v821, %v819
        %v825 = vshll.u32 %v603, 16
        %v827 = vrot.slane %v825, 1
        %v828 = vsel %vm640, %v823, %v827
        %v829 = vshrl.u32 %v603, 16
        %v831 = vor.u32 %v829, %v827
        %v833 = vshll.u32 %v604, 16
        %v835 = vrot.slane %v833, 1
        %v836 = vsel %vm640, %v831, %v835
        %v837 = vshrl.u32 %v604, 16
        %v839 = vor.u32 %v837, %v835
        %v841 = vshll.u32 %v605, 16
        %v843 = vrot.slane %v841, 1
        %v844 = vsel %vm640, %v839, %v843
        %v845 = vshrl.u32 %v605, 16
        %v847 = vor.u32 %v845, %v843
        %v849 = vshll.u32 %v606, 16
        %v851 = vrot.slane %v849, 1
        %v852 = vsel %vm640, %v847, %v851
        %v853 = vshrl.u32 %v606, 16
        %v855 = vor.u32 %v853, %v851
        %v857 = vshll.u32 %v607, 16
        %v859 = vrot.slane %v857, 1
        %v860 = vsel %vm640, %v855, %v859
        %v861 = vshrl.u32 %v607, 16
        %v863 = vor.u32 %v861, %v859
        %v865 = vshll.u32 %v608, 16
        %v867 = vrot.slane %v865, 1
        %v868 = vsel %vm640, %v863, %v867
        %v869 = vshrl.u32 %v608, 16
        %v871 = vor.u32 %v869, %v867
        %v873 = vshll.u32 %v609, 16
        %v875 = vrot.slane %v873, 1
        %v876 = vsel %vm640, %v871, %v875
        %v877 = vshrl.u32 %v609, 16
        %v879 = vor.u32 %v877, %v875
        %v881 = vshll.u32 %v610, 16
        %v883 = vrot.slane %v881, 1
        %v884 = vsel %vm640, %v879, %v883
        %v885 = vshrl.u32 %v610, 16
        %v887 = vor.u32 %v885, %v883
        %v889 = vshll.u32 %v611, 16
        %v891 = vrot.slane %v889, 1
        %v892 = vsel %vm640, %v887, %v891
        %v893 = vshrl.u32 %v611, 16
        %v895 = vor.u32 %v893, %v891
        %v897 = vshll.u32 %v612, 16
        %v899 = vrot.slane %v897, 1
        %v900 = vsel %vm640, %v895, %v899
        %v901 = vshrl.u32 %v612, 16
        %v903 = vor.u32 %v901, %v899
        %v905 = vshll.u32 %v613, 16
        %v907 = vrot.slane %v905, 1
        %v908 = vsel %vm640, %v903, %v907
        %v909 = vshrl.u32 %v613, 16
        %v911 = vor.u32 %v909, %v907
        %v913 = vshll.u32 %v614, 16
        %v915 = vrot.slane %v913, 1
        %v916 = vsel %vm640, %v911, %v915
        %v917 = vshrl.u32 %v614, 16
        %v919 = vor.u32 %v917, %v915
        %v921 = vshll.u32 %v615, 16
        %v923 = vrot.slane %v921, 1
        %v924 = vsel %vm640, %v919, %v923
        %v925 = vshrl.u32 %v615, 16
        %v927 = vor.u32 %v925, %v923
        %v929 = vshll.u32 %v616, 16
        %v931 = vrot.slane %v929, 1
        %v932 = vsel %vm640, %v927, %v931
        %v933 = vshrl.u32 %v616, 16
        %v935 = vor.u32 %v933, %v931
        %v937 = vshll.u32 %v617, 16
        %v939 = vrot.slane %v937, 1
        %v940 = vsel %vm640, %v935, %v939
        %v941 = vshrl.u32 %v617, 16
        %v943 = vor.u32 %v941, %v939
        %v945 = vshll.u32 %v618, 16
        %v947 = vrot.slane %v945, 1
        %v948 = vsel %vm640, %v943, %v947
        %v949 = vshrl.u32 %v618, 16
        %v951 = vor.u32 %v949, %v947
        %v953 = vshll.u32 %v619, 16
        %v955 = vrot.slane %v953, 1
        %v956 = vsel %vm640, %v951, %v955
        %v957 = vshrl.u32 %v619, 16
        %v959 = vor.u32 %v957, %v955
        %v961 = vshll.u32 %v620, 16
        %v963 = vrot.slane %v961, 1
        %v964 = vsel %vm640, %v959, %v963
        %v965 = vshrl.u32 %v620, 16
        %v967 = vor.u32 %v965, %v963
        %v969 = vshll.u32 %v621, 16
        %v971 = vrot.slane %v969, 1
        %v972 = vsel %vm640, %v967, %v971
        %v973 = vshrl.u32 %v621, 16
        %v975 = vor.u32 %v973, %v971
        %v977 = vshll.u32 %v622, 16
        %v979 = vrot.slane %v977, 1
        %v980 = vsel %vm640, %v975, %v979
        %v981 = vshrl.u32 %v622, 16
        %v983 = vor.u32 %v981, %v979
        %v985 = vshll.u32 %v623, 16
        %v987 = vrot.slane %v985, 1
        %v988 = vsel %vm640, %v983, %v987
        %v989 = vshrl.u32 %v623, 16
        %v991 = vor.u32 %v989, %v987
        %v993 = vshll.u32 %v624, 16
        %v995 = vrot.slane %v993, 1
        %v996 = vsel %vm640, %v991, %v995
        %v997 = vshrl.u32 %v624, 16
        %v999 = vor.u32 %v997, %v995
        %v1001 = vshll.u32 %v625, 16
        %v1003 = vrot.slane %v1001, 1
        %v1004 = vsel %vm640, %v999, %v1003
        %v1005 = vshrl.u32 %v625, 16
        %v1007 = vor.u32 %v1005, %v1003
        %v1009 = vshll.u32 %v626, 16
        %v1011 = vrot.slane %v1009, 1
        %v1012 = vsel %vm640, %v1007, %v1011
        %v1013 = vshrl.u32 %v626, 16
        %v1015 = vor.u32 %v1013, %v1011
        %v1017 = vshll.u32 %v627, 16
        %v1019 = vrot.slane %v1017, 1
        %v1020 = vsel %vm640, %v1015, %v1019
        %v1021 = vshrl.u32 %v627, 16
        %v1023 = vor.u32 %v1021, %v1019
        %v1025 = vshll.u32 %v628, 16
        %v1027 = vrot.slane %v1025, 1
        %v1028 = vsel %vm640, %v1023, %v1027
        %v1029 = vshrl.u32 %v628, 16
        %v1031 = vor.u32 %v1029, %v1027
        %v1033 = vshll.u32 %v629, 16
        %v1035 = vrot.slane %v1033, 1
        %v1036 = vsel %vm640, %v1031, %v1035
        %v1037 = vshrl.u32 %v629, 16
        %v1039 = vor.u32 %v1037, %v1035
        %v1041 = vshll.u32 %v630, 16
        %v1043 = vrot.slane %v1041, 1
        %v1044 = vsel %vm640, %v1039, %v1043
        %v1045 = vshrl.u32 %v630, 16
        %v1047 = vor.u32 %v1045, %v1043
        %v1049 = vshll.u32 %v631, 16
        %v1051 = vrot.slane %v1049, 1
        %v1052 = vsel %vm640, %v1047, %v1051
        %v1053 = vshrl.u32 %v631, 16
        %v1055 = vor.u32 %v1053, %v1051
        %v1057 = vshll.u32 %v632, 16
        %v1059 = vrot.slane %v1057, 1
        %v1060 = vsel %vm640, %v1055, %v1059
        %v1061 = vshrl.u32 %v632, 16
        %v1063 = vor.u32 %v1061, %v1059
        %v1065 = vshll.u32 %v633, 16
        %v1067 = vrot.slane %v1065, 1
        %v1068 = vsel %vm640, %v1063, %v1067
        %v1069 = vshrl.u32 %v633, 16
        %v1071 = vor.u32 %v1069, %v1067
        %v1073 = vshll.u32 %v634, 16
        %v1075 = vrot.slane %v1073, 1
        %v1076 = vsel %vm640, %v1071, %v1075
        %v1077 = vshrl.u32 %v634, 16
        %v1079 = vor.u32 %v1077, %v1075
        %v1081 = vshll.u32 %v635, 16
        %v1083 = vrot.slane %v1081, 1
        %v1084 = vsel %vm640, %v1079, %v1083
        %v1085 = vshrl.u32 %v635, 16
        %v1087 = vor.u32 %v1085, %v1083
        %v1089 = vshll.u32 %v636, 16
        %v1091 = vrot.slane %v1089, 1
        %v1092 = vsel %vm640, %v1087, %v1091
        %v1093 = vshrl.u32 %v636, 16
        %v1095 = vor.u32 %v1093, %v1091
        %v1097 = vshll.u32 %v637, 16
        %v1099 = vrot.slane %v1097, 1
        %v1100 = vsel %vm640, %v1095, %v1099
        %v1101 = vshrl.u32 %v637, 16
        %v1103 = vor.u32 %v1101, %v1099
        %v1105 = vshll.u32 %v638, 16
        %v1107 = vrot.slane %v1105, 1
        %v1108 = vsel %vm640, %v1103, %v1107
        %v1109 = vshrl.u32 %v638, 16
        %v1111 = vor.u32 %v1109, %v1107
        %v1113 = vshll.u32 %v639, 16
        %v1115 = vrot.slane %v1113, 1
        %v1116 = vsel %vm640, %v1111, %v1115
        %v1117 = vshrl.u32 %v639, 16
        %v1119 = vor.u32 %v1117, %v1115
        %vm1180 = vcmask 1047552
        %vm1181 = vmand %vm1180, %vm640
        %v1182 = vsel %vm1181, %v1119, 0
        %vm1183 = vcmask 1046528
        %v1184 = vrot.slane %v580, 1
        %v1185 = vrot.slane %v581, 1
        %v1186 = vsel %vm1183, %v1184, %v1185
        %v1187 = vrot.slane %v582, 1
        %v1188 = vsel %vm1183, %v1185, %v1187
        %v1189 = vrot.slane %v583, 1
        %v1190 = vsel %vm1183, %v1187, %v1189
        %v1191 = vrot.slane %v584, 1
        %v1192 = vsel %vm1183, %v1189, %v1191
        %v1193 = vrot.slane %v585, 1
        %v1194 = vsel %vm1183, %v1191, %v1193
        %v1195 = vrot.slane %v586, 1
        %v1196 = vsel %vm1183, %v1193, %v1195
        %v1197 = vrot.slane %v587, 1
        %v1198 = vsel %vm1183, %v1195, %v1197
        %v1199 = vrot.slane %v588, 1
        %v1200 = vsel %vm1183, %v1197, %v1199
        %v1201 = vrot.slane %v589, 1
        %v1202 = vsel %vm1183, %v1199, %v1201
        %v1203 = vrot.slane %v590, 1
        %v1204 = vsel %vm1183, %v1201, %v1203
        %v1205 = vrot.slane %v591, 1
        %v1206 = vsel %vm1183, %v1203, %v1205
        %v1207 = vrot.slane %v592, 1
        %v1208 = vsel %vm1183, %v1205, %v1207
        %v1209 = vrot.slane %v593, 1
        %v1210 = vsel %vm1183, %v1207, %v1209
        %v1211 = vrot.slane %v594, 1
        %v1212 = vsel %vm1183, %v1209, %v1211
        %v1213 = vrot.slane %v595, 1
        %v1214 = vsel %vm1183, %v1211, %v1213
        %v1215 = vrot.slane %v596, 1
        %v1216 = vsel %vm1183, %v1213, %v1215
        %v1217 = vrot.slane %v597, 1
        %v1218 = vsel %vm1183, %v1215, %v1217
        %v1219 = vrot.slane %v598, 1
        %v1220 = vsel %vm1183, %v1217, %v1219
        %v1221 = vrot.slane %v599, 1
        %v1222 = vsel %vm1183, %v1219, %v1221
        %v1223 = vrot.slane %v600, 1
        %v1224 = vsel %vm1183, %v1221, %v1223
        %v1225 = vrot.slane %v601, 1
        %v1226 = vsel %vm1183, %v1223, %v1225
        %v1227 = vrot.slane %v602, 1
        %v1228 = vsel %vm1183, %v1225, %v1227
        %v1229 = vrot.slane %v603, 1
        %v1230 = vsel %vm1183, %v1227, %v1229
        %v1231 = vrot.slane %v604, 1
        %v1232 = vsel %vm1183, %v1229, %v1231
        %v1233 = vrot.slane %v605, 1
        %v1234 = vsel %vm1183, %v1231, %v1233
        %v1235 = vrot.slane %v606, 1
        %v1236 = vsel %vm1183, %v1233, %v1235
        %v1237 = vrot.slane %v607, 1
        %v1238 = vsel %vm1183, %v1235, %v1237
        %v1239 = vrot.slane %v608, 1
        %v1240 = vsel %vm1183, %v1237, %v1239
        %v1241 = vrot.slane %v609, 1
        %v1242 = vsel %vm1183, %v1239, %v1241
        %v1243 = vrot.slane %v610, 1
        %v1244 = vsel %vm1183, %v1241, %v1243
        %v1245 = vrot.slane %v611, 1
        %v1246 = vsel %vm1183, %v1243, %v1245
        %v1247 = vrot.slane %v612, 1
        %v1248 = vsel %vm1183, %v1245, %v1247
        %v1249 = vrot.slane %v613, 1
        %v1250 = vsel %vm1183, %v1247, %v1249
        %v1251 = vrot.slane %v614, 1
        %v1252 = vsel %vm1183, %v1249, %v1251
        %v1253 = vrot.slane %v615, 1
        %v1254 = vsel %vm1183, %v1251, %v1253
        %v1255 = vrot.slane %v616, 1
        %v1256 = vsel %vm1183, %v1253, %v1255
        %v1257 = vrot.slane %v617, 1
        %v1258 = vsel %vm1183, %v1255, %v1257
        %v1259 = vrot.slane %v618, 1
        %v1260 = vsel %vm1183, %v1257, %v1259
        %v1261 = vrot.slane %v619, 1
        %v1262 = vsel %vm1183, %v1259, %v1261
        %v1263 = vrot.slane %v620, 1
        %v1264 = vsel %vm1183, %v1261, %v1263
        %v1265 = vrot.slane %v621, 1
        %v1266 = vsel %vm1183, %v1263, %v1265
        %v1267 = vrot.slane %v622, 1
        %v1268 = vsel %vm1183, %v1265, %v1267
        %v1269 = vrot.slane %v623, 1
        %v1270 = vsel %vm1183, %v1267, %v1269
        %v1271 = vrot.slane %v624, 1
        %v1272 = vsel %vm1183, %v1269, %v1271
        %v1273 = vrot.slane %v625, 1
        %v1274 = vsel %vm1183, %v1271, %v1273
        %v1275 = vrot.slane %v626, 1
        %v1276 = vsel %vm1183, %v1273, %v1275
        %v1277 = vrot.slane %v627, 1
        %v1278 = vsel %vm1183, %v1275, %v1277
        %v1279 = vrot.slane %v628, 1
        %v1280 = vsel %vm1183, %v1277, %v1279
        %v1281 = vrot.slane %v629, 1
        %v1282 = vsel %vm1183, %v1279, %v1281
        %v1283 = vrot.slane %v630, 1
        %v1284 = vsel %vm1183, %v1281, %v1283
        %v1285 = vrot.slane %v631, 1
        %v1286 = vsel %vm1183, %v1283, %v1285
        %v1287 = vrot.slane %v632, 1
        %v1288 = vsel %vm1183, %v1285, %v1287
        %v1289 = vrot.slane %v633, 1
        %v1290 = vsel %vm1183, %v1287, %v1289
        %v1291 = vrot.slane %v634, 1
        %v1292 = vsel %vm1183, %v1289, %v1291
        %v1293 = vrot.slane %v635, 1
        %v1294 = vsel %vm1183, %v1291, %v1293
        %v1295 = vrot.slane %v636, 1
        %v1296 = vsel %vm1183, %v1293, %v1295
        %v1297 = vrot.slane %v637, 1
        %v1298 = vsel %vm1183, %v1295, %v1297
        %v1299 = vrot.slane %v638, 1
        %v1300 = vsel %vm1183, %v1297, %v1299
        %v1301 = vrot.slane %v639, 1
        %v1302 = vsel %vm1183, %v1299, %v1301
        %vm1362 = vcmask 1046528
        %v1365 = vsel %vm1362, %v1301, 0
        %v1427 = vld [vmem:[#allocation5] sm:$0xf]
        %v1428 = vld [vmem:[#allocation5 + $0x4] sm:$0xf]
        %v1429 = vld [vmem:[#allocation5 + $0x8] sm:$0xf]
        %v1430 = vld [vmem:[#allocation5 + $0xc] sm:$0xf]
        %v1431 = vld [vmem:[#allocation5 + $0x10] sm:$0xf]
        %v1432 = vld [vmem:[#allocation5 + $0x14] sm:$0xf]
        %v1433 = vld [vmem:[#allocation5 + $0x18] sm:$0xf]
        %v1434 = vld [vmem:[#allocation5 + $0x1c] sm:$0xf]
        %v1435 = vld [vmem:[#allocation5 + $0x20] sm:$0xf]
        %v1436 = vld [vmem:[#allocation5 + $0x24] sm:$0xf]
        %v1437 = vld [vmem:[#allocation5 + $0x28] sm:$0xf]
        %v1438 = vld [vmem:[#allocation5 + $0x2c] sm:$0xf]
        %v1439 = vld [vmem:[#allocation5 + $0x30] sm:$0xf]
        %v1440 = vld [vmem:[#allocation5 + $0x34] sm:$0xf]
        %v1441 = vld [vmem:[#allocation5 + $0x38] sm:$0xf]
        %v1442 = vld [vmem:[#allocation5 + $0x3c] sm:$0xf]
        %v1443 = vld [vmem:[#allocation5 + $0x40] sm:$0xf]
        %v1444 = vld [vmem:[#allocation5 + $0x44] sm:$0xf]
        %v1445 = vld [vmem:[#allocation5 + $0x48] sm:$0xf]
        %v1446 = vld [vmem:[#allocation5 + $0x4c] sm:$0xf]
        %v1447 = vld [vmem:[#allocation5 + $0x50] sm:$0xf]
        %v1448 = vld [vmem:[#allocation5 + $0x54] sm:$0xf]
        %v1449 = vld [vmem:[#allocation5 + $0x58] sm:$0xf]
        %v1450 = vld [vmem:[#allocation5 + $0x5c] sm:$0xf]
        %v1451 = vld [vmem:[#allocation5 + $0x60] sm:$0xf]
        %v1452 = vld [vmem:[#allocation5 + $0x64] sm:$0xf]
        %v1453 = vld [vmem:[#allocation5 + $0x68] sm:$0xf]
        %v1454 = vld [vmem:[#allocation5 + $0x6c] sm:$0xf]
        %v1455 = vld [vmem:[#allocation5 + $0x70] sm:$0xf]
        %v1456 = vld [vmem:[#allocation5 + $0x74] sm:$0xf]
        %v1457 = vld [vmem:[#allocation5 + $0x78] sm:$0xf]
        %v1458 = vld [vmem:[#allocation5 + $0x7c] sm:$0xf]
        %v1459 = vld [vmem:[#allocation5 + $0x80] sm:$0xf]
        %v1460 = vld [vmem:[#allocation5 + $0x84] sm:$0xf]
        %v1461 = vld [vmem:[#allocation5 + $0x88] sm:$0xf]
        %v1462 = vld [vmem:[#allocation5 + $0x8c] sm:$0xf]
        %v1463 = vld [vmem:[#allocation5 + $0x90] sm:$0xf]
        %v1464 = vld [vmem:[#allocation5 + $0x94] sm:$0xf]
        %v1465 = vld [vmem:[#allocation5 + $0x98] sm:$0xf]
        %v1466 = vld [vmem:[#allocation5 + $0x9c] sm:$0xf]
        %v1467 = vld [vmem:[#allocation5 + $0xa0] sm:$0xf]
        %v1468 = vld [vmem:[#allocation5 + $0xa4] sm:$0xf]
        %v1469 = vld [vmem:[#allocation5 + $0xa8] sm:$0xf]
        %v1470 = vld [vmem:[#allocation5 + $0xac] sm:$0xf]
        %v1471 = vld [vmem:[#allocation5 + $0xb0] sm:$0xf]
        %v1472 = vld [vmem:[#allocation5 + $0xb4] sm:$0xf]
        %v1473 = vld [vmem:[#allocation5 + $0xb8] sm:$0xf]
        %v1474 = vld [vmem:[#allocation5 + $0xbc] sm:$0xf]
        %s1475 = scalar_lea.vmem [#allocation5], 192
        %v1476 = vld [vmem:[%s1475] sm:$0xf]
        %v1477 = vld [vmem:[%s1475 + $0x4] sm:$0xf]
        %v1478 = vld [vmem:[%s1475 + $0x8] sm:$0xf]
        %v1479 = vld [vmem:[%s1475 + $0xc] sm:$0xf]
        %v1480 = vld [vmem:[%s1475 + $0x10] sm:$0xf]
        %v1481 = vld [vmem:[%s1475 + $0x14] sm:$0xf]
        %v1482 = vld [vmem:[%s1475 + $0x18] sm:$0xf]
        %v1483 = vld [vmem:[%s1475 + $0x1c] sm:$0xf]
        %v1484 = vld [vmem:[%s1475 + $0x20] sm:$0xf]
        %v1485 = vld [vmem:[%s1475 + $0x24] sm:$0xf]
        %v1486 = vld [vmem:[%s1475 + $0x28] sm:$0xf]
        %v1487 = vld [vmem:[%s1475 + $0x2c] sm:$0xf]
        %v1488 = vld [vmem:[%s1475 + $0x30] sm:$0xf]
        %v1489 = vld [vmem:[%s1475 + $0x34] sm:$0xf]
        %v1490 = vld [vmem:[%s1475 + $0x38] sm:$0xf]
        %v1491 = vld [vmem:[%s1475 + $0x3c] sm:$0xf]
        %v1492 = vld [vmem:[%s1475 + $0x40] sm:$0xf]
        %v1493 = vld [vmem:[%s1475 + $0x44] sm:$0xf]
        %v1494 = vld [vmem:[%s1475 + $0x48] sm:$0xf]
        %v1495 = vld [vmem:[%s1475 + $0x4c] sm:$0xf]
        %v1496 = vld [vmem:[%s1475 + $0x50] sm:$0xf]
        %v1497 = vld [vmem:[%s1475 + $0x54] sm:$0xf]
        %v1498 = vld [vmem:[%s1475 + $0x58] sm:$0xf]
        %v1499 = vld [vmem:[%s1475 + $0x5c] sm:$0xf]
        %v1500 = vld [vmem:[%s1475 + $0x60] sm:$0xf]
        %v1501 = vld [vmem:[%s1475 + $0x64] sm:$0xf]
        %v1502 = vld [vmem:[%s1475 + $0x68] sm:$0xf]
        %v1503 = vld [vmem:[%s1475 + $0x6c] sm:$0xf]
        %v1504 = vld [vmem:[%s1475 + $0x70] sm:$0xf]
        %v1505 = vld [vmem:[%s1475 + $0x74] sm:$0xf]
        %v1506 = vld [vmem:[%s1475 + $0x78] sm:$0xf]
        %v1507 = vld [vmem:[%s1475 + $0x7c] sm:$0xf]
        %v1508 = vld [vmem:[%s1475 + $0x80] sm:$0xf]
        %v1509 = vld [vmem:[%s1475 + $0x84] sm:$0xf]
        %v1510 = vld [vmem:[%s1475 + $0x88] sm:$0xf]
        %v1511 = vld [vmem:[%s1475 + $0x8c] sm:$0xf]
        %v1512 = vld [vmem:[%s1475 + $0x90] sm:$0xf]
        %v1513 = vld [vmem:[%s1475 + $0x94] sm:$0xf]
        %v1514 = vld [vmem:[%s1475 + $0x98] sm:$0xf]
        %v1515 = vld [vmem:[%s1475 + $0x9c] sm:$0xf]
        %v1516 = vld [vmem:[%s1475 + $0xa0] sm:$0xf]
        %v1517 = vld [vmem:[%s1475 + $0xa4] sm:$0xf]
        %v1518 = vld [vmem:[%s1475 + $0xa8] sm:$0xf]
        %v1519 = vld [vmem:[%s1475 + $0xac] sm:$0xf]
        %v1520 = vld [vmem:[%s1475 + $0xb0] sm:$0xf]
        %v1521 = vld [vmem:[%s1475 + $0xb4] sm:$0xf]
        %v1522 = vld [vmem:[%s1475 + $0xb8] sm:$0xf]
        %v1523 = vld [vmem:[%s1475 + $0xbc] sm:$0xf]
        %v1572 = vunpack.c.l.b16 %v1476
        %v1573 = vunpack.c.l.b16 %v1477
        %v1574 = vunpack.c.l.b16 %v1478
        %v1575 = vunpack.c.l.b16 %v1479
        %v1576 = vunpack.c.l.b16 %v1480
        %v1577 = vunpack.c.l.b16 %v1481
        %v1578 = vunpack.c.l.b16 %v1482
        %v1579 = vunpack.c.l.b16 %v1483
        %v1580 = vunpack.c.l.b16 %v1484
        %v1581 = vunpack.c.l.b16 %v1485
        %v1582 = vunpack.c.l.b16 %v1486
        %v1583 = vunpack.c.l.b16 %v1487
        %v1584 = vunpack.c.l.b16 %v1488
        %v1585 = vunpack.c.l.b16 %v1489
        %v1586 = vunpack.c.l.b16 %v1490
        %v1587 = vunpack.c.l.b16 %v1491
        %v1588 = vunpack.c.l.b16 %v1492
        %v1589 = vunpack.c.l.b16 %v1493
        %v1590 = vunpack.c.l.b16 %v1494
        %v1591 = vunpack.c.l.b16 %v1495
        %v1592 = vunpack.c.l.b16 %v1496
        %v1593 = vunpack.c.l.b16 %v1497
        %v1594 = vunpack.c.l.b16 %v1498
        %v1595 = vunpack.c.l.b16 %v1499
        %v1596 = vunpack.c.l.b16 %v1500
        %v1597 = vunpack.c.l.b16 %v1501
        %v1598 = vunpack.c.l.b16 %v1502
        %v1599 = vunpack.c.l.b16 %v1503
        %v1600 = vunpack.c.l.b16 %v1504
        %v1601 = vunpack.c.l.b16 %v1505
        %v1602 = vunpack.c.l.b16 %v1506
        %v1603 = vunpack.c.l.b16 %v1507
        %v1604 = vunpack.c.l.b16 %v1508
        %v1605 = vunpack.c.l.b16 %v1509
        %v1606 = vunpack.c.l.b16 %v1510
        %v1607 = vunpack.c.l.b16 %v1511
        %v1608 = vunpack.c.l.b16 %v1512
        %v1609 = vunpack.c.l.b16 %v1513
        %v1610 = vunpack.c.l.b16 %v1514
        %v1611 = vunpack.c.l.b16 %v1515
        %v1612 = vunpack.c.l.b16 %v1516
        %v1613 = vunpack.c.l.b16 %v1517
        %v1614 = vunpack.c.l.b16 %v1518
        %v1615 = vunpack.c.l.b16 %v1519
        %v1616 = vunpack.c.l.b16 %v1520
        %v1617 = vunpack.c.l.b16 %v1521
        %v1618 = vunpack.c.l.b16 %v1522
        %v1619 = vunpack.c.l.b16 %v1523
        %v1620 = vpack.c.b16 %v1573, %v1572
        %v1621 = vpack.c.b16 %v1575, %v1574
        %v1622 = vpack.c.b16 %v1577, %v1576
        %v1623 = vpack.c.b16 %v1579, %v1578
        %v1624 = vpack.c.b16 %v1581, %v1580
        %v1625 = vpack.c.b16 %v1583, %v1582
        %v1626 = vpack.c.b16 %v1585, %v1584
        %v1627 = vpack.c.b16 %v1587, %v1586
        %v1628 = vpack.c.b16 %v1589, %v1588
        %v1629 = vpack.c.b16 %v1591, %v1590
        %v1630 = vpack.c.b16 %v1593, %v1592
        %v1631 = vpack.c.b16 %v1595, %v1594
        %v1632 = vpack.c.b16 %v1597, %v1596
        %v1633 = vpack.c.b16 %v1599, %v1598
        %v1634 = vpack.c.b16 %v1601, %v1600
        %v1635 = vpack.c.b16 %v1603, %v1602
        %v1636 = vpack.c.b16 %v1605, %v1604
        %v1637 = vpack.c.b16 %v1607, %v1606
        %v1638 = vpack.c.b16 %v1609, %v1608
        %v1639 = vpack.c.b16 %v1611, %v1610
        %v1640 = vpack.c.b16 %v1613, %v1612
        %v1641 = vpack.c.b16 %v1615, %v1614
        %v1642 = vpack.c.b16 %v1617, %v1616
        %v1643 = vpack.c.b16 %v1619, %v1618
        %1668 = vmatpush.bf16.msra.mxu0 %v1627
        %1669 = vmatpush.bf16.msra.mxu0 %v1626
        %1670 = vmatpush.bf16.msra.mxu0 %v1625
        %1671 = vmatpush.bf16.msra.mxu0 %v1624
        %1672 = vmatpush.bf16.msra.mxu0 %v1623
        %1673 = vmatpush.bf16.msra.mxu0 %v1622
        %1674 = vmatpush.bf16.msra.mxu0 %v1621
        %1675 = vmatpush.bf16.msra.mxu0 %v1620
        %1676 = vmatmul.bf16.gmra.mxu0 %v582
        %v1677 = vpop.f32.mrf.mxu0
        %v1678 = vadd.f32 0.0, %v1677
        %v1679 = vpop.f32.mrf.mxu0
        %v1680 = vadd.f32 0.0, %v1679
        %1681 = vmatmul.bf16.gmra.mxu0 %v583
        %v1682 = vpop.f32.mrf.mxu0
        %v1683 = vadd.f32 0.0, %v1682
        %v1684 = vpop.f32.mrf.mxu0
        %v1685 = vadd.f32 0.0, %v1684
        %1686 = vmatmul.bf16.gmra.mxu0 %v584
        %v1687 = vpop.f32.mrf.mxu0
        %v1688 = vadd.f32 0.0, %v1687
        %v1689 = vpop.f32.mrf.mxu0
        %v1690 = vadd.f32 0.0, %v1689
        %1691 = vmatmul.bf16.gmra.mxu0 %v585
        %v1692 = vpop.f32.mrf.mxu0
        %v1693 = vadd.f32 0.0, %v1692
        %v1694 = vpop.f32.mrf.mxu0
        %v1695 = vadd.f32 0.0, %v1694
        %1696 = vmatmul.bf16.gmra.mxu0 %v586
        %v1697 = vpop.f32.mrf.mxu0
        %v1698 = vadd.f32 0.0, %v1697
        %v1699 = vpop.f32.mrf.mxu0
        %v1700 = vadd.f32 0.0, %v1699
        %1701 = vmatmul.bf16.gmra.mxu0 %v587
        %v1702 = vpop.f32.mrf.mxu0
        %v1703 = vadd.f32 0.0, %v1702
        %v1704 = vpop.f32.mrf.mxu0
        %v1705 = vadd.f32 0.0, %v1704
        %1706 = vmatmul.bf16.gmra.mxu0 %v588
        %v1707 = vpop.f32.mrf.mxu0
        %v1708 = vadd.f32 0.0, %v1707
        %v1709 = vpop.f32.mrf.mxu0
        %v1710 = vadd.f32 0.0, %v1709
        %1711 = vmatmul.bf16.gmra.mxu0 %v589
        %v1712 = vpop.f32.mrf.mxu0
        %v1713 = vadd.f32 0.0, %v1712
        %v1714 = vpop.f32.mrf.mxu0
        %v1715 = vadd.f32 0.0, %v1714
        %1716 = vmatmul.bf16.gmra.mxu0 %v590
        %v1717 = vpop.f32.mrf.mxu0
        %v1718 = vadd.f32 0.0, %v1717
        %v1719 = vpop.f32.mrf.mxu0
        %v1720 = vadd.f32 0.0, %v1719
        %1721 = vmatmul.bf16.gmra.mxu0 %v591
        %v1722 = vpop.f32.mrf.mxu0
        %v1723 = vadd.f32 0.0, %v1722
        %v1724 = vpop.f32.mrf.mxu0
        %v1725 = vadd.f32 0.0, %v1724
        %1726 = vmatmul.bf16.gmra.mxu0 %v592
        %v1727 = vpop.f32.mrf.mxu0
        %v1728 = vadd.f32 0.0, %v1727
        %v1729 = vpop.f32.mrf.mxu0
        %v1730 = vadd.f32 0.0, %v1729
        %1731 = vmatmul.bf16.gmra.mxu0 %v593
        %v1732 = vpop.f32.mrf.mxu0
        %v1733 = vadd.f32 0.0, %v1732
        %v1734 = vpop.f32.mrf.mxu0
        %v1735 = vadd.f32 0.0, %v1734
        %1736 = vmatmul.bf16.gmra.mxu0 %v594
        %v1737 = vpop.f32.mrf.mxu0
        %v1738 = vadd.f32 0.0, %v1737
        %v1739 = vpop.f32.mrf.mxu0
        %v1740 = vadd.f32 0.0, %v1739
        %1741 = vmatmul.bf16.gmra.mxu0 %v595
        %v1742 = vpop.f32.mrf.mxu0
        %v1743 = vadd.f32 0.0, %v1742
        %v1744 = vpop.f32.mrf.mxu0
        %v1745 = vadd.f32 0.0, %v1744
        %1746 = vmatmul.bf16.gmra.mxu0 %v596
        %v1747 = vpop.f32.mrf.mxu0
        %v1748 = vadd.f32 0.0, %v1747
        %v1749 = vpop.f32.mrf.mxu0
        %v1750 = vadd.f32 0.0, %v1749
        %1751 = vmatmul.bf16.gmra.mxu0 %v597
        %v1752 = vpop.f32.mrf.mxu0
        %v1753 = vadd.f32 0.0, %v1752
        %v1754 = vpop.f32.mrf.mxu0
        %v1755 = vadd.f32 0.0, %v1754
        %1756 = vmatmul.bf16.gmra.mxu0 %v598
        %v1757 = vpop.f32.mrf.mxu0
        %v1758 = vadd.f32 0.0, %v1757
        %v1759 = vpop.f32.mrf.mxu0
        %v1760 = vadd.f32 0.0, %v1759
        %1761 = vmatmul.bf16.gmra.mxu0 %v599
        %v1762 = vpop.f32.mrf.mxu0
        %v1763 = vadd.f32 0.0, %v1762
        %v1764 = vpop.f32.mrf.mxu0
        %v1765 = vadd.f32 0.0, %v1764
        %1766 = vmatmul.bf16.gmra.mxu0 %v600
        %v1767 = vpop.f32.mrf.mxu0
        %v1768 = vadd.f32 0.0, %v1767
        %v1769 = vpop.f32.mrf.mxu0
        %v1770 = vadd.f32 0.0, %v1769
        %1771 = vmatmul.bf16.gmra.mxu0 %v601
        %v1772 = vpop.f32.mrf.mxu0
        %v1773 = vadd.f32 0.0, %v1772
        %v1774 = vpop.f32.mrf.mxu0
        %v1775 = vadd.f32 0.0, %v1774
        %1776 = vmatmul.bf16.gmra.mxu0 %v602
        %v1777 = vpop.f32.mrf.mxu0
        %v1778 = vadd.f32 0.0, %v1777
        %v1779 = vpop.f32.mrf.mxu0
        %v1780 = vadd.f32 0.0, %v1779
        %1781 = vmatmul.bf16.gmra.mxu0 %v603
        %v1782 = vpop.f32.mrf.mxu0
        %v1783 = vadd.f32 0.0, %v1782
        %v1784 = vpop.f32.mrf.mxu0
        %v1785 = vadd.f32 0.0, %v1784
        %1786 = vmatmul.bf16.gmra.mxu0 %v604
        %v1787 = vpop.f32.mrf.mxu0
        %v1788 = vadd.f32 0.0, %v1787
        %v1789 = vpop.f32.mrf.mxu0
        %v1790 = vadd.f32 0.0, %v1789
        %1791 = vmatmul.bf16.gmra.mxu0 %v605
        %v1792 = vpop.f32.mrf.mxu0
        %v1793 = vadd.f32 0.0, %v1792
        %v1794 = vpop.f32.mrf.mxu0
        %v1795 = vadd.f32 0.0, %v1794
        %1796 = vmatmul.bf16.gmra.mxu0 %v606
        %v1797 = vpop.f32.mrf.mxu0
        %v1798 = vadd.f32 0.0, %v1797
        %v1799 = vpop.f32.mrf.mxu0
        %v1800 = vadd.f32 0.0, %v1799
        %1801 = vmatmul.bf16.gmra.mxu0 %v607
        %v1802 = vpop.f32.mrf.mxu0
        %v1803 = vadd.f32 0.0, %v1802
        %v1804 = vpop.f32.mrf.mxu0
        %v1805 = vadd.f32 0.0, %v1804
        %1806 = vmatmul.bf16.gmra.mxu0 %v608
        %v1807 = vpop.f32.mrf.mxu0
        %v1808 = vadd.f32 0.0, %v1807
        %v1809 = vpop.f32.mrf.mxu0
        %v1810 = vadd.f32 0.0, %v1809
        %1811 = vmatmul.bf16.gmra.mxu0 %v609
        %v1812 = vpop.f32.mrf.mxu0
        %v1813 = vadd.f32 0.0, %v1812
        %v1814 = vpop.f32.mrf.mxu0
        %v1815 = vadd.f32 0.0, %v1814
        %1816 = vmatmul.bf16.gmra.mxu0 %v610
        %v1817 = vpop.f32.mrf.mxu0
        %v1818 = vadd.f32 0.0, %v1817
        %v1819 = vpop.f32.mrf.mxu0
        %v1820 = vadd.f32 0.0, %v1819
        %1821 = vmatmul.bf16.gmra.mxu0 %v611
        %v1822 = vpop.f32.mrf.mxu0
        %v1823 = vadd.f32 0.0, %v1822
        %v1824 = vpop.f32.mrf.mxu0
        %v1825 = vadd.f32 0.0, %v1824
        %1826 = vmatmul.bf16.gmra.mxu0 %v612
        %v1827 = vpop.f32.mrf.mxu0
        %v1828 = vadd.f32 0.0, %v1827
        %v1829 = vpop.f32.mrf.mxu0
        %v1830 = vadd.f32 0.0, %v1829
        %1831 = vmatmul.bf16.gmra.mxu0 %v613
        %v1832 = vpop.f32.mrf.mxu0
        %v1833 = vadd.f32 0.0, %v1832
        %v1834 = vpop.f32.mrf.mxu0
        %v1835 = vadd.f32 0.0, %v1834
        %1836 = vmatmul.bf16.gmra.mxu0 %v614
        %v1837 = vpop.f32.mrf.mxu0
        %v1838 = vadd.f32 0.0, %v1837
        %v1839 = vpop.f32.mrf.mxu0
        %v1840 = vadd.f32 0.0, %v1839
        %1841 = vmatmul.bf16.gmra.mxu0 %v615
        %v1842 = vpop.f32.mrf.mxu0
        %v1843 = vadd.f32 0.0, %v1842
        %v1844 = vpop.f32.mrf.mxu0
        %v1845 = vadd.f32 0.0, %v1844
        %1846 = vmatmul.bf16.gmra.mxu0 %v616
        %v1847 = vpop.f32.mrf.mxu0
        %v1848 = vadd.f32 0.0, %v1847
        %v1849 = vpop.f32.mrf.mxu0
        %v1850 = vadd.f32 0.0, %v1849
        %1851 = vmatmul.bf16.gmra.mxu0 %v617
        %v1852 = vpop.f32.mrf.mxu0
        %v1853 = vadd.f32 0.0, %v1852
        %v1854 = vpop.f32.mrf.mxu0
        %v1855 = vadd.f32 0.0, %v1854
        %1856 = vmatmul.bf16.gmra.mxu0 %v618
        %v1857 = vpop.f32.mrf.mxu0
        %v1858 = vadd.f32 0.0, %v1857
        %v1859 = vpop.f32.mrf.mxu0
        %v1860 = vadd.f32 0.0, %v1859
        %1861 = vmatmul.bf16.gmra.mxu0 %v619
        %v1862 = vpop.f32.mrf.mxu0
        %v1863 = vadd.f32 0.0, %v1862
        %v1864 = vpop.f32.mrf.mxu0
        %v1865 = vadd.f32 0.0, %v1864
        %1866 = vmatmul.bf16.gmra.mxu0 %v620
        %v1867 = vpop.f32.mrf.mxu0
        %v1868 = vadd.f32 0.0, %v1867
        %v1869 = vpop.f32.mrf.mxu0
        %v1870 = vadd.f32 0.0, %v1869
        %1871 = vmatmul.bf16.gmra.mxu0 %v621
        %v1872 = vpop.f32.mrf.mxu0
        %v1873 = vadd.f32 0.0, %v1872
        %v1874 = vpop.f32.mrf.mxu0
        %v1875 = vadd.f32 0.0, %v1874
        %1876 = vmatmul.bf16.gmra.mxu0 %v622
        %v1877 = vpop.f32.mrf.mxu0
        %v1878 = vadd.f32 0.0, %v1877
        %v1879 = vpop.f32.mrf.mxu0
        %v1880 = vadd.f32 0.0, %v1879
        %1881 = vmatmul.bf16.gmra.mxu0 %v623
        %v1882 = vpop.f32.mrf.mxu0
        %v1883 = vadd.f32 0.0, %v1882
        %v1884 = vpop.f32.mrf.mxu0
        %v1885 = vadd.f32 0.0, %v1884
        %1886 = vmatmul.bf16.gmra.mxu0 %v624
        %v1887 = vpop.f32.mrf.mxu0
        %v1888 = vadd.f32 0.0, %v1887
        %v1889 = vpop.f32.mrf.mxu0
        %v1890 = vadd.f32 0.0, %v1889
        %1891 = vmatmul.bf16.gmra.mxu0 %v625
        %v1892 = vpop.f32.mrf.mxu0
        %v1893 = vadd.f32 0.0, %v1892
        %v1894 = vpop.f32.mrf.mxu0
        %v1895 = vadd.f32 0.0, %v1894
        %1896 = vmatmul.bf16.gmra.mxu0 %v626
        %v1897 = vpop.f32.mrf.mxu0
        %v1898 = vadd.f32 0.0, %v1897
        %v1899 = vpop.f32.mrf.mxu0
        %v1900 = vadd.f32 0.0, %v1899
        %1901 = vmatmul.bf16.gmra.mxu0 %v627
        %v1902 = vpop.f32.mrf.mxu0
        %v1903 = vadd.f32 0.0, %v1902
        %v1904 = vpop.f32.mrf.mxu0
        %v1905 = vadd.f32 0.0, %v1904
        %1906 = vmatmul.bf16.gmra.mxu0 %v628
        %v1907 = vpop.f32.mrf.mxu0
        %v1908 = vadd.f32 0.0, %v1907
        %v1909 = vpop.f32.mrf.mxu0
        %v1910 = vadd.f32 0.0, %v1909
        %1911 = vmatmul.bf16.gmra.mxu0 %v629
        %v1912 = vpop.f32.mrf.mxu0
        %v1913 = vadd.f32 0.0, %v1912
        %v1914 = vpop.f32.mrf.mxu0
        %v1915 = vadd.f32 0.0, %v1914
        %1916 = vmatmul.bf16.gmra.mxu0 %v630
        %v1917 = vpop.f32.mrf.mxu0
        %v1918 = vadd.f32 0.0, %v1917
        %v1919 = vpop.f32.mrf.mxu0
        %v1920 = vadd.f32 0.0, %v1919
        %1921 = vmatmul.bf16.gmra.mxu0 %v631
        %v1922 = vpop.f32.mrf.mxu0
        %v1923 = vadd.f32 0.0, %v1922
        %v1924 = vpop.f32.mrf.mxu0
        %v1925 = vadd.f32 0.0, %v1924
        %1926 = vmatmul.bf16.gmra.mxu0 %v632
        %v1927 = vpop.f32.mrf.mxu0
        %v1928 = vadd.f32 0.0, %v1927
        %v1929 = vpop.f32.mrf.mxu0
        %v1930 = vadd.f32 0.0, %v1929
        %1931 = vmatmul.bf16.gmra.mxu0 %v633
        %v1932 = vpop.f32.mrf.mxu0
        %v1933 = vadd.f32 0.0, %v1932
        %v1934 = vpop.f32.mrf.mxu0
        %v1935 = vadd.f32 0.0, %v1934
        %1936 = vmatmul.bf16.gmra.mxu0 %v634
        %v1937 = vpop.f32.mrf.mxu0
        %v1938 = vadd.f32 0.0, %v1937
        %v1939 = vpop.f32.mrf.mxu0
        %v1940 = vadd.f32 0.0, %v1939
        %1941 = vmatmul.bf16.gmra.mxu0 %v635
        %v1942 = vpop.f32.mrf.mxu0
        %v1943 = vadd.f32 0.0, %v1942
        %v1944 = vpop.f32.mrf.mxu0
        %v1945 = vadd.f32 0.0, %v1944
        %1946 = vmatmul.bf16.gmra.mxu0 %v636
        %v1947 = vpop.f32.mrf.mxu0
        %v1948 = vadd.f32 0.0, %v1947
        %v1949 = vpop.f32.mrf.mxu0
        %v1950 = vadd.f32 0.0, %v1949
        %1951 = vmatmul.bf16.gmra.mxu0 %v637
        %v1952 = vpop.f32.mrf.mxu0
        %v1953 = vadd.f32 0.0, %v1952
        %v1954 = vpop.f32.mrf.mxu0
        %v1955 = vadd.f32 0.0, %v1954
        %1956 = vdwg.mxu0
        %1957 = vmatpush.bf16.msra.mxu0 %v1635
        %1958 = vmatpush.bf16.msra.mxu0 %v1634
        %1959 = vmatpush.bf16.msra.mxu0 %v1633
        %1960 = vmatpush.bf16.msra.mxu0 %v1632
        %1961 = vmatpush.bf16.msra.mxu0 %v1631
        %1962 = vmatpush.bf16.msra.mxu0 %v1630
        %1963 = vmatpush.bf16.msra.mxu0 %v1629
        %1964 = vmatpush.bf16.msra.mxu0 %v1628
        %1965 = vmatmul.bf16.gmra.mxu0 %v668
        %v1966 = vpop.f32.mrf.mxu0
        %v1967 = vadd.f32 %v1678, %v1966
        %v1968 = vpop.f32.mrf.mxu0
        %v1969 = vadd.f32 %v1680, %v1968
        %1970 = vmatmul.bf16.gmra.mxu0 %v676
        %v1971 = vpop.f32.mrf.mxu0
        %v1972 = vadd.f32 %v1683, %v1971
        %v1973 = vpop.f32.mrf.mxu0
        %v1974 = vadd.f32 %v1685, %v1973
        %1975 = vmatmul.bf16.gmra.mxu0 %v684
        %v1976 = vpop.f32.mrf.mxu0
        %v1977 = vadd.f32 %v1688, %v1976
        %v1978 = vpop.f32.mrf.mxu0
        %v1979 = vadd.f32 %v1690, %v1978
        %1980 = vmatmul.bf16.gmra.mxu0 %v692
        %v1981 = vpop.f32.mrf.mxu0
        %v1982 = vadd.f32 %v1693, %v1981
        %v1983 = vpop.f32.mrf.mxu0
        %v1984 = vadd.f32 %v1695, %v1983
        %1985 = vmatmul.bf16.gmra.mxu0 %v700
        %v1986 = vpop.f32.mrf.mxu0
        %v1987 = vadd.f32 %v1698, %v1986
        %v1988 = vpop.f32.mrf.mxu0
        %v1989 = vadd.f32 %v1700, %v1988
        %1990 = vmatmul.bf16.gmra.mxu0 %v708
        %v1991 = vpop.f32.mrf.mxu0
        %v1992 = vadd.f32 %v1703, %v1991
        %v1993 = vpop.f32.mrf.mxu0
        %v1994 = vadd.f32 %v1705, %v1993
        %1995 = vmatmul.bf16.gmra.mxu0 %v716
        %v1996 = vpop.f32.mrf.mxu0
        %v1997 = vadd.f32 %v1708, %v1996
        %v1998 = vpop.f32.mrf.mxu0
        %v1999 = vadd.f32 %v1710, %v1998
        %2000 = vmatmul.bf16.gmra.mxu0 %v724
        %v2001 = vpop.f32.mrf.mxu0
        %v2002 = vadd.f32 %v1713, %v2001
        %v2003 = vpop.f32.mrf.mxu0
        %v2004 = vadd.f32 %v1715, %v2003
        %2005 = vmatmul.bf16.gmra.mxu0 %v732
        %v2006 = vpop.f32.mrf.mxu0
        %v2007 = vadd.f32 %v1718, %v2006
        %v2008 = vpop.f32.mrf.mxu0
        %v2009 = vadd.f32 %v1720, %v2008
        %2010 = vmatmul.bf16.gmra.mxu0 %v740
        %v2011 = vpop.f32.mrf.mxu0
        %v2012 = vadd.f32 %v1723, %v2011
        %v2013 = vpop.f32.mrf.mxu0
        %v2014 = vadd.f32 %v1725, %v2013
        %2015 = vmatmul.bf16.gmra.mxu0 %v748
        %v2016 = vpop.f32.mrf.mxu0
        %v2017 = vadd.f32 %v1728, %v2016
        %v2018 = vpop.f32.mrf.mxu0
        %v2019 = vadd.f32 %v1730, %v2018
        %2020 = vmatmul.bf16.gmra.mxu0 %v756
        %v2021 = vpop.f32.mrf.mxu0
        %v2022 = vadd.f32 %v1733, %v2021
        %v2023 = vpop.f32.mrf.mxu0
        %v2024 = vadd.f32 %v1735, %v2023
        %2025 = vmatmul.bf16.gmra.mxu0 %v764
        %v2026 = vpop.f32.mrf.mxu0
        %v2027 = vadd.f32 %v1738, %v2026
        %v2028 = vpop.f32.mrf.mxu0
        %v2029 = vadd.f32 %v1740, %v2028
        %2030 = vmatmul.bf16.gmra.mxu0 %v772
        %v2031 = vpop.f32.mrf.mxu0
        %v2032 = vadd.f32 %v1743, %v2031
        %v2033 = vpop.f32.mrf.mxu0
        %v2034 = vadd.f32 %v1745, %v2033
        %2035 = vmatmul.bf16.gmra.mxu0 %v780
        %v2036 = vpop.f32.mrf.mxu0
        %v2037 = vadd.f32 %v1748, %v2036
        %v2038 = vpop.f32.mrf.mxu0
        %v2039 = vadd.f32 %v1750, %v2038
        %2040 = vmatmul.bf16.gmra.mxu0 %v788
        %v2041 = vpop.f32.mrf.mxu0
        %v2042 = vadd.f32 %v1753, %v2041
        %v2043 = vpop.f32.mrf.mxu0
        %v2044 = vadd.f32 %v1755, %v2043
        %2045 = vmatmul.bf16.gmra.mxu0 %v796
        %v2046 = vpop.f32.mrf.mxu0
        %v2047 = vadd.f32 %v1758, %v2046
        %v2048 = vpop.f32.mrf.mxu0
        %v2049 = vadd.f32 %v1760, %v2048
        %2050 = vmatmul.bf16.gmra.mxu0 %v804
        %v2051 = vpop.f32.mrf.mxu0
        %v2052 = vadd.f32 %v1763, %v2051
        %v2053 = vpop.f32.mrf.mxu0
        %v2054 = vadd.f32 %v1765, %v2053
        %2055 = vmatmul.bf16.gmra.mxu0 %v812
        %v2056 = vpop.f32.mrf.mxu0
        %v2057 = vadd.f32 %v1768, %v2056
        %v2058 = vpop.f32.mrf.mxu0
        %v2059 = vadd.f32 %v1770, %v2058
        %2060 = vmatmul.bf16.gmra.mxu0 %v820
        %v2061 = vpop.f32.mrf.mxu0
        %v2062 = vadd.f32 %v1773, %v2061
        %v2063 = vpop.f32.mrf.mxu0
        %v2064 = vadd.f32 %v1775, %v2063
        %2065 = vmatmul.bf16.gmra.mxu0 %v828
        %v2066 = vpop.f32.mrf.mxu0
        %v2067 = vadd.f32 %v1778, %v2066
        %v2068 = vpop.f32.mrf.mxu0
        %v2069 = vadd.f32 %v1780, %v2068
        %2070 = vmatmul.bf16.gmra.mxu0 %v836
        %v2071 = vpop.f32.mrf.mxu0
        %v2072 = vadd.f32 %v1783, %v2071
        %v2073 = vpop.f32.mrf.mxu0
        %v2074 = vadd.f32 %v1785, %v2073
        %2075 = vmatmul.bf16.gmra.mxu0 %v844
        %v2076 = vpop.f32.mrf.mxu0
        %v2077 = vadd.f32 %v1788, %v2076
        %v2078 = vpop.f32.mrf.mxu0
        %v2079 = vadd.f32 %v1790, %v2078
        %2080 = vmatmul.bf16.gmra.mxu0 %v852
        %v2081 = vpop.f32.mrf.mxu0
        %v2082 = vadd.f32 %v1793, %v2081
        %v2083 = vpop.f32.mrf.mxu0
        %v2084 = vadd.f32 %v1795, %v2083
        %2085 = vmatmul.bf16.gmra.mxu0 %v860
        %v2086 = vpop.f32.mrf.mxu0
        %v2087 = vadd.f32 %v1798, %v2086
        %v2088 = vpop.f32.mrf.mxu0
        %v2089 = vadd.f32 %v1800, %v2088
        %2090 = vmatmul.bf16.gmra.mxu0 %v868
        %v2091 = vpop.f32.mrf.mxu0
        %v2092 = vadd.f32 %v1803, %v2091
        %v2093 = vpop.f32.mrf.mxu0
        %v2094 = vadd.f32 %v1805, %v2093
        %2095 = vmatmul.bf16.gmra.mxu0 %v876
        %v2096 = vpop.f32.mrf.mxu0
        %v2097 = vadd.f32 %v1808, %v2096
        %v2098 = vpop.f32.mrf.mxu0
        %v2099 = vadd.f32 %v1810, %v2098
        %2100 = vmatmul.bf16.gmra.mxu0 %v884
        %v2101 = vpop.f32.mrf.mxu0
        %v2102 = vadd.f32 %v1813, %v2101
        %v2103 = vpop.f32.mrf.mxu0
        %v2104 = vadd.f32 %v1815, %v2103
        %2105 = vmatmul.bf16.gmra.mxu0 %v892
        %v2106 = vpop.f32.mrf.mxu0
        %v2107 = vadd.f32 %v1818, %v2106
        %v2108 = vpop.f32.mrf.mxu0
        %v2109 = vadd.f32 %v1820, %v2108
        %2110 = vmatmul.bf16.gmra.mxu0 %v900
        %v2111 = vpop.f32.mrf.mxu0
        %v2112 = vadd.f32 %v1823, %v2111
        %v2113 = vpop.f32.mrf.mxu0
        %v2114 = vadd.f32 %v1825, %v2113
        %2115 = vmatmul.bf16.gmra.mxu0 %v908
        %v2116 = vpop.f32.mrf.mxu0
        %v2117 = vadd.f32 %v1828, %v2116
        %v2118 = vpop.f32.mrf.mxu0
        %v2119 = vadd.f32 %v1830, %v2118
        %2120 = vmatmul.bf16.gmra.mxu0 %v916
        %v2121 = vpop.f32.mrf.mxu0
        %v2122 = vadd.f32 %v1833, %v2121
        %v2123 = vpop.f32.mrf.mxu0
        %v2124 = vadd.f32 %v1835, %v2123
        %2125 = vmatmul.bf16.gmra.mxu0 %v924
        %v2126 = vpop.f32.mrf.mxu0
        %v2127 = vadd.f32 %v1838, %v2126
        %v2128 = vpop.f32.mrf.mxu0
        %v2129 = vadd.f32 %v1840, %v2128
        %2130 = vmatmul.bf16.gmra.mxu0 %v932
        %v2131 = vpop.f32.mrf.mxu0
        %v2132 = vadd.f32 %v1843, %v2131
        %v2133 = vpop.f32.mrf.mxu0
        %v2134 = vadd.f32 %v1845, %v2133
        %2135 = vmatmul.bf16.gmra.mxu0 %v940
        %v2136 = vpop.f32.mrf.mxu0
        %v2137 = vadd.f32 %v1848, %v2136
        %v2138 = vpop.f32.mrf.mxu0
        %v2139 = vadd.f32 %v1850, %v2138
        %2140 = vmatmul.bf16.gmra.mxu0 %v948
        %v2141 = vpop.f32.mrf.mxu0
        %v2142 = vadd.f32 %v1853, %v2141
        %v2143 = vpop.f32.mrf.mxu0
        %v2144 = vadd.f32 %v1855, %v2143
        %2145 = vmatmul.bf16.gmra.mxu0 %v956
        %v2146 = vpop.f32.mrf.mxu0
        %v2147 = vadd.f32 %v1858, %v2146
        %v2148 = vpop.f32.mrf.mxu0
        %v2149 = vadd.f32 %v1860, %v2148
        %2150 = vmatmul.bf16.gmra.mxu0 %v964
        %v2151 = vpop.f32.mrf.mxu0
        %v2152 = vadd.f32 %v1863, %v2151
        %v2153 = vpop.f32.mrf.mxu0
        %v2154 = vadd.f32 %v1865, %v2153
        %2155 = vmatmul.bf16.gmra.mxu0 %v972
        %v2156 = vpop.f32.mrf.mxu0
        %v2157 = vadd.f32 %v1868, %v2156
        %v2158 = vpop.f32.mrf.mxu0
        %v2159 = vadd.f32 %v1870, %v2158
        %2160 = vmatmul.bf16.gmra.mxu0 %v980
        %v2161 = vpop.f32.mrf.mxu0
        %v2162 = vadd.f32 %v1873, %v2161
        %v2163 = vpop.f32.mrf.mxu0
        %v2164 = vadd.f32 %v1875, %v2163
        %2165 = vmatmul.bf16.gmra.mxu0 %v988
        %v2166 = vpop.f32.mrf.mxu0
        %v2167 = vadd.f32 %v1878, %v2166
        %v2168 = vpop.f32.mrf.mxu0
        %v2169 = vadd.f32 %v1880, %v2168
        %2170 = vmatmul.bf16.gmra.mxu0 %v996
        %v2171 = vpop.f32.mrf.mxu0
        %v2172 = vadd.f32 %v1883, %v2171
        %v2173 = vpop.f32.mrf.mxu0
        %v2174 = vadd.f32 %v1885, %v2173
        %2175 = vmatmul.bf16.gmra.mxu0 %v1004
        %v2176 = vpop.f32.mrf.mxu0
        %v2177 = vadd.f32 %v1888, %v2176
        %v2178 = vpop.f32.mrf.mxu0
        %v2179 = vadd.f32 %v1890, %v2178
        %2180 = vmatmul.bf16.gmra.mxu0 %v1012
        %v2181 = vpop.f32.mrf.mxu0
        %v2182 = vadd.f32 %v1893, %v2181
        %v2183 = vpop.f32.mrf.mxu0
        %v2184 = vadd.f32 %v1895, %v2183
        %2185 = vmatmul.bf16.gmra.mxu0 %v1020
        %v2186 = vpop.f32.mrf.mxu0
        %v2187 = vadd.f32 %v1898, %v2186
        %v2188 = vpop.f32.mrf.mxu0
        %v2189 = vadd.f32 %v1900, %v2188
        %2190 = vmatmul.bf16.gmra.mxu0 %v1028
        %v2191 = vpop.f32.mrf.mxu0
        %v2192 = vadd.f32 %v1903, %v2191
        %v2193 = vpop.f32.mrf.mxu0
        %v2194 = vadd.f32 %v1905, %v2193
        %2195 = vmatmul.bf16.gmra.mxu0 %v1036
        %v2196 = vpop.f32.mrf.mxu0
        %v2197 = vadd.f32 %v1908, %v2196
        %v2198 = vpop.f32.mrf.mxu0
        %v2199 = vadd.f32 %v1910, %v2198
        %2200 = vmatmul.bf16.gmra.mxu0 %v1044
        %v2201 = vpop.f32.mrf.mxu0
        %v2202 = vadd.f32 %v1913, %v2201
        %v2203 = vpop.f32.mrf.mxu0
        %v2204 = vadd.f32 %v1915, %v2203
        %2205 = vmatmul.bf16.gmra.mxu0 %v1052
        %v2206 = vpop.f32.mrf.mxu0
        %v2207 = vadd.f32 %v1918, %v2206
        %v2208 = vpop.f32.mrf.mxu0
        %v2209 = vadd.f32 %v1920, %v2208
        %2210 = vmatmul.bf16.gmra.mxu0 %v1060
        %v2211 = vpop.f32.mrf.mxu0
        %v2212 = vadd.f32 %v1923, %v2211
        %v2213 = vpop.f32.mrf.mxu0
        %v2214 = vadd.f32 %v1925, %v2213
        %2215 = vmatmul.bf16.gmra.mxu0 %v1068
        %v2216 = vpop.f32.mrf.mxu0
        %v2217 = vadd.f32 %v1928, %v2216
        %v2218 = vpop.f32.mrf.mxu0
        %v2219 = vadd.f32 %v1930, %v2218
        %2220 = vmatmul.bf16.gmra.mxu0 %v1076
        %v2221 = vpop.f32.mrf.mxu0
        %v2222 = vadd.f32 %v1933, %v2221
        %v2223 = vpop.f32.mrf.mxu0
        %v2224 = vadd.f32 %v1935, %v2223
        %2225 = vmatmul.bf16.gmra.mxu0 %v1084
        %v2226 = vpop.f32.mrf.mxu0
        %v2227 = vadd.f32 %v1938, %v2226
        %v2228 = vpop.f32.mrf.mxu0
        %v2229 = vadd.f32 %v1940, %v2228
        %2230 = vmatmul.bf16.gmra.mxu0 %v1092
        %v2231 = vpop.f32.mrf.mxu0
        %v2232 = vadd.f32 %v1943, %v2231
        %v2233 = vpop.f32.mrf.mxu0
        %v2234 = vadd.f32 %v1945, %v2233
        %2235 = vmatmul.bf16.gmra.mxu0 %v1100
        %v2236 = vpop.f32.mrf.mxu0
        %v2237 = vadd.f32 %v1948, %v2236
        %v2238 = vpop.f32.mrf.mxu0
        %v2239 = vadd.f32 %v1950, %v2238
        %2240 = vmatmul.bf16.gmra.mxu0 %v1108
        %v2241 = vpop.f32.mrf.mxu0
        %v2242 = vadd.f32 %v1953, %v2241
        %v2243 = vpop.f32.mrf.mxu0
        %v2244 = vadd.f32 %v1955, %v2243
        %2245 = vdwg.mxu0
        %2246 = vmatpush.bf16.msra.mxu0 %v1643
        %2247 = vmatpush.bf16.msra.mxu0 %v1642
        %2248 = vmatpush.bf16.msra.mxu0 %v1641
        %2249 = vmatpush.bf16.msra.mxu0 %v1640
        %2250 = vmatpush.bf16.msra.mxu0 %v1639
        %2251 = vmatpush.bf16.msra.mxu0 %v1638
        %2252 = vmatpush.bf16.msra.mxu0 %v1637
        %2253 = vmatpush.bf16.msra.mxu0 %v1636
        %2254 = vmatmul.bf16.gmra.mxu0 %v1190
        %v2255 = vpop.f32.mrf.mxu0
        %v2256 = vadd.f32 %v1967, %v2255
        %v2257 = vpop.f32.mrf.mxu0
        %v2258 = vadd.f32 %v1969, %v2257
        %2259 = vmatmul.bf16.gmra.mxu0 %v1192
        %v2260 = vpop.f32.mrf.mxu0
        %v2261 = vadd.f32 %v1972, %v2260
        %v2262 = vpop.f32.mrf.mxu0
        %v2263 = vadd.f32 %v1974, %v2262
        %2264 = vmatmul.bf16.gmra.mxu0 %v1194
        %v2265 = vpop.f32.mrf.mxu0
        %v2266 = vadd.f32 %v1977, %v2265
        %v2267 = vpop.f32.mrf.mxu0
        %v2268 = vadd.f32 %v1979, %v2267
        %2269 = vmatmul.bf16.gmra.mxu0 %v1196
        %v2270 = vpop.f32.mrf.mxu0
        %v2271 = vadd.f32 %v1982, %v2270
        %v2272 = vpop.f32.mrf.mxu0
        %v2273 = vadd.f32 %v1984, %v2272
        %2274 = vmatmul.bf16.gmra.mxu0 %v1198
        %v2275 = vpop.f32.mrf.mxu0
        %v2276 = vadd.f32 %v1987, %v2275
        %v2277 = vpop.f32.mrf.mxu0
        %v2278 = vadd.f32 %v1989, %v2277
        %2279 = vmatmul.bf16.gmra.mxu0 %v1200
        %v2280 = vpop.f32.mrf.mxu0
        %v2281 = vadd.f32 %v1992, %v2280
        %v2282 = vpop.f32.mrf.mxu0
        %v2283 = vadd.f32 %v1994, %v2282
        %2284 = vmatmul.bf16.gmra.mxu0 %v1202
        %v2285 = vpop.f32.mrf.mxu0
        %v2286 = vadd.f32 %v1997, %v2285
        %v2287 = vpop.f32.mrf.mxu0
        %v2288 = vadd.f32 %v1999, %v2287
        %2289 = vmatmul.bf16.gmra.mxu0 %v1204
        %v2290 = vpop.f32.mrf.mxu0
        %v2291 = vadd.f32 %v2002, %v2290
        %v2292 = vpop.f32.mrf.mxu0
        %v2293 = vadd.f32 %v2004, %v2292
        %2294 = vmatmul.bf16.gmra.mxu0 %v1206
        %v2295 = vpop.f32.mrf.mxu0
        %v2296 = vadd.f32 %v2007, %v2295
        %v2297 = vpop.f32.mrf.mxu0
        %v2298 = vadd.f32 %v2009, %v2297
        %2299 = vmatmul.bf16.gmra.mxu0 %v1208
        %v2300 = vpop.f32.mrf.mxu0
        %v2301 = vadd.f32 %v2012, %v2300
        %v2302 = vpop.f32.mrf.mxu0
        %v2303 = vadd.f32 %v2014, %v2302
        %2304 = vmatmul.bf16.gmra.mxu0 %v1210
        %v2305 = vpop.f32.mrf.mxu0
        %v2306 = vadd.f32 %v2017, %v2305
        %v2307 = vpop.f32.mrf.mxu0
        %v2308 = vadd.f32 %v2019, %v2307
        %2309 = vmatmul.bf16.gmra.mxu0 %v1212
        %v2310 = vpop.f32.mrf.mxu0
        %v2311 = vadd.f32 %v2022, %v2310
        %v2312 = vpop.f32.mrf.mxu0
        %v2313 = vadd.f32 %v2024, %v2312
        %2314 = vmatmul.bf16.gmra.mxu0 %v1214
        %v2315 = vpop.f32.mrf.mxu0
        %v2316 = vadd.f32 %v2027, %v2315
        %v2317 = vpop.f32.mrf.mxu0
        %v2318 = vadd.f32 %v2029, %v2317
        %2319 = vmatmul.bf16.gmra.mxu0 %v1216
        %v2320 = vpop.f32.mrf.mxu0
        %v2321 = vadd.f32 %v2032, %v2320
        %v2322 = vpop.f32.mrf.mxu0
        %v2323 = vadd.f32 %v2034, %v2322
        %2324 = vmatmul.bf16.gmra.mxu0 %v1218
        %v2325 = vpop.f32.mrf.mxu0
        %v2326 = vadd.f32 %v2037, %v2325
        %v2327 = vpop.f32.mrf.mxu0
        %v2328 = vadd.f32 %v2039, %v2327
        %2329 = vmatmul.bf16.gmra.mxu0 %v1220
        %v2330 = vpop.f32.mrf.mxu0
        %v2331 = vadd.f32 %v2042, %v2330
        %v2332 = vpop.f32.mrf.mxu0
        %v2333 = vadd.f32 %v2044, %v2332
        %2334 = vmatmul.bf16.gmra.mxu0 %v1222
        %v2335 = vpop.f32.mrf.mxu0
        %v2336 = vadd.f32 %v2047, %v2335
        %v2337 = vpop.f32.mrf.mxu0
        %v2338 = vadd.f32 %v2049, %v2337
        %2339 = vmatmul.bf16.gmra.mxu0 %v1224
        %v2340 = vpop.f32.mrf.mxu0
        %v2341 = vadd.f32 %v2052, %v2340
        %v2342 = vpop.f32.mrf.mxu0
        %v2343 = vadd.f32 %v2054, %v2342
        %2344 = vmatmul.bf16.gmra.mxu0 %v1226
        %v2345 = vpop.f32.mrf.mxu0
        %v2346 = vadd.f32 %v2057, %v2345
        %v2347 = vpop.f32.mrf.mxu0
        %v2348 = vadd.f32 %v2059, %v2347
        %2349 = vmatmul.bf16.gmra.mxu0 %v1228
        %v2350 = vpop.f32.mrf.mxu0
        %v2351 = vadd.f32 %v2062, %v2350
        %v2352 = vpop.f32.mrf.mxu0
        %v2353 = vadd.f32 %v2064, %v2352
        %2354 = vmatmul.bf16.gmra.mxu0 %v1230
        %v2355 = vpop.f32.mrf.mxu0
        %v2356 = vadd.f32 %v2067, %v2355
        %v2357 = vpop.f32.mrf.mxu0
        %v2358 = vadd.f32 %v2069, %v2357
        %2359 = vmatmul.bf16.gmra.mxu0 %v1232
        %v2360 = vpop.f32.mrf.mxu0
        %v2361 = vadd.f32 %v2072, %v2360
        %v2362 = vpop.f32.mrf.mxu0
        %v2363 = vadd.f32 %v2074, %v2362
        %2364 = vmatmul.bf16.gmra.mxu0 %v1234
        %v2365 = vpop.f32.mrf.mxu0
        %v2366 = vadd.f32 %v2077, %v2365
        %v2367 = vpop.f32.mrf.mxu0
        %v2368 = vadd.f32 %v2079, %v2367
        %2369 = vmatmul.bf16.gmra.mxu0 %v1236
        %v2370 = vpop.f32.mrf.mxu0
        %v2371 = vadd.f32 %v2082, %v2370
        %v2372 = vpop.f32.mrf.mxu0
        %v2373 = vadd.f32 %v2084, %v2372
        %2374 = vmatmul.bf16.gmra.mxu0 %v1238
        %v2375 = vpop.f32.mrf.mxu0
        %v2376 = vadd.f32 %v2087, %v2375
        %v2377 = vpop.f32.mrf.mxu0
        %v2378 = vadd.f32 %v2089, %v2377
        %2379 = vmatmul.bf16.gmra.mxu0 %v1240
        %v2380 = vpop.f32.mrf.mxu0
        %v2381 = vadd.f32 %v2092, %v2380
        %v2382 = vpop.f32.mrf.mxu0
        %v2383 = vadd.f32 %v2094, %v2382
        %2384 = vmatmul.bf16.gmra.mxu0 %v1242
        %v2385 = vpop.f32.mrf.mxu0
        %v2386 = vadd.f32 %v2097, %v2385
        %v2387 = vpop.f32.mrf.mxu0
        %v2388 = vadd.f32 %v2099, %v2387
        %2389 = vmatmul.bf16.gmra.mxu0 %v1244
        %v2390 = vpop.f32.mrf.mxu0
        %v2391 = vadd.f32 %v2102, %v2390
        %v2392 = vpop.f32.mrf.mxu0
        %v2393 = vadd.f32 %v2104, %v2392
        %2394 = vmatmul.bf16.gmra.mxu0 %v1246
        %v2395 = vpop.f32.mrf.mxu0
        %v2396 = vadd.f32 %v2107, %v2395
        %v2397 = vpop.f32.mrf.mxu0
        %v2398 = vadd.f32 %v2109, %v2397
        %2399 = vmatmul.bf16.gmra.mxu0 %v1248
        %v2400 = vpop.f32.mrf.mxu0
        %v2401 = vadd.f32 %v2112, %v2400
        %v2402 = vpop.f32.mrf.mxu0
        %v2403 = vadd.f32 %v2114, %v2402
        %2404 = vmatmul.bf16.gmra.mxu0 %v1250
        %v2405 = vpop.f32.mrf.mxu0
        %v2406 = vadd.f32 %v2117, %v2405
        %v2407 = vpop.f32.mrf.mxu0
        %v2408 = vadd.f32 %v2119, %v2407
        %2409 = vmatmul.bf16.gmra.mxu0 %v1252
        %v2410 = vpop.f32.mrf.mxu0
        %v2411 = vadd.f32 %v2122, %v2410
        %v2412 = vpop.f32.mrf.mxu0
        %v2413 = vadd.f32 %v2124, %v2412
        %2414 = vmatmul.bf16.gmra.mxu0 %v1254
        %v2415 = vpop.f32.mrf.mxu0
        %v2416 = vadd.f32 %v2127, %v2415
        %v2417 = vpop.f32.mrf.mxu0
        %v2418 = vadd.f32 %v2129, %v2417
        %2419 = vmatmul.bf16.gmra.mxu0 %v1256
        %v2420 = vpop.f32.mrf.mxu0
        %v2421 = vadd.f32 %v2132, %v2420
        %v2422 = vpop.f32.mrf.mxu0
        %v2423 = vadd.f32 %v2134, %v2422
        %2424 = vmatmul.bf16.gmra.mxu0 %v1258
        %v2425 = vpop.f32.mrf.mxu0
        %v2426 = vadd.f32 %v2137, %v2425
        %v2427 = vpop.f32.mrf.mxu0
        %v2428 = vadd.f32 %v2139, %v2427
        %2429 = vmatmul.bf16.gmra.mxu0 %v1260
        %v2430 = vpop.f32.mrf.mxu0
        %v2431 = vadd.f32 %v2142, %v2430
        %v2432 = vpop.f32.mrf.mxu0
        %v2433 = vadd.f32 %v2144, %v2432
        %2434 = vmatmul.bf16.gmra.mxu0 %v1262
        %v2435 = vpop.f32.mrf.mxu0
        %v2436 = vadd.f32 %v2147, %v2435
        %v2437 = vpop.f32.mrf.mxu0
        %v2438 = vadd.f32 %v2149, %v2437
        %2439 = vmatmul.bf16.gmra.mxu0 %v1264
        %v2440 = vpop.f32.mrf.mxu0
        %v2441 = vadd.f32 %v2152, %v2440
        %v2442 = vpop.f32.mrf.mxu0
        %v2443 = vadd.f32 %v2154, %v2442
        %2444 = vmatmul.bf16.gmra.mxu0 %v1266
        %v2445 = vpop.f32.mrf.mxu0
        %v2446 = vadd.f32 %v2157, %v2445
        %v2447 = vpop.f32.mrf.mxu0
        %v2448 = vadd.f32 %v2159, %v2447
        %2449 = vmatmul.bf16.gmra.mxu0 %v1268
        %v2450 = vpop.f32.mrf.mxu0
        %v2451 = vadd.f32 %v2162, %v2450
        %v2452 = vpop.f32.mrf.mxu0
        %v2453 = vadd.f32 %v2164, %v2452
        %2454 = vmatmul.bf16.gmra.mxu0 %v1270
        %v2455 = vpop.f32.mrf.mxu0
        %v2456 = vadd.f32 %v2167, %v2455
        %v2457 = vpop.f32.mrf.mxu0
        %v2458 = vadd.f32 %v2169, %v2457
        %2459 = vmatmul.bf16.gmra.mxu0 %v1272
        %v2460 = vpop.f32.mrf.mxu0
        %v2461 = vadd.f32 %v2172, %v2460
        %v2462 = vpop.f32.mrf.mxu0
        %v2463 = vadd.f32 %v2174, %v2462
        %2464 = vmatmul.bf16.gmra.mxu0 %v1274
        %v2465 = vpop.f32.mrf.mxu0
        %v2466 = vadd.f32 %v2177, %v2465
        %v2467 = vpop.f32.mrf.mxu0
        %v2468 = vadd.f32 %v2179, %v2467
        %2469 = vmatmul.bf16.gmra.mxu0 %v1276
        %v2470 = vpop.f32.mrf.mxu0
        %v2471 = vadd.f32 %v2182, %v2470
        %v2472 = vpop.f32.mrf.mxu0
        %v2473 = vadd.f32 %v2184, %v2472
        %2474 = vmatmul.bf16.gmra.mxu0 %v1278
        %v2475 = vpop.f32.mrf.mxu0
        %v2476 = vadd.f32 %v2187, %v2475
        %v2477 = vpop.f32.mrf.mxu0
        %v2478 = vadd.f32 %v2189, %v2477
        %2479 = vmatmul.bf16.gmra.mxu0 %v1280
        %v2480 = vpop.f32.mrf.mxu0
        %v2481 = vadd.f32 %v2192, %v2480
        %v2482 = vpop.f32.mrf.mxu0
        %v2483 = vadd.f32 %v2194, %v2482
        %2484 = vmatmul.bf16.gmra.mxu0 %v1282
        %v2485 = vpop.f32.mrf.mxu0
        %v2486 = vadd.f32 %v2197, %v2485
        %v2487 = vpop.f32.mrf.mxu0
        %v2488 = vadd.f32 %v2199, %v2487
        %2489 = vmatmul.bf16.gmra.mxu0 %v1284
        %v2490 = vpop.f32.mrf.mxu0
        %v2491 = vadd.f32 %v2202, %v2490
        %v2492 = vpop.f32.mrf.mxu0
        %v2493 = vadd.f32 %v2204, %v2492
        %2494 = vmatmul.bf16.gmra.mxu0 %v1286
        %v2495 = vpop.f32.mrf.mxu0
        %v2496 = vadd.f32 %v2207, %v2495
        %v2497 = vpop.f32.mrf.mxu0
        %v2498 = vadd.f32 %v2209, %v2497
        %2499 = vmatmul.bf16.gmra.mxu0 %v1288
        %v2500 = vpop.f32.mrf.mxu0
        %v2501 = vadd.f32 %v2212, %v2500
        %v2502 = vpop.f32.mrf.mxu0
        %v2503 = vadd.f32 %v2214, %v2502
        %2504 = vmatmul.bf16.gmra.mxu0 %v1290
        %v2505 = vpop.f32.mrf.mxu0
        %v2506 = vadd.f32 %v2217, %v2505
        %v2507 = vpop.f32.mrf.mxu0
        %v2508 = vadd.f32 %v2219, %v2507
        %2509 = vmatmul.bf16.gmra.mxu0 %v1292
        %v2510 = vpop.f32.mrf.mxu0
        %v2511 = vadd.f32 %v2222, %v2510
        %v2512 = vpop.f32.mrf.mxu0
        %v2513 = vadd.f32 %v2224, %v2512
        %2514 = vmatmul.bf16.gmra.mxu0 %v1294
        %v2515 = vpop.f32.mrf.mxu0
        %v2516 = vadd.f32 %v2227, %v2515
        %v2517 = vpop.f32.mrf.mxu0
        %v2518 = vadd.f32 %v2229, %v2517
        %2519 = vmatmul.bf16.gmra.mxu0 %v1296
        %v2520 = vpop.f32.mrf.mxu0
        %v2521 = vadd.f32 %v2232, %v2520
        %v2522 = vpop.f32.mrf.mxu0
        %v2523 = vadd.f32 %v2234, %v2522
        %2524 = vmatmul.bf16.gmra.mxu0 %v1298
        %v2525 = vpop.f32.mrf.mxu0
        %v2526 = vadd.f32 %v2237, %v2525
        %v2527 = vpop.f32.mrf.mxu0
        %v2528 = vadd.f32 %v2239, %v2527
        %2529 = vmatmul.bf16.gmra.mxu0 %v1300
        %v2530 = vpop.f32.mrf.mxu0
        %v2531 = vadd.f32 %v2242, %v2530
        %v2532 = vpop.f32.mrf.mxu0
        %v2533 = vadd.f32 %v2244, %v2532
        %2534 = vdwg.mxu0
        %v2583 = vunpack.c.l.b16 %v1427
        %v2584 = vunpack.c.l.b16 %v1428
        %v2585 = vunpack.c.l.b16 %v1429
        %v2586 = vunpack.c.l.b16 %v1430
        %v2587 = vunpack.c.l.b16 %v1431
        %v2588 = vunpack.c.l.b16 %v1432
        %v2589 = vunpack.c.l.b16 %v1433
        %v2590 = vunpack.c.l.b16 %v1434
        %v2591 = vunpack.c.l.b16 %v1435
        %v2592 = vunpack.c.l.b16 %v1436
        %v2593 = vunpack.c.l.b16 %v1437
        %v2594 = vunpack.c.l.b16 %v1438
        %v2595 = vunpack.c.l.b16 %v1439
        %v2596 = vunpack.c.l.b16 %v1440
        %v2597 = vunpack.c.l.b16 %v1441
        %v2598 = vunpack.c.l.b16 %v1442
        %v2599 = vunpack.c.l.b16 %v1443
        %v2600 = vunpack.c.l.b16 %v1444
        %v2601 = vunpack.c.l.b16 %v1445
        %v2602 = vunpack.c.l.b16 %v1446
        %v2603 = vunpack.c.l.b16 %v1447
        %v2604 = vunpack.c.l.b16 %v1448
        %v2605 = vunpack.c.l.b16 %v1449
        %v2606 = vunpack.c.l.b16 %v1450
        %v2607 = vunpack.c.l.b16 %v1451
        %v2608 = vunpack.c.l.b16 %v1452
        %v2609 = vunpack.c.l.b16 %v1453
        %v2610 = vunpack.c.l.b16 %v1454
        %v2611 = vunpack.c.l.b16 %v1455
        %v2612 = vunpack.c.l.b16 %v1456
        %v2613 = vunpack.c.l.b16 %v1457
        %v2614 = vunpack.c.l.b16 %v1458
        %v2615 = vunpack.c.l.b16 %v1459
        %v2616 = vunpack.c.l.b16 %v1460
        %v2617 = vunpack.c.l.b16 %v1461
        %v2618 = vunpack.c.l.b16 %v1462
        %v2619 = vunpack.c.l.b16 %v1463
        %v2620 = vunpack.c.l.b16 %v1464
        %v2621 = vunpack.c.l.b16 %v1465
        %v2622 = vunpack.c.l.b16 %v1466
        %v2623 = vunpack.c.l.b16 %v1467
        %v2624 = vunpack.c.l.b16 %v1468
        %v2625 = vunpack.c.l.b16 %v1469
        %v2626 = vunpack.c.l.b16 %v1470
        %v2627 = vunpack.c.l.b16 %v1471
        %v2628 = vunpack.c.l.b16 %v1472
        %v2629 = vunpack.c.l.b16 %v1473
        %v2630 = vunpack.c.l.b16 %v1474
        %v2631 = vpack.c.b16 %v2584, %v2583
        %v2632 = vpack.c.b16 %v2586, %v2585
        %v2633 = vpack.c.b16 %v2588, %v2587
        %v2634 = vpack.c.b16 %v2590, %v2589
        %v2635 = vpack.c.b16 %v2592, %v2591
        %v2636 = vpack.c.b16 %v2594, %v2593
        %v2637 = vpack.c.b16 %v2596, %v2595
        %v2638 = vpack.c.b16 %v2598, %v2597
        %v2639 = vpack.c.b16 %v2600, %v2599
        %v2640 = vpack.c.b16 %v2602, %v2601
        %v2641 = vpack.c.b16 %v2604, %v2603
        %v2642 = vpack.c.b16 %v2606, %v2605
        %v2643 = vpack.c.b16 %v2608, %v2607
        %v2644 = vpack.c.b16 %v2610, %v2609
        %v2645 = vpack.c.b16 %v2612, %v2611
        %v2646 = vpack.c.b16 %v2614, %v2613
        %v2647 = vpack.c.b16 %v2616, %v2615
        %v2648 = vpack.c.b16 %v2618, %v2617
        %v2649 = vpack.c.b16 %v2620, %v2619
        %v2650 = vpack.c.b16 %v2622, %v2621
        %v2651 = vpack.c.b16 %v2624, %v2623
        %v2652 = vpack.c.b16 %v2626, %v2625
        %v2653 = vpack.c.b16 %v2628, %v2627
        %v2654 = vpack.c.b16 %v2630, %v2629
        %2679 = vmatpush.bf16.msra.mxu0 %v2638
        %2680 = vmatpush.bf16.msra.mxu0 %v2637
        %2681 = vmatpush.bf16.msra.mxu0 %v2636
        %2682 = vmatpush.bf16.msra.mxu0 %v2635
        %2683 = vmatpush.bf16.msra.mxu0 %v2634
        %2684 = vmatpush.bf16.msra.mxu0 %v2633
        %2685 = vmatpush.bf16.msra.mxu0 %v2632
        %2686 = vmatpush.bf16.msra.mxu0 %v2631
        %2687 = vmatmul.bf16.gmra.mxu0 %v580
        %v2688 = vpop.f32.mrf.mxu0
        %v2689 = vadd.f32 %v2256, %v2688
        %v2690 = vpop.f32.mrf.mxu0
        %v2691 = vadd.f32 %v2258, %v2690
        %2692 = vmatmul.bf16.gmra.mxu0 %v581
        %v2693 = vpop.f32.mrf.mxu0
        %v2694 = vadd.f32 %v2261, %v2693
        %v2695 = vpop.f32.mrf.mxu0
        %v2696 = vadd.f32 %v2263, %v2695
        %2697 = vmatmul.bf16.gmra.mxu0 %v582
        %v2698 = vpop.f32.mrf.mxu0
        %v2699 = vadd.f32 %v2266, %v2698
        %v2700 = vpop.f32.mrf.mxu0
        %v2701 = vadd.f32 %v2268, %v2700
        %2702 = vmatmul.bf16.gmra.mxu0 %v583
        %v2703 = vpop.f32.mrf.mxu0
        %v2704 = vadd.f32 %v2271, %v2703
        %v2705 = vpop.f32.mrf.mxu0
        %v2706 = vadd.f32 %v2273, %v2705
        %2707 = vmatmul.bf16.gmra.mxu0 %v584
        %v2708 = vpop.f32.mrf.mxu0
        %v2709 = vadd.f32 %v2276, %v2708
        %v2710 = vpop.f32.mrf.mxu0
        %v2711 = vadd.f32 %v2278, %v2710
        %2712 = vmatmul.bf16.gmra.mxu0 %v585
        %v2713 = vpop.f32.mrf.mxu0
        %v2714 = vadd.f32 %v2281, %v2713
        %v2715 = vpop.f32.mrf.mxu0
        %v2716 = vadd.f32 %v2283, %v2715
        %2717 = vmatmul.bf16.gmra.mxu0 %v586
        %v2718 = vpop.f32.mrf.mxu0
        %v2719 = vadd.f32 %v2286, %v2718
        %v2720 = vpop.f32.mrf.mxu0
        %v2721 = vadd.f32 %v2288, %v2720
        %2722 = vmatmul.bf16.gmra.mxu0 %v587
        %v2723 = vpop.f32.mrf.mxu0
        %v2724 = vadd.f32 %v2291, %v2723
        %v2725 = vpop.f32.mrf.mxu0
        %v2726 = vadd.f32 %v2293, %v2725
        %2727 = vmatmul.bf16.gmra.mxu0 %v588
        %v2728 = vpop.f32.mrf.mxu0
        %v2729 = vadd.f32 %v2296, %v2728
        %v2730 = vpop.f32.mrf.mxu0
        %v2731 = vadd.f32 %v2298, %v2730
        %2732 = vmatmul.bf16.gmra.mxu0 %v589
        %v2733 = vpop.f32.mrf.mxu0
        %v2734 = vadd.f32 %v2301, %v2733
        %v2735 = vpop.f32.mrf.mxu0
        %v2736 = vadd.f32 %v2303, %v2735
        %2737 = vmatmul.bf16.gmra.mxu0 %v590
        %v2738 = vpop.f32.mrf.mxu0
        %v2739 = vadd.f32 %v2306, %v2738
        %v2740 = vpop.f32.mrf.mxu0
        %v2741 = vadd.f32 %v2308, %v2740
        %2742 = vmatmul.bf16.gmra.mxu0 %v591
        %v2743 = vpop.f32.mrf.mxu0
        %v2744 = vadd.f32 %v2311, %v2743
        %v2745 = vpop.f32.mrf.mxu0
        %v2746 = vadd.f32 %v2313, %v2745
        %2747 = vmatmul.bf16.gmra.mxu0 %v592
        %v2748 = vpop.f32.mrf.mxu0
        %v2749 = vadd.f32 %v2316, %v2748
        %v2750 = vpop.f32.mrf.mxu0
        %v2751 = vadd.f32 %v2318, %v2750
        %2752 = vmatmul.bf16.gmra.mxu0 %v593
        %v2753 = vpop.f32.mrf.mxu0
        %v2754 = vadd.f32 %v2321, %v2753
        %v2755 = vpop.f32.mrf.mxu0
        %v2756 = vadd.f32 %v2323, %v2755
        %2757 = vmatmul.bf16.gmra.mxu0 %v594
        %v2758 = vpop.f32.mrf.mxu0
        %v2759 = vadd.f32 %v2326, %v2758
        %v2760 = vpop.f32.mrf.mxu0
        %v2761 = vadd.f32 %v2328, %v2760
        %2762 = vmatmul.bf16.gmra.mxu0 %v595
        %v2763 = vpop.f32.mrf.mxu0
        %v2764 = vadd.f32 %v2331, %v2763
        %v2765 = vpop.f32.mrf.mxu0
        %v2766 = vadd.f32 %v2333, %v2765
        %2767 = vmatmul.bf16.gmra.mxu0 %v596
        %v2768 = vpop.f32.mrf.mxu0
        %v2769 = vadd.f32 %v2336, %v2768
        %v2770 = vpop.f32.mrf.mxu0
        %v2771 = vadd.f32 %v2338, %v2770
        %2772 = vmatmul.bf16.gmra.mxu0 %v597
        %v2773 = vpop.f32.mrf.mxu0
        %v2774 = vadd.f32 %v2341, %v2773
        %v2775 = vpop.f32.mrf.mxu0
        %v2776 = vadd.f32 %v2343, %v2775
        %2777 = vmatmul.bf16.gmra.mxu0 %v598
        %v2778 = vpop.f32.mrf.mxu0
        %v2779 = vadd.f32 %v2346, %v2778
        %v2780 = vpop.f32.mrf.mxu0
        %v2781 = vadd.f32 %v2348, %v2780
        %2782 = vmatmul.bf16.gmra.mxu0 %v599
        %v2783 = vpop.f32.mrf.mxu0
        %v2784 = vadd.f32 %v2351, %v2783
        %v2785 = vpop.f32.mrf.mxu0
        %v2786 = vadd.f32 %v2353, %v2785
        %2787 = vmatmul.bf16.gmra.mxu0 %v600
        %v2788 = vpop.f32.mrf.mxu0
        %v2789 = vadd.f32 %v2356, %v2788
        %v2790 = vpop.f32.mrf.mxu0
        %v2791 = vadd.f32 %v2358, %v2790
        %2792 = vmatmul.bf16.gmra.mxu0 %v601
        %v2793 = vpop.f32.mrf.mxu0
        %v2794 = vadd.f32 %v2361, %v2793
        %v2795 = vpop.f32.mrf.mxu0
        %v2796 = vadd.f32 %v2363, %v2795
        %2797 = vmatmul.bf16.gmra.mxu0 %v602
        %v2798 = vpop.f32.mrf.mxu0
        %v2799 = vadd.f32 %v2366, %v2798
        %v2800 = vpop.f32.mrf.mxu0
        %v2801 = vadd.f32 %v2368, %v2800
        %2802 = vmatmul.bf16.gmra.mxu0 %v603
        %v2803 = vpop.f32.mrf.mxu0
        %v2804 = vadd.f32 %v2371, %v2803
        %v2805 = vpop.f32.mrf.mxu0
        %v2806 = vadd.f32 %v2373, %v2805
        %2807 = vmatmul.bf16.gmra.mxu0 %v604
        %v2808 = vpop.f32.mrf.mxu0
        %v2809 = vadd.f32 %v2376, %v2808
        %v2810 = vpop.f32.mrf.mxu0
        %v2811 = vadd.f32 %v2378, %v2810
        %2812 = vmatmul.bf16.gmra.mxu0 %v605
        %v2813 = vpop.f32.mrf.mxu0
        %v2814 = vadd.f32 %v2381, %v2813
        %v2815 = vpop.f32.mrf.mxu0
        %v2816 = vadd.f32 %v2383, %v2815
        %2817 = vmatmul.bf16.gmra.mxu0 %v606
        %v2818 = vpop.f32.mrf.mxu0
        %v2819 = vadd.f32 %v2386, %v2818
        %v2820 = vpop.f32.mrf.mxu0
        %v2821 = vadd.f32 %v2388, %v2820
        %2822 = vmatmul.bf16.gmra.mxu0 %v607
        %v2823 = vpop.f32.mrf.mxu0
        %v2824 = vadd.f32 %v2391, %v2823
        %v2825 = vpop.f32.mrf.mxu0
        %v2826 = vadd.f32 %v2393, %v2825
        %2827 = vmatmul.bf16.gmra.mxu0 %v608
        %v2828 = vpop.f32.mrf.mxu0
        %v2829 = vadd.f32 %v2396, %v2828
        %v2830 = vpop.f32.mrf.mxu0
        %v2831 = vadd.f32 %v2398, %v2830
        %2832 = vmatmul.bf16.gmra.mxu0 %v609
        %v2833 = vpop.f32.mrf.mxu0
        %v2834 = vadd.f32 %v2401, %v2833
        %v2835 = vpop.f32.mrf.mxu0
        %v2836 = vadd.f32 %v2403, %v2835
        %2837 = vmatmul.bf16.gmra.mxu0 %v610
        %v2838 = vpop.f32.mrf.mxu0
        %v2839 = vadd.f32 %v2406, %v2838
        %v2840 = vpop.f32.mrf.mxu0
        %v2841 = vadd.f32 %v2408, %v2840
        %2842 = vmatmul.bf16.gmra.mxu0 %v611
        %v2843 = vpop.f32.mrf.mxu0
        %v2844 = vadd.f32 %v2411, %v2843
        %v2845 = vpop.f32.mrf.mxu0
        %v2846 = vadd.f32 %v2413, %v2845
        %2847 = vmatmul.bf16.gmra.mxu0 %v612
        %v2848 = vpop.f32.mrf.mxu0
        %v2849 = vadd.f32 %v2416, %v2848
        %v2850 = vpop.f32.mrf.mxu0
        %v2851 = vadd.f32 %v2418, %v2850
        %2852 = vmatmul.bf16.gmra.mxu0 %v613
        %v2853 = vpop.f32.mrf.mxu0
        %v2854 = vadd.f32 %v2421, %v2853
        %v2855 = vpop.f32.mrf.mxu0
        %v2856 = vadd.f32 %v2423, %v2855
        %2857 = vmatmul.bf16.gmra.mxu0 %v614
        %v2858 = vpop.f32.mrf.mxu0
        %v2859 = vadd.f32 %v2426, %v2858
        %v2860 = vpop.f32.mrf.mxu0
        %v2861 = vadd.f32 %v2428, %v2860
        %2862 = vmatmul.bf16.gmra.mxu0 %v615
        %v2863 = vpop.f32.mrf.mxu0
        %v2864 = vadd.f32 %v2431, %v2863
        %v2865 = vpop.f32.mrf.mxu0
        %v2866 = vadd.f32 %v2433, %v2865
        %2867 = vmatmul.bf16.gmra.mxu0 %v616
        %v2868 = vpop.f32.mrf.mxu0
        %v2869 = vadd.f32 %v2436, %v2868
        %v2870 = vpop.f32.mrf.mxu0
        %v2871 = vadd.f32 %v2438, %v2870
        %2872 = vmatmul.bf16.gmra.mxu0 %v617
        %v2873 = vpop.f32.mrf.mxu0
        %v2874 = vadd.f32 %v2441, %v2873
        %v2875 = vpop.f32.mrf.mxu0
        %v2876 = vadd.f32 %v2443, %v2875
        %2877 = vmatmul.bf16.gmra.mxu0 %v618
        %v2878 = vpop.f32.mrf.mxu0
        %v2879 = vadd.f32 %v2446, %v2878
        %v2880 = vpop.f32.mrf.mxu0
        %v2881 = vadd.f32 %v2448, %v2880
        %2882 = vmatmul.bf16.gmra.mxu0 %v619
        %v2883 = vpop.f32.mrf.mxu0
        %v2884 = vadd.f32 %v2451, %v2883
        %v2885 = vpop.f32.mrf.mxu0
        %v2886 = vadd.f32 %v2453, %v2885
        %2887 = vmatmul.bf16.gmra.mxu0 %v620
        %v2888 = vpop.f32.mrf.mxu0
        %v2889 = vadd.f32 %v2456, %v2888
        %v2890 = vpop.f32.mrf.mxu0
        %v2891 = vadd.f32 %v2458, %v2890
        %2892 = vmatmul.bf16.gmra.mxu0 %v621
        %v2893 = vpop.f32.mrf.mxu0
        %v2894 = vadd.f32 %v2461, %v2893
        %v2895 = vpop.f32.mrf.mxu0
        %v2896 = vadd.f32 %v2463, %v2895
        %2897 = vmatmul.bf16.gmra.mxu0 %v622
        %v2898 = vpop.f32.mrf.mxu0
        %v2899 = vadd.f32 %v2466, %v2898
        %v2900 = vpop.f32.mrf.mxu0
        %v2901 = vadd.f32 %v2468, %v2900
        %2902 = vmatmul.bf16.gmra.mxu0 %v623
        %v2903 = vpop.f32.mrf.mxu0
        %v2904 = vadd.f32 %v2471, %v2903
        %v2905 = vpop.f32.mrf.mxu0
        %v2906 = vadd.f32 %v2473, %v2905
        %2907 = vmatmul.bf16.gmra.mxu0 %v624
        %v2908 = vpop.f32.mrf.mxu0
        %v2909 = vadd.f32 %v2476, %v2908
        %v2910 = vpop.f32.mrf.mxu0
        %v2911 = vadd.f32 %v2478, %v2910
        %2912 = vmatmul.bf16.gmra.mxu0 %v625
        %v2913 = vpop.f32.mrf.mxu0
        %v2914 = vadd.f32 %v2481, %v2913
        %v2915 = vpop.f32.mrf.mxu0
        %v2916 = vadd.f32 %v2483, %v2915
        %2917 = vmatmul.bf16.gmra.mxu0 %v626
        %v2918 = vpop.f32.mrf.mxu0
        %v2919 = vadd.f32 %v2486, %v2918
        %v2920 = vpop.f32.mrf.mxu0
        %v2921 = vadd.f32 %v2488, %v2920
        %2922 = vmatmul.bf16.gmra.mxu0 %v627
        %v2923 = vpop.f32.mrf.mxu0
        %v2924 = vadd.f32 %v2491, %v2923
        %v2925 = vpop.f32.mrf.mxu0
        %v2926 = vadd.f32 %v2493, %v2925
        %2927 = vmatmul.bf16.gmra.mxu0 %v628
        %v2928 = vpop.f32.mrf.mxu0
        %v2929 = vadd.f32 %v2496, %v2928
        %v2930 = vpop.f32.mrf.mxu0
        %v2931 = vadd.f32 %v2498, %v2930
        %2932 = vmatmul.bf16.gmra.mxu0 %v629
        %v2933 = vpop.f32.mrf.mxu0
        %v2934 = vadd.f32 %v2501, %v2933
        %v2935 = vpop.f32.mrf.mxu0
        %v2936 = vadd.f32 %v2503, %v2935
        %2937 = vmatmul.bf16.gmra.mxu0 %v630
        %v2938 = vpop.f32.mrf.mxu0
        %v2939 = vadd.f32 %v2506, %v2938
        %v2940 = vpop.f32.mrf.mxu0
        %v2941 = vadd.f32 %v2508, %v2940
        %2942 = vmatmul.bf16.gmra.mxu0 %v631
        %v2943 = vpop.f32.mrf.mxu0
        %v2944 = vadd.f32 %v2511, %v2943
        %v2945 = vpop.f32.mrf.mxu0
        %v2946 = vadd.f32 %v2513, %v2945
        %2947 = vmatmul.bf16.gmra.mxu0 %v632
        %v2948 = vpop.f32.mrf.mxu0
        %v2949 = vadd.f32 %v2516, %v2948
        %v2950 = vpop.f32.mrf.mxu0
        %v2951 = vadd.f32 %v2518, %v2950
        %2952 = vmatmul.bf16.gmra.mxu0 %v633
        %v2953 = vpop.f32.mrf.mxu0
        %v2954 = vadd.f32 %v2521, %v2953
        %v2955 = vpop.f32.mrf.mxu0
        %v2956 = vadd.f32 %v2523, %v2955
        %2957 = vmatmul.bf16.gmra.mxu0 %v634
        %v2958 = vpop.f32.mrf.mxu0
        %v2959 = vadd.f32 %v2526, %v2958
        %v2960 = vpop.f32.mrf.mxu0
        %v2961 = vadd.f32 %v2528, %v2960
        %2962 = vmatmul.bf16.gmra.mxu0 %v635
        %v2963 = vpop.f32.mrf.mxu0
        %v2964 = vadd.f32 %v2531, %v2963
        %v2965 = vpop.f32.mrf.mxu0
        %v2966 = vadd.f32 %v2533, %v2965
        %2967 = vdwg.mxu0
        %2968 = vmatpush.bf16.msra.mxu0 %v2646
        %2969 = vmatpush.bf16.msra.mxu0 %v2645
        %2970 = vmatpush.bf16.msra.mxu0 %v2644
        %2971 = vmatpush.bf16.msra.mxu0 %v2643
        %2972 = vmatpush.bf16.msra.mxu0 %v2642
        %2973 = vmatpush.bf16.msra.mxu0 %v2641
        %2974 = vmatpush.bf16.msra.mxu0 %v2640
        %2975 = vmatpush.bf16.msra.mxu0 %v2639
        %2976 = vmatmul.bf16.gmra.mxu0 %v652
        %v2977 = vpop.f32.mrf.mxu0
        %v2978 = vadd.f32 %v2689, %v2977
        %v2979 = vpop.f32.mrf.mxu0
        %v2980 = vadd.f32 %v2691, %v2979
        %2981 = vmatmul.bf16.gmra.mxu0 %v660
        %v2982 = vpop.f32.mrf.mxu0
        %v2983 = vadd.f32 %v2694, %v2982
        %v2984 = vpop.f32.mrf.mxu0
        %v2985 = vadd.f32 %v2696, %v2984
        %2986 = vmatmul.bf16.gmra.mxu0 %v668
        %v2987 = vpop.f32.mrf.mxu0
        %v2988 = vadd.f32 %v2699, %v2987
        %v2989 = vpop.f32.mrf.mxu0
        %v2990 = vadd.f32 %v2701, %v2989
        %2991 = vmatmul.bf16.gmra.mxu0 %v676
        %v2992 = vpop.f32.mrf.mxu0
        %v2993 = vadd.f32 %v2704, %v2992
        %v2994 = vpop.f32.mrf.mxu0
        %v2995 = vadd.f32 %v2706, %v2994
        %2996 = vmatmul.bf16.gmra.mxu0 %v684
        %v2997 = vpop.f32.mrf.mxu0
        %v2998 = vadd.f32 %v2709, %v2997
        %v2999 = vpop.f32.mrf.mxu0
        %v3000 = vadd.f32 %v2711, %v2999
        %3001 = vmatmul.bf16.gmra.mxu0 %v692
        %v3002 = vpop.f32.mrf.mxu0
        %v3003 = vadd.f32 %v2714, %v3002
        %v3004 = vpop.f32.mrf.mxu0
        %v3005 = vadd.f32 %v2716, %v3004
        %3006 = vmatmul.bf16.gmra.mxu0 %v700
        %v3007 = vpop.f32.mrf.mxu0
        %v3008 = vadd.f32 %v2719, %v3007
        %v3009 = vpop.f32.mrf.mxu0
        %v3010 = vadd.f32 %v2721, %v3009
        %3011 = vmatmul.bf16.gmra.mxu0 %v708
        %v3012 = vpop.f32.mrf.mxu0
        %v3013 = vadd.f32 %v2724, %v3012
        %v3014 = vpop.f32.mrf.mxu0
        %v3015 = vadd.f32 %v2726, %v3014
        %3016 = vmatmul.bf16.gmra.mxu0 %v716
        %v3017 = vpop.f32.mrf.mxu0
        %v3018 = vadd.f32 %v2729, %v3017
        %v3019 = vpop.f32.mrf.mxu0
        %v3020 = vadd.f32 %v2731, %v3019
        %3021 = vmatmul.bf16.gmra.mxu0 %v724
        %v3022 = vpop.f32.mrf.mxu0
        %v3023 = vadd.f32 %v2734, %v3022
        %v3024 = vpop.f32.mrf.mxu0
        %v3025 = vadd.f32 %v2736, %v3024
        %3026 = vmatmul.bf16.gmra.mxu0 %v732
        %v3027 = vpop.f32.mrf.mxu0
        %v3028 = vadd.f32 %v2739, %v3027
        %v3029 = vpop.f32.mrf.mxu0
        %v3030 = vadd.f32 %v2741, %v3029
        %3031 = vmatmul.bf16.gmra.mxu0 %v740
        %v3032 = vpop.f32.mrf.mxu0
        %v3033 = vadd.f32 %v2744, %v3032
        %v3034 = vpop.f32.mrf.mxu0
        %v3035 = vadd.f32 %v2746, %v3034
        %3036 = vmatmul.bf16.gmra.mxu0 %v748
        %v3037 = vpop.f32.mrf.mxu0
        %v3038 = vadd.f32 %v2749, %v3037
        %v3039 = vpop.f32.mrf.mxu0
        %v3040 = vadd.f32 %v2751, %v3039
        %3041 = vmatmul.bf16.gmra.mxu0 %v756
        %v3042 = vpop.f32.mrf.mxu0
        %v3043 = vadd.f32 %v2754, %v3042
        %v3044 = vpop.f32.mrf.mxu0
        %v3045 = vadd.f32 %v2756, %v3044
        %3046 = vmatmul.bf16.gmra.mxu0 %v764
        %v3047 = vpop.f32.mrf.mxu0
        %v3048 = vadd.f32 %v2759, %v3047
        %v3049 = vpop.f32.mrf.mxu0
        %v3050 = vadd.f32 %v2761, %v3049
        %3051 = vmatmul.bf16.gmra.mxu0 %v772
        %v3052 = vpop.f32.mrf.mxu0
        %v3053 = vadd.f32 %v2764, %v3052
        %v3054 = vpop.f32.mrf.mxu0
        %v3055 = vadd.f32 %v2766, %v3054
        %3056 = vmatmul.bf16.gmra.mxu0 %v780
        %v3057 = vpop.f32.mrf.mxu0
        %v3058 = vadd.f32 %v2769, %v3057
        %v3059 = vpop.f32.mrf.mxu0
        %v3060 = vadd.f32 %v2771, %v3059
        %3061 = vmatmul.bf16.gmra.mxu0 %v788
        %v3062 = vpop.f32.mrf.mxu0
        %v3063 = vadd.f32 %v2774, %v3062
        %v3064 = vpop.f32.mrf.mxu0
        %v3065 = vadd.f32 %v2776, %v3064
        %3066 = vmatmul.bf16.gmra.mxu0 %v796
        %v3067 = vpop.f32.mrf.mxu0
        %v3068 = vadd.f32 %v2779, %v3067
        %v3069 = vpop.f32.mrf.mxu0
        %v3070 = vadd.f32 %v2781, %v3069
        %3071 = vmatmul.bf16.gmra.mxu0 %v804
        %v3072 = vpop.f32.mrf.mxu0
        %v3073 = vadd.f32 %v2784, %v3072
        %v3074 = vpop.f32.mrf.mxu0
        %v3075 = vadd.f32 %v2786, %v3074
        %3076 = vmatmul.bf16.gmra.mxu0 %v812
        %v3077 = vpop.f32.mrf.mxu0
        %v3078 = vadd.f32 %v2789, %v3077
        %v3079 = vpop.f32.mrf.mxu0
        %v3080 = vadd.f32 %v2791, %v3079
        %3081 = vmatmul.bf16.gmra.mxu0 %v820
        %v3082 = vpop.f32.mrf.mxu0
        %v3083 = vadd.f32 %v2794, %v3082
        %v3084 = vpop.f32.mrf.mxu0
        %v3085 = vadd.f32 %v2796, %v3084
        %3086 = vmatmul.bf16.gmra.mxu0 %v828
        %v3087 = vpop.f32.mrf.mxu0
        %v3088 = vadd.f32 %v2799, %v3087
        %v3089 = vpop.f32.mrf.mxu0
        %v3090 = vadd.f32 %v2801, %v3089
        %3091 = vmatmul.bf16.gmra.mxu0 %v836
        %v3092 = vpop.f32.mrf.mxu0
        %v3093 = vadd.f32 %v2804, %v3092
        %v3094 = vpop.f32.mrf.mxu0
        %v3095 = vadd.f32 %v2806, %v3094
        %3096 = vmatmul.bf16.gmra.mxu0 %v844
        %v3097 = vpop.f32.mrf.mxu0
        %v3098 = vadd.f32 %v2809, %v3097
        %v3099 = vpop.f32.mrf.mxu0
        %v3100 = vadd.f32 %v2811, %v3099
        %3101 = vmatmul.bf16.gmra.mxu0 %v852
        %v3102 = vpop.f32.mrf.mxu0
        %v3103 = vadd.f32 %v2814, %v3102
        %v3104 = vpop.f32.mrf.mxu0
        %v3105 = vadd.f32 %v2816, %v3104
        %3106 = vmatmul.bf16.gmra.mxu0 %v860
        %v3107 = vpop.f32.mrf.mxu0
        %v3108 = vadd.f32 %v2819, %v3107
        %v3109 = vpop.f32.mrf.mxu0
        %v3110 = vadd.f32 %v2821, %v3109
        %3111 = vmatmul.bf16.gmra.mxu0 %v868
        %v3112 = vpop.f32.mrf.mxu0
        %v3113 = vadd.f32 %v2824, %v3112
        %v3114 = vpop.f32.mrf.mxu0
        %v3115 = vadd.f32 %v2826, %v3114
        %3116 = vmatmul.bf16.gmra.mxu0 %v876
        %v3117 = vpop.f32.mrf.mxu0
        %v3118 = vadd.f32 %v2829, %v3117
        %v3119 = vpop.f32.mrf.mxu0
        %v3120 = vadd.f32 %v2831, %v3119
        %3121 = vmatmul.bf16.gmra.mxu0 %v884
        %v3122 = vpop.f32.mrf.mxu0
        %v3123 = vadd.f32 %v2834, %v3122
        %v3124 = vpop.f32.mrf.mxu0
        %v3125 = vadd.f32 %v2836, %v3124
        %3126 = vmatmul.bf16.gmra.mxu0 %v892
        %v3127 = vpop.f32.mrf.mxu0
        %v3128 = vadd.f32 %v2839, %v3127
        %v3129 = vpop.f32.mrf.mxu0
        %v3130 = vadd.f32 %v2841, %v3129
        %3131 = vmatmul.bf16.gmra.mxu0 %v900
        %v3132 = vpop.f32.mrf.mxu0
        %v3133 = vadd.f32 %v2844, %v3132
        %v3134 = vpop.f32.mrf.mxu0
        %v3135 = vadd.f32 %v2846, %v3134
        %3136 = vmatmul.bf16.gmra.mxu0 %v908
        %v3137 = vpop.f32.mrf.mxu0
        %v3138 = vadd.f32 %v2849, %v3137
        %v3139 = vpop.f32.mrf.mxu0
        %v3140 = vadd.f32 %v2851, %v3139
        %3141 = vmatmul.bf16.gmra.mxu0 %v916
        %v3142 = vpop.f32.mrf.mxu0
        %v3143 = vadd.f32 %v2854, %v3142
        %v3144 = vpop.f32.mrf.mxu0
        %v3145 = vadd.f32 %v2856, %v3144
        %3146 = vmatmul.bf16.gmra.mxu0 %v924
        %v3147 = vpop.f32.mrf.mxu0
        %v3148 = vadd.f32 %v2859, %v3147
        %v3149 = vpop.f32.mrf.mxu0
        %v3150 = vadd.f32 %v2861, %v3149
        %3151 = vmatmul.bf16.gmra.mxu0 %v932
        %v3152 = vpop.f32.mrf.mxu0
        %v3153 = vadd.f32 %v2864, %v3152
        %v3154 = vpop.f32.mrf.mxu0
        %v3155 = vadd.f32 %v2866, %v3154
        %3156 = vmatmul.bf16.gmra.mxu0 %v940
        %v3157 = vpop.f32.mrf.mxu0
        %v3158 = vadd.f32 %v2869, %v3157
        %v3159 = vpop.f32.mrf.mxu0
        %v3160 = vadd.f32 %v2871, %v3159
        %3161 = vmatmul.bf16.gmra.mxu0 %v948
        %v3162 = vpop.f32.mrf.mxu0
        %v3163 = vadd.f32 %v2874, %v3162
        %v3164 = vpop.f32.mrf.mxu0
        %v3165 = vadd.f32 %v2876, %v3164
        %3166 = vmatmul.bf16.gmra.mxu0 %v956
        %v3167 = vpop.f32.mrf.mxu0
        %v3168 = vadd.f32 %v2879, %v3167
        %v3169 = vpop.f32.mrf.mxu0
        %v3170 = vadd.f32 %v2881, %v3169
        %3171 = vmatmul.bf16.gmra.mxu0 %v964
        %v3172 = vpop.f32.mrf.mxu0
        %v3173 = vadd.f32 %v2884, %v3172
        %v3174 = vpop.f32.mrf.mxu0
        %v3175 = vadd.f32 %v2886, %v3174
        %3176 = vmatmul.bf16.gmra.mxu0 %v972
        %v3177 = vpop.f32.mrf.mxu0
        %v3178 = vadd.f32 %v2889, %v3177
        %v3179 = vpop.f32.mrf.mxu0
        %v3180 = vadd.f32 %v2891, %v3179
        %3181 = vmatmul.bf16.gmra.mxu0 %v980
        %v3182 = vpop.f32.mrf.mxu0
        %v3183 = vadd.f32 %v2894, %v3182
        %v3184 = vpop.f32.mrf.mxu0
        %v3185 = vadd.f32 %v2896, %v3184
        %3186 = vmatmul.bf16.gmra.mxu0 %v988
        %v3187 = vpop.f32.mrf.mxu0
        %v3188 = vadd.f32 %v2899, %v3187
        %v3189 = vpop.f32.mrf.mxu0
        %v3190 = vadd.f32 %v2901, %v3189
        %3191 = vmatmul.bf16.gmra.mxu0 %v996
        %v3192 = vpop.f32.mrf.mxu0
        %v3193 = vadd.f32 %v2904, %v3192
        %v3194 = vpop.f32.mrf.mxu0
        %v3195 = vadd.f32 %v2906, %v3194
        %3196 = vmatmul.bf16.gmra.mxu0 %v1004
        %v3197 = vpop.f32.mrf.mxu0
        %v3198 = vadd.f32 %v2909, %v3197
        %v3199 = vpop.f32.mrf.mxu0
        %v3200 = vadd.f32 %v2911, %v3199
        %3201 = vmatmul.bf16.gmra.mxu0 %v1012
        %v3202 = vpop.f32.mrf.mxu0
        %v3203 = vadd.f32 %v2914, %v3202
        %v3204 = vpop.f32.mrf.mxu0
        %v3205 = vadd.f32 %v2916, %v3204
        %3206 = vmatmul.bf16.gmra.mxu0 %v1020
        %v3207 = vpop.f32.mrf.mxu0
        %v3208 = vadd.f32 %v2919, %v3207
        %v3209 = vpop.f32.mrf.mxu0
        %v3210 = vadd.f32 %v2921, %v3209
        %3211 = vmatmul.bf16.gmra.mxu0 %v1028
        %v3212 = vpop.f32.mrf.mxu0
        %v3213 = vadd.f32 %v2924, %v3212
        %v3214 = vpop.f32.mrf.mxu0
        %v3215 = vadd.f32 %v2926, %v3214
        %3216 = vmatmul.bf16.gmra.mxu0 %v1036
        %v3217 = vpop.f32.mrf.mxu0
        %v3218 = vadd.f32 %v2929, %v3217
        %v3219 = vpop.f32.mrf.mxu0
        %v3220 = vadd.f32 %v2931, %v3219
        %3221 = vmatmul.bf16.gmra.mxu0 %v1044
        %v3222 = vpop.f32.mrf.mxu0
        %v3223 = vadd.f32 %v2934, %v3222
        %v3224 = vpop.f32.mrf.mxu0
        %v3225 = vadd.f32 %v2936, %v3224
        %3226 = vmatmul.bf16.gmra.mxu0 %v1052
        %v3227 = vpop.f32.mrf.mxu0
        %v3228 = vadd.f32 %v2939, %v3227
        %v3229 = vpop.f32.mrf.mxu0
        %v3230 = vadd.f32 %v2941, %v3229
        %3231 = vmatmul.bf16.gmra.mxu0 %v1060
        %v3232 = vpop.f32.mrf.mxu0
        %v3233 = vadd.f32 %v2944, %v3232
        %v3234 = vpop.f32.mrf.mxu0
        %v3235 = vadd.f32 %v2946, %v3234
        %3236 = vmatmul.bf16.gmra.mxu0 %v1068
        %v3237 = vpop.f32.mrf.mxu0
        %v3238 = vadd.f32 %v2949, %v3237
        %v3239 = vpop.f32.mrf.mxu0
        %v3240 = vadd.f32 %v2951, %v3239
        %3241 = vmatmul.bf16.gmra.mxu0 %v1076
        %v3242 = vpop.f32.mrf.mxu0
        %v3243 = vadd.f32 %v2954, %v3242
        %v3244 = vpop.f32.mrf.mxu0
        %v3245 = vadd.f32 %v2956, %v3244
        %3246 = vmatmul.bf16.gmra.mxu0 %v1084
        %v3247 = vpop.f32.mrf.mxu0
        %v3248 = vadd.f32 %v2959, %v3247
        %v3249 = vpop.f32.mrf.mxu0
        %v3250 = vadd.f32 %v2961, %v3249
        %3251 = vmatmul.bf16.gmra.mxu0 %v1092
        %v3252 = vpop.f32.mrf.mxu0
        %v3253 = vadd.f32 %v2964, %v3252
        %v3254 = vpop.f32.mrf.mxu0
        %v3255 = vadd.f32 %v2966, %v3254
        %3256 = vdwg.mxu0
        %3257 = vmatpush.bf16.msra.mxu0 %v2654
        %3258 = vmatpush.bf16.msra.mxu0 %v2653
        %3259 = vmatpush.bf16.msra.mxu0 %v2652
        %3260 = vmatpush.bf16.msra.mxu0 %v2651
        %3261 = vmatpush.bf16.msra.mxu0 %v2650
        %3262 = vmatpush.bf16.msra.mxu0 %v2649
        %3263 = vmatpush.bf16.msra.mxu0 %v2648
        %3264 = vmatpush.bf16.msra.mxu0 %v2647
        %3265 = vmatmul.bf16.gmra.mxu0 %v1186
        %v3266 = vpop.f32.mrf.mxu0
        %v3267 = vadd.f32 %v2978, %v3266
        %v3268 = vpop.f32.mrf.mxu0
        %v3269 = vadd.f32 %v2980, %v3268
        %3270 = vmatmul.bf16.gmra.mxu0 %v1188
        %v3271 = vpop.f32.mrf.mxu0
        %v3272 = vadd.f32 %v2983, %v3271
        %v3273 = vpop.f32.mrf.mxu0
        %v3274 = vadd.f32 %v2985, %v3273
        %3275 = vmatmul.bf16.gmra.mxu0 %v1190
        %v3276 = vpop.f32.mrf.mxu0
        %v3277 = vadd.f32 %v2988, %v3276
        %v3278 = vpop.f32.mrf.mxu0
        %v3279 = vadd.f32 %v2990, %v3278
        %3280 = vmatmul.bf16.gmra.mxu0 %v1192
        %v3281 = vpop.f32.mrf.mxu0
        %v3282 = vadd.f32 %v2993, %v3281
        %v3283 = vpop.f32.mrf.mxu0
        %v3284 = vadd.f32 %v2995, %v3283
        %3285 = vmatmul.bf16.gmra.mxu0 %v1194
        %v3286 = vpop.f32.mrf.mxu0
        %v3287 = vadd.f32 %v2998, %v3286
        %v3288 = vpop.f32.mrf.mxu0
        %v3289 = vadd.f32 %v3000, %v3288
        %3290 = vmatmul.bf16.gmra.mxu0 %v1196
        %v3291 = vpop.f32.mrf.mxu0
        %v3292 = vadd.f32 %v3003, %v3291
        %v3293 = vpop.f32.mrf.mxu0
        %v3294 = vadd.f32 %v3005, %v3293
        %3295 = vmatmul.bf16.gmra.mxu0 %v1198
        %v3296 = vpop.f32.mrf.mxu0
        %v3297 = vadd.f32 %v3008, %v3296
        %v3298 = vpop.f32.mrf.mxu0
        %v3299 = vadd.f32 %v3010, %v3298
        %3300 = vmatmul.bf16.gmra.mxu0 %v1200
        %v3301 = vpop.f32.mrf.mxu0
        %v3302 = vadd.f32 %v3013, %v3301
        %v3303 = vpop.f32.mrf.mxu0
        %v3304 = vadd.f32 %v3015, %v3303
        %3305 = vmatmul.bf16.gmra.mxu0 %v1202
        %v3306 = vpop.f32.mrf.mxu0
        %v3307 = vadd.f32 %v3018, %v3306
        %v3308 = vpop.f32.mrf.mxu0
        %v3309 = vadd.f32 %v3020, %v3308
        %3310 = vmatmul.bf16.gmra.mxu0 %v1204
        %v3311 = vpop.f32.mrf.mxu0
        %v3312 = vadd.f32 %v3023, %v3311
        %v3313 = vpop.f32.mrf.mxu0
        %v3314 = vadd.f32 %v3025, %v3313
        %3315 = vmatmul.bf16.gmra.mxu0 %v1206
        %v3316 = vpop.f32.mrf.mxu0
        %v3317 = vadd.f32 %v3028, %v3316
        %v3318 = vpop.f32.mrf.mxu0
        %v3319 = vadd.f32 %v3030, %v3318
        %3320 = vmatmul.bf16.gmra.mxu0 %v1208
        %v3321 = vpop.f32.mrf.mxu0
        %v3322 = vadd.f32 %v3033, %v3321
        %v3323 = vpop.f32.mrf.mxu0
        %v3324 = vadd.f32 %v3035, %v3323
        %3325 = vmatmul.bf16.gmra.mxu0 %v1210
        %v3326 = vpop.f32.mrf.mxu0
        %v3327 = vadd.f32 %v3038, %v3326
        %v3328 = vpop.f32.mrf.mxu0
        %v3329 = vadd.f32 %v3040, %v3328
        %3330 = vmatmul.bf16.gmra.mxu0 %v1212
        %v3331 = vpop.f32.mrf.mxu0
        %v3332 = vadd.f32 %v3043, %v3331
        %v3333 = vpop.f32.mrf.mxu0
        %v3334 = vadd.f32 %v3045, %v3333
        %3335 = vmatmul.bf16.gmra.mxu0 %v1214
        %v3336 = vpop.f32.mrf.mxu0
        %v3337 = vadd.f32 %v3048, %v3336
        %v3338 = vpop.f32.mrf.mxu0
        %v3339 = vadd.f32 %v3050, %v3338
        %3340 = vmatmul.bf16.gmra.mxu0 %v1216
        %v3341 = vpop.f32.mrf.mxu0
        %v3342 = vadd.f32 %v3053, %v3341
        %v3343 = vpop.f32.mrf.mxu0
        %v3344 = vadd.f32 %v3055, %v3343
        %3345 = vmatmul.bf16.gmra.mxu0 %v1218
        %v3346 = vpop.f32.mrf.mxu0
        %v3347 = vadd.f32 %v3058, %v3346
        %v3348 = vpop.f32.mrf.mxu0
        %v3349 = vadd.f32 %v3060, %v3348
        %3350 = vmatmul.bf16.gmra.mxu0 %v1220
        %v3351 = vpop.f32.mrf.mxu0
        %v3352 = vadd.f32 %v3063, %v3351
        %v3353 = vpop.f32.mrf.mxu0
        %v3354 = vadd.f32 %v3065, %v3353
        %3355 = vmatmul.bf16.gmra.mxu0 %v1222
        %v3356 = vpop.f32.mrf.mxu0
        %v3357 = vadd.f32 %v3068, %v3356
        %v3358 = vpop.f32.mrf.mxu0
        %v3359 = vadd.f32 %v3070, %v3358
        %3360 = vmatmul.bf16.gmra.mxu0 %v1224
        %v3361 = vpop.f32.mrf.mxu0
        %v3362 = vadd.f32 %v3073, %v3361
        %v3363 = vpop.f32.mrf.mxu0
        %v3364 = vadd.f32 %v3075, %v3363
        %3365 = vmatmul.bf16.gmra.mxu0 %v1226
        %v3366 = vpop.f32.mrf.mxu0
        %v3367 = vadd.f32 %v3078, %v3366
        %v3368 = vpop.f32.mrf.mxu0
        %v3369 = vadd.f32 %v3080, %v3368
        %3370 = vmatmul.bf16.gmra.mxu0 %v1228
        %v3371 = vpop.f32.mrf.mxu0
        %v3372 = vadd.f32 %v3083, %v3371
        %v3373 = vpop.f32.mrf.mxu0
        %v3374 = vadd.f32 %v3085, %v3373
        %3375 = vmatmul.bf16.gmra.mxu0 %v1230
        %v3376 = vpop.f32.mrf.mxu0
        %v3377 = vadd.f32 %v3088, %v3376
        %v3378 = vpop.f32.mrf.mxu0
        %v3379 = vadd.f32 %v3090, %v3378
        %3380 = vmatmul.bf16.gmra.mxu0 %v1232
        %v3381 = vpop.f32.mrf.mxu0
        %v3382 = vadd.f32 %v3093, %v3381
        %v3383 = vpop.f32.mrf.mxu0
        %v3384 = vadd.f32 %v3095, %v3383
        %3385 = vmatmul.bf16.gmra.mxu0 %v1234
        %v3386 = vpop.f32.mrf.mxu0
        %v3387 = vadd.f32 %v3098, %v3386
        %v3388 = vpop.f32.mrf.mxu0
        %v3389 = vadd.f32 %v3100, %v3388
        %3390 = vmatmul.bf16.gmra.mxu0 %v1236
        %v3391 = vpop.f32.mrf.mxu0
        %v3392 = vadd.f32 %v3103, %v3391
        %v3393 = vpop.f32.mrf.mxu0
        %v3394 = vadd.f32 %v3105, %v3393
        %3395 = vmatmul.bf16.gmra.mxu0 %v1238
        %v3396 = vpop.f32.mrf.mxu0
        %v3397 = vadd.f32 %v3108, %v3396
        %v3398 = vpop.f32.mrf.mxu0
        %v3399 = vadd.f32 %v3110, %v3398
        %3400 = vmatmul.bf16.gmra.mxu0 %v1240
        %v3401 = vpop.f32.mrf.mxu0
        %v3402 = vadd.f32 %v3113, %v3401
        %v3403 = vpop.f32.mrf.mxu0
        %v3404 = vadd.f32 %v3115, %v3403
        %3405 = vmatmul.bf16.gmra.mxu0 %v1242
        %v3406 = vpop.f32.mrf.mxu0
        %v3407 = vadd.f32 %v3118, %v3406
        %v3408 = vpop.f32.mrf.mxu0
        %v3409 = vadd.f32 %v3120, %v3408
        %3410 = vmatmul.bf16.gmra.mxu0 %v1244
        %v3411 = vpop.f32.mrf.mxu0
        %v3412 = vadd.f32 %v3123, %v3411
        %v3413 = vpop.f32.mrf.mxu0
        %v3414 = vadd.f32 %v3125, %v3413
        %3415 = vmatmul.bf16.gmra.mxu0 %v1246
        %v3416 = vpop.f32.mrf.mxu0
        %v3417 = vadd.f32 %v3128, %v3416
        %v3418 = vpop.f32.mrf.mxu0
        %v3419 = vadd.f32 %v3130, %v3418
        %3420 = vmatmul.bf16.gmra.mxu0 %v1248
        %v3421 = vpop.f32.mrf.mxu0
        %v3422 = vadd.f32 %v3133, %v3421
        %v3423 = vpop.f32.mrf.mxu0
        %v3424 = vadd.f32 %v3135, %v3423
        %3425 = vmatmul.bf16.gmra.mxu0 %v1250
        %v3426 = vpop.f32.mrf.mxu0
        %v3427 = vadd.f32 %v3138, %v3426
        %v3428 = vpop.f32.mrf.mxu0
        %v3429 = vadd.f32 %v3140, %v3428
        %3430 = vmatmul.bf16.gmra.mxu0 %v1252
        %v3431 = vpop.f32.mrf.mxu0
        %v3432 = vadd.f32 %v3143, %v3431
        %v3433 = vpop.f32.mrf.mxu0
        %v3434 = vadd.f32 %v3145, %v3433
        %3435 = vmatmul.bf16.gmra.mxu0 %v1254
        %v3436 = vpop.f32.mrf.mxu0
        %v3437 = vadd.f32 %v3148, %v3436
        %v3438 = vpop.f32.mrf.mxu0
        %v3439 = vadd.f32 %v3150, %v3438
        %3440 = vmatmul.bf16.gmra.mxu0 %v1256
        %v3441 = vpop.f32.mrf.mxu0
        %v3442 = vadd.f32 %v3153, %v3441
        %v3443 = vpop.f32.mrf.mxu0
        %v3444 = vadd.f32 %v3155, %v3443
        %3445 = vmatmul.bf16.gmra.mxu0 %v1258
        %v3446 = vpop.f32.mrf.mxu0
        %v3447 = vadd.f32 %v3158, %v3446
        %v3448 = vpop.f32.mrf.mxu0
        %v3449 = vadd.f32 %v3160, %v3448
        %3450 = vmatmul.bf16.gmra.mxu0 %v1260
        %v3451 = vpop.f32.mrf.mxu0
        %v3452 = vadd.f32 %v3163, %v3451
        %v3453 = vpop.f32.mrf.mxu0
        %v3454 = vadd.f32 %v3165, %v3453
        %3455 = vmatmul.bf16.gmra.mxu0 %v1262
        %v3456 = vpop.f32.mrf.mxu0
        %v3457 = vadd.f32 %v3168, %v3456
        %v3458 = vpop.f32.mrf.mxu0
        %v3459 = vadd.f32 %v3170, %v3458
        %3460 = vmatmul.bf16.gmra.mxu0 %v1264
        %v3461 = vpop.f32.mrf.mxu0
        %v3462 = vadd.f32 %v3173, %v3461
        %v3463 = vpop.f32.mrf.mxu0
        %v3464 = vadd.f32 %v3175, %v3463
        %3465 = vmatmul.bf16.gmra.mxu0 %v1266
        %v3466 = vpop.f32.mrf.mxu0
        %v3467 = vadd.f32 %v3178, %v3466
        %v3468 = vpop.f32.mrf.mxu0
        %v3469 = vadd.f32 %v3180, %v3468
        %3470 = vmatmul.bf16.gmra.mxu0 %v1268
        %v3471 = vpop.f32.mrf.mxu0
        %v3472 = vadd.f32 %v3183, %v3471
        %v3473 = vpop.f32.mrf.mxu0
        %v3474 = vadd.f32 %v3185, %v3473
        %3475 = vmatmul.bf16.gmra.mxu0 %v1270
        %v3476 = vpop.f32.mrf.mxu0
        %v3477 = vadd.f32 %v3188, %v3476
        %v3478 = vpop.f32.mrf.mxu0
        %v3479 = vadd.f32 %v3190, %v3478
        %3480 = vmatmul.bf16.gmra.mxu0 %v1272
        %v3481 = vpop.f32.mrf.mxu0
        %v3482 = vadd.f32 %v3193, %v3481
        %v3483 = vpop.f32.mrf.mxu0
        %v3484 = vadd.f32 %v3195, %v3483
        %3485 = vmatmul.bf16.gmra.mxu0 %v1274
        %v3486 = vpop.f32.mrf.mxu0
        %v3487 = vadd.f32 %v3198, %v3486
        %v3488 = vpop.f32.mrf.mxu0
        %v3489 = vadd.f32 %v3200, %v3488
        %3490 = vmatmul.bf16.gmra.mxu0 %v1276
        %v3491 = vpop.f32.mrf.mxu0
        %v3492 = vadd.f32 %v3203, %v3491
        %v3493 = vpop.f32.mrf.mxu0
        %v3494 = vadd.f32 %v3205, %v3493
        %3495 = vmatmul.bf16.gmra.mxu0 %v1278
        %v3496 = vpop.f32.mrf.mxu0
        %v3497 = vadd.f32 %v3208, %v3496
        %v3498 = vpop.f32.mrf.mxu0
        %v3499 = vadd.f32 %v3210, %v3498
        %3500 = vmatmul.bf16.gmra.mxu0 %v1280
        %v3501 = vpop.f32.mrf.mxu0
        %v3502 = vadd.f32 %v3213, %v3501
        %v3503 = vpop.f32.mrf.mxu0
        %v3504 = vadd.f32 %v3215, %v3503
        %3505 = vmatmul.bf16.gmra.mxu0 %v1282
        %v3506 = vpop.f32.mrf.mxu0
        %v3507 = vadd.f32 %v3218, %v3506
        %v3508 = vpop.f32.mrf.mxu0
        %v3509 = vadd.f32 %v3220, %v3508
        %3510 = vmatmul.bf16.gmra.mxu0 %v1284
        %v3511 = vpop.f32.mrf.mxu0
        %v3512 = vadd.f32 %v3223, %v3511
        %v3513 = vpop.f32.mrf.mxu0
        %v3514 = vadd.f32 %v3225, %v3513
        %3515 = vmatmul.bf16.gmra.mxu0 %v1286
        %v3516 = vpop.f32.mrf.mxu0
        %v3517 = vadd.f32 %v3228, %v3516
        %v3518 = vpop.f32.mrf.mxu0
        %v3519 = vadd.f32 %v3230, %v3518
        %3520 = vmatmul.bf16.gmra.mxu0 %v1288
        %v3521 = vpop.f32.mrf.mxu0
        %v3522 = vadd.f32 %v3233, %v3521
        %v3523 = vpop.f32.mrf.mxu0
        %v3524 = vadd.f32 %v3235, %v3523
        %3525 = vmatmul.bf16.gmra.mxu0 %v1290
        %v3526 = vpop.f32.mrf.mxu0
        %v3527 = vadd.f32 %v3238, %v3526
        %v3528 = vpop.f32.mrf.mxu0
        %v3529 = vadd.f32 %v3240, %v3528
        %3530 = vmatmul.bf16.gmra.mxu0 %v1292
        %v3531 = vpop.f32.mrf.mxu0
        %v3532 = vadd.f32 %v3243, %v3531
        %v3533 = vpop.f32.mrf.mxu0
        %v3534 = vadd.f32 %v3245, %v3533
        %3535 = vmatmul.bf16.gmra.mxu0 %v1294
        %v3536 = vpop.f32.mrf.mxu0
        %v3537 = vadd.f32 %v3248, %v3536
        %v3538 = vpop.f32.mrf.mxu0
        %v3539 = vadd.f32 %v3250, %v3538
        %3540 = vmatmul.bf16.gmra.mxu0 %v1296
        %v3541 = vpop.f32.mrf.mxu0
        %v3542 = vadd.f32 %v3253, %v3541
        %v3543 = vpop.f32.mrf.mxu0
        %v3544 = vadd.f32 %v3255, %v3543
        %3545 = vdwg.mxu0
        %s3546 = scalar_lea.vmem [#allocation5], 384
        %v3547 = vld [vmem:[%s3546] sm:$0xf]
        %v3548 = vld [vmem:[%s3546 + $0x4] sm:$0xf]
        %v3549 = vld [vmem:[%s3546 + $0x8] sm:$0xf]
        %v3550 = vld [vmem:[%s3546 + $0xc] sm:$0xf]
        %v3551 = vld [vmem:[%s3546 + $0x10] sm:$0xf]
        %v3552 = vld [vmem:[%s3546 + $0x14] sm:$0xf]
        %v3553 = vld [vmem:[%s3546 + $0x18] sm:$0xf]
        %v3554 = vld [vmem:[%s3546 + $0x1c] sm:$0xf]
        %v3555 = vld [vmem:[%s3546 + $0x20] sm:$0xf]
        %v3556 = vld [vmem:[%s3546 + $0x24] sm:$0xf]
        %v3557 = vld [vmem:[%s3546 + $0x28] sm:$0xf]
        %v3558 = vld [vmem:[%s3546 + $0x2c] sm:$0xf]
        %v3559 = vld [vmem:[%s3546 + $0x30] sm:$0xf]
        %v3560 = vld [vmem:[%s3546 + $0x34] sm:$0xf]
        %v3561 = vld [vmem:[%s3546 + $0x38] sm:$0xf]
        %v3562 = vld [vmem:[%s3546 + $0x3c] sm:$0xf]
        %v3563 = vld [vmem:[%s3546 + $0x40] sm:$0xf]
        %v3564 = vld [vmem:[%s3546 + $0x44] sm:$0xf]
        %v3565 = vld [vmem:[%s3546 + $0x48] sm:$0xf]
        %v3566 = vld [vmem:[%s3546 + $0x4c] sm:$0xf]
        %v3567 = vld [vmem:[%s3546 + $0x50] sm:$0xf]
        %v3568 = vld [vmem:[%s3546 + $0x54] sm:$0xf]
        %v3569 = vld [vmem:[%s3546 + $0x58] sm:$0xf]
        %v3570 = vld [vmem:[%s3546 + $0x5c] sm:$0xf]
        %v3571 = vld [vmem:[%s3546 + $0x60] sm:$0xf]
        %v3572 = vld [vmem:[%s3546 + $0x64] sm:$0xf]
        %v3573 = vld [vmem:[%s3546 + $0x68] sm:$0xf]
        %v3574 = vld [vmem:[%s3546 + $0x6c] sm:$0xf]
        %v3575 = vld [vmem:[%s3546 + $0x70] sm:$0xf]
        %v3576 = vld [vmem:[%s3546 + $0x74] sm:$0xf]
        %v3577 = vld [vmem:[%s3546 + $0x78] sm:$0xf]
        %v3578 = vld [vmem:[%s3546 + $0x7c] sm:$0xf]
        %v3579 = vld [vmem:[%s3546 + $0x80] sm:$0xf]
        %v3580 = vld [vmem:[%s3546 + $0x84] sm:$0xf]
        %v3581 = vld [vmem:[%s3546 + $0x88] sm:$0xf]
        %v3582 = vld [vmem:[%s3546 + $0x8c] sm:$0xf]
        %v3583 = vld [vmem:[%s3546 + $0x90] sm:$0xf]
        %v3584 = vld [vmem:[%s3546 + $0x94] sm:$0xf]
        %v3585 = vld [vmem:[%s3546 + $0x98] sm:$0xf]
        %v3586 = vld [vmem:[%s3546 + $0x9c] sm:$0xf]
        %v3587 = vld [vmem:[%s3546 + $0xa0] sm:$0xf]
        %v3588 = vld [vmem:[%s3546 + $0xa4] sm:$0xf]
        %v3589 = vld [vmem:[%s3546 + $0xa8] sm:$0xf]
        %v3590 = vld [vmem:[%s3546 + $0xac] sm:$0xf]
        %v3591 = vld [vmem:[%s3546 + $0xb0] sm:$0xf]
        %v3592 = vld [vmem:[%s3546 + $0xb4] sm:$0xf]
        %v3593 = vld [vmem:[%s3546 + $0xb8] sm:$0xf]
        %v3594 = vld [vmem:[%s3546 + $0xbc] sm:$0xf]
        %v3643 = vunpack.c.l.b16 %v3547
        %v3644 = vunpack.c.l.b16 %v3548
        %v3645 = vunpack.c.l.b16 %v3549
        %v3646 = vunpack.c.l.b16 %v3550
        %v3647 = vunpack.c.l.b16 %v3551
        %v3648 = vunpack.c.l.b16 %v3552
        %v3649 = vunpack.c.l.b16 %v3553
        %v3650 = vunpack.c.l.b16 %v3554
        %v3651 = vunpack.c.l.b16 %v3555
        %v3652 = vunpack.c.l.b16 %v3556
        %v3653 = vunpack.c.l.b16 %v3557
        %v3654 = vunpack.c.l.b16 %v3558
        %v3655 = vunpack.c.l.b16 %v3559
        %v3656 = vunpack.c.l.b16 %v3560
        %v3657 = vunpack.c.l.b16 %v3561
        %v3658 = vunpack.c.l.b16 %v3562
        %v3659 = vunpack.c.l.b16 %v3563
        %v3660 = vunpack.c.l.b16 %v3564
        %v3661 = vunpack.c.l.b16 %v3565
        %v3662 = vunpack.c.l.b16 %v3566
        %v3663 = vunpack.c.l.b16 %v3567
        %v3664 = vunpack.c.l.b16 %v3568
        %v3665 = vunpack.c.l.b16 %v3569
        %v3666 = vunpack.c.l.b16 %v3570
        %v3667 = vunpack.c.l.b16 %v3571
        %v3668 = vunpack.c.l.b16 %v3572
        %v3669 = vunpack.c.l.b16 %v3573
        %v3670 = vunpack.c.l.b16 %v3574
        %v3671 = vunpack.c.l.b16 %v3575
        %v3672 = vunpack.c.l.b16 %v3576
        %v3673 = vunpack.c.l.b16 %v3577
        %v3674 = vunpack.c.l.b16 %v3578
        %v3675 = vunpack.c.l.b16 %v3579
        %v3676 = vunpack.c.l.b16 %v3580
        %v3677 = vunpack.c.l.b16 %v3581
        %v3678 = vunpack.c.l.b16 %v3582
        %v3679 = vunpack.c.l.b16 %v3583
        %v3680 = vunpack.c.l.b16 %v3584
        %v3681 = vunpack.c.l.b16 %v3585
        %v3682 = vunpack.c.l.b16 %v3586
        %v3683 = vunpack.c.l.b16 %v3587
        %v3684 = vunpack.c.l.b16 %v3588
        %v3685 = vunpack.c.l.b16 %v3589
        %v3686 = vunpack.c.l.b16 %v3590
        %v3687 = vunpack.c.l.b16 %v3591
        %v3688 = vunpack.c.l.b16 %v3592
        %v3689 = vunpack.c.l.b16 %v3593
        %v3690 = vunpack.c.l.b16 %v3594
        %v3691 = vpack.c.b16 %v3644, %v3643
        %v3692 = vpack.c.b16 %v3646, %v3645
        %v3693 = vpack.c.b16 %v3648, %v3647
        %v3694 = vpack.c.b16 %v3650, %v3649
        %v3695 = vpack.c.b16 %v3652, %v3651
        %v3696 = vpack.c.b16 %v3654, %v3653
        %v3697 = vpack.c.b16 %v3656, %v3655
        %v3698 = vpack.c.b16 %v3658, %v3657
        %v3699 = vpack.c.b16 %v3660, %v3659
        %v3700 = vpack.c.b16 %v3662, %v3661
        %v3701 = vpack.c.b16 %v3664, %v3663
        %v3702 = vpack.c.b16 %v3666, %v3665
        %v3703 = vpack.c.b16 %v3668, %v3667
        %v3704 = vpack.c.b16 %v3670, %v3669
        %v3705 = vpack.c.b16 %v3672, %v3671
        %v3706 = vpack.c.b16 %v3674, %v3673
        %v3707 = vpack.c.b16 %v3676, %v3675
        %v3708 = vpack.c.b16 %v3678, %v3677
        %v3709 = vpack.c.b16 %v3680, %v3679
        %v3710 = vpack.c.b16 %v3682, %v3681
        %v3711 = vpack.c.b16 %v3684, %v3683
        %v3712 = vpack.c.b16 %v3686, %v3685
        %v3713 = vpack.c.b16 %v3688, %v3687
        %v3714 = vpack.c.b16 %v3690, %v3689
        %3739 = vmatpush.bf16.msra.mxu0 %v3698
        %3740 = vmatpush.bf16.msra.mxu0 %v3697
        %3741 = vmatpush.bf16.msra.mxu0 %v3696
        %3742 = vmatpush.bf16.msra.mxu0 %v3695
        %3743 = vmatpush.bf16.msra.mxu0 %v3694
        %3744 = vmatpush.bf16.msra.mxu0 %v3693
        %3745 = vmatpush.bf16.msra.mxu0 %v3692
        %3746 = vmatpush.bf16.msra.mxu0 %v3691
        %3747 = vmatmul.bf16.gmra.mxu0 %v584
        %v3748 = vpop.f32.mrf.mxu0
        %v3749 = vadd.f32 0.0, %v3748
        %v3750 = vpop.f32.mrf.mxu0
        %v3751 = vadd.f32 0.0, %v3750
        %3752 = vmatmul.bf16.gmra.mxu0 %v585
        %v3753 = vpop.f32.mrf.mxu0
        %v3754 = vadd.f32 0.0, %v3753
        %v3755 = vpop.f32.mrf.mxu0
        %v3756 = vadd.f32 0.0, %v3755
        %3757 = vmatmul.bf16.gmra.mxu0 %v586
        %v3758 = vpop.f32.mrf.mxu0
        %v3759 = vadd.f32 0.0, %v3758
        %v3760 = vpop.f32.mrf.mxu0
        %v3761 = vadd.f32 0.0, %v3760
        %3762 = vmatmul.bf16.gmra.mxu0 %v587
        %v3763 = vpop.f32.mrf.mxu0
        %v3764 = vadd.f32 0.0, %v3763
        %v3765 = vpop.f32.mrf.mxu0
        %v3766 = vadd.f32 0.0, %v3765
        %3767 = vmatmul.bf16.gmra.mxu0 %v588
        %v3768 = vpop.f32.mrf.mxu0
        %v3769 = vadd.f32 0.0, %v3768
        %v3770 = vpop.f32.mrf.mxu0
        %v3771 = vadd.f32 0.0, %v3770
        %3772 = vmatmul.bf16.gmra.mxu0 %v589
        %v3773 = vpop.f32.mrf.mxu0
        %v3774 = vadd.f32 0.0, %v3773
        %v3775 = vpop.f32.mrf.mxu0
        %v3776 = vadd.f32 0.0, %v3775
        %3777 = vmatmul.bf16.gmra.mxu0 %v590
        %v3778 = vpop.f32.mrf.mxu0
        %v3779 = vadd.f32 0.0, %v3778
        %v3780 = vpop.f32.mrf.mxu0
        %v3781 = vadd.f32 0.0, %v3780
        %3782 = vmatmul.bf16.gmra.mxu0 %v591
        %v3783 = vpop.f32.mrf.mxu0
        %v3784 = vadd.f32 0.0, %v3783
        %v3785 = vpop.f32.mrf.mxu0
        %v3786 = vadd.f32 0.0, %v3785
        %3787 = vmatmul.bf16.gmra.mxu0 %v592
        %v3788 = vpop.f32.mrf.mxu0
        %v3789 = vadd.f32 0.0, %v3788
        %v3790 = vpop.f32.mrf.mxu0
        %v3791 = vadd.f32 0.0, %v3790
        %3792 = vmatmul.bf16.gmra.mxu0 %v593
        %v3793 = vpop.f32.mrf.mxu0
        %v3794 = vadd.f32 0.0, %v3793
        %v3795 = vpop.f32.mrf.mxu0
        %v3796 = vadd.f32 0.0, %v3795
        %3797 = vmatmul.bf16.gmra.mxu0 %v594
        %v3798 = vpop.f32.mrf.mxu0
        %v3799 = vadd.f32 0.0, %v3798
        %v3800 = vpop.f32.mrf.mxu0
        %v3801 = vadd.f32 0.0, %v3800
        %3802 = vmatmul.bf16.gmra.mxu0 %v595
        %v3803 = vpop.f32.mrf.mxu0
        %v3804 = vadd.f32 0.0, %v3803
        %v3805 = vpop.f32.mrf.mxu0
        %v3806 = vadd.f32 0.0, %v3805
        %3807 = vmatmul.bf16.gmra.mxu0 %v596
        %v3808 = vpop.f32.mrf.mxu0
        %v3809 = vadd.f32 0.0, %v3808
        %v3810 = vpop.f32.mrf.mxu0
        %v3811 = vadd.f32 0.0, %v3810
        %3812 = vmatmul.bf16.gmra.mxu0 %v597
        %v3813 = vpop.f32.mrf.mxu0
        %v3814 = vadd.f32 0.0, %v3813
        %v3815 = vpop.f32.mrf.mxu0
        %v3816 = vadd.f32 0.0, %v3815
        %3817 = vmatmul.bf16.gmra.mxu0 %v598
        %v3818 = vpop.f32.mrf.mxu0
        %v3819 = vadd.f32 0.0, %v3818
        %v3820 = vpop.f32.mrf.mxu0
        %v3821 = vadd.f32 0.0, %v3820
        %3822 = vmatmul.bf16.gmra.mxu0 %v599
        %v3823 = vpop.f32.mrf.mxu0
        %v3824 = vadd.f32 0.0, %v3823
        %v3825 = vpop.f32.mrf.mxu0
        %v3826 = vadd.f32 0.0, %v3825
        %3827 = vmatmul.bf16.gmra.mxu0 %v600
        %v3828 = vpop.f32.mrf.mxu0
        %v3829 = vadd.f32 0.0, %v3828
        %v3830 = vpop.f32.mrf.mxu0
        %v3831 = vadd.f32 0.0, %v3830
        %3832 = vmatmul.bf16.gmra.mxu0 %v601
        %v3833 = vpop.f32.mrf.mxu0
        %v3834 = vadd.f32 0.0, %v3833
        %v3835 = vpop.f32.mrf.mxu0
        %v3836 = vadd.f32 0.0, %v3835
        %3837 = vmatmul.bf16.gmra.mxu0 %v602
        %v3838 = vpop.f32.mrf.mxu0
        %v3839 = vadd.f32 0.0, %v3838
        %v3840 = vpop.f32.mrf.mxu0
        %v3841 = vadd.f32 0.0, %v3840
        %3842 = vmatmul.bf16.gmra.mxu0 %v603
        %v3843 = vpop.f32.mrf.mxu0
        %v3844 = vadd.f32 0.0, %v3843
        %v3845 = vpop.f32.mrf.mxu0
        %v3846 = vadd.f32 0.0, %v3845
        %3847 = vmatmul.bf16.gmra.mxu0 %v604
        %v3848 = vpop.f32.mrf.mxu0
        %v3849 = vadd.f32 0.0, %v3848
        %v3850 = vpop.f32.mrf.mxu0
        %v3851 = vadd.f32 0.0, %v3850
        %3852 = vmatmul.bf16.gmra.mxu0 %v605
        %v3853 = vpop.f32.mrf.mxu0
        %v3854 = vadd.f32 0.0, %v3853
        %v3855 = vpop.f32.mrf.mxu0
        %v3856 = vadd.f32 0.0, %v3855
        %3857 = vmatmul.bf16.gmra.mxu0 %v606
        %v3858 = vpop.f32.mrf.mxu0
        %v3859 = vadd.f32 0.0, %v3858
        %v3860 = vpop.f32.mrf.mxu0
        %v3861 = vadd.f32 0.0, %v3860
        %3862 = vmatmul.bf16.gmra.mxu0 %v607
        %v3863 = vpop.f32.mrf.mxu0
        %v3864 = vadd.f32 0.0, %v3863
        %v3865 = vpop.f32.mrf.mxu0
        %v3866 = vadd.f32 0.0, %v3865
        %3867 = vmatmul.bf16.gmra.mxu0 %v608
        %v3868 = vpop.f32.mrf.mxu0
        %v3869 = vadd.f32 0.0, %v3868
        %v3870 = vpop.f32.mrf.mxu0
        %v3871 = vadd.f32 0.0, %v3870
        %3872 = vmatmul.bf16.gmra.mxu0 %v609
        %v3873 = vpop.f32.mrf.mxu0
        %v3874 = vadd.f32 0.0, %v3873
        %v3875 = vpop.f32.mrf.mxu0
        %v3876 = vadd.f32 0.0, %v3875
        %3877 = vmatmul.bf16.gmra.mxu0 %v610
        %v3878 = vpop.f32.mrf.mxu0
        %v3879 = vadd.f32 0.0, %v3878
        %v3880 = vpop.f32.mrf.mxu0
        %v3881 = vadd.f32 0.0, %v3880
        %3882 = vmatmul.bf16.gmra.mxu0 %v611
        %v3883 = vpop.f32.mrf.mxu0
        %v3884 = vadd.f32 0.0, %v3883
        %v3885 = vpop.f32.mrf.mxu0
        %v3886 = vadd.f32 0.0, %v3885
        %3887 = vmatmul.bf16.gmra.mxu0 %v612
        %v3888 = vpop.f32.mrf.mxu0
        %v3889 = vadd.f32 0.0, %v3888
        %v3890 = vpop.f32.mrf.mxu0
        %v3891 = vadd.f32 0.0, %v3890
        %3892 = vmatmul.bf16.gmra.mxu0 %v613
        %v3893 = vpop.f32.mrf.mxu0
        %v3894 = vadd.f32 0.0, %v3893
        %v3895 = vpop.f32.mrf.mxu0
        %v3896 = vadd.f32 0.0, %v3895
        %3897 = vmatmul.bf16.gmra.mxu0 %v614
        %v3898 = vpop.f32.mrf.mxu0
        %v3899 = vadd.f32 0.0, %v3898
        %v3900 = vpop.f32.mrf.mxu0
        %v3901 = vadd.f32 0.0, %v3900
        %3902 = vmatmul.bf16.gmra.mxu0 %v615
        %v3903 = vpop.f32.mrf.mxu0
        %v3904 = vadd.f32 0.0, %v3903
        %v3905 = vpop.f32.mrf.mxu0
        %v3906 = vadd.f32 0.0, %v3905
        %3907 = vmatmul.bf16.gmra.mxu0 %v616
        %v3908 = vpop.f32.mrf.mxu0
        %v3909 = vadd.f32 0.0, %v3908
        %v3910 = vpop.f32.mrf.mxu0
        %v3911 = vadd.f32 0.0, %v3910
        %3912 = vmatmul.bf16.gmra.mxu0 %v617
        %v3913 = vpop.f32.mrf.mxu0
        %v3914 = vadd.f32 0.0, %v3913
        %v3915 = vpop.f32.mrf.mxu0
        %v3916 = vadd.f32 0.0, %v3915
        %3917 = vmatmul.bf16.gmra.mxu0 %v618
        %v3918 = vpop.f32.mrf.mxu0
        %v3919 = vadd.f32 0.0, %v3918
        %v3920 = vpop.f32.mrf.mxu0
        %v3921 = vadd.f32 0.0, %v3920
        %3922 = vmatmul.bf16.gmra.mxu0 %v619
        %v3923 = vpop.f32.mrf.mxu0
        %v3924 = vadd.f32 0.0, %v3923
        %v3925 = vpop.f32.mrf.mxu0
        %v3926 = vadd.f32 0.0, %v3925
        %3927 = vmatmul.bf16.gmra.mxu0 %v620
        %v3928 = vpop.f32.mrf.mxu0
        %v3929 = vadd.f32 0.0, %v3928
        %v3930 = vpop.f32.mrf.mxu0
        %v3931 = vadd.f32 0.0, %v3930
        %3932 = vmatmul.bf16.gmra.mxu0 %v621
        %v3933 = vpop.f32.mrf.mxu0
        %v3934 = vadd.f32 0.0, %v3933
        %v3935 = vpop.f32.mrf.mxu0
        %v3936 = vadd.f32 0.0, %v3935
        %3937 = vmatmul.bf16.gmra.mxu0 %v622
        %v3938 = vpop.f32.mrf.mxu0
        %v3939 = vadd.f32 0.0, %v3938
        %v3940 = vpop.f32.mrf.mxu0
        %v3941 = vadd.f32 0.0, %v3940
        %3942 = vmatmul.bf16.gmra.mxu0 %v623
        %v3943 = vpop.f32.mrf.mxu0
        %v3944 = vadd.f32 0.0, %v3943
        %v3945 = vpop.f32.mrf.mxu0
        %v3946 = vadd.f32 0.0, %v3945
        %3947 = vmatmul.bf16.gmra.mxu0 %v624
        %v3948 = vpop.f32.mrf.mxu0
        %v3949 = vadd.f32 0.0, %v3948
        %v3950 = vpop.f32.mrf.mxu0
        %v3951 = vadd.f32 0.0, %v3950
        %3952 = vmatmul.bf16.gmra.mxu0 %v625
        %v3953 = vpop.f32.mrf.mxu0
        %v3954 = vadd.f32 0.0, %v3953
        %v3955 = vpop.f32.mrf.mxu0
        %v3956 = vadd.f32 0.0, %v3955
        %3957 = vmatmul.bf16.gmra.mxu0 %v626
        %v3958 = vpop.f32.mrf.mxu0
        %v3959 = vadd.f32 0.0, %v3958
        %v3960 = vpop.f32.mrf.mxu0
        %v3961 = vadd.f32 0.0, %v3960
        %3962 = vmatmul.bf16.gmra.mxu0 %v627
        %v3963 = vpop.f32.mrf.mxu0
        %v3964 = vadd.f32 0.0, %v3963
        %v3965 = vpop.f32.mrf.mxu0
        %v3966 = vadd.f32 0.0, %v3965
        %3967 = vmatmul.bf16.gmra.mxu0 %v628
        %v3968 = vpop.f32.mrf.mxu0
        %v3969 = vadd.f32 0.0, %v3968
        %v3970 = vpop.f32.mrf.mxu0
        %v3971 = vadd.f32 0.0, %v3970
        %3972 = vmatmul.bf16.gmra.mxu0 %v629
        %v3973 = vpop.f32.mrf.mxu0
        %v3974 = vadd.f32 0.0, %v3973
        %v3975 = vpop.f32.mrf.mxu0
        %v3976 = vadd.f32 0.0, %v3975
        %3977 = vmatmul.bf16.gmra.mxu0 %v630
        %v3978 = vpop.f32.mrf.mxu0
        %v3979 = vadd.f32 0.0, %v3978
        %v3980 = vpop.f32.mrf.mxu0
        %v3981 = vadd.f32 0.0, %v3980
        %3982 = vmatmul.bf16.gmra.mxu0 %v631
        %v3983 = vpop.f32.mrf.mxu0
        %v3984 = vadd.f32 0.0, %v3983
        %v3985 = vpop.f32.mrf.mxu0
        %v3986 = vadd.f32 0.0, %v3985
        %3987 = vmatmul.bf16.gmra.mxu0 %v632
        %v3988 = vpop.f32.mrf.mxu0
        %v3989 = vadd.f32 0.0, %v3988
        %v3990 = vpop.f32.mrf.mxu0
        %v3991 = vadd.f32 0.0, %v3990
        %3992 = vmatmul.bf16.gmra.mxu0 %v633
        %v3993 = vpop.f32.mrf.mxu0
        %v3994 = vadd.f32 0.0, %v3993
        %v3995 = vpop.f32.mrf.mxu0
        %v3996 = vadd.f32 0.0, %v3995
        %3997 = vmatmul.bf16.gmra.mxu0 %v634
        %v3998 = vpop.f32.mrf.mxu0
        %v3999 = vadd.f32 0.0, %v3998
        %v4000 = vpop.f32.mrf.mxu0
        %v4001 = vadd.f32 0.0, %v4000
        %4002 = vmatmul.bf16.gmra.mxu0 %v635
        %v4003 = vpop.f32.mrf.mxu0
        %v4004 = vadd.f32 0.0, %v4003
        %v4005 = vpop.f32.mrf.mxu0
        %v4006 = vadd.f32 0.0, %v4005
        %4007 = vmatmul.bf16.gmra.mxu0 %v636
        %v4008 = vpop.f32.mrf.mxu0
        %v4009 = vadd.f32 0.0, %v4008
        %v4010 = vpop.f32.mrf.mxu0
        %v4011 = vadd.f32 0.0, %v4010
        %4012 = vmatmul.bf16.gmra.mxu0 %v637
        %v4013 = vpop.f32.mrf.mxu0
        %v4014 = vadd.f32 0.0, %v4013
        %v4015 = vpop.f32.mrf.mxu0
        %v4016 = vadd.f32 0.0, %v4015
        %4017 = vmatmul.bf16.gmra.mxu0 %v638
        %v4018 = vpop.f32.mrf.mxu0
        %v4019 = vadd.f32 0.0, %v4018
        %v4020 = vpop.f32.mrf.mxu0
        %v4021 = vadd.f32 0.0, %v4020
        %4022 = vmatmul.bf16.gmra.mxu0 %v639
        %v4023 = vpop.f32.mrf.mxu0
        %v4024 = vadd.f32 0.0, %v4023
        %v4025 = vpop.f32.mrf.mxu0
        %v4026 = vadd.f32 0.0, %v4025
        %4027 = vdwg.mxu0
        %4028 = vmatpush.bf16.msra.mxu0 %v3706
        %4029 = vmatpush.bf16.msra.mxu0 %v3705
        %4030 = vmatpush.bf16.msra.mxu0 %v3704
        %4031 = vmatpush.bf16.msra.mxu0 %v3703
        %4032 = vmatpush.bf16.msra.mxu0 %v3702
        %4033 = vmatpush.bf16.msra.mxu0 %v3701
        %4034 = vmatpush.bf16.msra.mxu0 %v3700
        %4035 = vmatpush.bf16.msra.mxu0 %v3699
        %4036 = vmatmul.bf16.gmra.mxu0 %v684
        %v4037 = vpop.f32.mrf.mxu0
        %v4038 = vadd.f32 %v3749, %v4037
        %v4039 = vpop.f32.mrf.mxu0
        %v4040 = vadd.f32 %v3751, %v4039
        %4041 = vmatmul.bf16.gmra.mxu0 %v692
        %v4042 = vpop.f32.mrf.mxu0
        %v4043 = vadd.f32 %v3754, %v4042
        %v4044 = vpop.f32.mrf.mxu0
        %v4045 = vadd.f32 %v3756, %v4044
        %4046 = vmatmul.bf16.gmra.mxu0 %v700
        %v4047 = vpop.f32.mrf.mxu0
        %v4048 = vadd.f32 %v3759, %v4047
        %v4049 = vpop.f32.mrf.mxu0
        %v4050 = vadd.f32 %v3761, %v4049
        %4051 = vmatmul.bf16.gmra.mxu0 %v708
        %v4052 = vpop.f32.mrf.mxu0
        %v4053 = vadd.f32 %v3764, %v4052
        %v4054 = vpop.f32.mrf.mxu0
        %v4055 = vadd.f32 %v3766, %v4054
        %4056 = vmatmul.bf16.gmra.mxu0 %v716
        %v4057 = vpop.f32.mrf.mxu0
        %v4058 = vadd.f32 %v3769, %v4057
        %v4059 = vpop.f32.mrf.mxu0
        %v4060 = vadd.f32 %v3771, %v4059
        %4061 = vmatmul.bf16.gmra.mxu0 %v724
        %v4062 = vpop.f32.mrf.mxu0
        %v4063 = vadd.f32 %v3774, %v4062
        %v4064 = vpop.f32.mrf.mxu0
        %v4065 = vadd.f32 %v3776, %v4064
        %4066 = vmatmul.bf16.gmra.mxu0 %v732
        %v4067 = vpop.f32.mrf.mxu0
        %v4068 = vadd.f32 %v3779, %v4067
        %v4069 = vpop.f32.mrf.mxu0
        %v4070 = vadd.f32 %v3781, %v4069
        %4071 = vmatmul.bf16.gmra.mxu0 %v740
        %v4072 = vpop.f32.mrf.mxu0
        %v4073 = vadd.f32 %v3784, %v4072
        %v4074 = vpop.f32.mrf.mxu0
        %v4075 = vadd.f32 %v3786, %v4074
        %4076 = vmatmul.bf16.gmra.mxu0 %v748
        %v4077 = vpop.f32.mrf.mxu0
        %v4078 = vadd.f32 %v3789, %v4077
        %v4079 = vpop.f32.mrf.mxu0
        %v4080 = vadd.f32 %v3791, %v4079
        %4081 = vmatmul.bf16.gmra.mxu0 %v756
        %v4082 = vpop.f32.mrf.mxu0
        %v4083 = vadd.f32 %v3794, %v4082
        %v4084 = vpop.f32.mrf.mxu0
        %v4085 = vadd.f32 %v3796, %v4084
        %4086 = vmatmul.bf16.gmra.mxu0 %v764
        %v4087 = vpop.f32.mrf.mxu0
        %v4088 = vadd.f32 %v3799, %v4087
        %v4089 = vpop.f32.mrf.mxu0
        %v4090 = vadd.f32 %v3801, %v4089
        %4091 = vmatmul.bf16.gmra.mxu0 %v772
        %v4092 = vpop.f32.mrf.mxu0
        %v4093 = vadd.f32 %v3804, %v4092
        %v4094 = vpop.f32.mrf.mxu0
        %v4095 = vadd.f32 %v3806, %v4094
        %4096 = vmatmul.bf16.gmra.mxu0 %v780
        %v4097 = vpop.f32.mrf.mxu0
        %v4098 = vadd.f32 %v3809, %v4097
        %v4099 = vpop.f32.mrf.mxu0
        %v4100 = vadd.f32 %v3811, %v4099
        %4101 = vmatmul.bf16.gmra.mxu0 %v788
        %v4102 = vpop.f32.mrf.mxu0
        %v4103 = vadd.f32 %v3814, %v4102
        %v4104 = vpop.f32.mrf.mxu0
        %v4105 = vadd.f32 %v3816, %v4104
        %4106 = vmatmul.bf16.gmra.mxu0 %v796
        %v4107 = vpop.f32.mrf.mxu0
        %v4108 = vadd.f32 %v3819, %v4107
        %v4109 = vpop.f32.mrf.mxu0
        %v4110 = vadd.f32 %v3821, %v4109
        %4111 = vmatmul.bf16.gmra.mxu0 %v804
        %v4112 = vpop.f32.mrf.mxu0
        %v4113 = vadd.f32 %v3824, %v4112
        %v4114 = vpop.f32.mrf.mxu0
        %v4115 = vadd.f32 %v3826, %v4114
        %4116 = vmatmul.bf16.gmra.mxu0 %v812
        %v4117 = vpop.f32.mrf.mxu0
        %v4118 = vadd.f32 %v3829, %v4117
        %v4119 = vpop.f32.mrf.mxu0
        %v4120 = vadd.f32 %v3831, %v4119
        %4121 = vmatmul.bf16.gmra.mxu0 %v820
        %v4122 = vpop.f32.mrf.mxu0
        %v4123 = vadd.f32 %v3834, %v4122
        %v4124 = vpop.f32.mrf.mxu0
        %v4125 = vadd.f32 %v3836, %v4124
        %4126 = vmatmul.bf16.gmra.mxu0 %v828
        %v4127 = vpop.f32.mrf.mxu0
        %v4128 = vadd.f32 %v3839, %v4127
        %v4129 = vpop.f32.mrf.mxu0
        %v4130 = vadd.f32 %v3841, %v4129
        %4131 = vmatmul.bf16.gmra.mxu0 %v836
        %v4132 = vpop.f32.mrf.mxu0
        %v4133 = vadd.f32 %v3844, %v4132
        %v4134 = vpop.f32.mrf.mxu0
        %v4135 = vadd.f32 %v3846, %v4134
        %4136 = vmatmul.bf16.gmra.mxu0 %v844
        %v4137 = vpop.f32.mrf.mxu0
        %v4138 = vadd.f32 %v3849, %v4137
        %v4139 = vpop.f32.mrf.mxu0
        %v4140 = vadd.f32 %v3851, %v4139
        %4141 = vmatmul.bf16.gmra.mxu0 %v852
        %v4142 = vpop.f32.mrf.mxu0
        %v4143 = vadd.f32 %v3854, %v4142
        %v4144 = vpop.f32.mrf.mxu0
        %v4145 = vadd.f32 %v3856, %v4144
        %4146 = vmatmul.bf16.gmra.mxu0 %v860
        %v4147 = vpop.f32.mrf.mxu0
        %v4148 = vadd.f32 %v3859, %v4147
        %v4149 = vpop.f32.mrf.mxu0
        %v4150 = vadd.f32 %v3861, %v4149
        %4151 = vmatmul.bf16.gmra.mxu0 %v868
        %v4152 = vpop.f32.mrf.mxu0
        %v4153 = vadd.f32 %v3864, %v4152
        %v4154 = vpop.f32.mrf.mxu0
        %v4155 = vadd.f32 %v3866, %v4154
        %4156 = vmatmul.bf16.gmra.mxu0 %v876
        %v4157 = vpop.f32.mrf.mxu0
        %v4158 = vadd.f32 %v3869, %v4157
        %v4159 = vpop.f32.mrf.mxu0
        %v4160 = vadd.f32 %v3871, %v4159
        %4161 = vmatmul.bf16.gmra.mxu0 %v884
        %v4162 = vpop.f32.mrf.mxu0
        %v4163 = vadd.f32 %v3874, %v4162
        %v4164 = vpop.f32.mrf.mxu0
        %v4165 = vadd.f32 %v3876, %v4164
        %4166 = vmatmul.bf16.gmra.mxu0 %v892
        %v4167 = vpop.f32.mrf.mxu0
        %v4168 = vadd.f32 %v3879, %v4167
        %v4169 = vpop.f32.mrf.mxu0
        %v4170 = vadd.f32 %v3881, %v4169
        %4171 = vmatmul.bf16.gmra.mxu0 %v900
        %v4172 = vpop.f32.mrf.mxu0
        %v4173 = vadd.f32 %v3884, %v4172
        %v4174 = vpop.f32.mrf.mxu0
        %v4175 = vadd.f32 %v3886, %v4174
        %4176 = vmatmul.bf16.gmra.mxu0 %v908
        %v4177 = vpop.f32.mrf.mxu0
        %v4178 = vadd.f32 %v3889, %v4177
        %v4179 = vpop.f32.mrf.mxu0
        %v4180 = vadd.f32 %v3891, %v4179
        %4181 = vmatmul.bf16.gmra.mxu0 %v916
        %v4182 = vpop.f32.mrf.mxu0
        %v4183 = vadd.f32 %v3894, %v4182
        %v4184 = vpop.f32.mrf.mxu0
        %v4185 = vadd.f32 %v3896, %v4184
        %4186 = vmatmul.bf16.gmra.mxu0 %v924
        %v4187 = vpop.f32.mrf.mxu0
        %v4188 = vadd.f32 %v3899, %v4187
        %v4189 = vpop.f32.mrf.mxu0
        %v4190 = vadd.f32 %v3901, %v4189
        %4191 = vmatmul.bf16.gmra.mxu0 %v932
        %v4192 = vpop.f32.mrf.mxu0
        %v4193 = vadd.f32 %v3904, %v4192
        %v4194 = vpop.f32.mrf.mxu0
        %v4195 = vadd.f32 %v3906, %v4194
        %4196 = vmatmul.bf16.gmra.mxu0 %v940
        %v4197 = vpop.f32.mrf.mxu0
        %v4198 = vadd.f32 %v3909, %v4197
        %v4199 = vpop.f32.mrf.mxu0
        %v4200 = vadd.f32 %v3911, %v4199
        %4201 = vmatmul.bf16.gmra.mxu0 %v948
        %v4202 = vpop.f32.mrf.mxu0
        %v4203 = vadd.f32 %v3914, %v4202
        %v4204 = vpop.f32.mrf.mxu0
        %v4205 = vadd.f32 %v3916, %v4204
        %4206 = vmatmul.bf16.gmra.mxu0 %v956
        %v4207 = vpop.f32.mrf.mxu0
        %v4208 = vadd.f32 %v3919, %v4207
        %v4209 = vpop.f32.mrf.mxu0
        %v4210 = vadd.f32 %v3921, %v4209
        %4211 = vmatmul.bf16.gmra.mxu0 %v964
        %v4212 = vpop.f32.mrf.mxu0
        %v4213 = vadd.f32 %v3924, %v4212
        %v4214 = vpop.f32.mrf.mxu0
        %v4215 = vadd.f32 %v3926, %v4214
        %4216 = vmatmul.bf16.gmra.mxu0 %v972
        %v4217 = vpop.f32.mrf.mxu0
        %v4218 = vadd.f32 %v3929, %v4217
        %v4219 = vpop.f32.mrf.mxu0
        %v4220 = vadd.f32 %v3931, %v4219
        %4221 = vmatmul.bf16.gmra.mxu0 %v980
        %v4222 = vpop.f32.mrf.mxu0
        %v4223 = vadd.f32 %v3934, %v4222
        %v4224 = vpop.f32.mrf.mxu0
        %v4225 = vadd.f32 %v3936, %v4224
        %4226 = vmatmul.bf16.gmra.mxu0 %v988
        %v4227 = vpop.f32.mrf.mxu0
        %v4228 = vadd.f32 %v3939, %v4227
        %v4229 = vpop.f32.mrf.mxu0
        %v4230 = vadd.f32 %v3941, %v4229
        %4231 = vmatmul.bf16.gmra.mxu0 %v996
        %v4232 = vpop.f32.mrf.mxu0
        %v4233 = vadd.f32 %v3944, %v4232
        %v4234 = vpop.f32.mrf.mxu0
        %v4235 = vadd.f32 %v3946, %v4234
        %4236 = vmatmul.bf16.gmra.mxu0 %v1004
        %v4237 = vpop.f32.mrf.mxu0
        %v4238 = vadd.f32 %v3949, %v4237
        %v4239 = vpop.f32.mrf.mxu0
        %v4240 = vadd.f32 %v3951, %v4239
        %4241 = vmatmul.bf16.gmra.mxu0 %v1012
        %v4242 = vpop.f32.mrf.mxu0
        %v4243 = vadd.f32 %v3954, %v4242
        %v4244 = vpop.f32.mrf.mxu0
        %v4245 = vadd.f32 %v3956, %v4244
        %4246 = vmatmul.bf16.gmra.mxu0 %v1020
        %v4247 = vpop.f32.mrf.mxu0
        %v4248 = vadd.f32 %v3959, %v4247
        %v4249 = vpop.f32.mrf.mxu0
        %v4250 = vadd.f32 %v3961, %v4249
        %4251 = vmatmul.bf16.gmra.mxu0 %v1028
        %v4252 = vpop.f32.mrf.mxu0
        %v4253 = vadd.f32 %v3964, %v4252
        %v4254 = vpop.f32.mrf.mxu0
        %v4255 = vadd.f32 %v3966, %v4254
        %4256 = vmatmul.bf16.gmra.mxu0 %v1036
        %v4257 = vpop.f32.mrf.mxu0
        %v4258 = vadd.f32 %v3969, %v4257
        %v4259 = vpop.f32.mrf.mxu0
        %v4260 = vadd.f32 %v3971, %v4259
        %4261 = vmatmul.bf16.gmra.mxu0 %v1044
        %v4262 = vpop.f32.mrf.mxu0
        %v4263 = vadd.f32 %v3974, %v4262
        %v4264 = vpop.f32.mrf.mxu0
        %v4265 = vadd.f32 %v3976, %v4264
        %4266 = vmatmul.bf16.gmra.mxu0 %v1052
        %v4267 = vpop.f32.mrf.mxu0
        %v4268 = vadd.f32 %v3979, %v4267
        %v4269 = vpop.f32.mrf.mxu0
        %v4270 = vadd.f32 %v3981, %v4269
        %4271 = vmatmul.bf16.gmra.mxu0 %v1060
        %v4272 = vpop.f32.mrf.mxu0
        %v4273 = vadd.f32 %v3984, %v4272
        %v4274 = vpop.f32.mrf.mxu0
        %v4275 = vadd.f32 %v3986, %v4274
        %4276 = vmatmul.bf16.gmra.mxu0 %v1068
        %v4277 = vpop.f32.mrf.mxu0
        %v4278 = vadd.f32 %v3989, %v4277
        %v4279 = vpop.f32.mrf.mxu0
        %v4280 = vadd.f32 %v3991, %v4279
        %4281 = vmatmul.bf16.gmra.mxu0 %v1076
        %v4282 = vpop.f32.mrf.mxu0
        %v4283 = vadd.f32 %v3994, %v4282
        %v4284 = vpop.f32.mrf.mxu0
        %v4285 = vadd.f32 %v3996, %v4284
        %4286 = vmatmul.bf16.gmra.mxu0 %v1084
        %v4287 = vpop.f32.mrf.mxu0
        %v4288 = vadd.f32 %v3999, %v4287
        %v4289 = vpop.f32.mrf.mxu0
        %v4290 = vadd.f32 %v4001, %v4289
        %4291 = vmatmul.bf16.gmra.mxu0 %v1092
        %v4292 = vpop.f32.mrf.mxu0
        %v4293 = vadd.f32 %v4004, %v4292
        %v4294 = vpop.f32.mrf.mxu0
        %v4295 = vadd.f32 %v4006, %v4294
        %4296 = vmatmul.bf16.gmra.mxu0 %v1100
        %v4297 = vpop.f32.mrf.mxu0
        %v4298 = vadd.f32 %v4009, %v4297
        %v4299 = vpop.f32.mrf.mxu0
        %v4300 = vadd.f32 %v4011, %v4299
        %4301 = vmatmul.bf16.gmra.mxu0 %v1108
        %v4302 = vpop.f32.mrf.mxu0
        %v4303 = vadd.f32 %v4014, %v4302
        %v4304 = vpop.f32.mrf.mxu0
        %v4305 = vadd.f32 %v4016, %v4304
        %4306 = vmatmul.bf16.gmra.mxu0 %v1116
        %v4307 = vpop.f32.mrf.mxu0
        %v4308 = vadd.f32 %v4019, %v4307
        %v4309 = vpop.f32.mrf.mxu0
        %v4310 = vadd.f32 %v4021, %v4309
        %4311 = vmatmul.bf16.gmra.mxu0 %v1182
        %v4312 = vpop.f32.mrf.mxu0
        %v4313 = vadd.f32 %v4024, %v4312
        %v4314 = vpop.f32.mrf.mxu0
        %v4315 = vadd.f32 %v4026, %v4314
        %4316 = vdwg.mxu0
        %4317 = vmatpush.bf16.msra.mxu0 %v3714
        %4318 = vmatpush.bf16.msra.mxu0 %v3713
        %4319 = vmatpush.bf16.msra.mxu0 %v3712
        %4320 = vmatpush.bf16.msra.mxu0 %v3711
        %4321 = vmatpush.bf16.msra.mxu0 %v3710
        %4322 = vmatpush.bf16.msra.mxu0 %v3709
        %4323 = vmatpush.bf16.msra.mxu0 %v3708
        %4324 = vmatpush.bf16.msra.mxu0 %v3707
        %4325 = vmatmul.bf16.gmra.mxu0 %v1194
        %v4326 = vpop.f32.mrf.mxu0
        %v4327 = vadd.f32 %v4038, %v4326
        %v4328 = vpop.f32.mrf.mxu0
        %v4329 = vadd.f32 %v4040, %v4328
        %4330 = vmatmul.bf16.gmra.mxu0 %v1196
        %v4331 = vpop.f32.mrf.mxu0
        %v4332 = vadd.f32 %v4043, %v4331
        %v4333 = vpop.f32.mrf.mxu0
        %v4334 = vadd.f32 %v4045, %v4333
        %4335 = vmatmul.bf16.gmra.mxu0 %v1198
        %v4336 = vpop.f32.mrf.mxu0
        %v4337 = vadd.f32 %v4048, %v4336
        %v4338 = vpop.f32.mrf.mxu0
        %v4339 = vadd.f32 %v4050, %v4338
        %4340 = vmatmul.bf16.gmra.mxu0 %v1200
        %v4341 = vpop.f32.mrf.mxu0
        %v4342 = vadd.f32 %v4053, %v4341
        %v4343 = vpop.f32.mrf.mxu0
        %v4344 = vadd.f32 %v4055, %v4343
        %4345 = vmatmul.bf16.gmra.mxu0 %v1202
        %v4346 = vpop.f32.mrf.mxu0
        %v4347 = vadd.f32 %v4058, %v4346
        %v4348 = vpop.f32.mrf.mxu0
        %v4349 = vadd.f32 %v4060, %v4348
        %4350 = vmatmul.bf16.gmra.mxu0 %v1204
        %v4351 = vpop.f32.mrf.mxu0
        %v4352 = vadd.f32 %v4063, %v4351
        %v4353 = vpop.f32.mrf.mxu0
        %v4354 = vadd.f32 %v4065, %v4353
        %4355 = vmatmul.bf16.gmra.mxu0 %v1206
        %v4356 = vpop.f32.mrf.mxu0
        %v4357 = vadd.f32 %v4068, %v4356
        %v4358 = vpop.f32.mrf.mxu0
        %v4359 = vadd.f32 %v4070, %v4358
        %4360 = vmatmul.bf16.gmra.mxu0 %v1208
        %v4361 = vpop.f32.mrf.mxu0
        %v4362 = vadd.f32 %v4073, %v4361
        %v4363 = vpop.f32.mrf.mxu0
        %v4364 = vadd.f32 %v4075, %v4363
        %4365 = vmatmul.bf16.gmra.mxu0 %v1210
        %v4366 = vpop.f32.mrf.mxu0
        %v4367 = vadd.f32 %v4078, %v4366
        %v4368 = vpop.f32.mrf.mxu0
        %v4369 = vadd.f32 %v4080, %v4368
        %4370 = vmatmul.bf16.gmra.mxu0 %v1212
        %v4371 = vpop.f32.mrf.mxu0
        %v4372 = vadd.f32 %v4083, %v4371
        %v4373 = vpop.f32.mrf.mxu0
        %v4374 = vadd.f32 %v4085, %v4373
        %4375 = vmatmul.bf16.gmra.mxu0 %v1214
        %v4376 = vpop.f32.mrf.mxu0
        %v4377 = vadd.f32 %v4088, %v4376
        %v4378 = vpop.f32.mrf.mxu0
        %v4379 = vadd.f32 %v4090, %v4378
        %4380 = vmatmul.bf16.gmra.mxu0 %v1216
        %v4381 = vpop.f32.mrf.mxu0
        %v4382 = vadd.f32 %v4093, %v4381
        %v4383 = vpop.f32.mrf.mxu0
        %v4384 = vadd.f32 %v4095, %v4383
        %4385 = vmatmul.bf16.gmra.mxu0 %v1218
        %v4386 = vpop.f32.mrf.mxu0
        %v4387 = vadd.f32 %v4098, %v4386
        %v4388 = vpop.f32.mrf.mxu0
        %v4389 = vadd.f32 %v4100, %v4388
        %4390 = vmatmul.bf16.gmra.mxu0 %v1220
        %v4391 = vpop.f32.mrf.mxu0
        %v4392 = vadd.f32 %v4103, %v4391
        %v4393 = vpop.f32.mrf.mxu0
        %v4394 = vadd.f32 %v4105, %v4393
        %4395 = vmatmul.bf16.gmra.mxu0 %v1222
        %v4396 = vpop.f32.mrf.mxu0
        %v4397 = vadd.f32 %v4108, %v4396
        %v4398 = vpop.f32.mrf.mxu0
        %v4399 = vadd.f32 %v4110, %v4398
        %4400 = vmatmul.bf16.gmra.mxu0 %v1224
        %v4401 = vpop.f32.mrf.mxu0
        %v4402 = vadd.f32 %v4113, %v4401
        %v4403 = vpop.f32.mrf.mxu0
        %v4404 = vadd.f32 %v4115, %v4403
        %4405 = vmatmul.bf16.gmra.mxu0 %v1226
        %v4406 = vpop.f32.mrf.mxu0
        %v4407 = vadd.f32 %v4118, %v4406
        %v4408 = vpop.f32.mrf.mxu0
        %v4409 = vadd.f32 %v4120, %v4408
        %4410 = vmatmul.bf16.gmra.mxu0 %v1228
        %v4411 = vpop.f32.mrf.mxu0
        %v4412 = vadd.f32 %v4123, %v4411
        %v4413 = vpop.f32.mrf.mxu0
        %v4414 = vadd.f32 %v4125, %v4413
        %4415 = vmatmul.bf16.gmra.mxu0 %v1230
        %v4416 = vpop.f32.mrf.mxu0
        %v4417 = vadd.f32 %v4128, %v4416
        %v4418 = vpop.f32.mrf.mxu0
        %v4419 = vadd.f32 %v4130, %v4418
        %4420 = vmatmul.bf16.gmra.mxu0 %v1232
        %v4421 = vpop.f32.mrf.mxu0
        %v4422 = vadd.f32 %v4133, %v4421
        %v4423 = vpop.f32.mrf.mxu0
        %v4424 = vadd.f32 %v4135, %v4423
        %4425 = vmatmul.bf16.gmra.mxu0 %v1234
        %v4426 = vpop.f32.mrf.mxu0
        %v4427 = vadd.f32 %v4138, %v4426
        %v4428 = vpop.f32.mrf.mxu0
        %v4429 = vadd.f32 %v4140, %v4428
        %4430 = vmatmul.bf16.gmra.mxu0 %v1236
        %v4431 = vpop.f32.mrf.mxu0
        %v4432 = vadd.f32 %v4143, %v4431
        %v4433 = vpop.f32.mrf.mxu0
        %v4434 = vadd.f32 %v4145, %v4433
        %4435 = vmatmul.bf16.gmra.mxu0 %v1238
        %v4436 = vpop.f32.mrf.mxu0
        %v4437 = vadd.f32 %v4148, %v4436
        %v4438 = vpop.f32.mrf.mxu0
        %v4439 = vadd.f32 %v4150, %v4438
        %4440 = vmatmul.bf16.gmra.mxu0 %v1240
        %v4441 = vpop.f32.mrf.mxu0
        %v4442 = vadd.f32 %v4153, %v4441
        %v4443 = vpop.f32.mrf.mxu0
        %v4444 = vadd.f32 %v4155, %v4443
        %4445 = vmatmul.bf16.gmra.mxu0 %v1242
        %v4446 = vpop.f32.mrf.mxu0
        %v4447 = vadd.f32 %v4158, %v4446
        %v4448 = vpop.f32.mrf.mxu0
        %v4449 = vadd.f32 %v4160, %v4448
        %4450 = vmatmul.bf16.gmra.mxu0 %v1244
        %v4451 = vpop.f32.mrf.mxu0
        %v4452 = vadd.f32 %v4163, %v4451
        %v4453 = vpop.f32.mrf.mxu0
        %v4454 = vadd.f32 %v4165, %v4453
        %4455 = vmatmul.bf16.gmra.mxu0 %v1246
        %v4456 = vpop.f32.mrf.mxu0
        %v4457 = vadd.f32 %v4168, %v4456
        %v4458 = vpop.f32.mrf.mxu0
        %v4459 = vadd.f32 %v4170, %v4458
        %4460 = vmatmul.bf16.gmra.mxu0 %v1248
        %v4461 = vpop.f32.mrf.mxu0
        %v4462 = vadd.f32 %v4173, %v4461
        %v4463 = vpop.f32.mrf.mxu0
        %v4464 = vadd.f32 %v4175, %v4463
        %4465 = vmatmul.bf16.gmra.mxu0 %v1250
        %v4466 = vpop.f32.mrf.mxu0
        %v4467 = vadd.f32 %v4178, %v4466
        %v4468 = vpop.f32.mrf.mxu0
        %v4469 = vadd.f32 %v4180, %v4468
        %4470 = vmatmul.bf16.gmra.mxu0 %v1252
        %v4471 = vpop.f32.mrf.mxu0
        %v4472 = vadd.f32 %v4183, %v4471
        %v4473 = vpop.f32.mrf.mxu0
        %v4474 = vadd.f32 %v4185, %v4473
        %4475 = vmatmul.bf16.gmra.mxu0 %v1254
        %v4476 = vpop.f32.mrf.mxu0
        %v4477 = vadd.f32 %v4188, %v4476
        %v4478 = vpop.f32.mrf.mxu0
        %v4479 = vadd.f32 %v4190, %v4478
        %4480 = vmatmul.bf16.gmra.mxu0 %v1256
        %v4481 = vpop.f32.mrf.mxu0
        %v4482 = vadd.f32 %v4193, %v4481
        %v4483 = vpop.f32.mrf.mxu0
        %v4484 = vadd.f32 %v4195, %v4483
        %4485 = vmatmul.bf16.gmra.mxu0 %v1258
        %v4486 = vpop.f32.mrf.mxu0
        %v4487 = vadd.f32 %v4198, %v4486
        %v4488 = vpop.f32.mrf.mxu0
        %v4489 = vadd.f32 %v4200, %v4488
        %4490 = vmatmul.bf16.gmra.mxu0 %v1260
        %v4491 = vpop.f32.mrf.mxu0
        %v4492 = vadd.f32 %v4203, %v4491
        %v4493 = vpop.f32.mrf.mxu0
        %v4494 = vadd.f32 %v4205, %v4493
        %4495 = vmatmul.bf16.gmra.mxu0 %v1262
        %v4496 = vpop.f32.mrf.mxu0
        %v4497 = vadd.f32 %v4208, %v4496
        %v4498 = vpop.f32.mrf.mxu0
        %v4499 = vadd.f32 %v4210, %v4498
        %4500 = vmatmul.bf16.gmra.mxu0 %v1264
        %v4501 = vpop.f32.mrf.mxu0
        %v4502 = vadd.f32 %v4213, %v4501
        %v4503 = vpop.f32.mrf.mxu0
        %v4504 = vadd.f32 %v4215, %v4503
        %4505 = vmatmul.bf16.gmra.mxu0 %v1266
        %v4506 = vpop.f32.mrf.mxu0
        %v4507 = vadd.f32 %v4218, %v4506
        %v4508 = vpop.f32.mrf.mxu0
        %v4509 = vadd.f32 %v4220, %v4508
        %4510 = vmatmul.bf16.gmra.mxu0 %v1268
        %v4511 = vpop.f32.mrf.mxu0
        %v4512 = vadd.f32 %v4223, %v4511
        %v4513 = vpop.f32.mrf.mxu0
        %v4514 = vadd.f32 %v4225, %v4513
        %4515 = vmatmul.bf16.gmra.mxu0 %v1270
        %v4516 = vpop.f32.mrf.mxu0
        %v4517 = vadd.f32 %v4228, %v4516
        %v4518 = vpop.f32.mrf.mxu0
        %v4519 = vadd.f32 %v4230, %v4518
        %4520 = vmatmul.bf16.gmra.mxu0 %v1272
        %v4521 = vpop.f32.mrf.mxu0
        %v4522 = vadd.f32 %v4233, %v4521
        %v4523 = vpop.f32.mrf.mxu0
        %v4524 = vadd.f32 %v4235, %v4523
        %4525 = vmatmul.bf16.gmra.mxu0 %v1274
        %v4526 = vpop.f32.mrf.mxu0
        %v4527 = vadd.f32 %v4238, %v4526
        %v4528 = vpop.f32.mrf.mxu0
        %v4529 = vadd.f32 %v4240, %v4528
        %4530 = vmatmul.bf16.gmra.mxu0 %v1276
        %v4531 = vpop.f32.mrf.mxu0
        %v4532 = vadd.f32 %v4243, %v4531
        %v4533 = vpop.f32.mrf.mxu0
        %v4534 = vadd.f32 %v4245, %v4533
        %4535 = vmatmul.bf16.gmra.mxu0 %v1278
        %v4536 = vpop.f32.mrf.mxu0
        %v4537 = vadd.f32 %v4248, %v4536
        %v4538 = vpop.f32.mrf.mxu0
        %v4539 = vadd.f32 %v4250, %v4538
        %4540 = vmatmul.bf16.gmra.mxu0 %v1280
        %v4541 = vpop.f32.mrf.mxu0
        %v4542 = vadd.f32 %v4253, %v4541
        %v4543 = vpop.f32.mrf.mxu0
        %v4544 = vadd.f32 %v4255, %v4543
        %4545 = vmatmul.bf16.gmra.mxu0 %v1282
        %v4546 = vpop.f32.mrf.mxu0
        %v4547 = vadd.f32 %v4258, %v4546
        %v4548 = vpop.f32.mrf.mxu0
        %v4549 = vadd.f32 %v4260, %v4548
        %4550 = vmatmul.bf16.gmra.mxu0 %v1284
        %v4551 = vpop.f32.mrf.mxu0
        %v4552 = vadd.f32 %v4263, %v4551
        %v4553 = vpop.f32.mrf.mxu0
        %v4554 = vadd.f32 %v4265, %v4553
        %4555 = vmatmul.bf16.gmra.mxu0 %v1286
        %v4556 = vpop.f32.mrf.mxu0
        %v4557 = vadd.f32 %v4268, %v4556
        %v4558 = vpop.f32.mrf.mxu0
        %v4559 = vadd.f32 %v4270, %v4558
        %4560 = vmatmul.bf16.gmra.mxu0 %v1288
        %v4561 = vpop.f32.mrf.mxu0
        %v4562 = vadd.f32 %v4273, %v4561
        %v4563 = vpop.f32.mrf.mxu0
        %v4564 = vadd.f32 %v4275, %v4563
        %4565 = vmatmul.bf16.gmra.mxu0 %v1290
        %v4566 = vpop.f32.mrf.mxu0
        %v4567 = vadd.f32 %v4278, %v4566
        %v4568 = vpop.f32.mrf.mxu0
        %v4569 = vadd.f32 %v4280, %v4568
        %4570 = vmatmul.bf16.gmra.mxu0 %v1292
        %v4571 = vpop.f32.mrf.mxu0
        %v4572 = vadd.f32 %v4283, %v4571
        %v4573 = vpop.f32.mrf.mxu0
        %v4574 = vadd.f32 %v4285, %v4573
        %4575 = vmatmul.bf16.gmra.mxu0 %v1294
        %v4576 = vpop.f32.mrf.mxu0
        %v4577 = vadd.f32 %v4288, %v4576
        %v4578 = vpop.f32.mrf.mxu0
        %v4579 = vadd.f32 %v4290, %v4578
        %4580 = vmatmul.bf16.gmra.mxu0 %v1296
        %v4581 = vpop.f32.mrf.mxu0
        %v4582 = vadd.f32 %v4293, %v4581
        %v4583 = vpop.f32.mrf.mxu0
        %v4584 = vadd.f32 %v4295, %v4583
        %4585 = vmatmul.bf16.gmra.mxu0 %v1298
        %v4586 = vpop.f32.mrf.mxu0
        %v4587 = vadd.f32 %v4298, %v4586
        %v4588 = vpop.f32.mrf.mxu0
        %v4589 = vadd.f32 %v4300, %v4588
        %4590 = vmatmul.bf16.gmra.mxu0 %v1300
        %v4591 = vpop.f32.mrf.mxu0
        %v4592 = vadd.f32 %v4303, %v4591
        %v4593 = vpop.f32.mrf.mxu0
        %v4594 = vadd.f32 %v4305, %v4593
        %4595 = vmatmul.bf16.gmra.mxu0 %v1302
        %v4596 = vpop.f32.mrf.mxu0
        %v4597 = vadd.f32 %v4308, %v4596
        %v4598 = vpop.f32.mrf.mxu0
        %v4599 = vadd.f32 %v4310, %v4598
        %4600 = vmatmul.bf16.gmra.mxu0 %v1365
        %v4601 = vpop.f32.mrf.mxu0
        %v4602 = vadd.f32 %v4313, %v4601
        %v4603 = vpop.f32.mrf.mxu0
        %v4604 = vadd.f32 %v4315, %v4603
        %4605 = vdwg.mxu0
        %v4606 = vadd.f32 %v3267, %v4327
        %v4607 = vadd.f32 %v3269, %v4329
        %v4608 = vadd.f32 %v3272, %v4332
        %v4609 = vadd.f32 %v3274, %v4334
        %v4610 = vadd.f32 %v3277, %v4337
        %v4611 = vadd.f32 %v3279, %v4339
        %v4612 = vadd.f32 %v3282, %v4342
        %v4613 = vadd.f32 %v3284, %v4344
        %v4614 = vadd.f32 %v3287, %v4347
        %v4615 = vadd.f32 %v3289, %v4349
        %v4616 = vadd.f32 %v3292, %v4352
        %v4617 = vadd.f32 %v3294, %v4354
        %v4618 = vadd.f32 %v3297, %v4357
        %v4619 = vadd.f32 %v3299, %v4359
        %v4620 = vadd.f32 %v3302, %v4362
        %v4621 = vadd.f32 %v3304, %v4364
        %v4622 = vadd.f32 %v3307, %v4367
        %v4623 = vadd.f32 %v3309, %v4369
        %v4624 = vadd.f32 %v3312, %v4372
        %v4625 = vadd.f32 %v3314, %v4374
        %v4626 = vadd.f32 %v3317, %v4377
        %v4627 = vadd.f32 %v3319, %v4379
        %v4628 = vadd.f32 %v3322, %v4382
        %v4629 = vadd.f32 %v3324, %v4384
        %v4630 = vadd.f32 %v3327, %v4387
        %v4631 = vadd.f32 %v3329, %v4389
        %v4632 = vadd.f32 %v3332, %v4392
        %v4633 = vadd.f32 %v3334, %v4394
        %v4634 = vadd.f32 %v3337, %v4397
        %v4635 = vadd.f32 %v3339, %v4399
        %v4636 = vadd.f32 %v3342, %v4402
        %v4637 = vadd.f32 %v3344, %v4404
        %v4638 = vadd.f32 %v3347, %v4407
        %v4639 = vadd.f32 %v3349, %v4409
        %v4640 = vadd.f32 %v3352, %v4412
        %v4641 = vadd.f32 %v3354, %v4414
        %v4642 = vadd.f32 %v3357, %v4417
        %v4643 = vadd.f32 %v3359, %v4419
        %v4644 = vadd.f32 %v3362, %v4422
        %v4645 = vadd.f32 %v3364, %v4424
        %v4646 = vadd.f32 %v3367, %v4427
        %v4647 = vadd.f32 %v3369, %v4429
        %v4648 = vadd.f32 %v3372, %v4432
        %v4649 = vadd.f32 %v3374, %v4434
        %v4650 = vadd.f32 %v3377, %v4437
        %v4651 = vadd.f32 %v3379, %v4439
        %v4652 = vadd.f32 %v3382, %v4442
        %v4653 = vadd.f32 %v3384, %v4444
        %v4654 = vadd.f32 %v3387, %v4447
        %v4655 = vadd.f32 %v3389, %v4449
        %v4656 = vadd.f32 %v3392, %v4452
        %v4657 = vadd.f32 %v3394, %v4454
        %v4658 = vadd.f32 %v3397, %v4457
        %v4659 = vadd.f32 %v3399, %v4459
        %v4660 = vadd.f32 %v3402, %v4462
        %v4661 = vadd.f32 %v3404, %v4464
        %v4662 = vadd.f32 %v3407, %v4467
        %v4663 = vadd.f32 %v3409, %v4469
        %v4664 = vadd.f32 %v3412, %v4472
        %v4665 = vadd.f32 %v3414, %v4474
        %v4666 = vadd.f32 %v3417, %v4477
        %v4667 = vadd.f32 %v3419, %v4479
        %v4668 = vadd.f32 %v3422, %v4482
        %v4669 = vadd.f32 %v3424, %v4484
        %v4670 = vadd.f32 %v3427, %v4487
        %v4671 = vadd.f32 %v3429, %v4489
        %v4672 = vadd.f32 %v3432, %v4492
        %v4673 = vadd.f32 %v3434, %v4494
        %v4674 = vadd.f32 %v3437, %v4497
        %v4675 = vadd.f32 %v3439, %v4499
        %v4676 = vadd.f32 %v3442, %v4502
        %v4677 = vadd.f32 %v3444, %v4504
        %v4678 = vadd.f32 %v3447, %v4507
        %v4679 = vadd.f32 %v3449, %v4509
        %v4680 = vadd.f32 %v3452, %v4512
        %v4681 = vadd.f32 %v3454, %v4514
        %v4682 = vadd.f32 %v3457, %v4517
        %v4683 = vadd.f32 %v3459, %v4519
        %v4684 = vadd.f32 %v3462, %v4522
        %v4685 = vadd.f32 %v3464, %v4524
        %v4686 = vadd.f32 %v3467, %v4527
        %v4687 = vadd.f32 %v3469, %v4529
        %v4688 = vadd.f32 %v3472, %v4532
        %v4689 = vadd.f32 %v3474, %v4534
        %v4690 = vadd.f32 %v3477, %v4537
        %v4691 = vadd.f32 %v3479, %v4539
        %v4692 = vadd.f32 %v3482, %v4542
        %v4693 = vadd.f32 %v3484, %v4544
        %v4694 = vadd.f32 %v3487, %v4547
        %v4695 = vadd.f32 %v3489, %v4549
        %v4696 = vadd.f32 %v3492, %v4552
        %v4697 = vadd.f32 %v3494, %v4554
        %v4698 = vadd.f32 %v3497, %v4557
        %v4699 = vadd.f32 %v3499, %v4559
        %v4700 = vadd.f32 %v3502, %v4562
        %v4701 = vadd.f32 %v3504, %v4564
        %v4702 = vadd.f32 %v3507, %v4567
        %v4703 = vadd.f32 %v3509, %v4569
        %v4704 = vadd.f32 %v3512, %v4572
        %v4705 = vadd.f32 %v3514, %v4574
        %v4706 = vadd.f32 %v3517, %v4577
        %v4707 = vadd.f32 %v3519, %v4579
        %v4708 = vadd.f32 %v3522, %v4582
        %v4709 = vadd.f32 %v3524, %v4584
        %v4710 = vadd.f32 %v3527, %v4587
        %v4711 = vadd.f32 %v3529, %v4589
        %v4712 = vadd.f32 %v3532, %v4592
        %v4713 = vadd.f32 %v3534, %v4594
        %v4714 = vadd.f32 %v3537, %v4597
        %v4715 = vadd.f32 %v3539, %v4599
        %v4716 = vadd.f32 %v3542, %v4602
        %v4717 = vadd.f32 %v3544, %v4604
        %v4718 = vlaneseq
        %v4719 = vshrl.u32 %v4718, 7
        %v4720 = vadd.s32 %v4719, 8
        %v4721 = vadd.s32 %v4719, 16
        %v4722 = vadd.s32 %v4719, 24
        %v4723 = vadd.s32 %v4719, 32
        %v4724 = vadd.s32 %v4719, 40
        %v4725 = vadd.s32 %v4719, 48
        %v4726 = vadd.s32 %v4719, 56
        %v4727 = vadd.s32 %v4719, 64
        %v4728 = vadd.s32 %v4719, 72
        %v4729 = vadd.s32 %v4719, 80
        %v4730 = vadd.s32 %v4719, 88
        %v4731 = vadd.s32 %v4719, 96
        %v4732 = vadd.s32 %v4719, 104
        %v4733 = vadd.s32 %v4719, 112
        %v4734 = vadd.s32 %v4719, 120
        %v4735 = vadd.s32 %v4719, 128
        %v4736 = vadd.s32 %v4719, 136
        %v4737 = vadd.s32 %v4719, 144
        %v4738 = vadd.s32 %v4719, 152
        %v4739 = vadd.s32 %v4719, 160
        %v4740 = vadd.s32 %v4719, 168
        %v4741 = vadd.s32 %v4719, 176
        %v4742 = vadd.s32 %v4719, 184
        %v4743 = vadd.s32 %v4719, 192
        %v4744 = vadd.s32 %v4719, 200
        %v4745 = vadd.s32 %v4719, 208
        %v4746 = vadd.s32 %v4719, 216
        %v4747 = vadd.s32 %v4719, 224
        %v4748 = vadd.s32 %v4719, 232
        %v4749 = vadd.s32 %v4719, 240
        %v4750 = vadd.s32 %v4719, 248
        %v4751 = vadd.s32 %v4719, 256
        %v4752 = vadd.s32 %v4719, 264
        %v4753 = vadd.s32 %v4719, 272
        %v4754 = vadd.s32 %v4719, 280
        %v4755 = vadd.s32 %v4719, 288
        %v4756 = vadd.s32 %v4719, 296
        %v4757 = vadd.s32 %v4719, 304
        %v4758 = vadd.s32 %v4719, 312
        %v4759 = vadd.s32 %v4719, 320
        %v4760 = vadd.s32 %v4719, 328
        %v4761 = vadd.s32 %v4719, 336
        %v4762 = vadd.s32 %v4719, 344
        %v4763 = vadd.s32 %v4719, 352
        %v4764 = vadd.s32 %v4719, 360
        %v4765 = vadd.s32 %v4719, 368
        %v4766 = vadd.s32 %v4719, 376
        %v4767 = vadd.s32 %v4719, 384
        %v4768 = vadd.s32 %v4719, 392
        %v4769 = vadd.s32 %v4719, 400
        %v4770 = vadd.s32 %v4719, 408
        %v4771 = vadd.s32 %v4719, 416
        %v4772 = vadd.s32 %v4719, 424
        %v4773 = vadd.s32 %v4719, 432
        %v4774 = vadd.s32 %v4719, 440
        %v4775 = vadd.s32 %v4719, 448
        %v4776 = vadd.s32 %v4719, 456
        %v4777 = vadd.s32 %v4719, 464
        %v4778 = vadd.s32 %v4719, 472
        %v4779 = vadd.s32 %v4719, 480
        %v4780 = vadd.s32 %v4719, 488
        %v4781 = vadd.s32 %v4719, 496
        %v4782 = vadd.s32 %v4719, 504
        %v4783 = vadd.s32 %v4719, 512
        %v4784 = vadd.s32 %v4719, 520
        %v4785 = vadd.s32 %v4719, 528
        %v4786 = vadd.s32 %v4719, 536
        %v4787 = vadd.s32 %v4719, 544
        %v4788 = vadd.s32 %v4719, 552
        %v4789 = vadd.s32 %v4719, 560
        %v4790 = vadd.s32 %v4719, 568
        %v4791 = vadd.s32 %v4719, 576
        %v4792 = vadd.s32 %v4719, 584
        %v4793 = vadd.s32 %v4719, 592
        %v4794 = vadd.s32 %v4719, 600
        %v4795 = vadd.s32 %v4719, 608
        %v4796 = vadd.s32 %v4719, 616
        %v4797 = vadd.s32 %v4719, 624
        %v4798 = vadd.s32 %v4719, 632
        %v4799 = vadd.s32 %v4719, 640
        %v4800 = vadd.s32 %v4719, 648
        %v4801 = vadd.s32 %v4719, 656
        %v4802 = vadd.s32 %v4719, 664
        %v4803 = vadd.s32 %v4719, 672
        %v4804 = vadd.s32 %v4719, 680
        %v4805 = vadd.s32 %v4719, 688
        %v4806 = vadd.s32 %v4719, 696
        %v4807 = vadd.s32 %v4719, 704
        %v4808 = vadd.s32 %v4719, 712
        %v4809 = vadd.s32 %v4719, 720
        %v4810 = vadd.s32 %v4719, 728
        %v4811 = vadd.s32 %v4719, 736
        %v4812 = vadd.s32 %v4719, 744
        %v4813 = vadd.s32 %v4719, 752
        %v4814 = vadd.s32 %v4719, 760
        %v4815 = vadd.s32 %v4719, 768
        %v4816 = vadd.s32 %v4719, 776
        %v4817 = vadd.s32 %v4719, 784
        %v4818 = vadd.s32 %v4719, 792
        %v4819 = vadd.s32 %v4719, 800
        %v4820 = vadd.s32 %v4719, 808
        %v4821 = vadd.s32 %v4719, 816
        %v4822 = vadd.s32 %v4719, 824
        %v4823 = vadd.s32 %v4719, 832
        %v4824 = vadd.s32 %v4719, 840
        %v4825 = vadd.s32 %v4719, 848
        %v4826 = vadd.s32 %v4719, 856
        %v4827 = vadd.s32 %v4719, 864
        %v4828 = vadd.s32 %v4719, 872
        %v4829 = vadd.s32 %v4719, 880
        %v4830 = vadd.s32 %v4719, 888
        %vm4831 = vcmp.lt.s32.totalorder %v4719, 0
        %v4832 = vsub.s32 0, %v4719
        %v4833 = vsel %vm4831, %v4832, %v4719
        %v4834 = vshrl.u32 %v4833, 5
        %v4835 = vand.u32 %v4833, 31
        %v4836 = vsub.s32 0, %v4835
        %v4837 = vsel %vm4831, %v4836, %v4835
        %vm4838 = vcmp.lt.s32.totalorder %v4720, 0
        %v4839 = vsub.s32 0, %v4720
        %v4840 = vsel %vm4838, %v4839, %v4720
        %v4841 = vshrl.u32 %v4840, 5
        %v4842 = vand.u32 %v4840, 31
        %v4843 = vsub.s32 0, %v4842
        %v4844 = vsel %vm4838, %v4843, %v4842
        %vm4845 = vcmp.lt.s32.totalorder %v4721, 0
        %v4846 = vsub.s32 0, %v4721
        %v4847 = vsel %vm4845, %v4846, %v4721
        %v4848 = vshrl.u32 %v4847, 5
        %v4849 = vand.u32 %v4847, 31
        %v4850 = vsub.s32 0, %v4849
        %v4851 = vsel %vm4845, %v4850, %v4849
        %vm4852 = vcmp.lt.s32.totalorder %v4722, 0
        %v4853 = vsub.s32 0, %v4722
        %v4854 = vsel %vm4852, %v4853, %v4722
        %v4855 = vshrl.u32 %v4854, 5
        %v4856 = vand.u32 %v4854, 31
        %v4857 = vsub.s32 0, %v4856
        %v4858 = vsel %vm4852, %v4857, %v4856
        %vm4859 = vcmp.lt.s32.totalorder %v4723, 0
        %v4860 = vsub.s32 0, %v4723
        %v4861 = vsel %vm4859, %v4860, %v4723
        %v4862 = vshrl.u32 %v4861, 5
        %v4863 = vand.u32 %v4861, 31
        %v4864 = vsub.s32 0, %v4863
        %v4865 = vsel %vm4859, %v4864, %v4863
        %vm4866 = vcmp.lt.s32.totalorder %v4724, 0
        %v4867 = vsub.s32 0, %v4724
        %v4868 = vsel %vm4866, %v4867, %v4724
        %v4869 = vshrl.u32 %v4868, 5
        %v4870 = vand.u32 %v4868, 31
        %v4871 = vsub.s32 0, %v4870
        %v4872 = vsel %vm4866, %v4871, %v4870
        %vm4873 = vcmp.lt.s32.totalorder %v4725, 0
        %v4874 = vsub.s32 0, %v4725
        %v4875 = vsel %vm4873, %v4874, %v4725
        %v4876 = vshrl.u32 %v4875, 5
        %v4877 = vand.u32 %v4875, 31
        %v4878 = vsub.s32 0, %v4877
        %v4879 = vsel %vm4873, %v4878, %v4877
        %vm4880 = vcmp.lt.s32.totalorder %v4726, 0
        %v4881 = vsub.s32 0, %v4726
        %v4882 = vsel %vm4880, %v4881, %v4726
        %v4883 = vshrl.u32 %v4882, 5
        %v4884 = vand.u32 %v4882, 31
        %v4885 = vsub.s32 0, %v4884
        %v4886 = vsel %vm4880, %v4885, %v4884
        %vm4887 = vcmp.lt.s32.totalorder %v4727, 0
        %v4888 = vsub.s32 0, %v4727
        %v4889 = vsel %vm4887, %v4888, %v4727
        %v4890 = vshrl.u32 %v4889, 5
        %v4891 = vand.u32 %v4889, 31
        %v4892 = vsub.s32 0, %v4891
        %v4893 = vsel %vm4887, %v4892, %v4891
        %vm4894 = vcmp.lt.s32.totalorder %v4728, 0
        %v4895 = vsub.s32 0, %v4728
        %v4896 = vsel %vm4894, %v4895, %v4728
        %v4897 = vshrl.u32 %v4896, 5
        %v4898 = vand.u32 %v4896, 31
        %v4899 = vsub.s32 0, %v4898
        %v4900 = vsel %vm4894, %v4899, %v4898
        %vm4901 = vcmp.lt.s32.totalorder %v4729, 0
        %v4902 = vsub.s32 0, %v4729
        %v4903 = vsel %vm4901, %v4902, %v4729
        %v4904 = vshrl.u32 %v4903, 5
        %v4905 = vand.u32 %v4903, 31
        %v4906 = vsub.s32 0, %v4905
        %v4907 = vsel %vm4901, %v4906, %v4905
        %vm4908 = vcmp.lt.s32.totalorder %v4730, 0
        %v4909 = vsub.s32 0, %v4730
        %v4910 = vsel %vm4908, %v4909, %v4730
        %v4911 = vshrl.u32 %v4910, 5
        %v4912 = vand.u32 %v4910, 31
        %v4913 = vsub.s32 0, %v4912
        %v4914 = vsel %vm4908, %v4913, %v4912
        %vm4915 = vcmp.lt.s32.totalorder %v4731, 0
        %v4916 = vsub.s32 0, %v4731
        %v4917 = vsel %vm4915, %v4916, %v4731
        %v4918 = vshrl.u32 %v4917, 5
        %v4919 = vand.u32 %v4917, 31
        %v4920 = vsub.s32 0, %v4919
        %v4921 = vsel %vm4915, %v4920, %v4919
        %vm4922 = vcmp.lt.s32.totalorder %v4732, 0
        %v4923 = vsub.s32 0, %v4732
        %v4924 = vsel %vm4922, %v4923, %v4732
        %v4925 = vshrl.u32 %v4924, 5
        %v4926 = vand.u32 %v4924, 31
        %v4927 = vsub.s32 0, %v4926
        %v4928 = vsel %vm4922, %v4927, %v4926
        %vm4929 = vcmp.lt.s32.totalorder %v4733, 0
        %v4930 = vsub.s32 0, %v4733
        %v4931 = vsel %vm4929, %v4930, %v4733
        %v4932 = vshrl.u32 %v4931, 5
        %v4933 = vand.u32 %v4931, 31
        %v4934 = vsub.s32 0, %v4933
        %v4935 = vsel %vm4929, %v4934, %v4933
        %vm4936 = vcmp.lt.s32.totalorder %v4734, 0
        %v4937 = vsub.s32 0, %v4734
        %v4938 = vsel %vm4936, %v4937, %v4734
        %v4939 = vshrl.u32 %v4938, 5
        %v4940 = vand.u32 %v4938, 31
        %v4941 = vsub.s32 0, %v4940
        %v4942 = vsel %vm4936, %v4941, %v4940
        %vm4943 = vcmp.lt.s32.totalorder %v4735, 0
        %v4944 = vsub.s32 0, %v4735
        %v4945 = vsel %vm4943, %v4944, %v4735
        %v4946 = vshrl.u32 %v4945, 5
        %v4947 = vand.u32 %v4945, 31
        %v4948 = vsub.s32 0, %v4947
        %v4949 = vsel %vm4943, %v4948, %v4947
        %vm4950 = vcmp.lt.s32.totalorder %v4736, 0
        %v4951 = vsub.s32 0, %v4736
        %v4952 = vsel %vm4950, %v4951, %v4736
        %v4953 = vshrl.u32 %v4952, 5
        %v4954 = vand.u32 %v4952, 31
        %v4955 = vsub.s32 0, %v4954
        %v4956 = vsel %vm4950, %v4955, %v4954
        %vm4957 = vcmp.lt.s32.totalorder %v4737, 0
        %v4958 = vsub.s32 0, %v4737
        %v4959 = vsel %vm4957, %v4958, %v4737
        %v4960 = vshrl.u32 %v4959, 5
        %v4961 = vand.u32 %v4959, 31
        %v4962 = vsub.s32 0, %v4961
        %v4963 = vsel %vm4957, %v4962, %v4961
        %vm4964 = vcmp.lt.s32.totalorder %v4738, 0
        %v4965 = vsub.s32 0, %v4738
        %v4966 = vsel %vm4964, %v4965, %v4738
        %v4967 = vshrl.u32 %v4966, 5
        %v4968 = vand.u32 %v4966, 31
        %v4969 = vsub.s32 0, %v4968
        %v4970 = vsel %vm4964, %v4969, %v4968
        %vm4971 = vcmp.lt.s32.totalorder %v4739, 0
        %v4972 = vsub.s32 0, %v4739
        %v4973 = vsel %vm4971, %v4972, %v4739
        %v4974 = vshrl.u32 %v4973, 5
        %v4975 = vand.u32 %v4973, 31
        %v4976 = vsub.s32 0, %v4975
        %v4977 = vsel %vm4971, %v4976, %v4975
        %vm4978 = vcmp.lt.s32.totalorder %v4740, 0
        %v4979 = vsub.s32 0, %v4740
        %v4980 = vsel %vm4978, %v4979, %v4740
        %v4981 = vshrl.u32 %v4980, 5
        %v4982 = vand.u32 %v4980, 31
        %v4983 = vsub.s32 0, %v4982
        %v4984 = vsel %vm4978, %v4983, %v4982
        %vm4985 = vcmp.lt.s32.totalorder %v4741, 0
        %v4986 = vsub.s32 0, %v4741
        %v4987 = vsel %vm4985, %v4986, %v4741
        %v4988 = vshrl.u32 %v4987, 5
        %v4989 = vand.u32 %v4987, 31
        %v4990 = vsub.s32 0, %v4989
        %v4991 = vsel %vm4985, %v4990, %v4989
        %vm4992 = vcmp.lt.s32.totalorder %v4742, 0
        %v4993 = vsub.s32 0, %v4742
        %v4994 = vsel %vm4992, %v4993, %v4742
        %v4995 = vshrl.u32 %v4994, 5
        %v4996 = vand.u32 %v4994, 31
        %v4997 = vsub.s32 0, %v4996
        %v4998 = vsel %vm4992, %v4997, %v4996
        %vm4999 = vcmp.lt.s32.totalorder %v4743, 0
        %v5000 = vsub.s32 0, %v4743
        %v5001 = vsel %vm4999, %v5000, %v4743
        %v5002 = vshrl.u32 %v5001, 5
        %v5003 = vand.u32 %v5001, 31
        %v5004 = vsub.s32 0, %v5003
        %v5005 = vsel %vm4999, %v5004, %v5003
        %vm5006 = vcmp.lt.s32.totalorder %v4744, 0
        %v5007 = vsub.s32 0, %v4744
        %v5008 = vsel %vm5006, %v5007, %v4744
        %v5009 = vshrl.u32 %v5008, 5
        %v5010 = vand.u32 %v5008, 31
        %v5011 = vsub.s32 0, %v5010
        %v5012 = vsel %vm5006, %v5011, %v5010
        %vm5013 = vcmp.lt.s32.totalorder %v4745, 0
        %v5014 = vsub.s32 0, %v4745
        %v5015 = vsel %vm5013, %v5014, %v4745
        %v5016 = vshrl.u32 %v5015, 5
        %v5017 = vand.u32 %v5015, 31
        %v5018 = vsub.s32 0, %v5017
        %v5019 = vsel %vm5013, %v5018, %v5017
        %vm5020 = vcmp.lt.s32.totalorder %v4746, 0
        %v5021 = vsub.s32 0, %v4746
        %v5022 = vsel %vm5020, %v5021, %v4746
        %v5023 = vshrl.u32 %v5022, 5
        %v5024 = vand.u32 %v5022, 31
        %v5025 = vsub.s32 0, %v5024
        %v5026 = vsel %vm5020, %v5025, %v5024
        %vm5027 = vcmp.lt.s32.totalorder %v4747, 0
        %v5028 = vsub.s32 0, %v4747
        %v5029 = vsel %vm5027, %v5028, %v4747
        %v5030 = vshrl.u32 %v5029, 5
        %v5031 = vand.u32 %v5029, 31
        %v5032 = vsub.s32 0, %v5031
        %v5033 = vsel %vm5027, %v5032, %v5031
        %vm5034 = vcmp.lt.s32.totalorder %v4748, 0
        %v5035 = vsub.s32 0, %v4748
        %v5036 = vsel %vm5034, %v5035, %v4748
        %v5037 = vshrl.u32 %v5036, 5
        %v5038 = vand.u32 %v5036, 31
        %v5039 = vsub.s32 0, %v5038
        %v5040 = vsel %vm5034, %v5039, %v5038
        %vm5041 = vcmp.lt.s32.totalorder %v4749, 0
        %v5042 = vsub.s32 0, %v4749
        %v5043 = vsel %vm5041, %v5042, %v4749
        %v5044 = vshrl.u32 %v5043, 5
        %v5045 = vand.u32 %v5043, 31
        %v5046 = vsub.s32 0, %v5045
        %v5047 = vsel %vm5041, %v5046, %v5045
        %vm5048 = vcmp.lt.s32.totalorder %v4750, 0
        %v5049 = vsub.s32 0, %v4750
        %v5050 = vsel %vm5048, %v5049, %v4750
        %v5051 = vshrl.u32 %v5050, 5
        %v5052 = vand.u32 %v5050, 31
        %v5053 = vsub.s32 0, %v5052
        %v5054 = vsel %vm5048, %v5053, %v5052
        %vm5055 = vcmp.lt.s32.totalorder %v4751, 0
        %v5056 = vsub.s32 0, %v4751
        %v5057 = vsel %vm5055, %v5056, %v4751
        %v5058 = vshrl.u32 %v5057, 5
        %v5059 = vand.u32 %v5057, 31
        %v5060 = vsub.s32 0, %v5059
        %v5061 = vsel %vm5055, %v5060, %v5059
        %vm5062 = vcmp.lt.s32.totalorder %v4752, 0
        %v5063 = vsub.s32 0, %v4752
        %v5064 = vsel %vm5062, %v5063, %v4752
        %v5065 = vshrl.u32 %v5064, 5
        %v5066 = vand.u32 %v5064, 31
        %v5067 = vsub.s32 0, %v5066
        %v5068 = vsel %vm5062, %v5067, %v5066
        %vm5069 = vcmp.lt.s32.totalorder %v4753, 0
        %v5070 = vsub.s32 0, %v4753
        %v5071 = vsel %vm5069, %v5070, %v4753
        %v5072 = vshrl.u32 %v5071, 5
        %v5073 = vand.u32 %v5071, 31
        %v5074 = vsub.s32 0, %v5073
        %v5075 = vsel %vm5069, %v5074, %v5073
        %vm5076 = vcmp.lt.s32.totalorder %v4754, 0
        %v5077 = vsub.s32 0, %v4754
        %v5078 = vsel %vm5076, %v5077, %v4754
        %v5079 = vshrl.u32 %v5078, 5
        %v5080 = vand.u32 %v5078, 31
        %v5081 = vsub.s32 0, %v5080
        %v5082 = vsel %vm5076, %v5081, %v5080
        %vm5083 = vcmp.lt.s32.totalorder %v4755, 0
        %v5084 = vsub.s32 0, %v4755
        %v5085 = vsel %vm5083, %v5084, %v4755
        %v5086 = vshrl.u32 %v5085, 5
        %v5087 = vand.u32 %v5085, 31
        %v5088 = vsub.s32 0, %v5087
        %v5089 = vsel %vm5083, %v5088, %v5087
        %vm5090 = vcmp.lt.s32.totalorder %v4756, 0
        %v5091 = vsub.s32 0, %v4756
        %v5092 = vsel %vm5090, %v5091, %v4756
        %v5093 = vshrl.u32 %v5092, 5
        %v5094 = vand.u32 %v5092, 31
        %v5095 = vsub.s32 0, %v5094
        %v5096 = vsel %vm5090, %v5095, %v5094
        %vm5097 = vcmp.lt.s32.totalorder %v4757, 0
        %v5098 = vsub.s32 0, %v4757
        %v5099 = vsel %vm5097, %v5098, %v4757
        %v5100 = vshrl.u32 %v5099, 5
        %v5101 = vand.u32 %v5099, 31
        %v5102 = vsub.s32 0, %v5101
        %v5103 = vsel %vm5097, %v5102, %v5101
        %vm5104 = vcmp.lt.s32.totalorder %v4758, 0
        %v5105 = vsub.s32 0, %v4758
        %v5106 = vsel %vm5104, %v5105, %v4758
        %v5107 = vshrl.u32 %v5106, 5
        %v5108 = vand.u32 %v5106, 31
        %v5109 = vsub.s32 0, %v5108
        %v5110 = vsel %vm5104, %v5109, %v5108
        %vm5111 = vcmp.lt.s32.totalorder %v4759, 0
        %v5112 = vsub.s32 0, %v4759
        %v5113 = vsel %vm5111, %v5112, %v4759
        %v5114 = vshrl.u32 %v5113, 5
        %v5115 = vand.u32 %v5113, 31
        %v5116 = vsub.s32 0, %v5115
        %v5117 = vsel %vm5111, %v5116, %v5115
        %vm5118 = vcmp.lt.s32.totalorder %v4760, 0
        %v5119 = vsub.s32 0, %v4760
        %v5120 = vsel %vm5118, %v5119, %v4760
        %v5121 = vshrl.u32 %v5120, 5
        %v5122 = vand.u32 %v5120, 31
        %v5123 = vsub.s32 0, %v5122
        %v5124 = vsel %vm5118, %v5123, %v5122
        %vm5125 = vcmp.lt.s32.totalorder %v4761, 0
        %v5126 = vsub.s32 0, %v4761
        %v5127 = vsel %vm5125, %v5126, %v4761
        %v5128 = vshrl.u32 %v5127, 5
        %v5129 = vand.u32 %v5127, 31
        %v5130 = vsub.s32 0, %v5129
        %v5131 = vsel %vm5125, %v5130, %v5129
        %vm5132 = vcmp.lt.s32.totalorder %v4762, 0
        %v5133 = vsub.s32 0, %v4762
        %v5134 = vsel %vm5132, %v5133, %v4762
        %v5135 = vshrl.u32 %v5134, 5
        %v5136 = vand.u32 %v5134, 31
        %v5137 = vsub.s32 0, %v5136
        %v5138 = vsel %vm5132, %v5137, %v5136
        %vm5139 = vcmp.lt.s32.totalorder %v4763, 0
        %v5140 = vsub.s32 0, %v4763
        %v5141 = vsel %vm5139, %v5140, %v4763
        %v5142 = vshrl.u32 %v5141, 5
        %v5143 = vand.u32 %v5141, 31
        %v5144 = vsub.s32 0, %v5143
        %v5145 = vsel %vm5139, %v5144, %v5143
        %vm5146 = vcmp.lt.s32.totalorder %v4764, 0
        %v5147 = vsub.s32 0, %v4764
        %v5148 = vsel %vm5146, %v5147, %v4764
        %v5149 = vshrl.u32 %v5148, 5
        %v5150 = vand.u32 %v5148, 31
        %v5151 = vsub.s32 0, %v5150
        %v5152 = vsel %vm5146, %v5151, %v5150
        %vm5153 = vcmp.lt.s32.totalorder %v4765, 0
        %v5154 = vsub.s32 0, %v4765
        %v5155 = vsel %vm5153, %v5154, %v4765
        %v5156 = vshrl.u32 %v5155, 5
        %v5157 = vand.u32 %v5155, 31
        %v5158 = vsub.s32 0, %v5157
        %v5159 = vsel %vm5153, %v5158, %v5157
        %vm5160 = vcmp.lt.s32.totalorder %v4766, 0
        %v5161 = vsub.s32 0, %v4766
        %v5162 = vsel %vm5160, %v5161, %v4766
        %v5163 = vshrl.u32 %v5162, 5
        %v5164 = vand.u32 %v5162, 31
        %v5165 = vsub.s32 0, %v5164
        %v5166 = vsel %vm5160, %v5165, %v5164
        %vm5167 = vcmp.lt.s32.totalorder %v4767, 0
        %v5168 = vsub.s32 0, %v4767
        %v5169 = vsel %vm5167, %v5168, %v4767
        %v5170 = vshrl.u32 %v5169, 5
        %v5171 = vand.u32 %v5169, 31
        %v5172 = vsub.s32 0, %v5171
        %v5173 = vsel %vm5167, %v5172, %v5171
        %vm5174 = vcmp.lt.s32.totalorder %v4768, 0
        %v5175 = vsub.s32 0, %v4768
        %v5176 = vsel %vm5174, %v5175, %v4768
        %v5177 = vshrl.u32 %v5176, 5
        %v5178 = vand.u32 %v5176, 31
        %v5179 = vsub.s32 0, %v5178
        %v5180 = vsel %vm5174, %v5179, %v5178
        %vm5181 = vcmp.lt.s32.totalorder %v4769, 0
        %v5182 = vsub.s32 0, %v4769
        %v5183 = vsel %vm5181, %v5182, %v4769
        %v5184 = vshrl.u32 %v5183, 5
        %v5185 = vand.u32 %v5183, 31
        %v5186 = vsub.s32 0, %v5185
        %v5187 = vsel %vm5181, %v5186, %v5185
        %vm5188 = vcmp.lt.s32.totalorder %v4770, 0
        %v5189 = vsub.s32 0, %v4770
        %v5190 = vsel %vm5188, %v5189, %v4770
        %v5191 = vshrl.u32 %v5190, 5
        %v5192 = vand.u32 %v5190, 31
        %v5193 = vsub.s32 0, %v5192
        %v5194 = vsel %vm5188, %v5193, %v5192
        %vm5195 = vcmp.lt.s32.totalorder %v4771, 0
        %v5196 = vsub.s32 0, %v4771
        %v5197 = vsel %vm5195, %v5196, %v4771
        %v5198 = vshrl.u32 %v5197, 5
        %v5199 = vand.u32 %v5197, 31
        %v5200 = vsub.s32 0, %v5199
        %v5201 = vsel %vm5195, %v5200, %v5199
        %vm5202 = vcmp.lt.s32.totalorder %v4772, 0
        %v5203 = vsub.s32 0, %v4772
        %v5204 = vsel %vm5202, %v5203, %v4772
        %v5205 = vshrl.u32 %v5204, 5
        %v5206 = vand.u32 %v5204, 31
        %v5207 = vsub.s32 0, %v5206
        %v5208 = vsel %vm5202, %v5207, %v5206
        %vm5209 = vcmp.lt.s32.totalorder %v4773, 0
        %v5210 = vsub.s32 0, %v4773
        %v5211 = vsel %vm5209, %v5210, %v4773
        %v5212 = vshrl.u32 %v5211, 5
        %v5213 = vand.u32 %v5211, 31
        %v5214 = vsub.s32 0, %v5213
        %v5215 = vsel %vm5209, %v5214, %v5213
        %vm5216 = vcmp.lt.s32.totalorder %v4774, 0
        %v5217 = vsub.s32 0, %v4774
        %v5218 = vsel %vm5216, %v5217, %v4774
        %v5219 = vshrl.u32 %v5218, 5
        %v5220 = vand.u32 %v5218, 31
        %v5221 = vsub.s32 0, %v5220
        %v5222 = vsel %vm5216, %v5221, %v5220
        %vm5223 = vcmp.lt.s32.totalorder %v4775, 0
        %v5224 = vsub.s32 0, %v4775
        %v5225 = vsel %vm5223, %v5224, %v4775
        %v5226 = vshrl.u32 %v5225, 5
        %v5227 = vand.u32 %v5225, 31
        %v5228 = vsub.s32 0, %v5227
        %v5229 = vsel %vm5223, %v5228, %v5227
        %vm5230 = vcmp.lt.s32.totalorder %v4776, 0
        %v5231 = vsub.s32 0, %v4776
        %v5232 = vsel %vm5230, %v5231, %v4776
        %v5233 = vshrl.u32 %v5232, 5
        %v5234 = vand.u32 %v5232, 31
        %v5235 = vsub.s32 0, %v5234
        %v5236 = vsel %vm5230, %v5235, %v5234
        %vm5237 = vcmp.lt.s32.totalorder %v4777, 0
        %v5238 = vsub.s32 0, %v4777
        %v5239 = vsel %vm5237, %v5238, %v4777
        %v5240 = vshrl.u32 %v5239, 5
        %v5241 = vand.u32 %v5239, 31
        %v5242 = vsub.s32 0, %v5241
        %v5243 = vsel %vm5237, %v5242, %v5241
        %vm5244 = vcmp.lt.s32.totalorder %v4778, 0
        %v5245 = vsub.s32 0, %v4778
        %v5246 = vsel %vm5244, %v5245, %v4778
        %v5247 = vshrl.u32 %v5246, 5
        %v5248 = vand.u32 %v5246, 31
        %v5249 = vsub.s32 0, %v5248
        %v5250 = vsel %vm5244, %v5249, %v5248
        %vm5251 = vcmp.lt.s32.totalorder %v4779, 0
        %v5252 = vsub.s32 0, %v4779
        %v5253 = vsel %vm5251, %v5252, %v4779
        %v5254 = vshrl.u32 %v5253, 5
        %v5255 = vand.u32 %v5253, 31
        %v5256 = vsub.s32 0, %v5255
        %v5257 = vsel %vm5251, %v5256, %v5255
        %vm5258 = vcmp.lt.s32.totalorder %v4780, 0
        %v5259 = vsub.s32 0, %v4780
        %v5260 = vsel %vm5258, %v5259, %v4780
        %v5261 = vshrl.u32 %v5260, 5
        %v5262 = vand.u32 %v5260, 31
        %v5263 = vsub.s32 0, %v5262
        %v5264 = vsel %vm5258, %v5263, %v5262
        %vm5265 = vcmp.lt.s32.totalorder %v4781, 0
        %v5266 = vsub.s32 0, %v4781
        %v5267 = vsel %vm5265, %v5266, %v4781
        %v5268 = vshrl.u32 %v5267, 5
        %v5269 = vand.u32 %v5267, 31
        %v5270 = vsub.s32 0, %v5269
        %v5271 = vsel %vm5265, %v5270, %v5269
        %vm5272 = vcmp.lt.s32.totalorder %v4782, 0
        %v5273 = vsub.s32 0, %v4782
        %v5274 = vsel %vm5272, %v5273, %v4782
        %v5275 = vshrl.u32 %v5274, 5
        %v5276 = vand.u32 %v5274, 31
        %v5277 = vsub.s32 0, %v5276
        %v5278 = vsel %vm5272, %v5277, %v5276
        %vm5279 = vcmp.lt.s32.totalorder %v4783, 0
        %v5280 = vsub.s32 0, %v4783
        %v5281 = vsel %vm5279, %v5280, %v4783
        %v5282 = vshrl.u32 %v5281, 5
        %v5283 = vand.u32 %v5281, 31
        %v5284 = vsub.s32 0, %v5283
        %v5285 = vsel %vm5279, %v5284, %v5283
        %vm5286 = vcmp.lt.s32.totalorder %v4784, 0
        %v5287 = vsub.s32 0, %v4784
        %v5288 = vsel %vm5286, %v5287, %v4784
        %v5289 = vshrl.u32 %v5288, 5
        %v5290 = vand.u32 %v5288, 31
        %v5291 = vsub.s32 0, %v5290
        %v5292 = vsel %vm5286, %v5291, %v5290
        %vm5293 = vcmp.lt.s32.totalorder %v4785, 0
        %v5294 = vsub.s32 0, %v4785
        %v5295 = vsel %vm5293, %v5294, %v4785
        %v5296 = vshrl.u32 %v5295, 5
        %v5297 = vand.u32 %v5295, 31
        %v5298 = vsub.s32 0, %v5297
        %v5299 = vsel %vm5293, %v5298, %v5297
        %vm5300 = vcmp.lt.s32.totalorder %v4786, 0
        %v5301 = vsub.s32 0, %v4786
        %v5302 = vsel %vm5300, %v5301, %v4786
        %v5303 = vshrl.u32 %v5302, 5
        %v5304 = vand.u32 %v5302, 31
        %v5305 = vsub.s32 0, %v5304
        %v5306 = vsel %vm5300, %v5305, %v5304
        %vm5307 = vcmp.lt.s32.totalorder %v4787, 0
        %v5308 = vsub.s32 0, %v4787
        %v5309 = vsel %vm5307, %v5308, %v4787
        %v5310 = vshrl.u32 %v5309, 5
        %v5311 = vand.u32 %v5309, 31
        %v5312 = vsub.s32 0, %v5311
        %v5313 = vsel %vm5307, %v5312, %v5311
        %vm5314 = vcmp.lt.s32.totalorder %v4788, 0
        %v5315 = vsub.s32 0, %v4788
        %v5316 = vsel %vm5314, %v5315, %v4788
        %v5317 = vshrl.u32 %v5316, 5
        %v5318 = vand.u32 %v5316, 31
        %v5319 = vsub.s32 0, %v5318
        %v5320 = vsel %vm5314, %v5319, %v5318
        %vm5321 = vcmp.lt.s32.totalorder %v4789, 0
        %v5322 = vsub.s32 0, %v4789
        %v5323 = vsel %vm5321, %v5322, %v4789
        %v5324 = vshrl.u32 %v5323, 5
        %v5325 = vand.u32 %v5323, 31
        %v5326 = vsub.s32 0, %v5325
        %v5327 = vsel %vm5321, %v5326, %v5325
        %vm5328 = vcmp.lt.s32.totalorder %v4790, 0
        %v5329 = vsub.s32 0, %v4790
        %v5330 = vsel %vm5328, %v5329, %v4790
        %v5331 = vshrl.u32 %v5330, 5
        %v5332 = vand.u32 %v5330, 31
        %v5333 = vsub.s32 0, %v5332
        %v5334 = vsel %vm5328, %v5333, %v5332
        %vm5335 = vcmp.lt.s32.totalorder %v4791, 0
        %v5336 = vsub.s32 0, %v4791
        %v5337 = vsel %vm5335, %v5336, %v4791
        %v5338 = vshrl.u32 %v5337, 5
        %v5339 = vand.u32 %v5337, 31
        %v5340 = vsub.s32 0, %v5339
        %v5341 = vsel %vm5335, %v5340, %v5339
        %vm5342 = vcmp.lt.s32.totalorder %v4792, 0
        %v5343 = vsub.s32 0, %v4792
        %v5344 = vsel %vm5342, %v5343, %v4792
        %v5345 = vshrl.u32 %v5344, 5
        %v5346 = vand.u32 %v5344, 31
        %v5347 = vsub.s32 0, %v5346
        %v5348 = vsel %vm5342, %v5347, %v5346
        %vm5349 = vcmp.lt.s32.totalorder %v4793, 0
        %v5350 = vsub.s32 0, %v4793
        %v5351 = vsel %vm5349, %v5350, %v4793
        %v5352 = vshrl.u32 %v5351, 5
        %v5353 = vand.u32 %v5351, 31
        %v5354 = vsub.s32 0, %v5353
        %v5355 = vsel %vm5349, %v5354, %v5353
        %vm5356 = vcmp.lt.s32.totalorder %v4794, 0
        %v5357 = vsub.s32 0, %v4794
        %v5358 = vsel %vm5356, %v5357, %v4794
        %v5359 = vshrl.u32 %v5358, 5
        %v5360 = vand.u32 %v5358, 31
        %v5361 = vsub.s32 0, %v5360
        %v5362 = vsel %vm5356, %v5361, %v5360
        %vm5363 = vcmp.lt.s32.totalorder %v4795, 0
        %v5364 = vsub.s32 0, %v4795
        %v5365 = vsel %vm5363, %v5364, %v4795
        %v5366 = vshrl.u32 %v5365, 5
        %v5367 = vand.u32 %v5365, 31
        %v5368 = vsub.s32 0, %v5367
        %v5369 = vsel %vm5363, %v5368, %v5367
        %vm5370 = vcmp.lt.s32.totalorder %v4796, 0
        %v5371 = vsub.s32 0, %v4796
        %v5372 = vsel %vm5370, %v5371, %v4796
        %v5373 = vshrl.u32 %v5372, 5
        %v5374 = vand.u32 %v5372, 31
        %v5375 = vsub.s32 0, %v5374
        %v5376 = vsel %vm5370, %v5375, %v5374
        %vm5377 = vcmp.lt.s32.totalorder %v4797, 0
        %v5378 = vsub.s32 0, %v4797
        %v5379 = vsel %vm5377, %v5378, %v4797
        %v5380 = vshrl.u32 %v5379, 5
        %v5381 = vand.u32 %v5379, 31
        %v5382 = vsub.s32 0, %v5381
        %v5383 = vsel %vm5377, %v5382, %v5381
        %vm5384 = vcmp.lt.s32.totalorder %v4798, 0
        %v5385 = vsub.s32 0, %v4798
        %v5386 = vsel %vm5384, %v5385, %v4798
        %v5387 = vshrl.u32 %v5386, 5
        %v5388 = vand.u32 %v5386, 31
        %v5389 = vsub.s32 0, %v5388
        %v5390 = vsel %vm5384, %v5389, %v5388
        %vm5391 = vcmp.lt.s32.totalorder %v4799, 0
        %v5392 = vsub.s32 0, %v4799
        %v5393 = vsel %vm5391, %v5392, %v4799
        %v5394 = vshrl.u32 %v5393, 5
        %v5395 = vand.u32 %v5393, 31
        %v5396 = vsub.s32 0, %v5395
        %v5397 = vsel %vm5391, %v5396, %v5395
        %vm5398 = vcmp.lt.s32.totalorder %v4800, 0
        %v5399 = vsub.s32 0, %v4800
        %v5400 = vsel %vm5398, %v5399, %v4800
        %v5401 = vshrl.u32 %v5400, 5
        %v5402 = vand.u32 %v5400, 31
        %v5403 = vsub.s32 0, %v5402
        %v5404 = vsel %vm5398, %v5403, %v5402
        %vm5405 = vcmp.lt.s32.totalorder %v4801, 0
        %v5406 = vsub.s32 0, %v4801
        %v5407 = vsel %vm5405, %v5406, %v4801
        %v5408 = vshrl.u32 %v5407, 5
        %v5409 = vand.u32 %v5407, 31
        %v5410 = vsub.s32 0, %v5409
        %v5411 = vsel %vm5405, %v5410, %v5409
        %vm5412 = vcmp.lt.s32.totalorder %v4802, 0
        %v5413 = vsub.s32 0, %v4802
        %v5414 = vsel %vm5412, %v5413, %v4802
        %v5415 = vshrl.u32 %v5414, 5
        %v5416 = vand.u32 %v5414, 31
        %v5417 = vsub.s32 0, %v5416
        %v5418 = vsel %vm5412, %v5417, %v5416
        %vm5419 = vcmp.lt.s32.totalorder %v4803, 0
        %v5420 = vsub.s32 0, %v4803
        %v5421 = vsel %vm5419, %v5420, %v4803
        %v5422 = vshrl.u32 %v5421, 5
        %v5423 = vand.u32 %v5421, 31
        %v5424 = vsub.s32 0, %v5423
        %v5425 = vsel %vm5419, %v5424, %v5423
        %vm5426 = vcmp.lt.s32.totalorder %v4804, 0
        %v5427 = vsub.s32 0, %v4804
        %v5428 = vsel %vm5426, %v5427, %v4804
        %v5429 = vshrl.u32 %v5428, 5
        %v5430 = vand.u32 %v5428, 31
        %v5431 = vsub.s32 0, %v5430
        %v5432 = vsel %vm5426, %v5431, %v5430
        %vm5433 = vcmp.lt.s32.totalorder %v4805, 0
        %v5434 = vsub.s32 0, %v4805
        %v5435 = vsel %vm5433, %v5434, %v4805
        %v5436 = vshrl.u32 %v5435, 5
        %v5437 = vand.u32 %v5435, 31
        %v5438 = vsub.s32 0, %v5437
        %v5439 = vsel %vm5433, %v5438, %v5437
        %vm5440 = vcmp.lt.s32.totalorder %v4806, 0
        %v5441 = vsub.s32 0, %v4806
        %v5442 = vsel %vm5440, %v5441, %v4806
        %v5443 = vshrl.u32 %v5442, 5
        %v5444 = vand.u32 %v5442, 31
        %v5445 = vsub.s32 0, %v5444
        %v5446 = vsel %vm5440, %v5445, %v5444
        %vm5447 = vcmp.lt.s32.totalorder %v4807, 0
        %v5448 = vsub.s32 0, %v4807
        %v5449 = vsel %vm5447, %v5448, %v4807
        %v5450 = vshrl.u32 %v5449, 5
        %v5451 = vand.u32 %v5449, 31
        %v5452 = vsub.s32 0, %v5451
        %v5453 = vsel %vm5447, %v5452, %v5451
        %vm5454 = vcmp.lt.s32.totalorder %v4808, 0
        %v5455 = vsub.s32 0, %v4808
        %v5456 = vsel %vm5454, %v5455, %v4808
        %v5457 = vshrl.u32 %v5456, 5
        %v5458 = vand.u32 %v5456, 31
        %v5459 = vsub.s32 0, %v5458
        %v5460 = vsel %vm5454, %v5459, %v5458
        %vm5461 = vcmp.lt.s32.totalorder %v4809, 0
        %v5462 = vsub.s32 0, %v4809
        %v5463 = vsel %vm5461, %v5462, %v4809
        %v5464 = vshrl.u32 %v5463, 5
        %v5465 = vand.u32 %v5463, 31
        %v5466 = vsub.s32 0, %v5465
        %v5467 = vsel %vm5461, %v5466, %v5465
        %vm5468 = vcmp.lt.s32.totalorder %v4810, 0
        %v5469 = vsub.s32 0, %v4810
        %v5470 = vsel %vm5468, %v5469, %v4810
        %v5471 = vshrl.u32 %v5470, 5
        %v5472 = vand.u32 %v5470, 31
        %v5473 = vsub.s32 0, %v5472
        %v5474 = vsel %vm5468, %v5473, %v5472
        %vm5475 = vcmp.lt.s32.totalorder %v4811, 0
        %v5476 = vsub.s32 0, %v4811
        %v5477 = vsel %vm5475, %v5476, %v4811
        %v5478 = vshrl.u32 %v5477, 5
        %v5479 = vand.u32 %v5477, 31
        %v5480 = vsub.s32 0, %v5479
        %v5481 = vsel %vm5475, %v5480, %v5479
        %vm5482 = vcmp.lt.s32.totalorder %v4812, 0
        %v5483 = vsub.s32 0, %v4812
        %v5484 = vsel %vm5482, %v5483, %v4812
        %v5485 = vshrl.u32 %v5484, 5
        %v5486 = vand.u32 %v5484, 31
        %v5487 = vsub.s32 0, %v5486
        %v5488 = vsel %vm5482, %v5487, %v5486
        %vm5489 = vcmp.lt.s32.totalorder %v4813, 0
        %v5490 = vsub.s32 0, %v4813
        %v5491 = vsel %vm5489, %v5490, %v4813
        %v5492 = vshrl.u32 %v5491, 5
        %v5493 = vand.u32 %v5491, 31
        %v5494 = vsub.s32 0, %v5493
        %v5495 = vsel %vm5489, %v5494, %v5493
        %vm5496 = vcmp.lt.s32.totalorder %v4814, 0
        %v5497 = vsub.s32 0, %v4814
        %v5498 = vsel %vm5496, %v5497, %v4814
        %v5499 = vshrl.u32 %v5498, 5
        %v5500 = vand.u32 %v5498, 31
        %v5501 = vsub.s32 0, %v5500
        %v5502 = vsel %vm5496, %v5501, %v5500
        %vm5503 = vcmp.lt.s32.totalorder %v4815, 0
        %v5504 = vsub.s32 0, %v4815
        %v5505 = vsel %vm5503, %v5504, %v4815
        %v5506 = vshrl.u32 %v5505, 5
        %v5507 = vand.u32 %v5505, 31
        %v5508 = vsub.s32 0, %v5507
        %v5509 = vsel %vm5503, %v5508, %v5507
        %vm5510 = vcmp.lt.s32.totalorder %v4816, 0
        %v5511 = vsub.s32 0, %v4816
        %v5512 = vsel %vm5510, %v5511, %v4816
        %v5513 = vshrl.u32 %v5512, 5
        %v5514 = vand.u32 %v5512, 31
        %v5515 = vsub.s32 0, %v5514
        %v5516 = vsel %vm5510, %v5515, %v5514
        %vm5517 = vcmp.lt.s32.totalorder %v4817, 0
        %v5518 = vsub.s32 0, %v4817
        %v5519 = vsel %vm5517, %v5518, %v4817
        %v5520 = vshrl.u32 %v5519, 5
        %v5521 = vand.u32 %v5519, 31
        %v5522 = vsub.s32 0, %v5521
        %v5523 = vsel %vm5517, %v5522, %v5521
        %vm5524 = vcmp.lt.s32.totalorder %v4818, 0
        %v5525 = vsub.s32 0, %v4818
        %v5526 = vsel %vm5524, %v5525, %v4818
        %v5527 = vshrl.u32 %v5526, 5
        %v5528 = vand.u32 %v5526, 31
        %v5529 = vsub.s32 0, %v5528
        %v5530 = vsel %vm5524, %v5529, %v5528
        %vm5531 = vcmp.lt.s32.totalorder %v4819, 0
        %v5532 = vsub.s32 0, %v4819
        %v5533 = vsel %vm5531, %v5532, %v4819
        %v5534 = vshrl.u32 %v5533, 5
        %v5535 = vand.u32 %v5533, 31
        %v5536 = vsub.s32 0, %v5535
        %v5537 = vsel %vm5531, %v5536, %v5535
        %vm5538 = vcmp.lt.s32.totalorder %v4820, 0
        %v5539 = vsub.s32 0, %v4820
        %v5540 = vsel %vm5538, %v5539, %v4820
        %v5541 = vshrl.u32 %v5540, 5
        %v5542 = vand.u32 %v5540, 31
        %v5543 = vsub.s32 0, %v5542
        %v5544 = vsel %vm5538, %v5543, %v5542
        %vm5545 = vcmp.lt.s32.totalorder %v4821, 0
        %v5546 = vsub.s32 0, %v4821
        %v5547 = vsel %vm5545, %v5546, %v4821
        %v5548 = vshrl.u32 %v5547, 5
        %v5549 = vand.u32 %v5547, 31
        %v5550 = vsub.s32 0, %v5549
        %v5551 = vsel %vm5545, %v5550, %v5549
        %vm5552 = vcmp.lt.s32.totalorder %v4822, 0
        %v5553 = vsub.s32 0, %v4822
        %v5554 = vsel %vm5552, %v5553, %v4822
        %v5555 = vshrl.u32 %v5554, 5
        %v5556 = vand.u32 %v5554, 31
        %v5557 = vsub.s32 0, %v5556
        %v5558 = vsel %vm5552, %v5557, %v5556
        %vm5559 = vcmp.lt.s32.totalorder %v4823, 0
        %v5560 = vsub.s32 0, %v4823
        %v5561 = vsel %vm5559, %v5560, %v4823
        %v5562 = vshrl.u32 %v5561, 5
        %v5563 = vand.u32 %v5561, 31
        %v5564 = vsub.s32 0, %v5563
        %v5565 = vsel %vm5559, %v5564, %v5563
        %vm5566 = vcmp.lt.s32.totalorder %v4824, 0
        %v5567 = vsub.s32 0, %v4824
        %v5568 = vsel %vm5566, %v5567, %v4824
        %v5569 = vshrl.u32 %v5568, 5
        %v5570 = vand.u32 %v5568, 31
        %v5571 = vsub.s32 0, %v5570
        %v5572 = vsel %vm5566, %v5571, %v5570
        %vm5573 = vcmp.lt.s32.totalorder %v4825, 0
        %v5574 = vsub.s32 0, %v4825
        %v5575 = vsel %vm5573, %v5574, %v4825
        %v5576 = vshrl.u32 %v5575, 5
        %v5577 = vand.u32 %v5575, 31
        %v5578 = vsub.s32 0, %v5577
        %v5579 = vsel %vm5573, %v5578, %v5577
        %vm5580 = vcmp.lt.s32.totalorder %v4826, 0
        %v5581 = vsub.s32 0, %v4826
        %v5582 = vsel %vm5580, %v5581, %v4826
        %v5583 = vshrl.u32 %v5582, 5
        %v5584 = vand.u32 %v5582, 31
        %v5585 = vsub.s32 0, %v5584
        %v5586 = vsel %vm5580, %v5585, %v5584
        %vm5587 = vcmp.lt.s32.totalorder %v4827, 0
        %v5588 = vsub.s32 0, %v4827
        %v5589 = vsel %vm5587, %v5588, %v4827
        %v5590 = vshrl.u32 %v5589, 5
        %v5591 = vand.u32 %v5589, 31
        %v5592 = vsub.s32 0, %v5591
        %v5593 = vsel %vm5587, %v5592, %v5591
        %vm5594 = vcmp.lt.s32.totalorder %v4828, 0
        %v5595 = vsub.s32 0, %v4828
        %v5596 = vsel %vm5594, %v5595, %v4828
        %v5597 = vshrl.u32 %v5596, 5
        %v5598 = vand.u32 %v5596, 31
        %v5599 = vsub.s32 0, %v5598
        %v5600 = vsel %vm5594, %v5599, %v5598
        %vm5601 = vcmp.lt.s32.totalorder %v4829, 0
        %v5602 = vsub.s32 0, %v4829
        %v5603 = vsel %vm5601, %v5602, %v4829
        %v5604 = vshrl.u32 %v5603, 5
        %v5605 = vand.u32 %v5603, 31
        %v5606 = vsub.s32 0, %v5605
        %v5607 = vsel %vm5601, %v5606, %v5605
        %vm5608 = vcmp.lt.s32.totalorder %v4830, 0
        %v5609 = vsub.s32 0, %v4830
        %v5610 = vsel %vm5608, %v5609, %v4830
        %v5611 = vshrl.u32 %v5610, 5
        %v5612 = vand.u32 %v5610, 31
        %v5613 = vsub.s32 0, %v5612
        %v5614 = vsel %vm5608, %v5613, %v5612
        %vm5615 = vcmp.ne.s32.totalorder %v4837, 0
        %vm5616 = vcmp.ne.s32.totalorder %v4844, 0
        %vm5617 = vcmp.ne.s32.totalorder %v4851, 0
        %vm5618 = vcmp.ne.s32.totalorder %v4858, 0
        %vm5619 = vcmp.ne.s32.totalorder %v4865, 0
        %vm5620 = vcmp.ne.s32.totalorder %v4872, 0
        %vm5621 = vcmp.ne.s32.totalorder %v4879, 0
        %vm5622 = vcmp.ne.s32.totalorder %v4886, 0
        %vm5623 = vcmp.ne.s32.totalorder %v4893, 0
        %vm5624 = vcmp.ne.s32.totalorder %v4900, 0
        %vm5625 = vcmp.ne.s32.totalorder %v4907, 0
        %vm5626 = vcmp.ne.s32.totalorder %v4914, 0
        %vm5627 = vcmp.ne.s32.totalorder %v4921, 0
        %vm5628 = vcmp.ne.s32.totalorder %v4928, 0
        %vm5629 = vcmp.ne.s32.totalorder %v4935, 0
        %vm5630 = vcmp.ne.s32.totalorder %v4942, 0
        %vm5631 = vcmp.ne.s32.totalorder %v4949, 0
        %vm5632 = vcmp.ne.s32.totalorder %v4956, 0
        %vm5633 = vcmp.ne.s32.totalorder %v4963, 0
        %vm5634 = vcmp.ne.s32.totalorder %v4970, 0
        %vm5635 = vcmp.ne.s32.totalorder %v4977, 0
        %vm5636 = vcmp.ne.s32.totalorder %v4984, 0
        %vm5637 = vcmp.ne.s32.totalorder %v4991, 0
        %vm5638 = vcmp.ne.s32.totalorder %v4998, 0
        %vm5639 = vcmp.ne.s32.totalorder %v5005, 0
        %vm5640 = vcmp.ne.s32.totalorder %v5012, 0
        %vm5641 = vcmp.ne.s32.totalorder %v5019, 0
        %vm5642 = vcmp.ne.s32.totalorder %v5026, 0
        %vm5643 = vcmp.ne.s32.totalorder %v5033, 0
        %vm5644 = vcmp.ne.s32.totalorder %v5040, 0
        %vm5645 = vcmp.ne.s32.totalorder %v5047, 0
        %vm5646 = vcmp.ne.s32.totalorder %v5054, 0
        %vm5647 = vcmp.ne.s32.totalorder %v5061, 0
        %vm5648 = vcmp.ne.s32.totalorder %v5068, 0
        %vm5649 = vcmp.ne.s32.totalorder %v5075, 0
        %vm5650 = vcmp.ne.s32.totalorder %v5082, 0
        %vm5651 = vcmp.ne.s32.totalorder %v5089, 0
        %vm5652 = vcmp.ne.s32.totalorder %v5096, 0
        %vm5653 = vcmp.ne.s32.totalorder %v5103, 0
        %vm5654 = vcmp.ne.s32.totalorder %v5110, 0
        %vm5655 = vcmp.ne.s32.totalorder %v5117, 0
        %vm5656 = vcmp.ne.s32.totalorder %v5124, 0
        %vm5657 = vcmp.ne.s32.totalorder %v5131, 0
        %vm5658 = vcmp.ne.s32.totalorder %v5138, 0
        %vm5659 = vcmp.ne.s32.totalorder %v5145, 0
        %vm5660 = vcmp.ne.s32.totalorder %v5152, 0
        %vm5661 = vcmp.ne.s32.totalorder %v5159, 0
        %vm5662 = vcmp.ne.s32.totalorder %v5166, 0
        %vm5663 = vcmp.ne.s32.totalorder %v5173, 0
        %vm5664 = vcmp.ne.s32.totalorder %v5180, 0
        %vm5665 = vcmp.ne.s32.totalorder %v5187, 0
        %vm5666 = vcmp.ne.s32.totalorder %v5194, 0
        %vm5667 = vcmp.ne.s32.totalorder %v5201, 0
        %vm5668 = vcmp.ne.s32.totalorder %v5208, 0
        %vm5669 = vcmp.ne.s32.totalorder %v5215, 0
        %vm5670 = vcmp.ne.s32.totalorder %v5222, 0
        %vm5671 = vcmp.ne.s32.totalorder %v5229, 0
        %vm5672 = vcmp.ne.s32.totalorder %v5236, 0
        %vm5673 = vcmp.ne.s32.totalorder %v5243, 0
        %vm5674 = vcmp.ne.s32.totalorder %v5250, 0
        %vm5675 = vcmp.ne.s32.totalorder %v5257, 0
        %vm5676 = vcmp.ne.s32.totalorder %v5264, 0
        %vm5677 = vcmp.ne.s32.totalorder %v5271, 0
        %vm5678 = vcmp.ne.s32.totalorder %v5278, 0
        %vm5679 = vcmp.ne.s32.totalorder %v5285, 0
        %vm5680 = vcmp.ne.s32.totalorder %v5292, 0
        %vm5681 = vcmp.ne.s32.totalorder %v5299, 0
        %vm5682 = vcmp.ne.s32.totalorder %v5306, 0
        %vm5683 = vcmp.ne.s32.totalorder %v5313, 0
        %vm5684 = vcmp.ne.s32.totalorder %v5320, 0
        %vm5685 = vcmp.ne.s32.totalorder %v5327, 0
        %vm5686 = vcmp.ne.s32.totalorder %v5334, 0
        %vm5687 = vcmp.ne.s32.totalorder %v5341, 0
        %vm5688 = vcmp.ne.s32.totalorder %v5348, 0
        %vm5689 = vcmp.ne.s32.totalorder %v5355, 0
        %vm5690 = vcmp.ne.s32.totalorder %v5362, 0
        %vm5691 = vcmp.ne.s32.totalorder %v5369, 0
        %vm5692 = vcmp.ne.s32.totalorder %v5376, 0
        %vm5693 = vcmp.ne.s32.totalorder %v5383, 0
        %vm5694 = vcmp.ne.s32.totalorder %v5390, 0
        %vm5695 = vcmp.ne.s32.totalorder %v5397, 0
        %vm5696 = vcmp.ne.s32.totalorder %v5404, 0
        %vm5697 = vcmp.ne.s32.totalorder %v5411, 0
        %vm5698 = vcmp.ne.s32.totalorder %v5418, 0
        %vm5699 = vcmp.ne.s32.totalorder %v5425, 0
        %vm5700 = vcmp.ne.s32.totalorder %v5432, 0
        %vm5701 = vcmp.ne.s32.totalorder %v5439, 0
        %vm5702 = vcmp.ne.s32.totalorder %v5446, 0
        %vm5703 = vcmp.ne.s32.totalorder %v5453, 0
        %vm5704 = vcmp.ne.s32.totalorder %v5460, 0
        %vm5705 = vcmp.ne.s32.totalorder %v5467, 0
        %vm5706 = vcmp.ne.s32.totalorder %v5474, 0
        %vm5707 = vcmp.ne.s32.totalorder %v5481, 0
        %vm5708 = vcmp.ne.s32.totalorder %v5488, 0
        %vm5709 = vcmp.ne.s32.totalorder %v5495, 0
        %vm5710 = vcmp.ne.s32.totalorder %v5502, 0
        %vm5711 = vcmp.ne.s32.totalorder %v5509, 0
        %vm5712 = vcmp.ne.s32.totalorder %v5516, 0
        %vm5713 = vcmp.ne.s32.totalorder %v5523, 0
        %vm5714 = vcmp.ne.s32.totalorder %v5530, 0
        %vm5715 = vcmp.ne.s32.totalorder %v5537, 0
        %vm5716 = vcmp.ne.s32.totalorder %v5544, 0
        %vm5717 = vcmp.ne.s32.totalorder %v5551, 0
        %vm5718 = vcmp.ne.s32.totalorder %v5558, 0
        %vm5719 = vcmp.ne.s32.totalorder %v5565, 0
        %vm5720 = vcmp.ne.s32.totalorder %v5572, 0
        %vm5721 = vcmp.ne.s32.totalorder %v5579, 0
        %vm5722 = vcmp.ne.s32.totalorder %v5586, 0
        %vm5723 = vcmp.ne.s32.totalorder %v5593, 0
        %vm5724 = vcmp.ne.s32.totalorder %v5600, 0
        %vm5725 = vcmp.ne.s32.totalorder %v5607, 0
        %vm5726 = vcmp.ne.s32.totalorder %v5614, 0
        %vm5727 = vcmp.lt.s32.totalorder %v4837, 0
        %vm5728 = vcmp.lt.s32.totalorder %v4844, 0
        %vm5729 = vcmp.lt.s32.totalorder %v4851, 0
        %vm5730 = vcmp.lt.s32.totalorder %v4858, 0
        %vm5731 = vcmp.lt.s32.totalorder %v4865, 0
        %vm5732 = vcmp.lt.s32.totalorder %v4872, 0
        %vm5733 = vcmp.lt.s32.totalorder %v4879, 0
        %vm5734 = vcmp.lt.s32.totalorder %v4886, 0
        %vm5735 = vcmp.lt.s32.totalorder %v4893, 0
        %vm5736 = vcmp.lt.s32.totalorder %v4900, 0
        %vm5737 = vcmp.lt.s32.totalorder %v4907, 0
        %vm5738 = vcmp.lt.s32.totalorder %v4914, 0
        %vm5739 = vcmp.lt.s32.totalorder %v4921, 0
        %vm5740 = vcmp.lt.s32.totalorder %v4928, 0
        %vm5741 = vcmp.lt.s32.totalorder %v4935, 0
        %vm5742 = vcmp.lt.s32.totalorder %v4942, 0
        %vm5743 = vcmp.lt.s32.totalorder %v4949, 0
        %vm5744 = vcmp.lt.s32.totalorder %v4956, 0
        %vm5745 = vcmp.lt.s32.totalorder %v4963, 0
        %vm5746 = vcmp.lt.s32.totalorder %v4970, 0
        %vm5747 = vcmp.lt.s32.totalorder %v4977, 0
        %vm5748 = vcmp.lt.s32.totalorder %v4984, 0
        %vm5749 = vcmp.lt.s32.totalorder %v4991, 0
        %vm5750 = vcmp.lt.s32.totalorder %v4998, 0
        %vm5751 = vcmp.lt.s32.totalorder %v5005, 0
        %vm5752 = vcmp.lt.s32.totalorder %v5012, 0
        %vm5753 = vcmp.lt.s32.totalorder %v5019, 0
        %vm5754 = vcmp.lt.s32.totalorder %v5026, 0
        %vm5755 = vcmp.lt.s32.totalorder %v5033, 0
        %vm5756 = vcmp.lt.s32.totalorder %v5040, 0
        %vm5757 = vcmp.lt.s32.totalorder %v5047, 0
        %vm5758 = vcmp.lt.s32.totalorder %v5054, 0
        %vm5759 = vcmp.lt.s32.totalorder %v5061, 0
        %vm5760 = vcmp.lt.s32.totalorder %v5068, 0
        %vm5761 = vcmp.lt.s32.totalorder %v5075, 0
        %vm5762 = vcmp.lt.s32.totalorder %v5082, 0
        %vm5763 = vcmp.lt.s32.totalorder %v5089, 0
        %vm5764 = vcmp.lt.s32.totalorder %v5096, 0
        %vm5765 = vcmp.lt.s32.totalorder %v5103, 0
        %vm5766 = vcmp.lt.s32.totalorder %v5110, 0
        %vm5767 = vcmp.lt.s32.totalorder %v5117, 0
        %vm5768 = vcmp.lt.s32.totalorder %v5124, 0
        %vm5769 = vcmp.lt.s32.totalorder %v5131, 0
        %vm5770 = vcmp.lt.s32.totalorder %v5138, 0
        %vm5771 = vcmp.lt.s32.totalorder %v5145, 0
        %vm5772 = vcmp.lt.s32.totalorder %v5152, 0
        %vm5773 = vcmp.lt.s32.totalorder %v5159, 0
        %vm5774 = vcmp.lt.s32.totalorder %v5166, 0
        %vm5775 = vcmp.lt.s32.totalorder %v5173, 0
        %vm5776 = vcmp.lt.s32.totalorder %v5180, 0
        %vm5777 = vcmp.lt.s32.totalorder %v5187, 0
        %vm5778 = vcmp.lt.s32.totalorder %v5194, 0
        %vm5779 = vcmp.lt.s32.totalorder %v5201, 0
        %vm5780 = vcmp.lt.s32.totalorder %v5208, 0
        %vm5781 = vcmp.lt.s32.totalorder %v5215, 0
        %vm5782 = vcmp.lt.s32.totalorder %v5222, 0
        %vm5783 = vcmp.lt.s32.totalorder %v5229, 0
        %vm5784 = vcmp.lt.s32.totalorder %v5236, 0
        %vm5785 = vcmp.lt.s32.totalorder %v5243, 0
        %vm5786 = vcmp.lt.s32.totalorder %v5250, 0
        %vm5787 = vcmp.lt.s32.totalorder %v5257, 0
        %vm5788 = vcmp.lt.s32.totalorder %v5264, 0
        %vm5789 = vcmp.lt.s32.totalorder %v5271, 0
        %vm5790 = vcmp.lt.s32.totalorder %v5278, 0
        %vm5791 = vcmp.lt.s32.totalorder %v5285, 0
        %vm5792 = vcmp.lt.s32.totalorder %v5292, 0
        %vm5793 = vcmp.lt.s32.totalorder %v5299, 0
        %vm5794 = vcmp.lt.s32.totalorder %v5306, 0
        %vm5795 = vcmp.lt.s32.totalorder %v5313, 0
        %vm5796 = vcmp.lt.s32.totalorder %v5320, 0
        %vm5797 = vcmp.lt.s32.totalorder %v5327, 0
        %vm5798 = vcmp.lt.s32.totalorder %v5334, 0
        %vm5799 = vcmp.lt.s32.totalorder %v5341, 0
        %vm5800 = vcmp.lt.s32.totalorder %v5348, 0
        %vm5801 = vcmp.lt.s32.totalorder %v5355, 0
        %vm5802 = vcmp.lt.s32.totalorder %v5362, 0
        %vm5803 = vcmp.lt.s32.totalorder %v5369, 0
        %vm5804 = vcmp.lt.s32.totalorder %v5376, 0
        %vm5805 = vcmp.lt.s32.totalorder %v5383, 0
        %vm5806 = vcmp.lt.s32.totalorder %v5390, 0
        %vm5807 = vcmp.lt.s32.totalorder %v5397, 0
        %vm5808 = vcmp.lt.s32.totalorder %v5404, 0
        %vm5809 = vcmp.lt.s32.totalorder %v5411, 0
        %vm5810 = vcmp.lt.s32.totalorder %v5418, 0
        %vm5811 = vcmp.lt.s32.totalorder %v5425, 0
        %vm5812 = vcmp.lt.s32.totalorder %v5432, 0
        %vm5813 = vcmp.lt.s32.totalorder %v5439, 0
        %vm5814 = vcmp.lt.s32.totalorder %v5446, 0
        %vm5815 = vcmp.lt.s32.totalorder %v5453, 0
        %vm5816 = vcmp.lt.s32.totalorder %v5460, 0
        %vm5817 = vcmp.lt.s32.totalorder %v5467, 0
        %vm5818 = vcmp.lt.s32.totalorder %v5474, 0
        %vm5819 = vcmp.lt.s32.totalorder %v5481, 0
        %vm5820 = vcmp.lt.s32.totalorder %v5488, 0
        %vm5821 = vcmp.lt.s32.totalorder %v5495, 0
        %vm5822 = vcmp.lt.s32.totalorder %v5502, 0
        %vm5823 = vcmp.lt.s32.totalorder %v5509, 0
        %vm5824 = vcmp.lt.s32.totalorder %v5516, 0
        %vm5825 = vcmp.lt.s32.totalorder %v5523, 0
        %vm5826 = vcmp.lt.s32.totalorder %v5530, 0
        %vm5827 = vcmp.lt.s32.totalorder %v5537, 0
        %vm5828 = vcmp.lt.s32.totalorder %v5544, 0
        %vm5829 = vcmp.lt.s32.totalorder %v5551, 0
        %vm5830 = vcmp.lt.s32.totalorder %v5558, 0
        %vm5831 = vcmp.lt.s32.totalorder %v5565, 0
        %vm5832 = vcmp.lt.s32.totalorder %v5572, 0
        %vm5833 = vcmp.lt.s32.totalorder %v5579, 0
        %vm5834 = vcmp.lt.s32.totalorder %v5586, 0
        %vm5835 = vcmp.lt.s32.totalorder %v5593, 0
        %vm5836 = vcmp.lt.s32.totalorder %v5600, 0
        %vm5837 = vcmp.lt.s32.totalorder %v5607, 0
        %vm5838 = vcmp.lt.s32.totalorder %v5614, 0
        %vm5839 = vmand %vm5727, %vm5615
        %vm5840 = vmand %vm5728, %vm5616
        %vm5841 = vmand %vm5729, %vm5617
        %vm5842 = vmand %vm5730, %vm5618
        %vm5843 = vmand %vm5731, %vm5619
        %vm5844 = vmand %vm5732, %vm5620
        %vm5845 = vmand %vm5733, %vm5621
        %vm5846 = vmand %vm5734, %vm5622
        %vm5847 = vmand %vm5735, %vm5623
        %vm5848 = vmand %vm5736, %vm5624
        %vm5849 = vmand %vm5737, %vm5625
        %vm5850 = vmand %vm5738, %vm5626
        %vm5851 = vmand %vm5739, %vm5627
        %vm5852 = vmand %vm5740, %vm5628
        %vm5853 = vmand %vm5741, %vm5629
        %vm5854 = vmand %vm5742, %vm5630
        %vm5855 = vmand %vm5743, %vm5631
        %vm5856 = vmand %vm5744, %vm5632
        %vm5857 = vmand %vm5745, %vm5633
        %vm5858 = vmand %vm5746, %vm5634
        %vm5859 = vmand %vm5747, %vm5635
        %vm5860 = vmand %vm5748, %vm5636
        %vm5861 = vmand %vm5749, %vm5637
        %vm5862 = vmand %vm5750, %vm5638
        %vm5863 = vmand %vm5751, %vm5639
        %vm5864 = vmand %vm5752, %vm5640
        %vm5865 = vmand %vm5753, %vm5641
        %vm5866 = vmand %vm5754, %vm5642
        %vm5867 = vmand %vm5755, %vm5643
        %vm5868 = vmand %vm5756, %vm5644
        %vm5869 = vmand %vm5757, %vm5645
        %vm5870 = vmand %vm5758, %vm5646
        %vm5871 = vmand %vm5759, %vm5647
        %vm5872 = vmand %vm5760, %vm5648
        %vm5873 = vmand %vm5761, %vm5649
        %vm5874 = vmand %vm5762, %vm5650
        %vm5875 = vmand %vm5763, %vm5651
        %vm5876 = vmand %vm5764, %vm5652
        %vm5877 = vmand %vm5765, %vm5653
        %vm5878 = vmand %vm5766, %vm5654
        %vm5879 = vmand %vm5767, %vm5655
        %vm5880 = vmand %vm5768, %vm5656
        %vm5881 = vmand %vm5769, %vm5657
        %vm5882 = vmand %vm5770, %vm5658
        %vm5883 = vmand %vm5771, %vm5659
        %vm5884 = vmand %vm5772, %vm5660
        %vm5885 = vmand %vm5773, %vm5661
        %vm5886 = vmand %vm5774, %vm5662
        %vm5887 = vmand %vm5775, %vm5663
        %vm5888 = vmand %vm5776, %vm5664
        %vm5889 = vmand %vm5777, %vm5665
        %vm5890 = vmand %vm5778, %vm5666
        %vm5891 = vmand %vm5779, %vm5667
        %vm5892 = vmand %vm5780, %vm5668
        %vm5893 = vmand %vm5781, %vm5669
        %vm5894 = vmand %vm5782, %vm5670
        %vm5895 = vmand %vm5783, %vm5671
        %vm5896 = vmand %vm5784, %vm5672
        %vm5897 = vmand %vm5785, %vm5673
        %vm5898 = vmand %vm5786, %vm5674
        %vm5899 = vmand %vm5787, %vm5675
        %vm5900 = vmand %vm5788, %vm5676
        %vm5901 = vmand %vm5789, %vm5677
        %vm5902 = vmand %vm5790, %vm5678
        %vm5903 = vmand %vm5791, %vm5679
        %vm5904 = vmand %vm5792, %vm5680
        %vm5905 = vmand %vm5793, %vm5681
        %vm5906 = vmand %vm5794, %vm5682
        %vm5907 = vmand %vm5795, %vm5683
        %vm5908 = vmand %vm5796, %vm5684
        %vm5909 = vmand %vm5797, %vm5685
        %vm5910 = vmand %vm5798, %vm5686
        %vm5911 = vmand %vm5799, %vm5687
        %vm5912 = vmand %vm5800, %vm5688
        %vm5913 = vmand %vm5801, %vm5689
        %vm5914 = vmand %vm5802, %vm5690
        %vm5915 = vmand %vm5803, %vm5691
        %vm5916 = vmand %vm5804, %vm5692
        %vm5917 = vmand %vm5805, %vm5693
        %vm5918 = vmand %vm5806, %vm5694
        %vm5919 = vmand %vm5807, %vm5695
        %vm5920 = vmand %vm5808, %vm5696
        %vm5921 = vmand %vm5809, %vm5697
        %vm5922 = vmand %vm5810, %vm5698
        %vm5923 = vmand %vm5811, %vm5699
        %vm5924 = vmand %vm5812, %vm5700
        %vm5925 = vmand %vm5813, %vm5701
        %vm5926 = vmand %vm5814, %vm5702
        %vm5927 = vmand %vm5815, %vm5703
        %vm5928 = vmand %vm5816, %vm5704
        %vm5929 = vmand %vm5817, %vm5705
        %vm5930 = vmand %vm5818, %vm5706
        %vm5931 = vmand %vm5819, %vm5707
        %vm5932 = vmand %vm5820, %vm5708
        %vm5933 = vmand %vm5821, %vm5709
        %vm5934 = vmand %vm5822, %vm5710
        %vm5935 = vmand %vm5823, %vm5711
        %vm5936 = vmand %vm5824, %vm5712
        %vm5937 = vmand %vm5825, %vm5713
        %vm5938 = vmand %vm5826, %vm5714
        %vm5939 = vmand %vm5827, %vm5715
        %vm5940 = vmand %vm5828, %vm5716
        %vm5941 = vmand %vm5829, %vm5717
        %vm5942 = vmand %vm5830, %vm5718
        %vm5943 = vmand %vm5831, %vm5719
        %vm5944 = vmand %vm5832, %vm5720
        %vm5945 = vmand %vm5833, %vm5721
        %vm5946 = vmand %vm5834, %vm5722
        %vm5947 = vmand %vm5835, %vm5723
        %vm5948 = vmand %vm5836, %vm5724
        %vm5949 = vmand %vm5837, %vm5725
        %vm5950 = vmand %vm5838, %vm5726
        %v5951 = vadd.s32 %v4837, 32
        %v5952 = vadd.s32 %v4844, 32
        %v5953 = vadd.s32 %v4851, 32
        %v5954 = vadd.s32 %v4858, 32
        %v5955 = vadd.s32 %v4865, 32
        %v5956 = vadd.s32 %v4872, 32
        %v5957 = vadd.s32 %v4879, 32
        %v5958 = vadd.s32 %v4886, 32
        %v5959 = vadd.s32 %v4893, 32
        %v5960 = vadd.s32 %v4900, 32
        %v5961 = vadd.s32 %v4907, 32
        %v5962 = vadd.s32 %v4914, 32
        %v5963 = vadd.s32 %v4921, 32
        %v5964 = vadd.s32 %v4928, 32
        %v5965 = vadd.s32 %v4935, 32
        %v5966 = vadd.s32 %v4942, 32
        %v5967 = vadd.s32 %v4949, 32
        %v5968 = vadd.s32 %v4956, 32
        %v5969 = vadd.s32 %v4963, 32
        %v5970 = vadd.s32 %v4970, 32
        %v5971 = vadd.s32 %v4977, 32
        %v5972 = vadd.s32 %v4984, 32
        %v5973 = vadd.s32 %v4991, 32
        %v5974 = vadd.s32 %v4998, 32
        %v5975 = vadd.s32 %v5005, 32
        %v5976 = vadd.s32 %v5012, 32
        %v5977 = vadd.s32 %v5019, 32
        %v5978 = vadd.s32 %v5026, 32
        %v5979 = vadd.s32 %v5033, 32
        %v5980 = vadd.s32 %v5040, 32
        %v5981 = vadd.s32 %v5047, 32
        %v5982 = vadd.s32 %v5054, 32
        %v5983 = vadd.s32 %v5061, 32
        %v5984 = vadd.s32 %v5068, 32
        %v5985 = vadd.s32 %v5075, 32
        %v5986 = vadd.s32 %v5082, 32
        %v5987 = vadd.s32 %v5089, 32
        %v5988 = vadd.s32 %v5096, 32
        %v5989 = vadd.s32 %v5103, 32
        %v5990 = vadd.s32 %v5110, 32
        %v5991 = vadd.s32 %v5117, 32
        %v5992 = vadd.s32 %v5124, 32
        %v5993 = vadd.s32 %v5131, 32
        %v5994 = vadd.s32 %v5138, 32
        %v5995 = vadd.s32 %v5145, 32
        %v5996 = vadd.s32 %v5152, 32
        %v5997 = vadd.s32 %v5159, 32
        %v5998 = vadd.s32 %v5166, 32
        %v5999 = vadd.s32 %v5173, 32
        %v6000 = vadd.s32 %v5180, 32
        %v6001 = vadd.s32 %v5187, 32
        %v6002 = vadd.s32 %v5194, 32
        %v6003 = vadd.s32 %v5201, 32
        %v6004 = vadd.s32 %v5208, 32
        %v6005 = vadd.s32 %v5215, 32
        %v6006 = vadd.s32 %v5222, 32
        %v6007 = vadd.s32 %v5229, 32
        %v6008 = vadd.s32 %v5236, 32
        %v6009 = vadd.s32 %v5243, 32
        %v6010 = vadd.s32 %v5250, 32
        %v6011 = vadd.s32 %v5257, 32
        %v6012 = vadd.s32 %v5264, 32
        %v6013 = vadd.s32 %v5271, 32
        %v6014 = vadd.s32 %v5278, 32
        %v6015 = vadd.s32 %v5285, 32
        %v6016 = vadd.s32 %v5292, 32
        %v6017 = vadd.s32 %v5299, 32
        %v6018 = vadd.s32 %v5306, 32
        %v6019 = vadd.s32 %v5313, 32
        %v6020 = vadd.s32 %v5320, 32
        %v6021 = vadd.s32 %v5327, 32
        %v6022 = vadd.s32 %v5334, 32
        %v6023 = vadd.s32 %v5341, 32
        %v6024 = vadd.s32 %v5348, 32
        %v6025 = vadd.s32 %v5355, 32
        %v6026 = vadd.s32 %v5362, 32
        %v6027 = vadd.s32 %v5369, 32
        %v6028 = vadd.s32 %v5376, 32
        %v6029 = vadd.s32 %v5383, 32
        %v6030 = vadd.s32 %v5390, 32
        %v6031 = vadd.s32 %v5397, 32
        %v6032 = vadd.s32 %v5404, 32
        %v6033 = vadd.s32 %v5411, 32
        %v6034 = vadd.s32 %v5418, 32
        %v6035 = vadd.s32 %v5425, 32
        %v6036 = vadd.s32 %v5432, 32
        %v6037 = vadd.s32 %v5439, 32
        %v6038 = vadd.s32 %v5446, 32
        %v6039 = vadd.s32 %v5453, 32
        %v6040 = vadd.s32 %v5460, 32
        %v6041 = vadd.s32 %v5467, 32
        %v6042 = vadd.s32 %v5474, 32
        %v6043 = vadd.s32 %v5481, 32
        %v6044 = vadd.s32 %v5488, 32
        %v6045 = vadd.s32 %v5495, 32
        %v6046 = vadd.s32 %v5502, 32
        %v6047 = vadd.s32 %v5509, 32
        %v6048 = vadd.s32 %v5516, 32
        %v6049 = vadd.s32 %v5523, 32
        %v6050 = vadd.s32 %v5530, 32
        %v6051 = vadd.s32 %v5537, 32
        %v6052 = vadd.s32 %v5544, 32
        %v6053 = vadd.s32 %v5551, 32
        %v6054 = vadd.s32 %v5558, 32
        %v6055 = vadd.s32 %v5565, 32
        %v6056 = vadd.s32 %v5572, 32
        %v6057 = vadd.s32 %v5579, 32
        %v6058 = vadd.s32 %v5586, 32
        %v6059 = vadd.s32 %v5593, 32
        %v6060 = vadd.s32 %v5600, 32
        %v6061 = vadd.s32 %v5607, 32
        %v6062 = vadd.s32 %v5614, 32
        %v6063 = vsel %vm5839, %v5951, %v4837
        %v6064 = vsel %vm5840, %v5952, %v4844
        %v6065 = vsel %vm5841, %v5953, %v4851
        %v6066 = vsel %vm5842, %v5954, %v4858
        %v6067 = vsel %vm5843, %v5955, %v4865
        %v6068 = vsel %vm5844, %v5956, %v4872
        %v6069 = vsel %vm5845, %v5957, %v4879
        %v6070 = vsel %vm5846, %v5958, %v4886
        %v6071 = vsel %vm5847, %v5959, %v4893
        %v6072 = vsel %vm5848, %v5960, %v4900
        %v6073 = vsel %vm5849, %v5961, %v4907
        %v6074 = vsel %vm5850, %v5962, %v4914
        %v6075 = vsel %vm5851, %v5963, %v4921
        %v6076 = vsel %vm5852, %v5964, %v4928
        %v6077 = vsel %vm5853, %v5965, %v4935
        %v6078 = vsel %vm5854, %v5966, %v4942
        %v6079 = vsel %vm5855, %v5967, %v4949
        %v6080 = vsel %vm5856, %v5968, %v4956
        %v6081 = vsel %vm5857, %v5969, %v4963
        %v6082 = vsel %vm5858, %v5970, %v4970
        %v6083 = vsel %vm5859, %v5971, %v4977
        %v6084 = vsel %vm5860, %v5972, %v4984
        %v6085 = vsel %vm5861, %v5973, %v4991
        %v6086 = vsel %vm5862, %v5974, %v4998
        %v6087 = vsel %vm5863, %v5975, %v5005
        %v6088 = vsel %vm5864, %v5976, %v5012
        %v6089 = vsel %vm5865, %v5977, %v5019
        %v6090 = vsel %vm5866, %v5978, %v5026
        %v6091 = vsel %vm5867, %v5979, %v5033
        %v6092 = vsel %vm5868, %v5980, %v5040
        %v6093 = vsel %vm5869, %v5981, %v5047
        %v6094 = vsel %vm5870, %v5982, %v5054
        %v6095 = vsel %vm5871, %v5983, %v5061
        %v6096 = vsel %vm5872, %v5984, %v5068
        %v6097 = vsel %vm5873, %v5985, %v5075
        %v6098 = vsel %vm5874, %v5986, %v5082
        %v6099 = vsel %vm5875, %v5987, %v5089
        %v6100 = vsel %vm5876, %v5988, %v5096
        %v6101 = vsel %vm5877, %v5989, %v5103
        %v6102 = vsel %vm5878, %v5990, %v5110
        %v6103 = vsel %vm5879, %v5991, %v5117
        %v6104 = vsel %vm5880, %v5992, %v5124
        %v6105 = vsel %vm5881, %v5993, %v5131
        %v6106 = vsel %vm5882, %v5994, %v5138
        %v6107 = vsel %vm5883, %v5995, %v5145
        %v6108 = vsel %vm5884, %v5996, %v5152
        %v6109 = vsel %vm5885, %v5997, %v5159
        %v6110 = vsel %vm5886, %v5998, %v5166
        %v6111 = vsel %vm5887, %v5999, %v5173
        %v6112 = vsel %vm5888, %v6000, %v5180
        %v6113 = vsel %vm5889, %v6001, %v5187
        %v6114 = vsel %vm5890, %v6002, %v5194
        %v6115 = vsel %vm5891, %v6003, %v5201
        %v6116 = vsel %vm5892, %v6004, %v5208
        %v6117 = vsel %vm5893, %v6005, %v5215
        %v6118 = vsel %vm5894, %v6006, %v5222
        %v6119 = vsel %vm5895, %v6007, %v5229
        %v6120 = vsel %vm5896, %v6008, %v5236
        %v6121 = vsel %vm5897, %v6009, %v5243
        %v6122 = vsel %vm5898, %v6010, %v5250
        %v6123 = vsel %vm5899, %v6011, %v5257
        %v6124 = vsel %vm5900, %v6012, %v5264
        %v6125 = vsel %vm5901, %v6013, %v5271
        %v6126 = vsel %vm5902, %v6014, %v5278
        %v6127 = vsel %vm5903, %v6015, %v5285
        %v6128 = vsel %vm5904, %v6016, %v5292
        %v6129 = vsel %vm5905, %v6017, %v5299
        %v6130 = vsel %vm5906, %v6018, %v5306
        %v6131 = vsel %vm5907, %v6019, %v5313
        %v6132 = vsel %vm5908, %v6020, %v5320
        %v6133 = vsel %vm5909, %v6021, %v5327
        %v6134 = vsel %vm5910, %v6022, %v5334
        %v6135 = vsel %vm5911, %v6023, %v5341
        %v6136 = vsel %vm5912, %v6024, %v5348
        %v6137 = vsel %vm5913, %v6025, %v5355
        %v6138 = vsel %vm5914, %v6026, %v5362
        %v6139 = vsel %vm5915, %v6027, %v5369
        %v6140 = vsel %vm5916, %v6028, %v5376
        %v6141 = vsel %vm5917, %v6029, %v5383
        %v6142 = vsel %vm5918, %v6030, %v5390
        %v6143 = vsel %vm5919, %v6031, %v5397
        %v6144 = vsel %vm5920, %v6032, %v5404
        %v6145 = vsel %vm5921, %v6033, %v5411
        %v6146 = vsel %vm5922, %v6034, %v5418
        %v6147 = vsel %vm5923, %v6035, %v5425
        %v6148 = vsel %vm5924, %v6036, %v5432
        %v6149 = vsel %vm5925, %v6037, %v5439
        %v6150 = vsel %vm5926, %v6038, %v5446
        %v6151 = vsel %vm5927, %v6039, %v5453
        %v6152 = vsel %vm5928, %v6040, %v5460
        %v6153 = vsel %vm5929, %v6041, %v5467
        %v6154 = vsel %vm5930, %v6042, %v5474
        %v6155 = vsel %vm5931, %v6043, %v5481
        %v6156 = vsel %vm5932, %v6044, %v5488
        %v6157 = vsel %vm5933, %v6045, %v5495
        %v6158 = vsel %vm5934, %v6046, %v5502
        %v6159 = vsel %vm5935, %v6047, %v5509
        %v6160 = vsel %vm5936, %v6048, %v5516
        %v6161 = vsel %vm5937, %v6049, %v5523
        %v6162 = vsel %vm5938, %v6050, %v5530
        %v6163 = vsel %vm5939, %v6051, %v5537
        %v6164 = vsel %vm5940, %v6052, %v5544
        %v6165 = vsel %vm5941, %v6053, %v5551
        %v6166 = vsel %vm5942, %v6054, %v5558
        %v6167 = vsel %vm5943, %v6055, %v5565
        %v6168 = vsel %vm5944, %v6056, %v5572
        %v6169 = vsel %vm5945, %v6057, %v5579
        %v6170 = vsel %vm5946, %v6058, %v5586
        %v6171 = vsel %vm5947, %v6059, %v5593
        %v6172 = vsel %vm5948, %v6060, %v5600
        %v6173 = vsel %vm5949, %v6061, %v5607
        %v6174 = vsel %vm5950, %v6062, %v5614
        %vm6175 = vcmp.lt.s32.totalorder %v6063, 28
        %vm6176 = vcmp.lt.s32.totalorder %v6064, 28
        %vm6177 = vcmp.lt.s32.totalorder %v6065, 28
        %vm6178 = vcmp.lt.s32.totalorder %v6066, 28
        %vm6179 = vcmp.lt.s32.totalorder %v6067, 28
        %vm6180 = vcmp.lt.s32.totalorder %v6068, 28
        %vm6181 = vcmp.lt.s32.totalorder %v6069, 28
        %vm6182 = vcmp.lt.s32.totalorder %v6070, 28
        %vm6183 = vcmp.lt.s32.totalorder %v6071, 28
        %vm6184 = vcmp.lt.s32.totalorder %v6072, 28
        %vm6185 = vcmp.lt.s32.totalorder %v6073, 28
        %vm6186 = vcmp.lt.s32.totalorder %v6074, 28
        %vm6187 = vcmp.lt.s32.totalorder %v6075, 28
        %vm6188 = vcmp.lt.s32.totalorder %v6076, 28
        %vm6189 = vcmp.lt.s32.totalorder %v6077, 28
        %vm6190 = vcmp.lt.s32.totalorder %v6078, 28
        %vm6191 = vcmp.lt.s32.totalorder %v6079, 28
        %vm6192 = vcmp.lt.s32.totalorder %v6080, 28
        %vm6193 = vcmp.lt.s32.totalorder %v6081, 28
        %vm6194 = vcmp.lt.s32.totalorder %v6082, 28
        %vm6195 = vcmp.lt.s32.totalorder %v6083, 28
        %vm6196 = vcmp.lt.s32.totalorder %v6084, 28
        %vm6197 = vcmp.lt.s32.totalorder %v6085, 28
        %vm6198 = vcmp.lt.s32.totalorder %v6086, 28
        %vm6199 = vcmp.lt.s32.totalorder %v6087, 28
        %vm6200 = vcmp.lt.s32.totalorder %v6088, 28
        %vm6201 = vcmp.lt.s32.totalorder %v6089, 28
        %vm6202 = vcmp.lt.s32.totalorder %v6090, 28
        %vm6203 = vcmp.lt.s32.totalorder %v6091, 28
        %vm6204 = vcmp.lt.s32.totalorder %v6092, 28
        %vm6205 = vcmp.lt.s32.totalorder %v6093, 28
        %vm6206 = vcmp.lt.s32.totalorder %v6094, 28
        %vm6207 = vcmp.lt.s32.totalorder %v6095, 28
        %vm6208 = vcmp.lt.s32.totalorder %v6096, 28
        %vm6209 = vcmp.lt.s32.totalorder %v6097, 28
        %vm6210 = vcmp.lt.s32.totalorder %v6098, 28
        %vm6211 = vcmp.lt.s32.totalorder %v6099, 28
        %vm6212 = vcmp.lt.s32.totalorder %v6100, 28
        %vm6213 = vcmp.lt.s32.totalorder %v6101, 28
        %vm6214 = vcmp.lt.s32.totalorder %v6102, 28
        %vm6215 = vcmp.lt.s32.totalorder %v6103, 28
        %vm6216 = vcmp.lt.s32.totalorder %v6104, 28
        %vm6217 = vcmp.lt.s32.totalorder %v6105, 28
        %vm6218 = vcmp.lt.s32.totalorder %v6106, 28
        %vm6219 = vcmp.lt.s32.totalorder %v6107, 28
        %vm6220 = vcmp.lt.s32.totalorder %v6108, 28
        %vm6221 = vcmp.lt.s32.totalorder %v6109, 28
        %vm6222 = vcmp.lt.s32.totalorder %v6110, 28
        %vm6223 = vcmp.lt.s32.totalorder %v6111, 28
        %vm6224 = vcmp.lt.s32.totalorder %v6112, 28
        %vm6225 = vcmp.lt.s32.totalorder %v6113, 28
        %vm6226 = vcmp.lt.s32.totalorder %v6114, 28
        %vm6227 = vcmp.lt.s32.totalorder %v6115, 28
        %vm6228 = vcmp.lt.s32.totalorder %v6116, 28
        %vm6229 = vcmp.lt.s32.totalorder %v6117, 28
        %vm6230 = vcmp.lt.s32.totalorder %v6118, 28
        %vm6231 = vcmp.lt.s32.totalorder %v6119, 28
        %vm6232 = vcmp.lt.s32.totalorder %v6120, 28
        %vm6233 = vcmp.lt.s32.totalorder %v6121, 28
        %vm6234 = vcmp.lt.s32.totalorder %v6122, 28
        %vm6235 = vcmp.lt.s32.totalorder %v6123, 28
        %vm6236 = vcmp.lt.s32.totalorder %v6124, 28
        %vm6237 = vcmp.lt.s32.totalorder %v6125, 28
        %vm6238 = vcmp.lt.s32.totalorder %v6126, 28
        %vm6239 = vcmp.lt.s32.totalorder %v6127, 28
        %vm6240 = vcmp.lt.s32.totalorder %v6128, 28
        %vm6241 = vcmp.lt.s32.totalorder %v6129, 28
        %vm6242 = vcmp.lt.s32.totalorder %v6130, 28
        %vm6243 = vcmp.lt.s32.totalorder %v6131, 28
        %vm6244 = vcmp.lt.s32.totalorder %v6132, 28
        %vm6245 = vcmp.lt.s32.totalorder %v6133, 28
        %vm6246 = vcmp.lt.s32.totalorder %v6134, 28
        %vm6247 = vcmp.lt.s32.totalorder %v6135, 28
        %vm6248 = vcmp.lt.s32.totalorder %v6136, 28
        %vm6249 = vcmp.lt.s32.totalorder %v6137, 28
        %vm6250 = vcmp.lt.s32.totalorder %v6138, 28
        %vm6251 = vcmp.lt.s32.totalorder %v6139, 28
        %vm6252 = vcmp.lt.s32.totalorder %v6140, 28
        %vm6253 = vcmp.lt.s32.totalorder %v6141, 28
        %vm6254 = vcmp.lt.s32.totalorder %v6142, 28
        %vm6255 = vcmp.lt.s32.totalorder %v6143, 28
        %vm6256 = vcmp.lt.s32.totalorder %v6144, 28
        %vm6257 = vcmp.lt.s32.totalorder %v6145, 28
        %vm6258 = vcmp.lt.s32.totalorder %v6146, 28
        %vm6259 = vcmp.lt.s32.totalorder %v6147, 28
        %vm6260 = vcmp.lt.s32.totalorder %v6148, 28
        %vm6261 = vcmp.lt.s32.totalorder %v6149, 28
        %vm6262 = vcmp.lt.s32.totalorder %v6150, 28
        %vm6263 = vcmp.lt.s32.totalorder %v6151, 28
        %vm6264 = vcmp.lt.s32.totalorder %v6152, 28
        %vm6265 = vcmp.lt.s32.totalorder %v6153, 28
        %vm6266 = vcmp.lt.s32.totalorder %v6154, 28
        %vm6267 = vcmp.lt.s32.totalorder %v6155, 28
        %vm6268 = vcmp.lt.s32.totalorder %v6156, 28
        %vm6269 = vcmp.lt.s32.totalorder %v6157, 28
        %vm6270 = vcmp.lt.s32.totalorder %v6158, 28
        %vm6271 = vcmp.lt.s32.totalorder %v6159, 28
        %vm6272 = vcmp.lt.s32.totalorder %v6160, 28
        %vm6273 = vcmp.lt.s32.totalorder %v6161, 28
        %vm6274 = vcmp.lt.s32.totalorder %v6162, 28
        %vm6275 = vcmp.lt.s32.totalorder %v6163, 28
        %vm6276 = vcmp.lt.s32.totalorder %v6164, 28
        %vm6277 = vcmp.lt.s32.totalorder %v6165, 28
        %vm6278 = vcmp.lt.s32.totalorder %v6166, 28
        %vm6279 = vcmp.lt.s32.totalorder %v6167, 28
        %vm6280 = vcmp.lt.s32.totalorder %v6168, 28
        %vm6281 = vcmp.lt.s32.totalorder %v6169, 28
        %vm6282 = vcmp.lt.s32.totalorder %v6170, 28
        %vm6283 = vcmp.lt.s32.totalorder %v6171, 28
        %vm6284 = vcmp.lt.s32.totalorder %v6172, 28
        %vm6285 = vcmp.lt.s32.totalorder %v6173, 28
        %vm6286 = vcmp.lt.s32.totalorder %v6174, 28
        %v6287 = vsel %vm6175, 1, 0
        %v6288 = vsel %vm6176, 1, 0
        %v6289 = vsel %vm6177, 1, 0
        %v6290 = vsel %vm6178, 1, 0
        %v6291 = vsel %vm6179, 1, 0
        %v6292 = vsel %vm6180, 1, 0
        %v6293 = vsel %vm6181, 1, 0
        %v6294 = vsel %vm6182, 1, 0
        %v6295 = vsel %vm6183, 1, 0
        %v6296 = vsel %vm6184, 1, 0
        %v6297 = vsel %vm6185, 1, 0
        %v6298 = vsel %vm6186, 1, 0
        %v6299 = vsel %vm6187, 1, 0
        %v6300 = vsel %vm6188, 1, 0
        %v6301 = vsel %vm6189, 1, 0
        %v6302 = vsel %vm6190, 1, 0
        %v6303 = vsel %vm6191, 1, 0
        %v6304 = vsel %vm6192, 1, 0
        %v6305 = vsel %vm6193, 1, 0
        %v6306 = vsel %vm6194, 1, 0
        %v6307 = vsel %vm6195, 1, 0
        %v6308 = vsel %vm6196, 1, 0
        %v6309 = vsel %vm6197, 1, 0
        %v6310 = vsel %vm6198, 1, 0
        %v6311 = vsel %vm6199, 1, 0
        %v6312 = vsel %vm6200, 1, 0
        %v6313 = vsel %vm6201, 1, 0
        %v6314 = vsel %vm6202, 1, 0
        %v6315 = vsel %vm6203, 1, 0
        %v6316 = vsel %vm6204, 1, 0
        %v6317 = vsel %vm6205, 1, 0
        %v6318 = vsel %vm6206, 1, 0
        %v6319 = vsel %vm6207, 1, 0
        %v6320 = vsel %vm6208, 1, 0
        %v6321 = vsel %vm6209, 1, 0
        %v6322 = vsel %vm6210, 1, 0
        %v6323 = vsel %vm6211, 1, 0
        %v6324 = vsel %vm6212, 1, 0
        %v6325 = vsel %vm6213, 1, 0
        %v6326 = vsel %vm6214, 1, 0
        %v6327 = vsel %vm6215, 1, 0
        %v6328 = vsel %vm6216, 1, 0
        %v6329 = vsel %vm6217, 1, 0
        %v6330 = vsel %vm6218, 1, 0
        %v6331 = vsel %vm6219, 1, 0
        %v6332 = vsel %vm6220, 1, 0
        %v6333 = vsel %vm6221, 1, 0
        %v6334 = vsel %vm6222, 1, 0
        %v6335 = vsel %vm6223, 1, 0
        %v6336 = vsel %vm6224, 1, 0
        %v6337 = vsel %vm6225, 1, 0
        %v6338 = vsel %vm6226, 1, 0
        %v6339 = vsel %vm6227, 1, 0
        %v6340 = vsel %vm6228, 1, 0
        %v6341 = vsel %vm6229, 1, 0
        %v6342 = vsel %vm6230, 1, 0
        %v6343 = vsel %vm6231, 1, 0
        %v6344 = vsel %vm6232, 1, 0
        %v6345 = vsel %vm6233, 1, 0
        %v6346 = vsel %vm6234, 1, 0
        %v6347 = vsel %vm6235, 1, 0
        %v6348 = vsel %vm6236, 1, 0
        %v6349 = vsel %vm6237, 1, 0
        %v6350 = vsel %vm6238, 1, 0
        %v6351 = vsel %vm6239, 1, 0
        %v6352 = vsel %vm6240, 1, 0
        %v6353 = vsel %vm6241, 1, 0
        %v6354 = vsel %vm6242, 1, 0
        %v6355 = vsel %vm6243, 1, 0
        %v6356 = vsel %vm6244, 1, 0
        %v6357 = vsel %vm6245, 1, 0
        %v6358 = vsel %vm6246, 1, 0
        %v6359 = vsel %vm6247, 1, 0
        %v6360 = vsel %vm6248, 1, 0
        %v6361 = vsel %vm6249, 1, 0
        %v6362 = vsel %vm6250, 1, 0
        %v6363 = vsel %vm6251, 1, 0
        %v6364 = vsel %vm6252, 1, 0
        %v6365 = vsel %vm6253, 1, 0
        %v6366 = vsel %vm6254, 1, 0
        %v6367 = vsel %vm6255, 1, 0
        %v6368 = vsel %vm6256, 1, 0
        %v6369 = vsel %vm6257, 1, 0
        %v6370 = vsel %vm6258, 1, 0
        %v6371 = vsel %vm6259, 1, 0
        %v6372 = vsel %vm6260, 1, 0
        %v6373 = vsel %vm6261, 1, 0
        %v6374 = vsel %vm6262, 1, 0
        %v6375 = vsel %vm6263, 1, 0
        %v6376 = vsel %vm6264, 1, 0
        %v6377 = vsel %vm6265, 1, 0
        %v6378 = vsel %vm6266, 1, 0
        %v6379 = vsel %vm6267, 1, 0
        %v6380 = vsel %vm6268, 1, 0
        %v6381 = vsel %vm6269, 1, 0
        %v6382 = vsel %vm6270, 1, 0
        %v6383 = vsel %vm6271, 1, 0
        %v6384 = vsel %vm6272, 1, 0
        %v6385 = vsel %vm6273, 1, 0
        %v6386 = vsel %vm6274, 1, 0
        %v6387 = vsel %vm6275, 1, 0
        %v6388 = vsel %vm6276, 1, 0
        %v6389 = vsel %vm6277, 1, 0
        %v6390 = vsel %vm6278, 1, 0
        %v6391 = vsel %vm6279, 1, 0
        %v6392 = vsel %vm6280, 1, 0
        %v6393 = vsel %vm6281, 1, 0
        %v6394 = vsel %vm6282, 1, 0
        %v6395 = vsel %vm6283, 1, 0
        %v6396 = vsel %vm6284, 1, 0
        %v6397 = vsel %vm6285, 1, 0
        %v6398 = vsel %vm6286, 1, 0
        %vm6399 = vcmp.eq.s32.totalorder %v6287, 1
        %vm6400 = vcmp.eq.s32.totalorder %v6288, 1
        %vm6401 = vcmp.eq.s32.totalorder %v6289, 1
        %vm6402 = vcmp.eq.s32.totalorder %v6290, 1
        %vm6403 = vcmp.eq.s32.totalorder %v6291, 1
        %vm6404 = vcmp.eq.s32.totalorder %v6292, 1
        %vm6405 = vcmp.eq.s32.totalorder %v6293, 1
        %vm6406 = vcmp.eq.s32.totalorder %v6294, 1
        %vm6407 = vcmp.eq.s32.totalorder %v6295, 1
        %vm6408 = vcmp.eq.s32.totalorder %v6296, 1
        %vm6409 = vcmp.eq.s32.totalorder %v6297, 1
        %vm6410 = vcmp.eq.s32.totalorder %v6298, 1
        %vm6411 = vcmp.eq.s32.totalorder %v6299, 1
        %vm6412 = vcmp.eq.s32.totalorder %v6300, 1
        %vm6413 = vcmp.eq.s32.totalorder %v6301, 1
        %vm6414 = vcmp.eq.s32.totalorder %v6302, 1
        %vm6415 = vcmp.eq.s32.totalorder %v6303, 1
        %vm6416 = vcmp.eq.s32.totalorder %v6304, 1
        %vm6417 = vcmp.eq.s32.totalorder %v6305, 1
        %vm6418 = vcmp.eq.s32.totalorder %v6306, 1
        %vm6419 = vcmp.eq.s32.totalorder %v6307, 1
        %vm6420 = vcmp.eq.s32.totalorder %v6308, 1
        %vm6421 = vcmp.eq.s32.totalorder %v6309, 1
        %vm6422 = vcmp.eq.s32.totalorder %v6310, 1
        %vm6423 = vcmp.eq.s32.totalorder %v6311, 1
        %vm6424 = vcmp.eq.s32.totalorder %v6312, 1
        %vm6425 = vcmp.eq.s32.totalorder %v6313, 1
        %vm6426 = vcmp.eq.s32.totalorder %v6314, 1
        %vm6427 = vcmp.eq.s32.totalorder %v6315, 1
        %vm6428 = vcmp.eq.s32.totalorder %v6316, 1
        %vm6429 = vcmp.eq.s32.totalorder %v6317, 1
        %vm6430 = vcmp.eq.s32.totalorder %v6318, 1
        %vm6431 = vcmp.eq.s32.totalorder %v6319, 1
        %vm6432 = vcmp.eq.s32.totalorder %v6320, 1
        %vm6433 = vcmp.eq.s32.totalorder %v6321, 1
        %vm6434 = vcmp.eq.s32.totalorder %v6322, 1
        %vm6435 = vcmp.eq.s32.totalorder %v6323, 1
        %vm6436 = vcmp.eq.s32.totalorder %v6324, 1
        %vm6437 = vcmp.eq.s32.totalorder %v6325, 1
        %vm6438 = vcmp.eq.s32.totalorder %v6326, 1
        %vm6439 = vcmp.eq.s32.totalorder %v6327, 1
        %vm6440 = vcmp.eq.s32.totalorder %v6328, 1
        %vm6441 = vcmp.eq.s32.totalorder %v6329, 1
        %vm6442 = vcmp.eq.s32.totalorder %v6330, 1
        %vm6443 = vcmp.eq.s32.totalorder %v6331, 1
        %vm6444 = vcmp.eq.s32.totalorder %v6332, 1
        %vm6445 = vcmp.eq.s32.totalorder %v6333, 1
        %vm6446 = vcmp.eq.s32.totalorder %v6334, 1
        %vm6447 = vcmp.eq.s32.totalorder %v6335, 1
        %vm6448 = vcmp.eq.s32.totalorder %v6336, 1
        %vm6449 = vcmp.eq.s32.totalorder %v6337, 1
        %vm6450 = vcmp.eq.s32.totalorder %v6338, 1
        %vm6451 = vcmp.eq.s32.totalorder %v6339, 1
        %vm6452 = vcmp.eq.s32.totalorder %v6340, 1
        %vm6453 = vcmp.eq.s32.totalorder %v6341, 1
        %vm6454 = vcmp.eq.s32.totalorder %v6342, 1
        %vm6455 = vcmp.eq.s32.totalorder %v6343, 1
        %vm6456 = vcmp.eq.s32.totalorder %v6344, 1
        %vm6457 = vcmp.eq.s32.totalorder %v6345, 1
        %vm6458 = vcmp.eq.s32.totalorder %v6346, 1
        %vm6459 = vcmp.eq.s32.totalorder %v6347, 1
        %vm6460 = vcmp.eq.s32.totalorder %v6348, 1
        %vm6461 = vcmp.eq.s32.totalorder %v6349, 1
        %vm6462 = vcmp.eq.s32.totalorder %v6350, 1
        %vm6463 = vcmp.eq.s32.totalorder %v6351, 1
        %vm6464 = vcmp.eq.s32.totalorder %v6352, 1
        %vm6465 = vcmp.eq.s32.totalorder %v6353, 1
        %vm6466 = vcmp.eq.s32.totalorder %v6354, 1
        %vm6467 = vcmp.eq.s32.totalorder %v6355, 1
        %vm6468 = vcmp.eq.s32.totalorder %v6356, 1
        %vm6469 = vcmp.eq.s32.totalorder %v6357, 1
        %vm6470 = vcmp.eq.s32.totalorder %v6358, 1
        %vm6471 = vcmp.eq.s32.totalorder %v6359, 1
        %vm6472 = vcmp.eq.s32.totalorder %v6360, 1
        %vm6473 = vcmp.eq.s32.totalorder %v6361, 1
        %vm6474 = vcmp.eq.s32.totalorder %v6362, 1
        %vm6475 = vcmp.eq.s32.totalorder %v6363, 1
        %vm6476 = vcmp.eq.s32.totalorder %v6364, 1
        %vm6477 = vcmp.eq.s32.totalorder %v6365, 1
        %vm6478 = vcmp.eq.s32.totalorder %v6366, 1
        %vm6479 = vcmp.eq.s32.totalorder %v6367, 1
        %vm6480 = vcmp.eq.s32.totalorder %v6368, 1
        %vm6481 = vcmp.eq.s32.totalorder %v6369, 1
        %vm6482 = vcmp.eq.s32.totalorder %v6370, 1
        %vm6483 = vcmp.eq.s32.totalorder %v6371, 1
        %vm6484 = vcmp.eq.s32.totalorder %v6372, 1
        %vm6485 = vcmp.eq.s32.totalorder %v6373, 1
        %vm6486 = vcmp.eq.s32.totalorder %v6374, 1
        %vm6487 = vcmp.eq.s32.totalorder %v6375, 1
        %vm6488 = vcmp.eq.s32.totalorder %v6376, 1
        %vm6489 = vcmp.eq.s32.totalorder %v6377, 1
        %vm6490 = vcmp.eq.s32.totalorder %v6378, 1
        %vm6491 = vcmp.eq.s32.totalorder %v6379, 1
        %vm6492 = vcmp.eq.s32.totalorder %v6380, 1
        %vm6493 = vcmp.eq.s32.totalorder %v6381, 1
        %vm6494 = vcmp.eq.s32.totalorder %v6382, 1
        %vm6495 = vcmp.eq.s32.totalorder %v6383, 1
        %vm6496 = vcmp.eq.s32.totalorder %v6384, 1
        %vm6497 = vcmp.eq.s32.totalorder %v6385, 1
        %vm6498 = vcmp.eq.s32.totalorder %v6386, 1
        %vm6499 = vcmp.eq.s32.totalorder %v6387, 1
        %vm6500 = vcmp.eq.s32.totalorder %v6388, 1
        %vm6501 = vcmp.eq.s32.totalorder %v6389, 1
        %vm6502 = vcmp.eq.s32.totalorder %v6390, 1
        %vm6503 = vcmp.eq.s32.totalorder %v6391, 1
        %vm6504 = vcmp.eq.s32.totalorder %v6392, 1
        %vm6505 = vcmp.eq.s32.totalorder %v6393, 1
        %vm6506 = vcmp.eq.s32.totalorder %v6394, 1
        %vm6507 = vcmp.eq.s32.totalorder %v6395, 1
        %vm6508 = vcmp.eq.s32.totalorder %v6396, 1
        %vm6509 = vcmp.eq.s32.totalorder %v6397, 1
        %vm6510 = vcmp.eq.s32.totalorder %v6398, 1
        %v6511 = vsel %vm6399, %v4606, 0.0
        %v6512 = vsel %vm6400, %v4607, 0.0
        %v6513 = vsel %vm6401, %v4608, 0.0
        %v6514 = vsel %vm6402, %v4609, 0.0
        %v6515 = vsel %vm6403, %v4610, 0.0
        %v6516 = vsel %vm6404, %v4611, 0.0
        %v6517 = vsel %vm6405, %v4612, 0.0
        %v6518 = vsel %vm6406, %v4613, 0.0
        %v6519 = vsel %vm6407, %v4614, 0.0
        %v6520 = vsel %vm6408, %v4615, 0.0
        %v6521 = vsel %vm6409, %v4616, 0.0
        %v6522 = vsel %vm6410, %v4617, 0.0
        %v6523 = vsel %vm6411, %v4618, 0.0
        %v6524 = vsel %vm6412, %v4619, 0.0
        %v6525 = vsel %vm6413, %v4620, 0.0
        %v6526 = vsel %vm6414, %v4621, 0.0
        %v6527 = vsel %vm6415, %v4622, 0.0
        %v6528 = vsel %vm6416, %v4623, 0.0
        %v6529 = vsel %vm6417, %v4624, 0.0
        %v6530 = vsel %vm6418, %v4625, 0.0
        %v6531 = vsel %vm6419, %v4626, 0.0
        %v6532 = vsel %vm6420, %v4627, 0.0
        %v6533 = vsel %vm6421, %v4628, 0.0
        %v6534 = vsel %vm6422, %v4629, 0.0
        %v6535 = vsel %vm6423, %v4630, 0.0
        %v6536 = vsel %vm6424, %v4631, 0.0
        %v6537 = vsel %vm6425, %v4632, 0.0
        %v6538 = vsel %vm6426, %v4633, 0.0
        %v6539 = vsel %vm6427, %v4634, 0.0
        %v6540 = vsel %vm6428, %v4635, 0.0
        %v6541 = vsel %vm6429, %v4636, 0.0
        %v6542 = vsel %vm6430, %v4637, 0.0
        %v6543 = vsel %vm6431, %v4638, 0.0
        %v6544 = vsel %vm6432, %v4639, 0.0
        %v6545 = vsel %vm6433, %v4640, 0.0
        %v6546 = vsel %vm6434, %v4641, 0.0
        %v6547 = vsel %vm6435, %v4642, 0.0
        %v6548 = vsel %vm6436, %v4643, 0.0
        %v6549 = vsel %vm6437, %v4644, 0.0
        %v6550 = vsel %vm6438, %v4645, 0.0
        %v6551 = vsel %vm6439, %v4646, 0.0
        %v6552 = vsel %vm6440, %v4647, 0.0
        %v6553 = vsel %vm6441, %v4648, 0.0
        %v6554 = vsel %vm6442, %v4649, 0.0
        %v6555 = vsel %vm6443, %v4650, 0.0
        %v6556 = vsel %vm6444, %v4651, 0.0
        %v6557 = vsel %vm6445, %v4652, 0.0
        %v6558 = vsel %vm6446, %v4653, 0.0
        %v6559 = vsel %vm6447, %v4654, 0.0
        %v6560 = vsel %vm6448, %v4655, 0.0
        %v6561 = vsel %vm6449, %v4656, 0.0
        %v6562 = vsel %vm6450, %v4657, 0.0
        %v6563 = vsel %vm6451, %v4658, 0.0
        %v6564 = vsel %vm6452, %v4659, 0.0
        %v6565 = vsel %vm6453, %v4660, 0.0
        %v6566 = vsel %vm6454, %v4661, 0.0
        %v6567 = vsel %vm6455, %v4662, 0.0
        %v6568 = vsel %vm6456, %v4663, 0.0
        %v6569 = vsel %vm6457, %v4664, 0.0
        %v6570 = vsel %vm6458, %v4665, 0.0
        %v6571 = vsel %vm6459, %v4666, 0.0
        %v6572 = vsel %vm6460, %v4667, 0.0
        %v6573 = vsel %vm6461, %v4668, 0.0
        %v6574 = vsel %vm6462, %v4669, 0.0
        %v6575 = vsel %vm6463, %v4670, 0.0
        %v6576 = vsel %vm6464, %v4671, 0.0
        %v6577 = vsel %vm6465, %v4672, 0.0
        %v6578 = vsel %vm6466, %v4673, 0.0
        %v6579 = vsel %vm6467, %v4674, 0.0
        %v6580 = vsel %vm6468, %v4675, 0.0
        %v6581 = vsel %vm6469, %v4676, 0.0
        %v6582 = vsel %vm6470, %v4677, 0.0
        %v6583 = vsel %vm6471, %v4678, 0.0
        %v6584 = vsel %vm6472, %v4679, 0.0
        %v6585 = vsel %vm6473, %v4680, 0.0
        %v6586 = vsel %vm6474, %v4681, 0.0
        %v6587 = vsel %vm6475, %v4682, 0.0
        %v6588 = vsel %vm6476, %v4683, 0.0
        %v6589 = vsel %vm6477, %v4684, 0.0
        %v6590 = vsel %vm6478, %v4685, 0.0
        %v6591 = vsel %vm6479, %v4686, 0.0
        %v6592 = vsel %vm6480, %v4687, 0.0
        %v6593 = vsel %vm6481, %v4688, 0.0
        %v6594 = vsel %vm6482, %v4689, 0.0
        %v6595 = vsel %vm6483, %v4690, 0.0
        %v6596 = vsel %vm6484, %v4691, 0.0
        %v6597 = vsel %vm6485, %v4692, 0.0
        %v6598 = vsel %vm6486, %v4693, 0.0
        %v6599 = vsel %vm6487, %v4694, 0.0
        %v6600 = vsel %vm6488, %v4695, 0.0
        %v6601 = vsel %vm6489, %v4696, 0.0
        %v6602 = vsel %vm6490, %v4697, 0.0
        %v6603 = vsel %vm6491, %v4698, 0.0
        %v6604 = vsel %vm6492, %v4699, 0.0
        %v6605 = vsel %vm6493, %v4700, 0.0
        %v6606 = vsel %vm6494, %v4701, 0.0
        %v6607 = vsel %vm6495, %v4702, 0.0
        %v6608 = vsel %vm6496, %v4703, 0.0
        %v6609 = vsel %vm6497, %v4704, 0.0
        %v6610 = vsel %vm6498, %v4705, 0.0
        %v6611 = vsel %vm6499, %v4706, 0.0
        %v6612 = vsel %vm6500, %v4707, 0.0
        %v6613 = vsel %vm6501, %v4708, 0.0
        %v6614 = vsel %vm6502, %v4709, 0.0
        %v6615 = vsel %vm6503, %v4710, 0.0
        %v6616 = vsel %vm6504, %v4711, 0.0
        %v6617 = vsel %vm6505, %v4712, 0.0
        %v6618 = vsel %vm6506, %v4713, 0.0
        %v6619 = vsel %vm6507, %v4714, 0.0
        %v6620 = vsel %vm6508, %v4715, 0.0
        %v6621 = vsel %vm6509, %v4716, 0.0
        %v6622 = vsel %vm6510, %v4717, 0.0
        %v6623 = vadd.f32 %v6511, %v6512
        %v6624 = vadd.f32 %v6623, %v6513
        %v6625 = vadd.f32 %v6624, %v6514
        %v6626 = vadd.f32 %v6625, %v6515
        %v6627 = vadd.f32 %v6626, %v6516
        %v6628 = vadd.f32 %v6627, %v6517
        %v6629 = vadd.f32 %v6628, %v6518
        %v6630 = vadd.f32 %v6629, %v6519
        %v6631 = vadd.f32 %v6630, %v6520
        %v6632 = vadd.f32 %v6631, %v6521
        %v6633 = vadd.f32 %v6632, %v6522
        %v6634 = vadd.f32 %v6633, %v6523
        %v6635 = vadd.f32 %v6634, %v6524
        %v6636 = vadd.f32 %v6635, %v6525
        %v6637 = vadd.f32 %v6636, %v6526
        %v6638 = vadd.f32 %v6637, %v6527
        %v6639 = vadd.f32 %v6638, %v6528
        %v6640 = vadd.f32 %v6639, %v6529
        %v6641 = vadd.f32 %v6640, %v6530
        %v6642 = vadd.f32 %v6641, %v6531
        %v6643 = vadd.f32 %v6642, %v6532
        %v6644 = vadd.f32 %v6643, %v6533
        %v6645 = vadd.f32 %v6644, %v6534
        %v6646 = vadd.f32 %v6645, %v6535
        %v6647 = vadd.f32 %v6646, %v6536
        %v6648 = vadd.f32 %v6647, %v6537
        %v6649 = vadd.f32 %v6648, %v6538
        %v6650 = vadd.f32 %v6649, %v6539
        %v6651 = vadd.f32 %v6650, %v6540
        %v6652 = vadd.f32 %v6651, %v6541
        %v6653 = vadd.f32 %v6652, %v6542
        %v6654 = vadd.f32 %v6653, %v6543
        %v6655 = vadd.f32 %v6654, %v6544
        %v6656 = vadd.f32 %v6655, %v6545
        %v6657 = vadd.f32 %v6656, %v6546
        %v6658 = vadd.f32 %v6657, %v6547
        %v6659 = vadd.f32 %v6658, %v6548
        %v6660 = vadd.f32 %v6659, %v6549
        %v6661 = vadd.f32 %v6660, %v6550
        %v6662 = vadd.f32 %v6661, %v6551
        %v6663 = vadd.f32 %v6662, %v6552
        %v6664 = vadd.f32 %v6663, %v6553
        %v6665 = vadd.f32 %v6664, %v6554
        %v6666 = vadd.f32 %v6665, %v6555
        %v6667 = vadd.f32 %v6666, %v6556
        %v6668 = vadd.f32 %v6667, %v6557
        %v6669 = vadd.f32 %v6668, %v6558
        %v6670 = vadd.f32 %v6669, %v6559
        %v6671 = vadd.f32 %v6670, %v6560
        %v6672 = vadd.f32 %v6671, %v6561
        %v6673 = vadd.f32 %v6672, %v6562
        %v6674 = vadd.f32 %v6673, %v6563
        %v6675 = vadd.f32 %v6674, %v6564
        %v6676 = vadd.f32 %v6675, %v6565
        %v6677 = vadd.f32 %v6676, %v6566
        %v6678 = vadd.f32 %v6677, %v6567
        %v6679 = vadd.f32 %v6678, %v6568
        %v6680 = vadd.f32 %v6679, %v6569
        %v6681 = vadd.f32 %v6680, %v6570
        %v6682 = vadd.f32 %v6681, %v6571
        %v6683 = vadd.f32 %v6682, %v6572
        %v6684 = vadd.f32 %v6683, %v6573
        %v6685 = vadd.f32 %v6684, %v6574
        %v6686 = vadd.f32 %v6685, %v6575
        %v6687 = vadd.f32 %v6686, %v6576
        %v6688 = vadd.f32 %v6687, %v6577
        %v6689 = vadd.f32 %v6688, %v6578
        %v6690 = vadd.f32 %v6689, %v6579
        %v6691 = vadd.f32 %v6690, %v6580
        %v6692 = vadd.f32 %v6691, %v6581
        %v6693 = vadd.f32 %v6692, %v6582
        %v6694 = vadd.f32 %v6693, %v6583
        %v6695 = vadd.f32 %v6694, %v6584
        %v6696 = vadd.f32 %v6695, %v6585
        %v6697 = vadd.f32 %v6696, %v6586
        %v6698 = vadd.f32 %v6697, %v6587
        %v6699 = vadd.f32 %v6698, %v6588
        %v6700 = vadd.f32 %v6699, %v6589
        %v6701 = vadd.f32 %v6700, %v6590
        %v6702 = vadd.f32 %v6701, %v6591
        %v6703 = vadd.f32 %v6702, %v6592
        %v6704 = vadd.f32 %v6703, %v6593
        %v6705 = vadd.f32 %v6704, %v6594
        %v6706 = vadd.f32 %v6705, %v6595
        %v6707 = vadd.f32 %v6706, %v6596
        %v6708 = vadd.f32 %v6707, %v6597
        %v6709 = vadd.f32 %v6708, %v6598
        %v6710 = vadd.f32 %v6709, %v6599
        %v6711 = vadd.f32 %v6710, %v6600
        %v6712 = vadd.f32 %v6711, %v6601
        %v6713 = vadd.f32 %v6712, %v6602
        %v6714 = vadd.f32 %v6713, %v6603
        %v6715 = vadd.f32 %v6714, %v6604
        %v6716 = vadd.f32 %v6715, %v6605
        %v6717 = vadd.f32 %v6716, %v6606
        %v6718 = vadd.f32 %v6717, %v6607
        %v6719 = vadd.f32 %v6718, %v6608
        %v6720 = vadd.f32 %v6719, %v6609
        %v6721 = vadd.f32 %v6720, %v6610
        %v6722 = vadd.f32 %v6721, %v6611
        %v6723 = vadd.f32 %v6722, %v6612
        %v6724 = vadd.f32 %v6723, %v6613
        %v6725 = vadd.f32 %v6724, %v6614
        %v6726 = vadd.f32 %v6725, %v6615
        %v6727 = vadd.f32 %v6726, %v6616
        %v6728 = vadd.f32 %v6727, %v6617
        %v6729 = vadd.f32 %v6728, %v6618
        %v6730 = vadd.f32 %v6729, %v6619
        %v6731 = vadd.f32 %v6730, %v6620
        %v6732 = vadd.f32 %v6731, %v6621
        %v6733 = vadd.f32 %v6732, %v6622
        %v6734 = vrot.slane %v6733, 4
        %v6735 = vadd.f32 %v6733, %v6734
        %v6736 = vrot.slane %v6735, 2
        %v6737 = vadd.f32 %v6735, %v6736
        %v6738 = vrot.slane %v6737, 1
        %v6739 = vadd.f32 %v6737, %v6738
        %6740 = vst [vmem:[%s218] sm:$0x1] %v6739
        %v6741 = vmul.f32 %v6511, %v6511
        %v6742 = vmul.f32 %v6512, %v6512
        %v6743 = vmul.f32 %v6513, %v6513
        %v6744 = vmul.f32 %v6514, %v6514
        %v6745 = vmul.f32 %v6515, %v6515
        %v6746 = vmul.f32 %v6516, %v6516
        %v6747 = vmul.f32 %v6517, %v6517
        %v6748 = vmul.f32 %v6518, %v6518
        %v6749 = vmul.f32 %v6519, %v6519
        %v6750 = vmul.f32 %v6520, %v6520
        %v6751 = vmul.f32 %v6521, %v6521
        %v6752 = vmul.f32 %v6522, %v6522
        %v6753 = vmul.f32 %v6523, %v6523
        %v6754 = vmul.f32 %v6524, %v6524
        %v6755 = vmul.f32 %v6525, %v6525
        %v6756 = vmul.f32 %v6526, %v6526
        %v6757 = vmul.f32 %v6527, %v6527
        %v6758 = vmul.f32 %v6528, %v6528
        %v6759 = vmul.f32 %v6529, %v6529
        %v6760 = vmul.f32 %v6530, %v6530
        %v6761 = vmul.f32 %v6531, %v6531
        %v6762 = vmul.f32 %v6532, %v6532
        %v6763 = vmul.f32 %v6533, %v6533
        %v6764 = vmul.f32 %v6534, %v6534
        %v6765 = vmul.f32 %v6535, %v6535
        %v6766 = vmul.f32 %v6536, %v6536
        %v6767 = vmul.f32 %v6537, %v6537
        %v6768 = vmul.f32 %v6538, %v6538
        %v6769 = vmul.f32 %v6539, %v6539
        %v6770 = vmul.f32 %v6540, %v6540
        %v6771 = vmul.f32 %v6541, %v6541
        %v6772 = vmul.f32 %v6542, %v6542
        %v6773 = vmul.f32 %v6543, %v6543
        %v6774 = vmul.f32 %v6544, %v6544
        %v6775 = vmul.f32 %v6545, %v6545
        %v6776 = vmul.f32 %v6546, %v6546
        %v6777 = vmul.f32 %v6547, %v6547
        %v6778 = vmul.f32 %v6548, %v6548
        %v6779 = vmul.f32 %v6549, %v6549
        %v6780 = vmul.f32 %v6550, %v6550
        %v6781 = vmul.f32 %v6551, %v6551
        %v6782 = vmul.f32 %v6552, %v6552
        %v6783 = vmul.f32 %v6553, %v6553
        %v6784 = vmul.f32 %v6554, %v6554
        %v6785 = vmul.f32 %v6555, %v6555
        %v6786 = vmul.f32 %v6556, %v6556
        %v6787 = vmul.f32 %v6557, %v6557
        %v6788 = vmul.f32 %v6558, %v6558
        %v6789 = vmul.f32 %v6559, %v6559
        %v6790 = vmul.f32 %v6560, %v6560
        %v6791 = vmul.f32 %v6561, %v6561
        %v6792 = vmul.f32 %v6562, %v6562
        %v6793 = vmul.f32 %v6563, %v6563
        %v6794 = vmul.f32 %v6564, %v6564
        %v6795 = vmul.f32 %v6565, %v6565
        %v6796 = vmul.f32 %v6566, %v6566
        %v6797 = vmul.f32 %v6567, %v6567
        %v6798 = vmul.f32 %v6568, %v6568
        %v6799 = vmul.f32 %v6569, %v6569
        %v6800 = vmul.f32 %v6570, %v6570
        %v6801 = vmul.f32 %v6571, %v6571
        %v6802 = vmul.f32 %v6572, %v6572
        %v6803 = vmul.f32 %v6573, %v6573
        %v6804 = vmul.f32 %v6574, %v6574
        %v6805 = vmul.f32 %v6575, %v6575
        %v6806 = vmul.f32 %v6576, %v6576
        %v6807 = vmul.f32 %v6577, %v6577
        %v6808 = vmul.f32 %v6578, %v6578
        %v6809 = vmul.f32 %v6579, %v6579
        %v6810 = vmul.f32 %v6580, %v6580
        %v6811 = vmul.f32 %v6581, %v6581
        %v6812 = vmul.f32 %v6582, %v6582
        %v6813 = vmul.f32 %v6583, %v6583
        %v6814 = vmul.f32 %v6584, %v6584
        %v6815 = vmul.f32 %v6585, %v6585
        %v6816 = vmul.f32 %v6586, %v6586
        %v6817 = vmul.f32 %v6587, %v6587
        %v6818 = vmul.f32 %v6588, %v6588
        %v6819 = vmul.f32 %v6589, %v6589
        %v6820 = vmul.f32 %v6590, %v6590
        %v6821 = vmul.f32 %v6591, %v6591
        %v6822 = vmul.f32 %v6592, %v6592
        %v6823 = vmul.f32 %v6593, %v6593
        %v6824 = vmul.f32 %v6594, %v6594
        %v6825 = vmul.f32 %v6595, %v6595
        %v6826 = vmul.f32 %v6596, %v6596
        %v6827 = vmul.f32 %v6597, %v6597
        %v6828 = vmul.f32 %v6598, %v6598
        %v6829 = vmul.f32 %v6599, %v6599
        %v6830 = vmul.f32 %v6600, %v6600
        %v6831 = vmul.f32 %v6601, %v6601
        %v6832 = vmul.f32 %v6602, %v6602
        %v6833 = vmul.f32 %v6603, %v6603
        %v6834 = vmul.f32 %v6604, %v6604
        %v6835 = vmul.f32 %v6605, %v6605
        %v6836 = vmul.f32 %v6606, %v6606
        %v6837 = vmul.f32 %v6607, %v6607
        %v6838 = vmul.f32 %v6608, %v6608
        %v6839 = vmul.f32 %v6609, %v6609
        %v6840 = vmul.f32 %v6610, %v6610
        %v6841 = vmul.f32 %v6611, %v6611
        %v6842 = vmul.f32 %v6612, %v6612
        %v6843 = vmul.f32 %v6613, %v6613
        %v6844 = vmul.f32 %v6614, %v6614
        %v6845 = vmul.f32 %v6615, %v6615
        %v6846 = vmul.f32 %v6616, %v6616
        %v6847 = vmul.f32 %v6617, %v6617
        %v6848 = vmul.f32 %v6618, %v6618
        %v6849 = vmul.f32 %v6619, %v6619
        %v6850 = vmul.f32 %v6620, %v6620
        %v6851 = vmul.f32 %v6621, %v6621
        %v6852 = vmul.f32 %v6622, %v6622
        %v6853 = vadd.f32 %v6741, %v6742
        %v6854 = vadd.f32 %v6853, %v6743
        %v6855 = vadd.f32 %v6854, %v6744
        %v6856 = vadd.f32 %v6855, %v6745
        %v6857 = vadd.f32 %v6856, %v6746
        %v6858 = vadd.f32 %v6857, %v6747
        %v6859 = vadd.f32 %v6858, %v6748
        %v6860 = vadd.f32 %v6859, %v6749
        %v6861 = vadd.f32 %v6860, %v6750
        %v6862 = vadd.f32 %v6861, %v6751
        %v6863 = vadd.f32 %v6862, %v6752
        %v6864 = vadd.f32 %v6863, %v6753
        %v6865 = vadd.f32 %v6864, %v6754
        %v6866 = vadd.f32 %v6865, %v6755
        %v6867 = vadd.f32 %v6866, %v6756
        %v6868 = vadd.f32 %v6867, %v6757
        %v6869 = vadd.f32 %v6868, %v6758
        %v6870 = vadd.f32 %v6869, %v6759
        %v6871 = vadd.f32 %v6870, %v6760
        %v6872 = vadd.f32 %v6871, %v6761
        %v6873 = vadd.f32 %v6872, %v6762
        %v6874 = vadd.f32 %v6873, %v6763
        %v6875 = vadd.f32 %v6874, %v6764
        %v6876 = vadd.f32 %v6875, %v6765
        %v6877 = vadd.f32 %v6876, %v6766
        %v6878 = vadd.f32 %v6877, %v6767
        %v6879 = vadd.f32 %v6878, %v6768
        %v6880 = vadd.f32 %v6879, %v6769
        %v6881 = vadd.f32 %v6880, %v6770
        %v6882 = vadd.f32 %v6881, %v6771
        %v6883 = vadd.f32 %v6882, %v6772
        %v6884 = vadd.f32 %v6883, %v6773
        %v6885 = vadd.f32 %v6884, %v6774
        %v6886 = vadd.f32 %v6885, %v6775
        %v6887 = vadd.f32 %v6886, %v6776
        %v6888 = vadd.f32 %v6887, %v6777
        %v6889 = vadd.f32 %v6888, %v6778
        %v6890 = vadd.f32 %v6889, %v6779
        %v6891 = vadd.f32 %v6890, %v6780
        %v6892 = vadd.f32 %v6891, %v6781
        %v6893 = vadd.f32 %v6892, %v6782
        %v6894 = vadd.f32 %v6893, %v6783
        %v6895 = vadd.f32 %v6894, %v6784
        %v6896 = vadd.f32 %v6895, %v6785
        %v6897 = vadd.f32 %v6896, %v6786
        %v6898 = vadd.f32 %v6897, %v6787
        %v6899 = vadd.f32 %v6898, %v6788
        %v6900 = vadd.f32 %v6899, %v6789
        %v6901 = vadd.f32 %v6900, %v6790
        %v6902 = vadd.f32 %v6901, %v6791
        %v6903 = vadd.f32 %v6902, %v6792
        %v6904 = vadd.f32 %v6903, %v6793
        %v6905 = vadd.f32 %v6904, %v6794
        %v6906 = vadd.f32 %v6905, %v6795
        %v6907 = vadd.f32 %v6906, %v6796
        %v6908 = vadd.f32 %v6907, %v6797
        %v6909 = vadd.f32 %v6908, %v6798
        %v6910 = vadd.f32 %v6909, %v6799
        %v6911 = vadd.f32 %v6910, %v6800
        %v6912 = vadd.f32 %v6911, %v6801
        %v6913 = vadd.f32 %v6912, %v6802
        %v6914 = vadd.f32 %v6913, %v6803
        %v6915 = vadd.f32 %v6914, %v6804
        %v6916 = vadd.f32 %v6915, %v6805
        %v6917 = vadd.f32 %v6916, %v6806
        %v6918 = vadd.f32 %v6917, %v6807
        %v6919 = vadd.f32 %v6918, %v6808
        %v6920 = vadd.f32 %v6919, %v6809
        %v6921 = vadd.f32 %v6920, %v6810
        %v6922 = vadd.f32 %v6921, %v6811
        %v6923 = vadd.f32 %v6922, %v6812
        %v6924 = vadd.f32 %v6923, %v6813
        %v6925 = vadd.f32 %v6924, %v6814
        %v6926 = vadd.f32 %v6925, %v6815
        %v6927 = vadd.f32 %v6926, %v6816
        %v6928 = vadd.f32 %v6927, %v6817
        %v6929 = vadd.f32 %v6928, %v6818
        %v6930 = vadd.f32 %v6929, %v6819
        %v6931 = vadd.f32 %v6930, %v6820
        %v6932 = vadd.f32 %v6931, %v6821
        %v6933 = vadd.f32 %v6932, %v6822
        %v6934 = vadd.f32 %v6933, %v6823
        %v6935 = vadd.f32 %v6934, %v6824
        %v6936 = vadd.f32 %v6935, %v6825
        %v6937 = vadd.f32 %v6936, %v6826
        %v6938 = vadd.f32 %v6937, %v6827
        %v6939 = vadd.f32 %v6938, %v6828
        %v6940 = vadd.f32 %v6939, %v6829
        %v6941 = vadd.f32 %v6940, %v6830
        %v6942 = vadd.f32 %v6941, %v6831
        %v6943 = vadd.f32 %v6942, %v6832
        %v6944 = vadd.f32 %v6943, %v6833
        %v6945 = vadd.f32 %v6944, %v6834
        %v6946 = vadd.f32 %v6945, %v6835
        %v6947 = vadd.f32 %v6946, %v6836
        %v6948 = vadd.f32 %v6947, %v6837
        %v6949 = vadd.f32 %v6948, %v6838
        %v6950 = vadd.f32 %v6949, %v6839
        %v6951 = vadd.f32 %v6950, %v6840
        %v6952 = vadd.f32 %v6951, %v6841
        %v6953 = vadd.f32 %v6952, %v6842
        %v6954 = vadd.f32 %v6953, %v6843
        %v6955 = vadd.f32 %v6954, %v6844
        %v6956 = vadd.f32 %v6955, %v6845
        %v6957 = vadd.f32 %v6956, %v6846
        %v6958 = vadd.f32 %v6957, %v6847
        %v6959 = vadd.f32 %v6958, %v6848
        %v6960 = vadd.f32 %v6959, %v6849
        %v6961 = vadd.f32 %v6960, %v6850
        %v6962 = vadd.f32 %v6961, %v6851
        %v6963 = vadd.f32 %v6962, %v6852
        %v6964 = vrot.slane %v6963, 4
        %v6965 = vadd.f32 %v6963, %v6964
        %v6966 = vrot.slane %v6965, 2
        %v6967 = vadd.f32 %v6965, %v6966
        %v6968 = vrot.slane %v6967, 1
        %v6969 = vadd.f32 %v6967, %v6968
        %6970 = vst [vmem:[%s218 + $0x1] sm:$0x1] %v6969
        %6971 = vst [vmem:[%s211] sm:$0xff] %v4606
        %6972 = vst [vmem:[%s211 + $0x8] sm:$0xff] %v4607
        %6973 = vst [vmem:[%s211 + $0x10] sm:$0xff] %v4608
        %6974 = vst [vmem:[%s211 + $0x18] sm:$0xff] %v4609
        %6975 = vst [vmem:[%s211 + $0x20] sm:$0xff] %v4610
        %6976 = vst [vmem:[%s211 + $0x28] sm:$0xff] %v4611
        %6977 = vst [vmem:[%s211 + $0x30] sm:$0xff] %v4612
        %6978 = vst [vmem:[%s211 + $0x38] sm:$0xff] %v4613
        %6979 = vst [vmem:[%s211 + $0x40] sm:$0xff] %v4614
        %6980 = vst [vmem:[%s211 + $0x48] sm:$0xff] %v4615
        %6981 = vst [vmem:[%s211 + $0x50] sm:$0xff] %v4616
        %6982 = vst [vmem:[%s211 + $0x58] sm:$0xff] %v4617
        %6983 = vst [vmem:[%s211 + $0x60] sm:$0xff] %v4618
        %6984 = vst [vmem:[%s211 + $0x68] sm:$0xff] %v4619
        %6985 = vst [vmem:[%s211 + $0x70] sm:$0xff] %v4620
        %6986 = vst [vmem:[%s211 + $0x78] sm:$0xff] %v4621
        %6987 = vst [vmem:[%s211 + $0x80] sm:$0xff] %v4622
        %6988 = vst [vmem:[%s211 + $0x88] sm:$0xff] %v4623
        %6989 = vst [vmem:[%s211 + $0x90] sm:$0xff] %v4624
        %6990 = vst [vmem:[%s211 + $0x98] sm:$0xff] %v4625
        %6991 = vst [vmem:[%s211 + $0xa0] sm:$0xff] %v4626
        %6992 = vst [vmem:[%s211 + $0xa8] sm:$0xff] %v4627
        %6993 = vst [vmem:[%s211 + $0xb0] sm:$0xff] %v4628
        %6994 = vst [vmem:[%s211 + $0xb8] sm:$0xff] %v4629
        %6995 = vst [vmem:[%s211 + $0xc0] sm:$0xff] %v4630
        %6996 = vst [vmem:[%s211 + $0xc8] sm:$0xff] %v4631
        %6997 = vst [vmem:[%s211 + $0xd0] sm:$0xff] %v4632
        %6998 = vst [vmem:[%s211 + $0xd8] sm:$0xff] %v4633
        %6999 = vst [vmem:[%s211 + $0xe0] sm:$0xff] %v4634
        %7000 = vst [vmem:[%s211 + $0xe8] sm:$0xff] %v4635
        %7001 = vst [vmem:[%s211 + $0xf0] sm:$0xff] %v4636
        %7002 = vst [vmem:[%s211 + $0xf8] sm:$0xff] %v4637
        %7003 = vst [vmem:[%s211 + $0x100] sm:$0xff] %v4638
        %7004 = vst [vmem:[%s211 + $0x108] sm:$0xff] %v4639
        %7005 = vst [vmem:[%s211 + $0x110] sm:$0xff] %v4640
        %7006 = vst [vmem:[%s211 + $0x118] sm:$0xff] %v4641
        %7007 = vst [vmem:[%s211 + $0x120] sm:$0xff] %v4642
        %7008 = vst [vmem:[%s211 + $0x128] sm:$0xff] %v4643
        %7009 = vst [vmem:[%s211 + $0x130] sm:$0xff] %v4644
        %7010 = vst [vmem:[%s211 + $0x138] sm:$0xff] %v4645
        %7011 = vst [vmem:[%s211 + $0x140] sm:$0xff] %v4646
        %7012 = vst [vmem:[%s211 + $0x148] sm:$0xff] %v4647
        %7013 = vst [vmem:[%s211 + $0x150] sm:$0xff] %v4648
        %7014 = vst [vmem:[%s211 + $0x158] sm:$0xff] %v4649
        %7015 = vst [vmem:[%s211 + $0x160] sm:$0xff] %v4650
        %7016 = vst [vmem:[%s211 + $0x168] sm:$0xff] %v4651
        %7017 = vst [vmem:[%s211 + $0x170] sm:$0xff] %v4652
        %7018 = vst [vmem:[%s211 + $0x178] sm:$0xff] %v4653
        %7019 = vst [vmem:[%s211 + $0x180] sm:$0xff] %v4654
        %7020 = vst [vmem:[%s211 + $0x188] sm:$0xff] %v4655
        %7021 = vst [vmem:[%s211 + $0x190] sm:$0xff] %v4656
        %7022 = vst [vmem:[%s211 + $0x198] sm:$0xff] %v4657
        %7023 = vst [vmem:[%s211 + $0x1a0] sm:$0xff] %v4658
        %7024 = vst [vmem:[%s211 + $0x1a8] sm:$0xff] %v4659
        %7025 = vst [vmem:[%s211 + $0x1b0] sm:$0xff] %v4660
        %7026 = vst [vmem:[%s211 + $0x1b8] sm:$0xff] %v4661
        %7027 = vst [vmem:[%s211 + $0x1c0] sm:$0xff] %v4662
        %7028 = vst [vmem:[%s211 + $0x1c8] sm:$0xff] %v4663
        %7029 = vst [vmem:[%s211 + $0x1d0] sm:$0xff] %v4664
        %7030 = vst [vmem:[%s211 + $0x1d8] sm:$0xff] %v4665
        %7031 = vst [vmem:[%s211 + $0x1e0] sm:$0xff] %v4666
        %7032 = vst [vmem:[%s211 + $0x1e8] sm:$0xff] %v4667
        %7033 = vst [vmem:[%s211 + $0x1f0] sm:$0xff] %v4668
        %7034 = vst [vmem:[%s211 + $0x1f8] sm:$0xff] %v4669
        %7035 = vst [vmem:[%s211 + $0x200] sm:$0xff] %v4670
        %7036 = vst [vmem:[%s211 + $0x208] sm:$0xff] %v4671
        %7037 = vst [vmem:[%s211 + $0x210] sm:$0xff] %v4672
        %7038 = vst [vmem:[%s211 + $0x218] sm:$0xff] %v4673
        %7039 = vst [vmem:[%s211 + $0x220] sm:$0xff] %v4674
        %7040 = vst [vmem:[%s211 + $0x228] sm:$0xff] %v4675
        %7041 = vst [vmem:[%s211 + $0x230] sm:$0xff] %v4676
        %7042 = vst [vmem:[%s211 + $0x238] sm:$0xff] %v4677
        %7043 = vst [vmem:[%s211 + $0x240] sm:$0xff] %v4678
        %7044 = vst [vmem:[%s211 + $0x248] sm:$0xff] %v4679
        %7045 = vst [vmem:[%s211 + $0x250] sm:$0xff] %v4680
        %7046 = vst [vmem:[%s211 + $0x258] sm:$0xff] %v4681
        %7047 = vst [vmem:[%s211 + $0x260] sm:$0xff] %v4682
        %7048 = vst [vmem:[%s211 + $0x268] sm:$0xff] %v4683
        %7049 = vst [vmem:[%s211 + $0x270] sm:$0xff] %v4684
        %7050 = vst [vmem:[%s211 + $0x278] sm:$0xff] %v4685
        %7051 = vst [vmem:[%s211 + $0x280] sm:$0xff] %v4686
        %7052 = vst [vmem:[%s211 + $0x288] sm:$0xff] %v4687
        %7053 = vst [vmem:[%s211 + $0x290] sm:$0xff] %v4688
        %7054 = vst [vmem:[%s211 + $0x298] sm:$0xff] %v4689
        %7055 = vst [vmem:[%s211 + $0x2a0] sm:$0xff] %v4690
        %7056 = vst [vmem:[%s211 + $0x2a8] sm:$0xff] %v4691
        %7057 = vst [vmem:[%s211 + $0x2b0] sm:$0xff] %v4692
        %7058 = vst [vmem:[%s211 + $0x2b8] sm:$0xff] %v4693
        %7059 = vst [vmem:[%s211 + $0x2c0] sm:$0xff] %v4694
        %7060 = vst [vmem:[%s211 + $0x2c8] sm:$0xff] %v4695
        %7061 = vst [vmem:[%s211 + $0x2d0] sm:$0xff] %v4696
        %7062 = vst [vmem:[%s211 + $0x2d8] sm:$0xff] %v4697
        %7063 = vst [vmem:[%s211 + $0x2e0] sm:$0xff] %v4698
        %7064 = vst [vmem:[%s211 + $0x2e8] sm:$0xff] %v4699
        %7065 = vst [vmem:[%s211 + $0x2f0] sm:$0xff] %v4700
        %7066 = vst [vmem:[%s211 + $0x2f8] sm:$0xff] %v4701
        %7067 = vst [vmem:[%s211 + $0x300] sm:$0xff] %v4702
        %7068 = vst [vmem:[%s211 + $0x308] sm:$0xff] %v4703
        %7069 = vst [vmem:[%s211 + $0x310] sm:$0xff] %v4704
        %7070 = vst [vmem:[%s211 + $0x318] sm:$0xff] %v4705
        %7071 = vst [vmem:[%s211 + $0x320] sm:$0xff] %v4706
        %7072 = vst [vmem:[%s211 + $0x328] sm:$0xff] %v4707
        %7073 = vst [vmem:[%s211 + $0x330] sm:$0xff] %v4708
        %7074 = vst [vmem:[%s211 + $0x338] sm:$0xff] %v4709
        %7075 = vst [vmem:[%s211 + $0x340] sm:$0xff] %v4710
        %7076 = vst [vmem:[%s211 + $0x348] sm:$0xff] %v4711
        %7077 = vst [vmem:[%s211 + $0x350] sm:$0xff] %v4712
        %7078 = vst [vmem:[%s211 + $0x358] sm:$0xff] %v4713
        %7079 = vst [vmem:[%s211 + $0x360] sm:$0xff] %v4714
        %7080 = vst [vmem:[%s211 + $0x368] sm:$0xff] %v4715
        %7081 = vst [vmem:[%s211 + $0x370] sm:$0xff] %v4716
        %7082 = vst [vmem:[%s211 + $0x378] sm:$0xff] %v4717
        %s7083 = sand.u32 %s80, 1
        %s7084 = scalar_lea.sflag [#allocation4], %s7083
        %s7085 = sand.u32 %s80, 1
        %s7086 = smul.addr %s7085, 896
        %s7087 = scalar_lea.vmem [#allocation7], %s7086
        %s7088 = sand.u32 %s106, 1
        %s7089 = scalar_lea.sflag [#allocation9], %s7088
        %s7090 = sand.u32 %s106, 1
        %s7091 = smul.addr %s7090, 2
        %s7092 = scalar_lea.vmem [#allocation8], %s7091
        // Predicated region
        $region37: #{tpu_custom_call.1} parent=27 // pred_check
          %p7093 = pneg %p90
        $region38: #{tpu_custom_call.1} parent=27 // pred_check_branch
          %7095 = sbr.rel (%p7093) target = $region40
        $region39: #{tpu_custom_call.1} parent=27 // pred_region
          %7097 = vsyncadd %s7084, 0
          %s7098 = smul.addr %s25, 112
          %s7099 = smul.addr %s7098, 8
          %s7100 = scalar_lea.hbm %s2, %s7099
          %s7101 = sshll.u32 %s7087, 4
          %s7102 = int_to_ptr.vmem [resolvable:$true] %s7101
          %s7103 = sshll.u32 %s7100, 4
          %s7104 = int_to_ptr.hbm [resolvable:$true] %s7103
          %7109 = dma.vmem_to_hbm [thread:$0]  %s7102, 14336, %s7104, %s7084, 128, 128, 8
        $region40: #{tpu_custom_call.1} parent=27 // pred_fallthru
          _
        // Predicated region
        $region41: #{tpu_custom_call.1} parent=27 // pred_check
          %p7110 = pneg %p116
        $region42: #{tpu_custom_call.1} parent=27 // pred_check_branch
          %7112 = sbr.rel (%p7110) target = $region44
        $region43: #{tpu_custom_call.1} parent=27 // pred_region
          %7114 = vsyncadd %s7089, 0
          %s7115 = smul.addr %s25, 2
          %s7116 = scalar_lea.hbm %s3, %s7115
          %s7118 = sshll.u32 %s7092, 4
          %s7119 = int_to_ptr.vmem [resolvable:$true] %s7118
          %s7120 = sshll.u32 %s7116, 4
          %s7121 = int_to_ptr.hbm [resolvable:$true] %s7120
          %7123 = dma.vmem_to_hbm [thread:$0]  %s7119, 32, %s7121, %s7089
        $region44: #{tpu_custom_call.1} parent=27 // pred_fallthru
          _
      $region28: #{tpu_custom_call.1} parent=5 // pred_fallthru
        _
      %p7124 = scmp.le.s32.totalorder 2, %s20
      // Predicated region
      $region45: #{tpu_custom_call.1} parent=5 // pred_check
        %p7125 = pneg %p7124
      $region46: #{tpu_custom_call.1} parent=5 // pred_check_branch
        %7127 = sbr.rel (%p7125) target = $region48
      $region47: #{tpu_custom_call.1} parent=5 // pred_region
        %s7128 = ssub.s32 %s20, 2
        // Predicated region
        $region49: #{tpu_custom_call.1} parent=47 // pred_check
          %p7129 = pneg %p96
        $region50: #{tpu_custom_call.1} parent=47 // pred_check_branch
          %7131 = sbr.rel (%p7129) target = $region52
        $region51: #{tpu_custom_call.1} parent=47 // pred_region
          %s7132 = sand.u32 %s81, 1
          %s7133 = scalar_lea.sflag [#allocation4], %s7132
          %s7134 = sand.u32 %s81, 1
          %s7135 = smul.addr %s7134, 896
          %s7136 = scalar_lea.vmem [#allocation7], %s7135
          %7138 = dma.done %s7133, 14336
        $region52: #{tpu_custom_call.1} parent=47 // pred_fallthru
          _
        // Predicated region
        $region53: #{tpu_custom_call.1} parent=47 // pred_check
          %p7139 = pneg %p122
        $region54: #{tpu_custom_call.1} parent=47 // pred_check_branch
          %7141 = sbr.rel (%p7139) target = $region56
        $region55: #{tpu_custom_call.1} parent=47 // pred_region
          %s7142 = sand.u32 %s107, 1
          %s7143 = scalar_lea.sflag [#allocation9], %s7142
          %s7144 = sand.u32 %s107, 1
          %s7145 = smul.addr %s7144, 2
          %s7146 = scalar_lea.vmem [#allocation8], %s7145
          %7148 = dma.done %s7143, 32
        $region56: #{tpu_custom_call.1} parent=47 // pred_fallthru
          _
      $region48: #{tpu_custom_call.1} parent=5 // pred_fallthru
        _
    $region6: #{tpu_custom_call.1} parent=1 // loop_footer
      %s24 = sadd.s32 1, %s20
    $region7: #{tpu_custom_call.1} parent=1 // loop_footer_branch
      %19 = sbr.rel target = $region3
    $region8: #{tpu_custom_call.1} parent=1 // loop_exit
      _
    %7149 = vsyncpa [#allocation3], 1
    %s7150 = scalar_lea.sflag [#allocation3], 1
    %7151 = vsyncpa %s7150, 1
    %7152 = vsyncpa [#allocation6], 1
    %7153 = vsyncpa [#allocation4], 1
    %s7154 = scalar_lea.sflag [#allocation4], 1
    %7155 = vsyncpa %s7154, 1
    %7156 = vsyncpa [#allocation9], 1
    %s7157 = scalar_lea.sflag [#allocation9], 1
    %7158 = vsyncpa %s7157, 1

</llo_original>
